<compile_context>
chip_gen: v6e
topology: v6e:2x2x1
jax: 0.10.0
libtpu: 0.0.40
codegen_flags: <defaults>
</compile_context>

<pallas_src>
import functools

import numpy as np
import jax
import jax.numpy as jnp
from jax.experimental import pallas as pl
from jax.experimental.pallas import tpu as pltpu

LANE = 128
PAD = 2                      # 5x5 halo; the 3x3 branch rides the 9 central taps
K5 = 2 * PAD + 1


def _ru(a, m):
    return (a + m - 1) // m * m


def _sigmoid(z):
    # exp on the EUP; approx reciprocal (EUP) instead of a VALU divide.
    # ~1e-3-level relative error, well inside the bf16-matmul tolerance.
    return pl.reciprocal(1.0 + jnp.exp(-z), approx=True)


# --------------------------------------------------------------------------
# kernels
# --------------------------------------------------------------------------
def _stage_a_kernel(x_ref, w1_ref, b1_ref, w2_ref, b2_ref, wc_ref, wo_ref,
                    x1_ref, h_ref, ps_ref, scr_ref, *, H, W, Bt, Crp):
    """Channel attention (transposed orientation) fused with conv_a of both
    spatial branches (3x3 taps fused along N with the 9 central 5x5 taps)."""
    HW = H * W
    OFF = PAD * W + PAD
    OFF_ST = _ru(OFF, 8)              # sublane-aligned image start in the halo
    base = OFF_ST - OFF
    M = Bt * HW
    bf16 = jnp.bfloat16

    # Halo rows of the scratch are only ever read -> zero them once.
    @pl.when(pl.program_id(0) == 0)
    def _zero_halo():
        scr_ref[...] = jnp.zeros_like(scr_ref)

    # ---- channel attention: att^T = W2 @ relu(W1 @ x^T + b1) + b2 ----------
    for i in range(Bt):
        xT = x_ref[i]                                          # (HW, Cp) f32
        h1 = jnp.dot(w1_ref[...], xT.astype(bf16),
                     preferred_element_type=jnp.float32) + b1_ref[...]
        h1 = jnp.maximum(h1, 0.0)
        att = jnp.dot(w2_ref[...], h1.astype(bf16),
                      preferred_element_type=jnp.float32) + b2_ref[...]
        x1 = xT * _sigmoid(att)                                # (HW, Cp) f32
        x1_ref[i] = x1                                         # gate input (f32)
        scr_ref[i, OFF_ST:OFF_ST + HW, :] = x1.astype(bf16)    # conv input

    # ---- conv_a of both branches via shifted accumulation -------------------
    col = jax.lax.broadcasted_iota(jnp.int32, (M, 1), 0) % W
    masks = {dx: (col + dx >= 0) & (col + dx < W)
             for dx in range(-PAD, PAD + 1) if dx != 0}        # hoisted (4 masks)
    xs = [scr_ref[i] for i in range(Bt)]                       # (Lr, Cp) bf16

    acc_c = jnp.zeros((M, 2 * Crp), jnp.float32)               # fused [h3 | h5-central]
    acc_o = jnp.zeros((M, Crp), jnp.float32)                   # h5 outer-ring taps
    oi = 0
    for p in range(K5):
        for q in range(K5):
            t = base + p * W + q
            parts = [xs[i][t:t + HW, :] for i in range(Bt)]
            s = parts[0] if Bt == 1 else jnp.concatenate(parts, axis=0)
            dx = q - PAD
            if dx != 0:    # columns whose shifted x wrapped to a neighbor row
                s = jnp.where(masks[dx], s, jnp.zeros_like(s))
            if 1 <= p <= K5 - 2 and 1 <= q <= K5 - 2:
                ci = (p - 1) * (K5 - 2) + (q - 1)
                acc_c = acc_c + jnp.dot(s, wc_ref[ci],
                                        preferred_element_type=jnp.float32)
            else:
                acc_o = acc_o + jnp.dot(s, wo_ref[oi],
                                        preferred_element_type=jnp.float32)
                oi += 1

    h3 = acc_c[:, :Crp]
    h5 = acc_c[:, Crp:] + acc_o
    for i in range(Bt):                 # lane-aligned half stores, no big concat
        h_ref[i, :, :Crp] = h3[i * HW:(i + 1) * HW].astype(h_ref.dtype)
        h_ref[i, :, Crp:] = h5[i * HW:(i + 1) * HW].astype(h_ref.dtype)

    s1 = jnp.concatenate([jnp.sum(h3, axis=0, keepdims=True),
                          jnp.sum(h5, axis=0, keepdims=True)], axis=1)
    s2 = jnp.concatenate([jnp.sum(h3 * h3, axis=0, keepdims=True),
                          jnp.sum(h5 * h5, axis=0, keepdims=True)], axis=1)
    ps_ref[0] = jnp.concatenate([s1, s2], axis=0)              # BN partials (2, Nh)


def _stage_b_kernel(h_ref, sc_ref, sh_ref, w3_ref, w5_ref,
                    y_ref, ps_ref, scr_ref, *, H, W, Bt, Crp, Cp):
    """BN(batch-stat scale/shift)+ReLU prologue, then conv_b of both branches."""
    HW = H * W
    OFF = PAD * W + PAD
    OFF_ST = _ru(OFF, 8)
    base = OFF_ST - OFF
    M = Bt * HW
    bf16 = jnp.bfloat16

    @pl.when(pl.program_id(0) == 0)
    def _zero_halo():
        scr_ref[...] = jnp.zeros_like(scr_ref)

    for i in range(Bt):
        hn = jnp.maximum(
            h_ref[i].astype(jnp.float32) * sc_ref[...] + sh_ref[...], 0.0)
        scr_ref[i, OFF_ST:OFF_ST + HW, :] = hn.astype(bf16)

    col = jax.lax.broadcasted_iota(jnp.int32, (M, 1), 0) % W
    masks = {dx: (col + dx >= 0) & (col + dx < W)
             for dx in range(-PAD, PAD + 1) if dx != 0}
    xs = [scr_ref[i] for i in range(Bt)]                       # (Lr, 2*Crp) bf16

    acc3 = jnp.zeros((M, Cp), jnp.float32)
    acc5 = jnp.zeros((M, Cp), jnp.float32)
    for p in range(K5):
        for q in range(K5):
            t = base + p * W + q
            parts = [xs[i][t:t + HW, :] for i in range(Bt)]
            s = parts[0] if Bt == 1 else jnp.concatenate(parts, axis=0)
            dx = q - PAD
            if dx != 0:
                s = jnp.where(masks[dx], s, jnp.zeros_like(s))
            acc5 = acc5 + jnp.dot(s[:, Crp:], w5_ref[p * K5 + q],
                                  preferred_element_type=jnp.float32)
            if 1 <= p <= K5 - 2 and 1 <= q <= K5 - 2:
                acc3 = acc3 + jnp.dot(s[:, :Crp],
                                      w3_ref[(p - 1) * (K5 - 2) + (q - 1)],
                                      preferred_element_type=jnp.float32)

    for i in range(Bt):
        y_ref[i, :, :Cp] = acc3[i * HW:(i + 1) * HW].astype(y_ref.dtype)
        y_ref[i, :, Cp:] = acc5[i * HW:(i + 1) * HW].astype(y_ref.dtype)

    s1 = jnp.concatenate([jnp.sum(acc3, axis=0, keepdims=True),
                          jnp.sum(acc5, axis=0, keepdims=True)], axis=1)
    s2 = jnp.concatenate([jnp.sum(acc3 * acc3, axis=0, keepdims=True),
                          jnp.sum(acc5 * acc5, axis=0, keepdims=True)], axis=1)
    ps_ref[0] = jnp.concatenate([s1, s2], axis=0)


def _gate_kernel(x1_ref, y_ref, sc_ref, sh_ref, o_ref, *, Bt, Cp):
    # out = x1 * sigmoid(BN3(y3) + BN5(y5)); BN folded to per-channel scale/shift.
    for i in range(Bt):
        y = y_ref[i].astype(jnp.float32) * sc_ref[...] + sh_ref[...]
        s = y[:, :Cp] + y[:, Cp:]
        o_ref[i] = x1_ref[i] * _sigmoid(s)


# --------------------------------------------------------------------------
# wrapper
# --------------------------------------------------------------------------
def gam_attention_pallas(x, params):
    B, C, H, W = x.shape
    HW = H * W
    assert HW == C, "GAM_Attention applies Linear(in_channels) over the H*W axis"

    f32, bf16 = jnp.float32, jnp.bfloat16
    x = x.astype(f32)

    Cr = params["br3"]["w_a"].shape[0]
    Cp = _ru(C, LANE)
    Crp = _ru(Cr, LANE)
    Nh = 2 * Crp               # fused [h3 | h5] lanes of conv stage 1
    Ny = 2 * Cp                # fused [y3 | y5] lanes of conv stage 2
    OFF = PAD * W + PAD
    OFF_ST = _ru(OFF, 8)
    Lr = OFF_ST + HW + OFF     # per-image haloed row count (VMEM scratch only)
    n_pos = B * HW             # BatchNorm sample count per channel

    # Batch several images per conv grid step so M = Bt*HW fills the MXU rows.
    cap = max(1, 256 // HW)
    Bt = max(d for d in range(1, min(B, cap) + 1) if B % d == 0)
    NB = B // Bt

    def pad2(a, r, c):
        return jnp.pad(a, ((0, r - a.shape[0]), (0, c - a.shape[1])))

    def pad1(v, n):
        return jnp.pad(v, (0, n - v.shape[0]))

    def wspec(arr):
        """Full-block, grid-invariant operand; single-buffer it when large."""
        nd = arr.ndim
        idx = (lambda g, _nd=nd: (0,) * _nd)
        shape = tuple(arr.shape)
        if arr.size * arr.dtype.itemsize >= (4 << 20):
            try:
                return pl.BlockSpec(shape, idx, pipeline_mode=pl.Buffered(1))
            except (AttributeError, TypeError):
                pass
        return pl.BlockSpec(shape, idx)

    def cparams(est_bytes):
        kw = dict(dimension_semantics=("parallel",))
        if est_bytes > (16 << 20):   # raise the scoped-VMEM default when needed
            kw["vmem_limit_bytes"] = int(min(2 * est_bytes, 64 << 20))
        return pltpu.CompilerParams(**kw)

    # ---------------- parameter prep (weights -> bf16 MXU operands) ----------
    # transposed channel attention: att^T = W2 @ relu(W1 @ x^T + b1) + b2
    w1_p = pad2(params["w1"], Crp, HW).astype(bf16)             # (Crp, HW)
    b1_p = pad1(params["b1"], Crp).astype(f32)[:, None]         # (Crp, 1)
    w2_p = pad2(params["w2"], HW, Crp).astype(bf16)             # (HW, Crp)
    b2_p = params["b2"].astype(f32)[:, None]                    # (HW, 1)

    def conv_taps(w_oihw, cin_p, cout_p):
        O, I, Kk, _ = w_oihw.shape
        w = jnp.transpose(w_oihw, (2, 3, 1, 0)).reshape(Kk * Kk, I, O)
        return jnp.pad(w, ((0, 0), (0, cin_p - I), (0, cout_p - O))).astype(bf16)

    # conv bias is folded away: BN(conv(x)+b) == BN(conv(x)) exactly.
    w3a = conv_taps(params["br3"]["w_a"], Cp, Crp)              # (9,  Cp, Crp)
    w5a = conv_taps(params["br5"]["w_a"], Cp, Crp)              # (25, Cp, Crp)
    central = [p * K5 + q for p in range(1, K5 - 1) for q in range(1, K5 - 1)]
    outer = [t for t in range(K5 * K5) if t not in central]
    wc_a = jnp.concatenate([w3a, jnp.stack([w5a[t] for t in central])], axis=2)
    wo_a = jnp.stack([w5a[t] for t in outer])                   # (16, Cp, Crp)
    w3b = conv_taps(params["br3"]["w_b"], Crp, Cp)              # (9,  Crp, Cp)
    w5b = conv_taps(params["br5"]["w_b"], Crp, Cp)              # (25, Crp, Cp)

    # NHWC boundary transpose (the only layout copies besides the final one).
    x_nhwc = jnp.pad(jnp.transpose(x, (0, 2, 3, 1)).reshape(B, HW, C),
                     ((0, 0), (0, 0), (0, Cp - C)))

    # ---------------- stage A: channel attention + conv_a --------------------
    kA = functools.partial(_stage_a_kernel, H=H, W=W, Bt=Bt, Crp=Crp)
    est_a = (2 * (Bt * HW * (8 * Cp + 2 * Nh) + 8 * Nh
                  + 4 * Crp * HW + 4 * Crp + 4 * HW
                  + 2 * (9 * Cp * Nh + 16 * Cp * Crp))
             + Bt * Lr * Cp * 2)
    ce_a = pl.CostEstimate(flops=int(72 * B * HW * C * Cr),
                           transcendentals=int(B * HW * C),
                           bytes_accessed=int(B * HW * (8 * Cp + 2 * Nh)))
    x1_f32, h_raw, ps_h = pl.pallas_call(
        kA,
        out_shape=(jax.ShapeDtypeStruct((B, HW, Cp), f32),
                   jax.ShapeDtypeStruct((B, HW, Nh), bf16),
                   jax.ShapeDtypeStruct((NB, 2, Nh), f32)),
        grid=(NB,),
        in_specs=[
            pl.BlockSpec((Bt, HW, Cp), lambda g: (g, 0, 0)),
            wspec(w1_p), wspec(b1_p), wspec(w2_p), wspec(b2_p),
            wspec(wc_a), wspec(wo_a),
        ],
        out_specs=(pl.BlockSpec((Bt, HW, Cp), lambda g: (g, 0, 0)),
                   pl.BlockSpec((Bt, HW, Nh), lambda g: (g, 0, 0)),
                   pl.BlockSpec((1, 2, Nh), lambda g: (g, 0, 0))),
        scratch_shapes=[pltpu.VMEM((Bt, Lr, Cp), bf16)],
        compiler_params=cparams(est_a),
        cost_estimate=ce_a,
    )(x_nhwc, w1_p, b1_p, w2_p, b2_p, wc_a, wo_a)

    # Two-pass BatchNorm: reduce per-step partials -> per-channel scale/shift.
    def bn_affine(ps, gamma, beta, eps=1e-5):
        tot = jnp.sum(ps, axis=0)                               # (2, N)
        mean = tot[0] / n_pos
        var = jnp.maximum(tot[1] / n_pos - mean * mean, 0.0)
        scale = gamma * jax.lax.rsqrt(var + eps)
        shift = beta - mean * scale
        return scale[None, :].astype(f32), shift[None, :].astype(f32)

    g_h = jnp.concatenate([pad1(params["br3"]["g_a"], Crp),
                           pad1(params["br5"]["g_a"], Crp)])
    be_h = jnp.concatenate([pad1(params["br3"]["be_a"], Crp),
                            pad1(params["br5"]["be_a"], Crp)])
    sc_h, sh_h = bn_affine(ps_h, g_h, be_h)                     # (1, Nh) each

    # ---------------- stage B: BN+ReLU then conv_b ---------------------------
    kB = functools.partial(_stage_b_kernel, H=H, W=W, Bt=Bt, Crp=Crp, Cp=Cp)
    est_b = (2 * (Bt * HW * (2 * Nh + 2 * Ny) + 8 * Ny + 8 * Nh
                  + 2 * 34 * Crp * Cp)
             + Bt * Lr * Nh * 2)
    ce_b = pl.CostEstimate(flops=int(68 * B * HW * C * Cr),
                           transcendentals=0,
                           bytes_accessed=int(B * HW * (2 * Nh + 2 * Ny)))
    y_raw, ps_y = pl.pallas_call(
        kB,
        out_shape=(jax.ShapeDtypeStruct((B, HW, Ny), bf16),
                   jax.ShapeDtypeStruct((NB, 2, Ny), f32)),
        grid=(NB,),
        in_specs=[
            pl.BlockSpec((Bt, HW, Nh), lambda g: (g, 0, 0)),
            wspec(sc_h), wspec(sh_h), wspec(w3b), wspec(w5b),
        ],
        out_specs=(pl.BlockSpec((Bt, HW, Ny), lambda g: (g, 0, 0)),
                   pl.BlockSpec((1, 2, Ny), lambda g: (g, 0, 0))),
        scratch_shapes=[pltpu.VMEM((Bt, Lr, Nh), bf16)],
        compiler_params=cparams(est_b),
        cost_estimate=ce_b,
    )(h_raw, sc_h, sh_h, w3b, w5b)

    g_y = jnp.concatenate([pad1(params["br3"]["g_b"], Cp),
                           pad1(params["br5"]["g_b"], Cp)])
    be_y = jnp.concatenate([pad1(params["br3"]["be_b"], Cp),
                            pad1(params["br5"]["be_b"], Cp)])
    sc_y, sh_y = bn_affine(ps_y, g_y, be_y)                     # (1, Ny) each

    # ---------------- final gating -------------------------------------------
    kC = functools.partial(_gate_kernel, Bt=Bt, Cp=Cp)
    est_c = 2 * (Bt * HW * (8 * Cp + 2 * Ny) + 8 * Ny)
    ce_c = pl.CostEstimate(flops=int(6 * B * HW * Ny),
                           transcendentals=int(B * HW * C),
                           bytes_accessed=int(B * HW * (8 * Cp + 2 * Ny)))
    out_nhwc = pl.pallas_call(
        kC,
        out_shape=jax.ShapeDtypeStruct((B, HW, Cp), f32),
        grid=(NB,),
        in_specs=[
            pl.BlockSpec((Bt, HW, Cp), lambda g: (g, 0, 0)),
            pl.BlockSpec((Bt, HW, Ny), lambda g: (g, 0, 0)),
            wspec(sc_y), wspec(sh_y),
        ],
        out_specs=pl.BlockSpec((Bt, HW, Cp), lambda g: (g, 0, 0)),
        compiler_params=cparams(est_c),
        cost_estimate=ce_c,
    )(x1_f32, y_raw, sc_y, sh_y)

    out = out_nhwc[:, :, :C].reshape(B, H, W, C)
    return jnp.transpose(out, (0, 3, 1, 2))                     # back to NCHW


# --------------------------------------------------------------------------
# pure-JAX reference (faithful f32, for correctness check only)
# --------------------------------------------------------------------------
def gam_attention_reference(x, params):
    B, C, H, W = x.shape
    xp = x.reshape(B, C, H * W)
    h = jnp.maximum(xp @ params["w1"].T + params["b1"], 0.0)
    att = (h @ params["w2"].T + params["b2"]).reshape(B, C, H, W)
    x1 = x * jax.nn.sigmoid(att)

    def conv2d(z, w_oihw, b, pad):
        y = jax.lax.conv_general_dilated(
            z, w_oihw, window_strides=(1, 1),
            padding=[(pad, pad), (pad, pad)],
            dimension_numbers=("NCHW", "OIHW", "NCHW"))
        return y + b[None, :, None, None]

    def bn(z, g, be, eps=1e-5):
        mean = z.mean(axis=(0, 2, 3), keepdims=True)
        var = ((z - mean) ** 2).mean(axis=(0, 2, 3), keepdims=True)
        return ((z - mean) * jax.lax.rsqrt(var + eps)
                * g[None, :, None, None] + be[None, :, None, None])

    def branch(z, p):
        K = p["w_a"].shape[-1]
        pad = K // 2
        hh = jnp.maximum(bn(conv2d(z, p["w_a"], p["b_a"], pad),
                            p["g_a"], p["be_a"]), 0.0)
        return bn(conv2d(hh, p["w_b"], p["b_b"], pad), p["g_b"], p["be_b"])

    s = branch(x1, params["br3"]) + branch(x1, params["br5"])
    return x1 * jax.nn.sigmoid(s)


# --------------------------------------------------------------------------
# deterministic parameter init (shapes follow GAM_Attention.__init__)
# --------------------------------------------------------------------------
def init_params(key, C, rate=4):
    Cr = int(C / rate)
    keys = iter(jax.random.split(key, 12))

    def w(shape, fan_in):
        return jax.random.normal(next(keys), shape, dtype=jnp.float32) * (fan_in ** -0.5)

    def branch(K):
        return {
            "w_a": w((Cr, C, K, K), C * K * K), "b_a": w((Cr,), C * K * K),
            "g_a": jnp.ones((Cr,), jnp.float32), "be_a": jnp.zeros((Cr,), jnp.float32),
            "w_b": w((C, Cr, K, K), Cr * K * K), "b_b": w((C,), Cr * K * K),
            "g_b": jnp.ones((C,), jnp.float32), "be_b": jnp.zeros((C,), jnp.float32),
        }

    return {
        "w1": w((Cr, C), C), "b1": w((Cr,), C),
        "w2": w((C, Cr), Cr), "b2": w((C,), Cr),
        "br3": branch(3), "br5": branch(5),
    }


if __name__ == "__main__":
    # The module's forward requires H*W == in_channels (view(b, c, -1) feeds the
    # H*W axis into Linear(in_channels, ...) without a permute).
    B, C, H, W = 2, 16, 4, 4
    key = jax.random.PRNGKey(0)
    kx, kp = jax.random.split(key)
    x = jax.random.normal(kx, (B, C, H, W), dtype=jnp.float32)
    params = init_params(kp, C, rate=4)

    out = jax.jit(gam_attention_pallas)(x, params)
    out = jax.block_until_ready(out)

    ref = gam_attention_reference(x, params)
    assert out.shape == (B, C, H, W)
    # bf16 MXU operands (f32 accumulation) + approx reciprocal in the sigmoids.
    np.testing.assert_allclose(np.asarray(out), np.asarray(ref), rtol=2e-2, atol=2e-2)
    print("KERNEL_OK")
</pallas_src>

<mosaic_0001>
module attributes {stable_mosaic.version = 11 : i64} {
  func.func @_stage_a_kernel(%arg0: i32, %arg1: memref<2x16x128xf32, #tpu.memory_space<vmem>>, %arg2: memref<128x16xbf16, #tpu.memory_space<vmem>>, %arg3: memref<128x1xf32, #tpu.memory_space<vmem>>, %arg4: memref<16x128xbf16, #tpu.memory_space<vmem>>, %arg5: memref<16x1xf32, #tpu.memory_space<vmem>>, %arg6: memref<9x128x256xbf16, #tpu.memory_space<vmem>>, %arg7: memref<16x128x128xbf16, #tpu.memory_space<vmem>>, %arg8: memref<2x16x128xf32, #tpu.memory_space<vmem>>, %arg9: memref<2x16x256xbf16, #tpu.memory_space<vmem>>, %arg10: memref<1x2x256xf32, #tpu.memory_space<vmem>>, %arg11: memref<2x42x128xbf16, #tpu.memory_space<vmem>>) attributes {dimension_semantics = [#tpu.dimension_semantics<parallel>], iteration_bounds = array<i64: 1>, scalar_prefetch = 0 : i64, scratch_operands = 1 : i64, tpu.core_type = #tpu.core_type<tc>, window_params = [{transform_indices = @transform_0, window_bounds = array<i64: 2, 16, 128>}, {pipeline_mode = #tpu.pipeline_mode<synchronous>, transform_indices = @transform_1, window_bounds = array<i64: 128, 16>}, {pipeline_mode = #tpu.pipeline_mode<synchronous>, transform_indices = @transform_2, window_bounds = array<i64: 128, 1>}, {pipeline_mode = #tpu.pipeline_mode<synchronous>, transform_indices = @transform_3, window_bounds = array<i64: 16, 128>}, {pipeline_mode = #tpu.pipeline_mode<synchronous>, transform_indices = @transform_4, window_bounds = array<i64: 16, 1>}, {pipeline_mode = #tpu.pipeline_mode<synchronous>, transform_indices = @transform_5, window_bounds = array<i64: 9, 128, 256>}, {pipeline_mode = #tpu.pipeline_mode<synchronous>, transform_indices = @transform_6, window_bounds = array<i64: 16, 128, 128>}, {transform_indices = @transform_7, window_bounds = array<i64: 2, 16, 128>}, {transform_indices = @transform_8, window_bounds = array<i64: 2, 16, 256>}, {transform_indices = @transform_9, window_bounds = array<i64: 1, 2, 256>}]} {
    %c0_i32 = arith.constant 0 : i32
    %0 = arith.cmpi eq, %arg0, %c0_i32 : i32
    %1 = arith.extui %0 : i1 to i32
    %c0_i32_0 = arith.constant 0 : i32
    %2 = arith.cmpi ne, %1, %c0_i32_0 : i32
    scf.if %2 {
      %cst_190 = arith.constant 0.000000e+00 : bf16
      %416 = vector.broadcast %cst_190 : bf16 to vector<2x42x128xbf16>
      %c0_191 = arith.constant 0 : index
      %c0_192 = arith.constant 0 : index
      %c0_193 = arith.constant 0 : index
      %417 = vector.load %arg11[%c0_191, %c0_192, %c0_193] : memref<2x42x128xbf16, #tpu.memory_space<vmem>>, vector<2x42x128xbf16>
      tpu.vector_store %arg11[%c0_191, %c0_192, %c0_193], %416 {strides = array<i32>} : memref<2x42x128xbf16, #tpu.memory_space<vmem>>, vector<2x42x128xbf16>,
    } else {
    }
    %c0 = arith.constant 0 : index
    %c0_1 = arith.constant 0 : index
    %c0_2 = arith.constant 0 : index
    %3 = vector.load %arg1[%c0, %c0_1, %c0_2] : memref<2x16x128xf32, #tpu.memory_space<vmem>>, vector<1x16x128xf32>
    %4 = vector.shape_cast %3 : vector<1x16x128xf32> to vector<16x128xf32>
    %c0_3 = arith.constant 0 : index
    %c0_4 = arith.constant 0 : index
    %5 = vector.load %arg2[%c0_3, %c0_4] : memref<128x16xbf16, #tpu.memory_space<vmem>>, vector<128x16xbf16>
    %6 = arith.truncf %4 : vector<16x128xf32> to vector<16x128xbf16>
    %cst = arith.constant dense<0.000000e+00> : vector<128x128xf32>
    %7 = tpu.matmul %5, %6, %cst {dimension_numbers = #tpu.dot_dimension_numbers<[1], [0], [0], [1], [0, 0, 1, 1], [], []>} : vector<128x16xbf16>, vector<16x128xbf16>, vector<128x128xf32> -> vector<128x128xf32>
    %c0_5 = arith.constant 0 : index
    %c0_6 = arith.constant 0 : index
    %8 = vector.load %arg3[%c0_5, %c0_6] : memref<128x1xf32, #tpu.memory_space<vmem>>, vector<128x1xf32>
    %9 = vector.broadcast %8 : vector<128x1xf32> to vector<128x128xf32>
    %10 = arith.addf %7, %9 : vector<128x128xf32>
    %cst_7 = arith.constant 0.000000e+00 : f32
    %11 = vector.broadcast %cst_7 : f32 to vector<128x128xf32>
    %12 = arith.maximumf %10, %11 : vector<128x128xf32>
    %c0_8 = arith.constant 0 : index
    %c0_9 = arith.constant 0 : index
    %13 = vector.load %arg4[%c0_8, %c0_9] : memref<16x128xbf16, #tpu.memory_space<vmem>>, vector<16x128xbf16>
    %14 = arith.truncf %12 : vector<128x128xf32> to vector<128x128xbf16>
    %cst_10 = arith.constant dense<0.000000e+00> : vector<16x128xf32>
    %15 = tpu.matmul %13, %14, %cst_10 {dimension_numbers = #tpu.dot_dimension_numbers<[1], [0], [0], [1], [0, 0, 1, 1], [], []>} : vector<16x128xbf16>, vector<128x128xbf16>, vector<16x128xf32> -> vector<16x128xf32>
    %c0_11 = arith.constant 0 : index
    %c0_12 = arith.constant 0 : index
    %16 = vector.load %arg5[%c0_11, %c0_12] : memref<16x1xf32, #tpu.memory_space<vmem>>, vector<16x1xf32>
    %17 = vector.broadcast %16 : vector<16x1xf32> to vector<16x128xf32>
    %18 = arith.addf %15, %17 : vector<16x128xf32>
    %cst_13 = arith.constant 0.000000e+00 : f32
    %19 = vector.broadcast %cst_13 : f32 to vector<16x128xf32>
    %20 = arith.subf %19, %18 : vector<16x128xf32>
    %21 = math.exp %20 : vector<16x128xf32>
    %cst_14 = arith.constant 1.000000e+00 : f32
    %22 = vector.broadcast %cst_14 : f32 to vector<16x128xf32>
    %23 = arith.addf %22, %21 : vector<16x128xf32>
    %24 = tpu.reciprocal %23 {approx = true} : vector<16x128xf32> -> vector<16x128xf32>
    %25 = arith.mulf %4, %24 : vector<16x128xf32>
    %c0_15 = arith.constant 0 : index
    %c0_16 = arith.constant 0 : index
    %c0_17 = arith.constant 0 : index
    %26 = vector.load %arg8[%c0_15, %c0_16, %c0_17] : memref<2x16x128xf32, #tpu.memory_space<vmem>>, vector<1x16x128xf32>
    %27 = vector.shape_cast %26 : vector<1x16x128xf32> to vector<16x128xf32>
    %28 = vector.shape_cast %25 : vector<16x128xf32> to vector<1x16x128xf32>
    tpu.vector_store %arg8[%c0_15, %c0_16, %c0_17], %28 {strides = array<i32>} : memref<2x16x128xf32, #tpu.memory_space<vmem>>, vector<1x16x128xf32>,
    %29 = arith.truncf %25 : vector<16x128xf32> to vector<16x128xbf16>
    %c0_18 = arith.constant 0 : index
    %c16 = arith.constant 16 : index
    %c0_19 = arith.constant 0 : index
    %30 = vector.load %arg11[%c0_18, %c16, %c0_19] : memref<2x42x128xbf16, #tpu.memory_space<vmem>>, vector<1x16x128xbf16>
    %31 = vector.shape_cast %30 : vector<1x16x128xbf16> to vector<16x128xbf16>
    %32 = vector.shape_cast %29 : vector<16x128xbf16> to vector<1x16x128xbf16>
    tpu.vector_store %arg11[%c0_18, %c16, %c0_19], %32 {strides = array<i32>} : memref<2x42x128xbf16, #tpu.memory_space<vmem>>, vector<1x16x128xbf16>,
    %c1 = arith.constant 1 : index
    %c0_20 = arith.constant 0 : index
    %c0_21 = arith.constant 0 : index
    %33 = vector.load %arg1[%c1, %c0_20, %c0_21] : memref<2x16x128xf32, #tpu.memory_space<vmem>>, vector<1x16x128xf32>
    %34 = vector.shape_cast %33 : vector<1x16x128xf32> to vector<16x128xf32>
    %c0_22 = arith.constant 0 : index
    %c0_23 = arith.constant 0 : index
    %35 = vector.load %arg2[%c0_22, %c0_23] : memref<128x16xbf16, #tpu.memory_space<vmem>>, vector<128x16xbf16>
    %36 = arith.truncf %34 : vector<16x128xf32> to vector<16x128xbf16>
    %cst_24 = arith.constant dense<0.000000e+00> : vector<128x128xf32>
    %37 = tpu.matmul %35, %36, %cst_24 {dimension_numbers = #tpu.dot_dimension_numbers<[1], [0], [0], [1], [0, 0, 1, 1], [], []>} : vector<128x16xbf16>, vector<16x128xbf16>, vector<128x128xf32> -> vector<128x128xf32>
    %c0_25 = arith.constant 0 : index
    %c0_26 = arith.constant 0 : index
    %38 = vector.load %arg3[%c0_25, %c0_26] : memref<128x1xf32, #tpu.memory_space<vmem>>, vector<128x1xf32>
    %39 = vector.broadcast %38 : vector<128x1xf32> to vector<128x128xf32>
    %40 = arith.addf %37, %39 : vector<128x128xf32>
    %cst_27 = arith.constant 0.000000e+00 : f32
    %41 = vector.broadcast %cst_27 : f32 to vector<128x128xf32>
    %42 = arith.maximumf %40, %41 : vector<128x128xf32>
    %c0_28 = arith.constant 0 : index
    %c0_29 = arith.constant 0 : index
    %43 = vector.load %arg4[%c0_28, %c0_29] : memref<16x128xbf16, #tpu.memory_space<vmem>>, vector<16x128xbf16>
    %44 = arith.truncf %42 : vector<128x128xf32> to vector<128x128xbf16>
    %cst_30 = arith.constant dense<0.000000e+00> : vector<16x128xf32>
    %45 = tpu.matmul %43, %44, %cst_30 {dimension_numbers = #tpu.dot_dimension_numbers<[1], [0], [0], [1], [0, 0, 1, 1], [], []>} : vector<16x128xbf16>, vector<128x128xbf16>, vector<16x128xf32> -> vector<16x128xf32>
    %c0_31 = arith.constant 0 : index
    %c0_32 = arith.constant 0 : index
    %46 = vector.load %arg5[%c0_31, %c0_32] : memref<16x1xf32, #tpu.memory_space<vmem>>, vector<16x1xf32>
    %47 = vector.broadcast %46 : vector<16x1xf32> to vector<16x128xf32>
    %48 = arith.addf %45, %47 : vector<16x128xf32>
    %cst_33 = arith.constant 0.000000e+00 : f32
    %49 = vector.broadcast %cst_33 : f32 to vector<16x128xf32>
    %50 = arith.subf %49, %48 : vector<16x128xf32>
    %51 = math.exp %50 : vector<16x128xf32>
    %cst_34 = arith.constant 1.000000e+00 : f32
    %52 = vector.broadcast %cst_34 : f32 to vector<16x128xf32>
    %53 = arith.addf %52, %51 : vector<16x128xf32>
    %54 = tpu.reciprocal %53 {approx = true} : vector<16x128xf32> -> vector<16x128xf32>
    %55 = arith.mulf %34, %54 : vector<16x128xf32>
    %c1_35 = arith.constant 1 : index
    %c0_36 = arith.constant 0 : index
    %c0_37 = arith.constant 0 : index
    %56 = vector.load %arg8[%c1_35, %c0_36, %c0_37] : memref<2x16x128xf32, #tpu.memory_space<vmem>>, vector<1x16x128xf32>
    %57 = vector.shape_cast %56 : vector<1x16x128xf32> to vector<16x128xf32>
    %58 = vector.shape_cast %55 : vector<16x128xf32> to vector<1x16x128xf32>
    tpu.vector_store %arg8[%c1_35, %c0_36, %c0_37], %58 {strides = array<i32>} : memref<2x16x128xf32, #tpu.memory_space<vmem>>, vector<1x16x128xf32>,
    %59 = arith.truncf %55 : vector<16x128xf32> to vector<16x128xbf16>
    %c1_38 = arith.constant 1 : index
    %c16_39 = arith.constant 16 : index
    %c0_40 = arith.constant 0 : index
    %60 = vector.load %arg11[%c1_38, %c16_39, %c0_40] : memref<2x42x128xbf16, #tpu.memory_space<vmem>>, vector<1x16x128xbf16>
    %61 = vector.shape_cast %60 : vector<1x16x128xbf16> to vector<16x128xbf16>
    %62 = vector.shape_cast %59 : vector<16x128xbf16> to vector<1x16x128xbf16>
    tpu.vector_store %arg11[%c1_38, %c16_39, %c0_40], %62 {strides = array<i32>} : memref<2x42x128xbf16, #tpu.memory_space<vmem>>, vector<1x16x128xbf16>,
    %63 = tpu.iota {dimensions = array<i32: 0>} : vector<32x1xi32>
    %c4_i32 = arith.constant 4 : i32
    %c0_i32_41 = arith.constant 0 : i32
    %64 = arith.cmpi eq, %c4_i32, %c0_i32_41 : i32
    %c1_i32 = arith.constant 1 : i32
    %65 = arith.select %64, %c1_i32, %c4_i32 : i32
    %66 = vector.broadcast %65 : i32 to vector<32x1xi32>
    %67 = arith.remsi %63, %66 : vector<32x1xi32>
    %c0_i32_42 = arith.constant 0 : i32
    %68 = vector.broadcast %c0_i32_42 : i32 to vector<32x1xi32>
    %69 = arith.cmpi ne, %67, %68 : vector<32x1xi32>
    %c0_i32_43 = arith.constant 0 : i32
    %70 = vector.broadcast %c0_i32_43 : i32 to vector<32x1xi32>
    %71 = arith.cmpi slt, %67, %70 : vector<32x1xi32>
    %c0_i32_44 = arith.constant 0 : i32
    %72 = arith.cmpi slt, %65, %c0_i32_44 : i32
    %73 = vector.broadcast %72 : i1 to vector<32x1xi1>
    %74 = vector.broadcast %73 : vector<32x1xi1> to vector<32x1xi1>
    %75 = arith.xori %71, %74 : vector<32x1xi1>
    %76 = arith.andi %75, %69 : vector<32x1xi1>
    %77 = vector.broadcast %65 : i32 to vector<32x1xi32>
    %78 = arith.addi %67, %77 : vector<32x1xi32>
    %79 = arith.select %76, %78, %67 : vector<32x1xi1>, vector<32x1xi32>
    %c-2_i32 = arith.constant -2 : i32
    %80 = vector.broadcast %c-2_i32 : i32 to vector<32x1xi32>
    %81 = arith.addi %79, %80 : vector<32x1xi32>
    %c0_i32_45 = arith.constant 0 : i32
    %82 = vector.broadcast %c0_i32_45 : i32 to vector<32x1xi32>
    %83 = arith.cmpi sge, %81, %82 : vector<32x1xi32>
    %c-2_i32_46 = arith.constant -2 : i32
    %84 = vector.broadcast %c-2_i32_46 : i32 to vector<32x1xi32>
    %85 = arith.addi %79, %84 : vector<32x1xi32>
    %c4_i32_47 = arith.constant 4 : i32
    %86 = vector.broadcast %c4_i32_47 : i32 to vector<32x1xi32>
    %87 = arith.cmpi slt, %85, %86 : vector<32x1xi32>
    %88 = arith.andi %83, %87 : vector<32x1xi1>
    %c-1_i32 = arith.constant -1 : i32
    %89 = vector.broadcast %c-1_i32 : i32 to vector<32x1xi32>
    %90 = arith.addi %79, %89 : vector<32x1xi32>
    %c0_i32_48 = arith.constant 0 : i32
    %91 = vector.broadcast %c0_i32_48 : i32 to vector<32x1xi32>
    %92 = arith.cmpi sge, %90, %91 : vector<32x1xi32>
    %c-1_i32_49 = arith.constant -1 : i32
    %93 = vector.broadcast %c-1_i32_49 : i32 to vector<32x1xi32>
    %94 = arith.addi %79, %93 : vector<32x1xi32>
    %c4_i32_50 = arith.constant 4 : i32
    %95 = vector.broadcast %c4_i32_50 : i32 to vector<32x1xi32>
    %96 = arith.cmpi slt, %94, %95 : vector<32x1xi32>
    %97 = arith.andi %92, %96 : vector<32x1xi1>
    %c1_i32_51 = arith.constant 1 : i32
    %98 = vector.broadcast %c1_i32_51 : i32 to vector<32x1xi32>
    %99 = arith.addi %79, %98 : vector<32x1xi32>
    %c0_i32_52 = arith.constant 0 : i32
    %100 = vector.broadcast %c0_i32_52 : i32 to vector<32x1xi32>
    %101 = arith.cmpi sge, %99, %100 : vector<32x1xi32>
    %c1_i32_53 = arith.constant 1 : i32
    %102 = vector.broadcast %c1_i32_53 : i32 to vector<32x1xi32>
    %103 = arith.addi %79, %102 : vector<32x1xi32>
    %c4_i32_54 = arith.constant 4 : i32
    %104 = vector.broadcast %c4_i32_54 : i32 to vector<32x1xi32>
    %105 = arith.cmpi slt, %103, %104 : vector<32x1xi32>
    %106 = arith.andi %101, %105 : vector<32x1xi1>
    %c2_i32 = arith.constant 2 : i32
    %107 = vector.broadcast %c2_i32 : i32 to vector<32x1xi32>
    %108 = arith.addi %79, %107 : vector<32x1xi32>
    %c0_i32_55 = arith.constant 0 : i32
    %109 = vector.broadcast %c0_i32_55 : i32 to vector<32x1xi32>
    %110 = arith.cmpi sge, %108, %109 : vector<32x1xi32>
    %c2_i32_56 = arith.constant 2 : i32
    %111 = vector.broadcast %c2_i32_56 : i32 to vector<32x1xi32>
    %112 = arith.addi %79, %111 : vector<32x1xi32>
    %c4_i32_57 = arith.constant 4 : i32
    %113 = vector.broadcast %c4_i32_57 : i32 to vector<32x1xi32>
    %114 = arith.cmpi slt, %112, %113 : vector<32x1xi32>
    %115 = arith.andi %110, %114 : vector<32x1xi1>
    %c0_58 = arith.constant 0 : index
    %c0_59 = arith.constant 0 : index
    %c0_60 = arith.constant 0 : index
    %116 = vector.load %arg11[%c0_58, %c0_59, %c0_60] : memref<2x42x128xbf16, #tpu.memory_space<vmem>>, vector<1x42x128xbf16>
    %117 = vector.shape_cast %116 : vector<1x42x128xbf16> to vector<42x128xbf16>
    %c1_61 = arith.constant 1 : index
    %c0_62 = arith.constant 0 : index
    %c0_63 = arith.constant 0 : index
    %118 = vector.load %arg11[%c1_61, %c0_62, %c0_63] : memref<2x42x128xbf16, #tpu.memory_space<vmem>>, vector<1x42x128xbf16>
    %119 = vector.shape_cast %118 : vector<1x42x128xbf16> to vector<42x128xbf16>
    %cst_64 = arith.constant 0.000000e+00 : f32
    %120 = vector.broadcast %cst_64 : f32 to vector<32x256xf32>
    %cst_65 = arith.constant 0.000000e+00 : f32
    %121 = vector.broadcast %cst_65 : f32 to vector<32x128xf32>
    %122 = vector.extract_strided_slice %117 {offsets = [6, 0], sizes = [16, 128], strides = [1, 1]} : vector<42x128xbf16> to vector<16x128xbf16>
    %123 = vector.extract_strided_slice %119 {offsets = [6, 0], sizes = [16, 128], strides = [1, 1]} : vector<42x128xbf16> to vector<16x128xbf16>
    %124 = tpu.concatenate %122, %123 in 0 : vector<16x128xbf16>, vector<16x128xbf16> -> vector<32x128xbf16>
    %cst_66 = arith.constant 0.000000e+00 : bf16
    %125 = vector.broadcast %cst_66 : bf16 to vector<32x128xbf16>
    %126 = vector.shape_cast %88 : vector<32x1xi1> to vector<32x1xi1>
    %127 = vector.broadcast %126 : vector<32x1xi1> to vector<32x128xi1>
    %128 = arith.select %127, %124, %125 : vector<32x128xi1>, vector<32x128xbf16>
    %c0_67 = arith.constant 0 : index
    %c0_68 = arith.constant 0 : index
    %c0_69 = arith.constant 0 : index
    %129 = vector.load %arg7[%c0_67, %c0_68, %c0_69] : memref<16x128x128xbf16, #tpu.memory_space<vmem>>, vector<1x128x128xbf16>
    %130 = vector.shape_cast %129 : vector<1x128x128xbf16> to vector<128x128xbf16>
    %cst_70 = arith.constant dense<0.000000e+00> : vector<32x128xf32>
    %131 = tpu.matmul %128, %130, %cst_70 {dimension_numbers = #tpu.dot_dimension_numbers<[1], [0], [0], [1], [0, 0, 1, 1], [], []>} : vector<32x128xbf16>, vector<128x128xbf16>, vector<32x128xf32> -> vector<32x128xf32>
    %132 = arith.addf %121, %131 : vector<32x128xf32>
    %133 = vector.extract_strided_slice %117 {offsets = [7, 0], sizes = [16, 128], strides = [1, 1]} : vector<42x128xbf16> to vector<16x128xbf16>
    %134 = vector.extract_strided_slice %119 {offsets = [7, 0], sizes = [16, 128], strides = [1, 1]} : vector<42x128xbf16> to vector<16x128xbf16>
    %135 = tpu.concatenate %133, %134 in 0 : vector<16x128xbf16>, vector<16x128xbf16> -> vector<32x128xbf16>
    %cst_71 = arith.constant 0.000000e+00 : bf16
    %136 = vector.broadcast %cst_71 : bf16 to vector<32x128xbf16>
    %137 = vector.shape_cast %97 : vector<32x1xi1> to vector<32x1xi1>
    %138 = vector.broadcast %137 : vector<32x1xi1> to vector<32x128xi1>
    %139 = arith.select %138, %135, %136 : vector<32x128xi1>, vector<32x128xbf16>
    %c1_72 = arith.constant 1 : index
    %c0_73 = arith.constant 0 : index
    %c0_74 = arith.constant 0 : index
    %140 = vector.load %arg7[%c1_72, %c0_73, %c0_74] : memref<16x128x128xbf16, #tpu.memory_space<vmem>>, vector<1x128x128xbf16>
    %141 = vector.shape_cast %140 : vector<1x128x128xbf16> to vector<128x128xbf16>
    %cst_75 = arith.constant dense<0.000000e+00> : vector<32x128xf32>
    %142 = tpu.matmul %139, %141, %cst_75 {dimension_numbers = #tpu.dot_dimension_numbers<[1], [0], [0], [1], [0, 0, 1, 1], [], []>} : vector<32x128xbf16>, vector<128x128xbf16>, vector<32x128xf32> -> vector<32x128xf32>
    %143 = arith.addf %132, %142 : vector<32x128xf32>
    %144 = vector.extract_strided_slice %117 {offsets = [8, 0], sizes = [16, 128], strides = [1, 1]} : vector<42x128xbf16> to vector<16x128xbf16>
    %145 = vector.extract_strided_slice %119 {offsets = [8, 0], sizes = [16, 128], strides = [1, 1]} : vector<42x128xbf16> to vector<16x128xbf16>
    %146 = tpu.concatenate %144, %145 in 0 : vector<16x128xbf16>, vector<16x128xbf16> -> vector<32x128xbf16>
    %c2 = arith.constant 2 : index
    %c0_76 = arith.constant 0 : index
    %c0_77 = arith.constant 0 : index
    %147 = vector.load %arg7[%c2, %c0_76, %c0_77] : memref<16x128x128xbf16, #tpu.memory_space<vmem>>, vector<1x128x128xbf16>
    %148 = vector.shape_cast %147 : vector<1x128x128xbf16> to vector<128x128xbf16>
    %cst_78 = arith.constant dense<0.000000e+00> : vector<32x128xf32>
    %149 = tpu.matmul %146, %148, %cst_78 {dimension_numbers = #tpu.dot_dimension_numbers<[1], [0], [0], [1], [0, 0, 1, 1], [], []>} : vector<32x128xbf16>, vector<128x128xbf16>, vector<32x128xf32> -> vector<32x128xf32>
    %150 = arith.addf %143, %149 : vector<32x128xf32>
    %151 = vector.extract_strided_slice %117 {offsets = [9, 0], sizes = [16, 128], strides = [1, 1]} : vector<42x128xbf16> to vector<16x128xbf16>
    %152 = vector.extract_strided_slice %119 {offsets = [9, 0], sizes = [16, 128], strides = [1, 1]} : vector<42x128xbf16> to vector<16x128xbf16>
    %153 = tpu.concatenate %151, %152 in 0 : vector<16x128xbf16>, vector<16x128xbf16> -> vector<32x128xbf16>
    %cst_79 = arith.constant 0.000000e+00 : bf16
    %154 = vector.broadcast %cst_79 : bf16 to vector<32x128xbf16>
    %155 = vector.shape_cast %106 : vector<32x1xi1> to vector<32x1xi1>
    %156 = vector.broadcast %155 : vector<32x1xi1> to vector<32x128xi1>
    %157 = arith.select %156, %153, %154 : vector<32x128xi1>, vector<32x128xbf16>
    %c3 = arith.constant 3 : index
    %c0_80 = arith.constant 0 : index
    %c0_81 = arith.constant 0 : index
    %158 = vector.load %arg7[%c3, %c0_80, %c0_81] : memref<16x128x128xbf16, #tpu.memory_space<vmem>>, vector<1x128x128xbf16>
    %159 = vector.shape_cast %158 : vector<1x128x128xbf16> to vector<128x128xbf16>
    %cst_82 = arith.constant dense<0.000000e+00> : vector<32x128xf32>
    %160 = tpu.matmul %157, %159, %cst_82 {dimension_numbers = #tpu.dot_dimension_numbers<[1], [0], [0], [1], [0, 0, 1, 1], [], []>} : vector<32x128xbf16>, vector<128x128xbf16>, vector<32x128xf32> -> vector<32x128xf32>
    %161 = arith.addf %150, %160 : vector<32x128xf32>
    %162 = vector.extract_strided_slice %117 {offsets = [10, 0], sizes = [16, 128], strides = [1, 1]} : vector<42x128xbf16> to vector<16x128xbf16>
    %163 = vector.extract_strided_slice %119 {offsets = [10, 0], sizes = [16, 128], strides = [1, 1]} : vector<42x128xbf16> to vector<16x128xbf16>
    %164 = tpu.concatenate %162, %163 in 0 : vector<16x128xbf16>, vector<16x128xbf16> -> vector<32x128xbf16>
    %cst_83 = arith.constant 0.000000e+00 : bf16
    %165 = vector.broadcast %cst_83 : bf16 to vector<32x128xbf16>
    %166 = vector.shape_cast %115 : vector<32x1xi1> to vector<32x1xi1>
    %167 = vector.broadcast %166 : vector<32x1xi1> to vector<32x128xi1>
    %168 = arith.select %167, %164, %165 : vector<32x128xi1>, vector<32x128xbf16>
    %c4 = arith.constant 4 : index
    %c0_84 = arith.constant 0 : index
    %c0_85 = arith.constant 0 : index
    %169 = vector.load %arg7[%c4, %c0_84, %c0_85] : memref<16x128x128xbf16, #tpu.memory_space<vmem>>, vector<1x128x128xbf16>
    %170 = vector.shape_cast %169 : vector<1x128x128xbf16> to vector<128x128xbf16>
    %cst_86 = arith.constant dense<0.000000e+00> : vector<32x128xf32>
    %171 = tpu.matmul %168, %170, %cst_86 {dimension_numbers = #tpu.dot_dimension_numbers<[1], [0], [0], [1], [0, 0, 1, 1], [], []>} : vector<32x128xbf16>, vector<128x128xbf16>, vector<32x128xf32> -> vector<32x128xf32>
    %172 = arith.addf %161, %171 : vector<32x128xf32>
    %173 = vector.extract_strided_slice %117 {offsets = [10, 0], sizes = [16, 128], strides = [1, 1]} : vector<42x128xbf16> to vector<16x128xbf16>
    %174 = vector.extract_strided_slice %119 {offsets = [10, 0], sizes = [16, 128], strides = [1, 1]} : vector<42x128xbf16> to vector<16x128xbf16>
    %175 = tpu.concatenate %173, %174 in 0 : vector<16x128xbf16>, vector<16x128xbf16> -> vector<32x128xbf16>
    %cst_87 = arith.constant 0.000000e+00 : bf16
    %176 = vector.broadcast %cst_87 : bf16 to vector<32x128xbf16>
    %177 = vector.shape_cast %88 : vector<32x1xi1> to vector<32x1xi1>
    %178 = vector.broadcast %177 : vector<32x1xi1> to vector<32x128xi1>
    %179 = arith.select %178, %175, %176 : vector<32x128xi1>, vector<32x128xbf16>
    %c5 = arith.constant 5 : index
    %c0_88 = arith.constant 0 : index
    %c0_89 = arith.constant 0 : index
    %180 = vector.load %arg7[%c5, %c0_88, %c0_89] : memref<16x128x128xbf16, #tpu.memory_space<vmem>>, vector<1x128x128xbf16>
    %181 = vector.shape_cast %180 : vector<1x128x128xbf16> to vector<128x128xbf16>
    %cst_90 = arith.constant dense<0.000000e+00> : vector<32x128xf32>
    %182 = tpu.matmul %179, %181, %cst_90 {dimension_numbers = #tpu.dot_dimension_numbers<[1], [0], [0], [1], [0, 0, 1, 1], [], []>} : vector<32x128xbf16>, vector<128x128xbf16>, vector<32x128xf32> -> vector<32x128xf32>
    %183 = arith.addf %172, %182 : vector<32x128xf32>
    %184 = vector.extract_strided_slice %117 {offsets = [11, 0], sizes = [16, 128], strides = [1, 1]} : vector<42x128xbf16> to vector<16x128xbf16>
    %185 = vector.extract_strided_slice %119 {offsets = [11, 0], sizes = [16, 128], strides = [1, 1]} : vector<42x128xbf16> to vector<16x128xbf16>
    %186 = tpu.concatenate %184, %185 in 0 : vector<16x128xbf16>, vector<16x128xbf16> -> vector<32x128xbf16>
    %cst_91 = arith.constant 0.000000e+00 : bf16
    %187 = vector.broadcast %cst_91 : bf16 to vector<32x128xbf16>
    %188 = vector.shape_cast %97 : vector<32x1xi1> to vector<32x1xi1>
    %189 = vector.broadcast %188 : vector<32x1xi1> to vector<32x128xi1>
    %190 = arith.select %189, %186, %187 : vector<32x128xi1>, vector<32x128xbf16>
    %c0_92 = arith.constant 0 : index
    %c0_93 = arith.constant 0 : index
    %c0_94 = arith.constant 0 : index
    %191 = vector.load %arg6[%c0_92, %c0_93, %c0_94] : memref<9x128x256xbf16, #tpu.memory_space<vmem>>, vector<1x128x256xbf16>
    %192 = vector.shape_cast %191 : vector<1x128x256xbf16> to vector<128x256xbf16>
    %cst_95 = arith.constant dense<0.000000e+00> : vector<32x256xf32>
    %193 = tpu.matmul %190, %192, %cst_95 {dimension_numbers = #tpu.dot_dimension_numbers<[1], [0], [0], [1], [0, 0, 1, 1], [], []>} : vector<32x128xbf16>, vector<128x256xbf16>, vector<32x256xf32> -> vector<32x256xf32>
    %194 = arith.addf %120, %193 : vector<32x256xf32>
    %195 = vector.extract_strided_slice %117 {offsets = [12, 0], sizes = [16, 128], strides = [1, 1]} : vector<42x128xbf16> to vector<16x128xbf16>
    %196 = vector.extract_strided_slice %119 {offsets = [12, 0], sizes = [16, 128], strides = [1, 1]} : vector<42x128xbf16> to vector<16x128xbf16>
    %197 = tpu.concatenate %195, %196 in 0 : vector<16x128xbf16>, vector<16x128xbf16> -> vector<32x128xbf16>
    %c1_96 = arith.constant 1 : index
    %c0_97 = arith.constant 0 : index
    %c0_98 = arith.constant 0 : index
    %198 = vector.load %arg6[%c1_96, %c0_97, %c0_98] : memref<9x128x256xbf16, #tpu.memory_space<vmem>>, vector<1x128x256xbf16>
    %199 = vector.shape_cast %198 : vector<1x128x256xbf16> to vector<128x256xbf16>
    %cst_99 = arith.constant dense<0.000000e+00> : vector<32x256xf32>
    %200 = tpu.matmul %197, %199, %cst_99 {dimension_numbers = #tpu.dot_dimension_numbers<[1], [0], [0], [1], [0, 0, 1, 1], [], []>} : vector<32x128xbf16>, vector<128x256xbf16>, vector<32x256xf32> -> vector<32x256xf32>
    %201 = arith.addf %194, %200 : vector<32x256xf32>
    %202 = vector.extract_strided_slice %117 {offsets = [13, 0], sizes = [16, 128], strides = [1, 1]} : vector<42x128xbf16> to vector<16x128xbf16>
    %203 = vector.extract_strided_slice %119 {offsets = [13, 0], sizes = [16, 128], strides = [1, 1]} : vector<42x128xbf16> to vector<16x128xbf16>
    %204 = tpu.concatenate %202, %203 in 0 : vector<16x128xbf16>, vector<16x128xbf16> -> vector<32x128xbf16>
    %cst_100 = arith.constant 0.000000e+00 : bf16
    %205 = vector.broadcast %cst_100 : bf16 to vector<32x128xbf16>
    %206 = vector.shape_cast %106 : vector<32x1xi1> to vector<32x1xi1>
    %207 = vector.broadcast %206 : vector<32x1xi1> to vector<32x128xi1>
    %208 = arith.select %207, %204, %205 : vector<32x128xi1>, vector<32x128xbf16>
    %c2_101 = arith.constant 2 : index
    %c0_102 = arith.constant 0 : index
    %c0_103 = arith.constant 0 : index
    %209 = vector.load %arg6[%c2_101, %c0_102, %c0_103] : memref<9x128x256xbf16, #tpu.memory_space<vmem>>, vector<1x128x256xbf16>
    %210 = vector.shape_cast %209 : vector<1x128x256xbf16> to vector<128x256xbf16>
    %cst_104 = arith.constant dense<0.000000e+00> : vector<32x256xf32>
    %211 = tpu.matmul %208, %210, %cst_104 {dimension_numbers = #tpu.dot_dimension_numbers<[1], [0], [0], [1], [0, 0, 1, 1], [], []>} : vector<32x128xbf16>, vector<128x256xbf16>, vector<32x256xf32> -> vector<32x256xf32>
    %212 = arith.addf %201, %211 : vector<32x256xf32>
    %213 = vector.extract_strided_slice %117 {offsets = [14, 0], sizes = [16, 128], strides = [1, 1]} : vector<42x128xbf16> to vector<16x128xbf16>
    %214 = vector.extract_strided_slice %119 {offsets = [14, 0], sizes = [16, 128], strides = [1, 1]} : vector<42x128xbf16> to vector<16x128xbf16>
    %215 = tpu.concatenate %213, %214 in 0 : vector<16x128xbf16>, vector<16x128xbf16> -> vector<32x128xbf16>
    %cst_105 = arith.constant 0.000000e+00 : bf16
    %216 = vector.broadcast %cst_105 : bf16 to vector<32x128xbf16>
    %217 = vector.shape_cast %115 : vector<32x1xi1> to vector<32x1xi1>
    %218 = vector.broadcast %217 : vector<32x1xi1> to vector<32x128xi1>
    %219 = arith.select %218, %215, %216 : vector<32x128xi1>, vector<32x128xbf16>
    %c6 = arith.constant 6 : index
    %c0_106 = arith.constant 0 : index
    %c0_107 = arith.constant 0 : index
    %220 = vector.load %arg7[%c6, %c0_106, %c0_107] : memref<16x128x128xbf16, #tpu.memory_space<vmem>>, vector<1x128x128xbf16>
    %221 = vector.shape_cast %220 : vector<1x128x128xbf16> to vector<128x128xbf16>
    %cst_108 = arith.constant dense<0.000000e+00> : vector<32x128xf32>
    %222 = tpu.matmul %219, %221, %cst_108 {dimension_numbers = #tpu.dot_dimension_numbers<[1], [0], [0], [1], [0, 0, 1, 1], [], []>} : vector<32x128xbf16>, vector<128x128xbf16>, vector<32x128xf32> -> vector<32x128xf32>
    %223 = arith.addf %183, %222 : vector<32x128xf32>
    %224 = vector.extract_strided_slice %117 {offsets = [14, 0], sizes = [16, 128], strides = [1, 1]} : vector<42x128xbf16> to vector<16x128xbf16>
    %225 = vector.extract_strided_slice %119 {offsets = [14, 0], sizes = [16, 128], strides = [1, 1]} : vector<42x128xbf16> to vector<16x128xbf16>
    %226 = tpu.concatenate %224, %225 in 0 : vector<16x128xbf16>, vector<16x128xbf16> -> vector<32x128xbf16>
    %cst_109 = arith.constant 0.000000e+00 : bf16
    %227 = vector.broadcast %cst_109 : bf16 to vector<32x128xbf16>
    %228 = vector.shape_cast %88 : vector<32x1xi1> to vector<32x1xi1>
    %229 = vector.broadcast %228 : vector<32x1xi1> to vector<32x128xi1>
    %230 = arith.select %229, %226, %227 : vector<32x128xi1>, vector<32x128xbf16>
    %c7 = arith.constant 7 : index
    %c0_110 = arith.constant 0 : index
    %c0_111 = arith.constant 0 : index
    %231 = vector.load %arg7[%c7, %c0_110, %c0_111] : memref<16x128x128xbf16, #tpu.memory_space<vmem>>, vector<1x128x128xbf16>
    %232 = vector.shape_cast %231 : vector<1x128x128xbf16> to vector<128x128xbf16>
    %cst_112 = arith.constant dense<0.000000e+00> : vector<32x128xf32>
    %233 = tpu.matmul %230, %232, %cst_112 {dimension_numbers = #tpu.dot_dimension_numbers<[1], [0], [0], [1], [0, 0, 1, 1], [], []>} : vector<32x128xbf16>, vector<128x128xbf16>, vector<32x128xf32> -> vector<32x128xf32>
    %234 = arith.addf %223, %233 : vector<32x128xf32>
    %235 = vector.extract_strided_slice %117 {offsets = [15, 0], sizes = [16, 128], strides = [1, 1]} : vector<42x128xbf16> to vector<16x128xbf16>
    %236 = vector.extract_strided_slice %119 {offsets = [15, 0], sizes = [16, 128], strides = [1, 1]} : vector<42x128xbf16> to vector<16x128xbf16>
    %237 = tpu.concatenate %235, %236 in 0 : vector<16x128xbf16>, vector<16x128xbf16> -> vector<32x128xbf16>
    %cst_113 = arith.constant 0.000000e+00 : bf16
    %238 = vector.broadcast %cst_113 : bf16 to vector<32x128xbf16>
    %239 = vector.shape_cast %97 : vector<32x1xi1> to vector<32x1xi1>
    %240 = vector.broadcast %239 : vector<32x1xi1> to vector<32x128xi1>
    %241 = arith.select %240, %237, %238 : vector<32x128xi1>, vector<32x128xbf16>
    %c3_114 = arith.constant 3 : index
    %c0_115 = arith.constant 0 : index
    %c0_116 = arith.constant 0 : index
    %242 = vector.load %arg6[%c3_114, %c0_115, %c0_116] : memref<9x128x256xbf16, #tpu.memory_space<vmem>>, vector<1x128x256xbf16>
    %243 = vector.shape_cast %242 : vector<1x128x256xbf16> to vector<128x256xbf16>
    %cst_117 = arith.constant dense<0.000000e+00> : vector<32x256xf32>
    %244 = tpu.matmul %241, %243, %cst_117 {dimension_numbers = #tpu.dot_dimension_numbers<[1], [0], [0], [1], [0, 0, 1, 1], [], []>} : vector<32x128xbf16>, vector<128x256xbf16>, vector<32x256xf32> -> vector<32x256xf32>
    %245 = arith.addf %212, %244 : vector<32x256xf32>
    %246 = vector.extract_strided_slice %117 {offsets = [16, 0], sizes = [16, 128], strides = [1, 1]} : vector<42x128xbf16> to vector<16x128xbf16>
    %247 = vector.extract_strided_slice %119 {offsets = [16, 0], sizes = [16, 128], strides = [1, 1]} : vector<42x128xbf16> to vector<16x128xbf16>
    %248 = tpu.concatenate %246, %247 in 0 : vector<16x128xbf16>, vector<16x128xbf16> -> vector<32x128xbf16>
    %c4_118 = arith.constant 4 : index
    %c0_119 = arith.constant 0 : index
    %c0_120 = arith.constant 0 : index
    %249 = vector.load %arg6[%c4_118, %c0_119, %c0_120] : memref<9x128x256xbf16, #tpu.memory_space<vmem>>, vector<1x128x256xbf16>
    %250 = vector.shape_cast %249 : vector<1x128x256xbf16> to vector<128x256xbf16>
    %cst_121 = arith.constant dense<0.000000e+00> : vector<32x256xf32>
    %251 = tpu.matmul %248, %250, %cst_121 {dimension_numbers = #tpu.dot_dimension_numbers<[1], [0], [0], [1], [0, 0, 1, 1], [], []>} : vector<32x128xbf16>, vector<128x256xbf16>, vector<32x256xf32> -> vector<32x256xf32>
    %252 = arith.addf %245, %251 : vector<32x256xf32>
    %253 = vector.extract_strided_slice %117 {offsets = [17, 0], sizes = [16, 128], strides = [1, 1]} : vector<42x128xbf16> to vector<16x128xbf16>
    %254 = vector.extract_strided_slice %119 {offsets = [17, 0], sizes = [16, 128], strides = [1, 1]} : vector<42x128xbf16> to vector<16x128xbf16>
    %255 = tpu.concatenate %253, %254 in 0 : vector<16x128xbf16>, vector<16x128xbf16> -> vector<32x128xbf16>
    %cst_122 = arith.constant 0.000000e+00 : bf16
    %256 = vector.broadcast %cst_122 : bf16 to vector<32x128xbf16>
    %257 = vector.shape_cast %106 : vector<32x1xi1> to vector<32x1xi1>
    %258 = vector.broadcast %257 : vector<32x1xi1> to vector<32x128xi1>
    %259 = arith.select %258, %255, %256 : vector<32x128xi1>, vector<32x128xbf16>
    %c5_123 = arith.constant 5 : index
    %c0_124 = arith.constant 0 : index
    %c0_125 = arith.constant 0 : index
    %260 = vector.load %arg6[%c5_123, %c0_124, %c0_125] : memref<9x128x256xbf16, #tpu.memory_space<vmem>>, vector<1x128x256xbf16>
    %261 = vector.shape_cast %260 : vector<1x128x256xbf16> to vector<128x256xbf16>
    %cst_126 = arith.constant dense<0.000000e+00> : vector<32x256xf32>
    %262 = tpu.matmul %259, %261, %cst_126 {dimension_numbers = #tpu.dot_dimension_numbers<[1], [0], [0], [1], [0, 0, 1, 1], [], []>} : vector<32x128xbf16>, vector<128x256xbf16>, vector<32x256xf32> -> vector<32x256xf32>
    %263 = arith.addf %252, %262 : vector<32x256xf32>
    %264 = vector.extract_strided_slice %117 {offsets = [18, 0], sizes = [16, 128], strides = [1, 1]} : vector<42x128xbf16> to vector<16x128xbf16>
    %265 = vector.extract_strided_slice %119 {offsets = [18, 0], sizes = [16, 128], strides = [1, 1]} : vector<42x128xbf16> to vector<16x128xbf16>
    %266 = tpu.concatenate %264, %265 in 0 : vector<16x128xbf16>, vector<16x128xbf16> -> vector<32x128xbf16>
    %cst_127 = arith.constant 0.000000e+00 : bf16
    %267 = vector.broadcast %cst_127 : bf16 to vector<32x128xbf16>
    %268 = vector.shape_cast %115 : vector<32x1xi1> to vector<32x1xi1>
    %269 = vector.broadcast %268 : vector<32x1xi1> to vector<32x128xi1>
    %270 = arith.select %269, %266, %267 : vector<32x128xi1>, vector<32x128xbf16>
    %c8 = arith.constant 8 : index
    %c0_128 = arith.constant 0 : index
    %c0_129 = arith.constant 0 : index
    %271 = vector.load %arg7[%c8, %c0_128, %c0_129] : memref<16x128x128xbf16, #tpu.memory_space<vmem>>, vector<1x128x128xbf16>
    %272 = vector.shape_cast %271 : vector<1x128x128xbf16> to vector<128x128xbf16>
    %cst_130 = arith.constant dense<0.000000e+00> : vector<32x128xf32>
    %273 = tpu.matmul %270, %272, %cst_130 {dimension_numbers = #tpu.dot_dimension_numbers<[1], [0], [0], [1], [0, 0, 1, 1], [], []>} : vector<32x128xbf16>, vector<128x128xbf16>, vector<32x128xf32> -> vector<32x128xf32>
    %274 = arith.addf %234, %273 : vector<32x128xf32>
    %275 = vector.extract_strided_slice %117 {offsets = [18, 0], sizes = [16, 128], strides = [1, 1]} : vector<42x128xbf16> to vector<16x128xbf16>
    %276 = vector.extract_strided_slice %119 {offsets = [18, 0], sizes = [16, 128], strides = [1, 1]} : vector<42x128xbf16> to vector<16x128xbf16>
    %277 = tpu.concatenate %275, %276 in 0 : vector<16x128xbf16>, vector<16x128xbf16> -> vector<32x128xbf16>
    %cst_131 = arith.constant 0.000000e+00 : bf16
    %278 = vector.broadcast %cst_131 : bf16 to vector<32x128xbf16>
    %279 = vector.shape_cast %88 : vector<32x1xi1> to vector<32x1xi1>
    %280 = vector.broadcast %279 : vector<32x1xi1> to vector<32x128xi1>
    %281 = arith.select %280, %277, %278 : vector<32x128xi1>, vector<32x128xbf16>
    %c9 = arith.constant 9 : index
    %c0_132 = arith.constant 0 : index
    %c0_133 = arith.constant 0 : index
    %282 = vector.load %arg7[%c9, %c0_132, %c0_133] : memref<16x128x128xbf16, #tpu.memory_space<vmem>>, vector<1x128x128xbf16>
    %283 = vector.shape_cast %282 : vector<1x128x128xbf16> to vector<128x128xbf16>
    %cst_134 = arith.constant dense<0.000000e+00> : vector<32x128xf32>
    %284 = tpu.matmul %281, %283, %cst_134 {dimension_numbers = #tpu.dot_dimension_numbers<[1], [0], [0], [1], [0, 0, 1, 1], [], []>} : vector<32x128xbf16>, vector<128x128xbf16>, vector<32x128xf32> -> vector<32x128xf32>
    %285 = arith.addf %274, %284 : vector<32x128xf32>
    %286 = vector.extract_strided_slice %117 {offsets = [19, 0], sizes = [16, 128], strides = [1, 1]} : vector<42x128xbf16> to vector<16x128xbf16>
    %287 = vector.extract_strided_slice %119 {offsets = [19, 0], sizes = [16, 128], strides = [1, 1]} : vector<42x128xbf16> to vector<16x128xbf16>
    %288 = tpu.concatenate %286, %287 in 0 : vector<16x128xbf16>, vector<16x128xbf16> -> vector<32x128xbf16>
    %cst_135 = arith.constant 0.000000e+00 : bf16
    %289 = vector.broadcast %cst_135 : bf16 to vector<32x128xbf16>
    %290 = vector.shape_cast %97 : vector<32x1xi1> to vector<32x1xi1>
    %291 = vector.broadcast %290 : vector<32x1xi1> to vector<32x128xi1>
    %292 = arith.select %291, %288, %289 : vector<32x128xi1>, vector<32x128xbf16>
    %c6_136 = arith.constant 6 : index
    %c0_137 = arith.constant 0 : index
    %c0_138 = arith.constant 0 : index
    %293 = vector.load %arg6[%c6_136, %c0_137, %c0_138] : memref<9x128x256xbf16, #tpu.memory_space<vmem>>, vector<1x128x256xbf16>
    %294 = vector.shape_cast %293 : vector<1x128x256xbf16> to vector<128x256xbf16>
    %cst_139 = arith.constant dense<0.000000e+00> : vector<32x256xf32>
    %295 = tpu.matmul %292, %294, %cst_139 {dimension_numbers = #tpu.dot_dimension_numbers<[1], [0], [0], [1], [0, 0, 1, 1], [], []>} : vector<32x128xbf16>, vector<128x256xbf16>, vector<32x256xf32> -> vector<32x256xf32>
    %296 = arith.addf %263, %295 : vector<32x256xf32>
    %297 = vector.extract_strided_slice %117 {offsets = [20, 0], sizes = [16, 128], strides = [1, 1]} : vector<42x128xbf16> to vector<16x128xbf16>
    %298 = vector.extract_strided_slice %119 {offsets = [20, 0], sizes = [16, 128], strides = [1, 1]} : vector<42x128xbf16> to vector<16x128xbf16>
    %299 = tpu.concatenate %297, %298 in 0 : vector<16x128xbf16>, vector<16x128xbf16> -> vector<32x128xbf16>
    %c7_140 = arith.constant 7 : index
    %c0_141 = arith.constant 0 : index
    %c0_142 = arith.constant 0 : index
    %300 = vector.load %arg6[%c7_140, %c0_141, %c0_142] : memref<9x128x256xbf16, #tpu.memory_space<vmem>>, vector<1x128x256xbf16>
    %301 = vector.shape_cast %300 : vector<1x128x256xbf16> to vector<128x256xbf16>
    %cst_143 = arith.constant dense<0.000000e+00> : vector<32x256xf32>
    %302 = tpu.matmul %299, %301, %cst_143 {dimension_numbers = #tpu.dot_dimension_numbers<[1], [0], [0], [1], [0, 0, 1, 1], [], []>} : vector<32x128xbf16>, vector<128x256xbf16>, vector<32x256xf32> -> vector<32x256xf32>
    %303 = arith.addf %296, %302 : vector<32x256xf32>
    %304 = vector.extract_strided_slice %117 {offsets = [21, 0], sizes = [16, 128], strides = [1, 1]} : vector<42x128xbf16> to vector<16x128xbf16>
    %305 = vector.extract_strided_slice %119 {offsets = [21, 0], sizes = [16, 128], strides = [1, 1]} : vector<42x128xbf16> to vector<16x128xbf16>
    %306 = tpu.concatenate %304, %305 in 0 : vector<16x128xbf16>, vector<16x128xbf16> -> vector<32x128xbf16>
    %cst_144 = arith.constant 0.000000e+00 : bf16
    %307 = vector.broadcast %cst_144 : bf16 to vector<32x128xbf16>
    %308 = vector.shape_cast %106 : vector<32x1xi1> to vector<32x1xi1>
    %309 = vector.broadcast %308 : vector<32x1xi1> to vector<32x128xi1>
    %310 = arith.select %309, %306, %307 : vector<32x128xi1>, vector<32x128xbf16>
    %c8_145 = arith.constant 8 : index
    %c0_146 = arith.constant 0 : index
    %c0_147 = arith.constant 0 : index
    %311 = vector.load %arg6[%c8_145, %c0_146, %c0_147] : memref<9x128x256xbf16, #tpu.memory_space<vmem>>, vector<1x128x256xbf16>
    %312 = vector.shape_cast %311 : vector<1x128x256xbf16> to vector<128x256xbf16>
    %cst_148 = arith.constant dense<0.000000e+00> : vector<32x256xf32>
    %313 = tpu.matmul %310, %312, %cst_148 {dimension_numbers = #tpu.dot_dimension_numbers<[1], [0], [0], [1], [0, 0, 1, 1], [], []>} : vector<32x128xbf16>, vector<128x256xbf16>, vector<32x256xf32> -> vector<32x256xf32>
    %314 = arith.addf %303, %313 : vector<32x256xf32>
    %315 = vector.extract_strided_slice %117 {offsets = [22, 0], sizes = [16, 128], strides = [1, 1]} : vector<42x128xbf16> to vector<16x128xbf16>
    %316 = vector.extract_strided_slice %119 {offsets = [22, 0], sizes = [16, 128], strides = [1, 1]} : vector<42x128xbf16> to vector<16x128xbf16>
    %317 = tpu.concatenate %315, %316 in 0 : vector<16x128xbf16>, vector<16x128xbf16> -> vector<32x128xbf16>
    %cst_149 = arith.constant 0.000000e+00 : bf16
    %318 = vector.broadcast %cst_149 : bf16 to vector<32x128xbf16>
    %319 = vector.shape_cast %115 : vector<32x1xi1> to vector<32x1xi1>
    %320 = vector.broadcast %319 : vector<32x1xi1> to vector<32x128xi1>
    %321 = arith.select %320, %317, %318 : vector<32x128xi1>, vector<32x128xbf16>
    %c10 = arith.constant 10 : index
    %c0_150 = arith.constant 0 : index
    %c0_151 = arith.constant 0 : index
    %322 = vector.load %arg7[%c10, %c0_150, %c0_151] : memref<16x128x128xbf16, #tpu.memory_space<vmem>>, vector<1x128x128xbf16>
    %323 = vector.shape_cast %322 : vector<1x128x128xbf16> to vector<128x128xbf16>
    %cst_152 = arith.constant dense<0.000000e+00> : vector<32x128xf32>
    %324 = tpu.matmul %321, %323, %cst_152 {dimension_numbers = #tpu.dot_dimension_numbers<[1], [0], [0], [1], [0, 0, 1, 1], [], []>} : vector<32x128xbf16>, vector<128x128xbf16>, vector<32x128xf32> -> vector<32x128xf32>
    %325 = arith.addf %285, %324 : vector<32x128xf32>
    %326 = vector.extract_strided_slice %117 {offsets = [22, 0], sizes = [16, 128], strides = [1, 1]} : vector<42x128xbf16> to vector<16x128xbf16>
    %327 = vector.extract_strided_slice %119 {offsets = [22, 0], sizes = [16, 128], strides = [1, 1]} : vector<42x128xbf16> to vector<16x128xbf16>
    %328 = tpu.concatenate %326, %327 in 0 : vector<16x128xbf16>, vector<16x128xbf16> -> vector<32x128xbf16>
    %cst_153 = arith.constant 0.000000e+00 : bf16
    %329 = vector.broadcast %cst_153 : bf16 to vector<32x128xbf16>
    %330 = vector.shape_cast %88 : vector<32x1xi1> to vector<32x1xi1>
    %331 = vector.broadcast %330 : vector<32x1xi1> to vector<32x128xi1>
    %332 = arith.select %331, %328, %329 : vector<32x128xi1>, vector<32x128xbf16>
    %c11 = arith.constant 11 : index
    %c0_154 = arith.constant 0 : index
    %c0_155 = arith.constant 0 : index
    %333 = vector.load %arg7[%c11, %c0_154, %c0_155] : memref<16x128x128xbf16, #tpu.memory_space<vmem>>, vector<1x128x128xbf16>
    %334 = vector.shape_cast %333 : vector<1x128x128xbf16> to vector<128x128xbf16>
    %cst_156 = arith.constant dense<0.000000e+00> : vector<32x128xf32>
    %335 = tpu.matmul %332, %334, %cst_156 {dimension_numbers = #tpu.dot_dimension_numbers<[1], [0], [0], [1], [0, 0, 1, 1], [], []>} : vector<32x128xbf16>, vector<128x128xbf16>, vector<32x128xf32> -> vector<32x128xf32>
    %336 = arith.addf %325, %335 : vector<32x128xf32>
    %337 = vector.extract_strided_slice %117 {offsets = [23, 0], sizes = [16, 128], strides = [1, 1]} : vector<42x128xbf16> to vector<16x128xbf16>
    %338 = vector.extract_strided_slice %119 {offsets = [23, 0], sizes = [16, 128], strides = [1, 1]} : vector<42x128xbf16> to vector<16x128xbf16>
    %339 = tpu.concatenate %337, %338 in 0 : vector<16x128xbf16>, vector<16x128xbf16> -> vector<32x128xbf16>
    %cst_157 = arith.constant 0.000000e+00 : bf16
    %340 = vector.broadcast %cst_157 : bf16 to vector<32x128xbf16>
    %341 = vector.shape_cast %97 : vector<32x1xi1> to vector<32x1xi1>
    %342 = vector.broadcast %341 : vector<32x1xi1> to vector<32x128xi1>
    %343 = arith.select %342, %339, %340 : vector<32x128xi1>, vector<32x128xbf16>
    %c12 = arith.constant 12 : index
    %c0_158 = arith.constant 0 : index
    %c0_159 = arith.constant 0 : index
    %344 = vector.load %arg7[%c12, %c0_158, %c0_159] : memref<16x128x128xbf16, #tpu.memory_space<vmem>>, vector<1x128x128xbf16>
    %345 = vector.shape_cast %344 : vector<1x128x128xbf16> to vector<128x128xbf16>
    %cst_160 = arith.constant dense<0.000000e+00> : vector<32x128xf32>
    %346 = tpu.matmul %343, %345, %cst_160 {dimension_numbers = #tpu.dot_dimension_numbers<[1], [0], [0], [1], [0, 0, 1, 1], [], []>} : vector<32x128xbf16>, vector<128x128xbf16>, vector<32x128xf32> -> vector<32x128xf32>
    %347 = arith.addf %336, %346 : vector<32x128xf32>
    %348 = vector.extract_strided_slice %117 {offsets = [24, 0], sizes = [16, 128], strides = [1, 1]} : vector<42x128xbf16> to vector<16x128xbf16>
    %349 = vector.extract_strided_slice %119 {offsets = [24, 0], sizes = [16, 128], strides = [1, 1]} : vector<42x128xbf16> to vector<16x128xbf16>
    %350 = tpu.concatenate %348, %349 in 0 : vector<16x128xbf16>, vector<16x128xbf16> -> vector<32x128xbf16>
    %c13 = arith.constant 13 : index
    %c0_161 = arith.constant 0 : index
    %c0_162 = arith.constant 0 : index
    %351 = vector.load %arg7[%c13, %c0_161, %c0_162] : memref<16x128x128xbf16, #tpu.memory_space<vmem>>, vector<1x128x128xbf16>
    %352 = vector.shape_cast %351 : vector<1x128x128xbf16> to vector<128x128xbf16>
    %cst_163 = arith.constant dense<0.000000e+00> : vector<32x128xf32>
    %353 = tpu.matmul %350, %352, %cst_163 {dimension_numbers = #tpu.dot_dimension_numbers<[1], [0], [0], [1], [0, 0, 1, 1], [], []>} : vector<32x128xbf16>, vector<128x128xbf16>, vector<32x128xf32> -> vector<32x128xf32>
    %354 = arith.addf %347, %353 : vector<32x128xf32>
    %355 = vector.extract_strided_slice %117 {offsets = [25, 0], sizes = [16, 128], strides = [1, 1]} : vector<42x128xbf16> to vector<16x128xbf16>
    %356 = vector.extract_strided_slice %119 {offsets = [25, 0], sizes = [16, 128], strides = [1, 1]} : vector<42x128xbf16> to vector<16x128xbf16>
    %357 = tpu.concatenate %355, %356 in 0 : vector<16x128xbf16>, vector<16x128xbf16> -> vector<32x128xbf16>
    %cst_164 = arith.constant 0.000000e+00 : bf16
    %358 = vector.broadcast %cst_164 : bf16 to vector<32x128xbf16>
    %359 = vector.shape_cast %106 : vector<32x1xi1> to vector<32x1xi1>
    %360 = vector.broadcast %359 : vector<32x1xi1> to vector<32x128xi1>
    %361 = arith.select %360, %357, %358 : vector<32x128xi1>, vector<32x128xbf16>
    %c14 = arith.constant 14 : index
    %c0_165 = arith.constant 0 : index
    %c0_166 = arith.constant 0 : index
    %362 = vector.load %arg7[%c14, %c0_165, %c0_166] : memref<16x128x128xbf16, #tpu.memory_space<vmem>>, vector<1x128x128xbf16>
    %363 = vector.shape_cast %362 : vector<1x128x128xbf16> to vector<128x128xbf16>
    %cst_167 = arith.constant dense<0.000000e+00> : vector<32x128xf32>
    %364 = tpu.matmul %361, %363, %cst_167 {dimension_numbers = #tpu.dot_dimension_numbers<[1], [0], [0], [1], [0, 0, 1, 1], [], []>} : vector<32x128xbf16>, vector<128x128xbf16>, vector<32x128xf32> -> vector<32x128xf32>
    %365 = arith.addf %354, %364 : vector<32x128xf32>
    %366 = vector.extract_strided_slice %117 {offsets = [26, 0], sizes = [16, 128], strides = [1, 1]} : vector<42x128xbf16> to vector<16x128xbf16>
    %367 = vector.extract_strided_slice %119 {offsets = [26, 0], sizes = [16, 128], strides = [1, 1]} : vector<42x128xbf16> to vector<16x128xbf16>
    %368 = tpu.concatenate %366, %367 in 0 : vector<16x128xbf16>, vector<16x128xbf16> -> vector<32x128xbf16>
    %cst_168 = arith.constant 0.000000e+00 : bf16
    %369 = vector.broadcast %cst_168 : bf16 to vector<32x128xbf16>
    %370 = vector.shape_cast %115 : vector<32x1xi1> to vector<32x1xi1>
    %371 = vector.broadcast %370 : vector<32x1xi1> to vector<32x128xi1>
    %372 = arith.select %371, %368, %369 : vector<32x128xi1>, vector<32x128xbf16>
    %c15 = arith.constant 15 : index
    %c0_169 = arith.constant 0 : index
    %c0_170 = arith.constant 0 : index
    %373 = vector.load %arg7[%c15, %c0_169, %c0_170] : memref<16x128x128xbf16, #tpu.memory_space<vmem>>, vector<1x128x128xbf16>
    %374 = vector.shape_cast %373 : vector<1x128x128xbf16> to vector<128x128xbf16>
    %cst_171 = arith.constant dense<0.000000e+00> : vector<32x128xf32>
    %375 = tpu.matmul %372, %374, %cst_171 {dimension_numbers = #tpu.dot_dimension_numbers<[1], [0], [0], [1], [0, 0, 1, 1], [], []>} : vector<32x128xbf16>, vector<128x128xbf16>, vector<32x128xf32> -> vector<32x128xf32>
    %376 = arith.addf %365, %375 : vector<32x128xf32>
    %377 = vector.extract_strided_slice %314 {offsets = [0, 0], sizes = [32, 128], strides = [1, 1]} : vector<32x256xf32> to vector<32x128xf32>
    %378 = vector.extract_strided_slice %314 {offsets = [0, 128], sizes = [32, 128], strides = [1, 1]} : vector<32x256xf32> to vector<32x128xf32>
    %379 = arith.addf %378, %376 : vector<32x128xf32>
    %380 = vector.extract_strided_slice %377 {offsets = [0, 0], sizes = [16, 128], strides = [1, 1]} : vector<32x128xf32> to vector<16x128xf32>
    %381 = arith.truncf %380 : vector<16x128xf32> to vector<16x128xbf16>
    %c0_172 = arith.constant 0 : index
    %c0_173 = arith.constant 0 : index
    %c0_174 = arith.constant 0 : index
    %382 = vector.load %arg9[%c0_172, %c0_173, %c0_174] : memref<2x16x256xbf16, #tpu.memory_space<vmem>>, vector<1x16x128xbf16>
    %383 = vector.shape_cast %382 : vector<1x16x128xbf16> to vector<16x128xbf16>
    %384 = vector.shape_cast %381 : vector<16x128xbf16> to vector<1x16x128xbf16>
    tpu.vector_store %arg9[%c0_172, %c0_173, %c0_174], %384 {strides = array<i32>} : memref<2x16x256xbf16, #tpu.memory_space<vmem>>, vector<1x16x128xbf16>,
    %385 = vector.extract_strided_slice %379 {offsets = [0, 0], sizes = [16, 128], strides = [1, 1]} : vector<32x128xf32> to vector<16x128xf32>
    %386 = arith.truncf %385 : vector<16x128xf32> to vector<16x128xbf16>
    %c0_175 = arith.constant 0 : index
    %c0_176 = arith.constant 0 : index
    %c128 = arith.constant 128 : index
    %387 = vector.load %arg9[%c0_175, %c0_176, %c128] : memref<2x16x256xbf16, #tpu.memory_space<vmem>>, vector<1x16x128xbf16>
    %388 = vector.shape_cast %387 : vector<1x16x128xbf16> to vector<16x128xbf16>
    %389 = vector.shape_cast %386 : vector<16x128xbf16> to vector<1x16x128xbf16>
    tpu.vector_store %arg9[%c0_175, %c0_176, %c128], %389 {strides = array<i32>} : memref<2x16x256xbf16, #tpu.memory_space<vmem>>, vector<1x16x128xbf16>,
    %390 = vector.extract_strided_slice %377 {offsets = [16, 0], sizes = [16, 128], strides = [1, 1]} : vector<32x128xf32> to vector<16x128xf32>
    %391 = arith.truncf %390 : vector<16x128xf32> to vector<16x128xbf16>
    %c1_177 = arith.constant 1 : index
    %c0_178 = arith.constant 0 : index
    %c0_179 = arith.constant 0 : index
    %392 = vector.load %arg9[%c1_177, %c0_178, %c0_179] : memref<2x16x256xbf16, #tpu.memory_space<vmem>>, vector<1x16x128xbf16>
    %393 = vector.shape_cast %392 : vector<1x16x128xbf16> to vector<16x128xbf16>
    %394 = vector.shape_cast %391 : vector<16x128xbf16> to vector<1x16x128xbf16>
    tpu.vector_store %arg9[%c1_177, %c0_178, %c0_179], %394 {strides = array<i32>} : memref<2x16x256xbf16, #tpu.memory_space<vmem>>, vector<1x16x128xbf16>,
    %395 = vector.extract_strided_slice %379 {offsets = [16, 0], sizes = [16, 128], strides = [1, 1]} : vector<32x128xf32> to vector<16x128xf32>
    %396 = arith.truncf %395 : vector<16x128xf32> to vector<16x128xbf16>
    %c1_180 = arith.constant 1 : index
    %c0_181 = arith.constant 0 : index
    %c128_182 = arith.constant 128 : index
    %397 = vector.load %arg9[%c1_180, %c0_181, %c128_182] : memref<2x16x256xbf16, #tpu.memory_space<vmem>>, vector<1x16x128xbf16>
    %398 = vector.shape_cast %397 : vector<1x16x128xbf16> to vector<16x128xbf16>
    %399 = vector.shape_cast %396 : vector<16x128xbf16> to vector<1x16x128xbf16>
    tpu.vector_store %arg9[%c1_180, %c0_181, %c128_182], %399 {strides = array<i32>} : memref<2x16x256xbf16, #tpu.memory_space<vmem>>, vector<1x16x128xbf16>,
    %cst_183 = arith.constant dense<0.000000e+00> : vector<128xf32>
    %400 = vector.multi_reduction <add>, %377, %cst_183 [0] : vector<32x128xf32> to vector<128xf32>
    %401 = vector.shape_cast %400 : vector<128xf32> to vector<1x128xf32>
    %cst_184 = arith.constant dense<0.000000e+00> : vector<128xf32>
    %402 = vector.multi_reduction <add>, %379, %cst_184 [0] : vector<32x128xf32> to vector<128xf32>
    %403 = vector.shape_cast %402 : vector<128xf32> to vector<1x128xf32>
    %404 = tpu.concatenate %401, %403 in 1 : vector<1x128xf32>, vector<1x128xf32> -> vector<1x256xf32>
    %405 = arith.mulf %377, %377 : vector<32x128xf32>
    %cst_185 = arith.constant dense<0.000000e+00> : vector<128xf32>
    %406 = vector.multi_reduction <add>, %405, %cst_185 [0] : vector<32x128xf32> to vector<128xf32>
    %407 = vector.shape_cast %406 : vector<128xf32> to vector<1x128xf32>
    %408 = arith.mulf %379, %379 : vector<32x128xf32>
    %cst_186 = arith.constant dense<0.000000e+00> : vector<128xf32>
    %409 = vector.multi_reduction <add>, %408, %cst_186 [0] : vector<32x128xf32> to vector<128xf32>
    %410 = vector.shape_cast %409 : vector<128xf32> to vector<1x128xf32>
    %411 = tpu.concatenate %407, %410 in 1 : vector<1x128xf32>, vector<1x128xf32> -> vector<1x256xf32>
    %412 = tpu.concatenate %404, %411 in 0 : vector<1x256xf32>, vector<1x256xf32> -> vector<2x256xf32>
    %c0_187 = arith.constant 0 : index
    %c0_188 = arith.constant 0 : index
    %c0_189 = arith.constant 0 : index
    %413 = vector.load %arg10[%c0_187, %c0_188, %c0_189] : memref<1x2x256xf32, #tpu.memory_space<vmem>>, vector<1x2x256xf32>
    %414 = vector.shape_cast %413 : vector<1x2x256xf32> to vector<2x256xf32>
    %415 = vector.shape_cast %412 : vector<2x256xf32> to vector<1x2x256xf32>
    tpu.vector_store %arg10[%c0_187, %c0_188, %c0_189], %415 {strides = array<i32>} : memref<1x2x256xf32, #tpu.memory_space<vmem>>, vector<1x2x256xf32>,
    return
  }
  func.func @transform_0(%arg0: i32) -> (i32, i32, i32) {
    %c0_i32 = arith.constant 0 : i32
    %c0_i32_0 = arith.constant 0 : i32
    %c0_i32_1 = arith.constant 0 : i32
    return %arg0, %c0_i32, %c0_i32_0 : i32, i32, i32
  }
  func.func @transform_1(%arg0: i32) -> (i32, i32) {
    %c0_i32 = arith.constant 0 : i32
    %c0_i32_0 = arith.constant 0 : i32
    %c0_i32_1 = arith.constant 0 : i32
    return %c0_i32, %c0_i32_0 : i32, i32
  }
  func.func @transform_2(%arg0: i32) -> (i32, i32) {
    %c0_i32 = arith.constant 0 : i32
    %c0_i32_0 = arith.constant 0 : i32
    %c0_i32_1 = arith.constant 0 : i32
    return %c0_i32, %c0_i32_0 : i32, i32
  }
  func.func @transform_3(%arg0: i32) -> (i32, i32) {
    %c0_i32 = arith.constant 0 : i32
    %c0_i32_0 = arith.constant 0 : i32
    %c0_i32_1 = arith.constant 0 : i32
    return %c0_i32, %c0_i32_0 : i32, i32
  }
  func.func @transform_4(%arg0: i32) -> (i32, i32) {
    %c0_i32 = arith.constant 0 : i32
    %c0_i32_0 = arith.constant 0 : i32
    %c0_i32_1 = arith.constant 0 : i32
    return %c0_i32, %c0_i32_0 : i32, i32
  }
  func.func @transform_5(%arg0: i32) -> (i32, i32, i32) {
    %c0_i32 = arith.constant 0 : i32
    %c0_i32_0 = arith.constant 0 : i32
    %c0_i32_1 = arith.constant 0 : i32
    %c0_i32_2 = arith.constant 0 : i32
    return %c0_i32, %c0_i32_0, %c0_i32_1 : i32, i32, i32
  }
  func.func @transform_6(%arg0: i32) -> (i32, i32, i32) {
    %c0_i32 = arith.constant 0 : i32
    %c0_i32_0 = arith.constant 0 : i32
    %c0_i32_1 = arith.constant 0 : i32
    %c0_i32_2 = arith.constant 0 : i32
    return %c0_i32, %c0_i32_0, %c0_i32_1 : i32, i32, i32
  }
  func.func @transform_7(%arg0: i32) -> (i32, i32, i32) {
    %c0_i32 = arith.constant 0 : i32
    %c0_i32_0 = arith.constant 0 : i32
    %c0_i32_1 = arith.constant 0 : i32
    return %arg0, %c0_i32, %c0_i32_0 : i32, i32, i32
  }
  func.func @transform_8(%arg0: i32) -> (i32, i32, i32) {
    %c0_i32 = arith.constant 0 : i32
    %c0_i32_0 = arith.constant 0 : i32
    %c0_i32_1 = arith.constant 0 : i32
    return %arg0, %c0_i32, %c0_i32_0 : i32, i32, i32
  }
  func.func @transform_9(%arg0: i32) -> (i32, i32, i32) {
    %c0_i32 = arith.constant 0 : i32
    %c0_i32_0 = arith.constant 0 : i32
    %c0_i32_1 = arith.constant 0 : i32
    return %arg0, %c0_i32, %c0_i32_0 : i32, i32, i32
  }
}

module attributes {stable_mosaic.version = 11 : i64} {
  func.func @_gate_kernel(%arg0: i32, %arg1: memref<2x16x128xf32, #tpu.memory_space<vmem>>, %arg2: memref<2x16x256xbf16, #tpu.memory_space<vmem>>, %arg3: memref<1x256xf32, #tpu.memory_space<vmem>>, %arg4: memref<1x256xf32, #tpu.memory_space<vmem>>, %arg5: memref<2x16x128xf32, #tpu.memory_space<vmem>>) attributes {dimension_semantics = [#tpu.dimension_semantics<parallel>], iteration_bounds = array<i64: 1>, scalar_prefetch = 0 : i64, scratch_operands = 0 : i64, tpu.core_type = #tpu.core_type<tc>, window_params = [{transform_indices = @transform_0, window_bounds = array<i64: 2, 16, 128>}, {transform_indices = @transform_1, window_bounds = array<i64: 2, 16, 256>}, {pipeline_mode = #tpu.pipeline_mode<synchronous>, transform_indices = @transform_2, window_bounds = array<i64: 1, 256>}, {pipeline_mode = #tpu.pipeline_mode<synchronous>, transform_indices = @transform_3, window_bounds = array<i64: 1, 256>}, {transform_indices = @transform_4, window_bounds = array<i64: 2, 16, 128>}]} {
    %c0 = arith.constant 0 : index
    %c0_0 = arith.constant 0 : index
    %c0_1 = arith.constant 0 : index
    %0 = vector.load %arg2[%c0, %c0_0, %c0_1] : memref<2x16x256xbf16, #tpu.memory_space<vmem>>, vector<1x16x256xbf16>
    %1 = vector.shape_cast %0 : vector<1x16x256xbf16> to vector<16x256xbf16>
    %2 = arith.extf %1 : vector<16x256xbf16> to vector<16x256xf32>
    %c0_2 = arith.constant 0 : index
    %c0_3 = arith.constant 0 : index
    %3 = vector.load %arg3[%c0_2, %c0_3] : memref<1x256xf32, #tpu.memory_space<vmem>>, vector<1x256xf32>
    %4 = vector.broadcast %3 : vector<1x256xf32> to vector<16x256xf32>
    %5 = arith.mulf %2, %4 : vector<16x256xf32>
    %c0_4 = arith.constant 0 : index
    %c0_5 = arith.constant 0 : index
    %6 = vector.load %arg4[%c0_4, %c0_5] : memref<1x256xf32, #tpu.memory_space<vmem>>, vector<1x256xf32>
    %7 = vector.broadcast %6 : vector<1x256xf32> to vector<16x256xf32>
    %8 = arith.addf %5, %7 : vector<16x256xf32>
    %9 = vector.extract_strided_slice %8 {offsets = [0, 0], sizes = [16, 128], strides = [1, 1]} : vector<16x256xf32> to vector<16x128xf32>
    %10 = vector.extract_strided_slice %8 {offsets = [0, 128], sizes = [16, 128], strides = [1, 1]} : vector<16x256xf32> to vector<16x128xf32>
    %11 = arith.addf %9, %10 : vector<16x128xf32>
    %c0_6 = arith.constant 0 : index
    %c0_7 = arith.constant 0 : index
    %c0_8 = arith.constant 0 : index
    %12 = vector.load %arg1[%c0_6, %c0_7, %c0_8] : memref<2x16x128xf32, #tpu.memory_space<vmem>>, vector<1x16x128xf32>
    %13 = vector.shape_cast %12 : vector<1x16x128xf32> to vector<16x128xf32>
    %cst = arith.constant 0.000000e+00 : f32
    %14 = vector.broadcast %cst : f32 to vector<16x128xf32>
    %15 = arith.subf %14, %11 : vector<16x128xf32>
    %16 = math.exp %15 : vector<16x128xf32>
    %cst_9 = arith.constant 1.000000e+00 : f32
    %17 = vector.broadcast %cst_9 : f32 to vector<16x128xf32>
    %18 = arith.addf %17, %16 : vector<16x128xf32>
    %19 = tpu.reciprocal %18 {approx = true} : vector<16x128xf32> -> vector<16x128xf32>
    %20 = arith.mulf %13, %19 : vector<16x128xf32>
    %c0_10 = arith.constant 0 : index
    %c0_11 = arith.constant 0 : index
    %c0_12 = arith.constant 0 : index
    %21 = vector.load %arg5[%c0_10, %c0_11, %c0_12] : memref<2x16x128xf32, #tpu.memory_space<vmem>>, vector<1x16x128xf32>
    %22 = vector.shape_cast %21 : vector<1x16x128xf32> to vector<16x128xf32>
    %23 = vector.shape_cast %20 : vector<16x128xf32> to vector<1x16x128xf32>
    tpu.vector_store %arg5[%c0_10, %c0_11, %c0_12], %23 {strides = array<i32>} : memref<2x16x128xf32, #tpu.memory_space<vmem>>, vector<1x16x128xf32>,
    %c1 = arith.constant 1 : index
    %c0_13 = arith.constant 0 : index
    %c0_14 = arith.constant 0 : index
    %24 = vector.load %arg2[%c1, %c0_13, %c0_14] : memref<2x16x256xbf16, #tpu.memory_space<vmem>>, vector<1x16x256xbf16>
    %25 = vector.shape_cast %24 : vector<1x16x256xbf16> to vector<16x256xbf16>
    %26 = arith.extf %25 : vector<16x256xbf16> to vector<16x256xf32>
    %c0_15 = arith.constant 0 : index
    %c0_16 = arith.constant 0 : index
    %27 = vector.load %arg3[%c0_15, %c0_16] : memref<1x256xf32, #tpu.memory_space<vmem>>, vector<1x256xf32>
    %28 = vector.broadcast %27 : vector<1x256xf32> to vector<16x256xf32>
    %29 = arith.mulf %26, %28 : vector<16x256xf32>
    %c0_17 = arith.constant 0 : index
    %c0_18 = arith.constant 0 : index
    %30 = vector.load %arg4[%c0_17, %c0_18] : memref<1x256xf32, #tpu.memory_space<vmem>>, vector<1x256xf32>
    %31 = vector.broadcast %30 : vector<1x256xf32> to vector<16x256xf32>
    %32 = arith.addf %29, %31 : vector<16x256xf32>
    %33 = vector.extract_strided_slice %32 {offsets = [0, 0], sizes = [16, 128], strides = [1, 1]} : vector<16x256xf32> to vector<16x128xf32>
    %34 = vector.extract_strided_slice %32 {offsets = [0, 128], sizes = [16, 128], strides = [1, 1]} : vector<16x256xf32> to vector<16x128xf32>
    %35 = arith.addf %33, %34 : vector<16x128xf32>
    %c1_19 = arith.constant 1 : index
    %c0_20 = arith.constant 0 : index
    %c0_21 = arith.constant 0 : index
    %36 = vector.load %arg1[%c1_19, %c0_20, %c0_21] : memref<2x16x128xf32, #tpu.memory_space<vmem>>, vector<1x16x128xf32>
    %37 = vector.shape_cast %36 : vector<1x16x128xf32> to vector<16x128xf32>
    %cst_22 = arith.constant 0.000000e+00 : f32
    %38 = vector.broadcast %cst_22 : f32 to vector<16x128xf32>
    %39 = arith.subf %38, %35 : vector<16x128xf32>
    %40 = math.exp %39 : vector<16x128xf32>
    %cst_23 = arith.constant 1.000000e+00 : f32
    %41 = vector.broadcast %cst_23 : f32 to vector<16x128xf32>
    %42 = arith.addf %41, %40 : vector<16x128xf32>
    %43 = tpu.reciprocal %42 {approx = true} : vector<16x128xf32> -> vector<16x128xf32>
    %44 = arith.mulf %37, %43 : vector<16x128xf32>
    %c1_24 = arith.constant 1 : index
    %c0_25 = arith.constant 0 : index
    %c0_26 = arith.constant 0 : index
    %45 = vector.load %arg5[%c1_24, %c0_25, %c0_26] : memref<2x16x128xf32, #tpu.memory_space<vmem>>, vector<1x16x128xf32>
    %46 = vector.shape_cast %45 : vector<1x16x128xf32> to vector<16x128xf32>
    %47 = vector.shape_cast %44 : vector<16x128xf32> to vector<1x16x128xf32>
    tpu.vector_store %arg5[%c1_24, %c0_25, %c0_26], %47 {strides = array<i32>} : memref<2x16x128xf32, #tpu.memory_space<vmem>>, vector<1x16x128xf32>,
    return
  }
  func.func @transform_0(%arg0: i32) -> (i32, i32, i32) {
    %c0_i32 = arith.constant 0 : i32
    %c0_i32_0 = arith.constant 0 : i32
    %c0_i32_1 = arith.constant 0 : i32
    return %arg0, %c0_i32, %c0_i32_0 : i32, i32, i32
  }
  func.func @transform_1(%arg0: i32) -> (i32, i32, i32) {
    %c0_i32 = arith.constant 0 : i32
    %c0_i32_0 = arith.constant 0 : i32
    %c0_i32_1 = arith.constant 0 : i32
    return %arg0, %c0_i32, %c0_i32_0 : i32, i32, i32
  }
  func.func @transform_2(%arg0: i32) -> (i32, i32) {
    %c0_i32 = arith.constant 0 : i32
    %c0_i32_0 = arith.constant 0 : i32
    %c0_i32_1 = arith.constant 0 : i32
    return %c0_i32, %c0_i32_0 : i32, i32
  }
  func.func @transform_3(%arg0: i32) -> (i32, i32) {
    %c0_i32 = arith.constant 0 : i32
    %c0_i32_0 = arith.constant 0 : i32
    %c0_i32_1 = arith.constant 0 : i32
    return %c0_i32, %c0_i32_0 : i32, i32
  }
  func.func @transform_4(%arg0: i32) -> (i32, i32, i32) {
    %c0_i32 = arith.constant 0 : i32
    %c0_i32_0 = arith.constant 0 : i32
    %c0_i32_1 = arith.constant 0 : i32
    return %arg0, %c0_i32, %c0_i32_0 : i32, i32, i32
  }
}

module attributes {stable_mosaic.version = 11 : i64} {
  func.func @_stage_b_kernel(%arg0: i32, %arg1: memref<2x16x256xbf16, #tpu.memory_space<vmem>>, %arg2: memref<1x256xf32, #tpu.memory_space<vmem>>, %arg3: memref<1x256xf32, #tpu.memory_space<vmem>>, %arg4: memref<9x128x128xbf16, #tpu.memory_space<vmem>>, %arg5: memref<25x128x128xbf16, #tpu.memory_space<vmem>>, %arg6: memref<2x16x256xbf16, #tpu.memory_space<vmem>>, %arg7: memref<1x2x256xf32, #tpu.memory_space<vmem>>, %arg8: memref<2x42x256xbf16, #tpu.memory_space<vmem>>) attributes {dimension_semantics = [#tpu.dimension_semantics<parallel>], iteration_bounds = array<i64: 1>, scalar_prefetch = 0 : i64, scratch_operands = 1 : i64, tpu.core_type = #tpu.core_type<tc>, window_params = [{transform_indices = @transform_0, window_bounds = array<i64: 2, 16, 256>}, {pipeline_mode = #tpu.pipeline_mode<synchronous>, transform_indices = @transform_1, window_bounds = array<i64: 1, 256>}, {pipeline_mode = #tpu.pipeline_mode<synchronous>, transform_indices = @transform_2, window_bounds = array<i64: 1, 256>}, {pipeline_mode = #tpu.pipeline_mode<synchronous>, transform_indices = @transform_3, window_bounds = array<i64: 9, 128, 128>}, {pipeline_mode = #tpu.pipeline_mode<synchronous>, transform_indices = @transform_4, window_bounds = array<i64: 25, 128, 128>}, {transform_indices = @transform_5, window_bounds = array<i64: 2, 16, 256>}, {transform_indices = @transform_6, window_bounds = array<i64: 1, 2, 256>}]} {
    %c0_i32 = arith.constant 0 : i32
    %0 = arith.cmpi eq, %arg0, %c0_i32 : i32
    %1 = arith.extui %0 : i1 to i32
    %c0_i32_0 = arith.constant 0 : i32
    %2 = arith.cmpi ne, %1, %c0_i32_0 : i32
    scf.if %2 {
      %cst_196 = arith.constant 0.000000e+00 : bf16
      %453 = vector.broadcast %cst_196 : bf16 to vector<2x42x256xbf16>
      %c0_197 = arith.constant 0 : index
      %c0_198 = arith.constant 0 : index
      %c0_199 = arith.constant 0 : index
      %454 = vector.load %arg8[%c0_197, %c0_198, %c0_199] : memref<2x42x256xbf16, #tpu.memory_space<vmem>>, vector<2x42x256xbf16>
      tpu.vector_store %arg8[%c0_197, %c0_198, %c0_199], %453 {strides = array<i32>} : memref<2x42x256xbf16, #tpu.memory_space<vmem>>, vector<2x42x256xbf16>,
    } else {
    }
    %c0 = arith.constant 0 : index
    %c0_1 = arith.constant 0 : index
    %c0_2 = arith.constant 0 : index
    %3 = vector.load %arg1[%c0, %c0_1, %c0_2] : memref<2x16x256xbf16, #tpu.memory_space<vmem>>, vector<1x16x256xbf16>
    %4 = vector.shape_cast %3 : vector<1x16x256xbf16> to vector<16x256xbf16>
    %5 = arith.extf %4 : vector<16x256xbf16> to vector<16x256xf32>
    %c0_3 = arith.constant 0 : index
    %c0_4 = arith.constant 0 : index
    %6 = vector.load %arg2[%c0_3, %c0_4] : memref<1x256xf32, #tpu.memory_space<vmem>>, vector<1x256xf32>
    %7 = vector.broadcast %6 : vector<1x256xf32> to vector<16x256xf32>
    %8 = arith.mulf %5, %7 : vector<16x256xf32>
    %c0_5 = arith.constant 0 : index
    %c0_6 = arith.constant 0 : index
    %9 = vector.load %arg3[%c0_5, %c0_6] : memref<1x256xf32, #tpu.memory_space<vmem>>, vector<1x256xf32>
    %10 = vector.broadcast %9 : vector<1x256xf32> to vector<16x256xf32>
    %11 = arith.addf %8, %10 : vector<16x256xf32>
    %cst = arith.constant 0.000000e+00 : f32
    %12 = vector.broadcast %cst : f32 to vector<16x256xf32>
    %13 = arith.maximumf %11, %12 : vector<16x256xf32>
    %14 = arith.truncf %13 : vector<16x256xf32> to vector<16x256xbf16>
    %c0_7 = arith.constant 0 : index
    %c16 = arith.constant 16 : index
    %c0_8 = arith.constant 0 : index
    %15 = vector.load %arg8[%c0_7, %c16, %c0_8] : memref<2x42x256xbf16, #tpu.memory_space<vmem>>, vector<1x16x256xbf16>
    %16 = vector.shape_cast %15 : vector<1x16x256xbf16> to vector<16x256xbf16>
    %17 = vector.shape_cast %14 : vector<16x256xbf16> to vector<1x16x256xbf16>
    tpu.vector_store %arg8[%c0_7, %c16, %c0_8], %17 {strides = array<i32>} : memref<2x42x256xbf16, #tpu.memory_space<vmem>>, vector<1x16x256xbf16>,
    %c1 = arith.constant 1 : index
    %c0_9 = arith.constant 0 : index
    %c0_10 = arith.constant 0 : index
    %18 = vector.load %arg1[%c1, %c0_9, %c0_10] : memref<2x16x256xbf16, #tpu.memory_space<vmem>>, vector<1x16x256xbf16>
    %19 = vector.shape_cast %18 : vector<1x16x256xbf16> to vector<16x256xbf16>
    %20 = arith.extf %19 : vector<16x256xbf16> to vector<16x256xf32>
    %c0_11 = arith.constant 0 : index
    %c0_12 = arith.constant 0 : index
    %21 = vector.load %arg2[%c0_11, %c0_12] : memref<1x256xf32, #tpu.memory_space<vmem>>, vector<1x256xf32>
    %22 = vector.broadcast %21 : vector<1x256xf32> to vector<16x256xf32>
    %23 = arith.mulf %20, %22 : vector<16x256xf32>
    %c0_13 = arith.constant 0 : index
    %c0_14 = arith.constant 0 : index
    %24 = vector.load %arg3[%c0_13, %c0_14] : memref<1x256xf32, #tpu.memory_space<vmem>>, vector<1x256xf32>
    %25 = vector.broadcast %24 : vector<1x256xf32> to vector<16x256xf32>
    %26 = arith.addf %23, %25 : vector<16x256xf32>
    %cst_15 = arith.constant 0.000000e+00 : f32
    %27 = vector.broadcast %cst_15 : f32 to vector<16x256xf32>
    %28 = arith.maximumf %26, %27 : vector<16x256xf32>
    %29 = arith.truncf %28 : vector<16x256xf32> to vector<16x256xbf16>
    %c1_16 = arith.constant 1 : index
    %c16_17 = arith.constant 16 : index
    %c0_18 = arith.constant 0 : index
    %30 = vector.load %arg8[%c1_16, %c16_17, %c0_18] : memref<2x42x256xbf16, #tpu.memory_space<vmem>>, vector<1x16x256xbf16>
    %31 = vector.shape_cast %30 : vector<1x16x256xbf16> to vector<16x256xbf16>
    %32 = vector.shape_cast %29 : vector<16x256xbf16> to vector<1x16x256xbf16>
    tpu.vector_store %arg8[%c1_16, %c16_17, %c0_18], %32 {strides = array<i32>} : memref<2x42x256xbf16, #tpu.memory_space<vmem>>, vector<1x16x256xbf16>,
    %33 = tpu.iota {dimensions = array<i32: 0>} : vector<32x1xi32>
    %c4_i32 = arith.constant 4 : i32
    %c0_i32_19 = arith.constant 0 : i32
    %34 = arith.cmpi eq, %c4_i32, %c0_i32_19 : i32
    %c1_i32 = arith.constant 1 : i32
    %35 = arith.select %34, %c1_i32, %c4_i32 : i32
    %36 = vector.broadcast %35 : i32 to vector<32x1xi32>
    %37 = arith.remsi %33, %36 : vector<32x1xi32>
    %c0_i32_20 = arith.constant 0 : i32
    %38 = vector.broadcast %c0_i32_20 : i32 to vector<32x1xi32>
    %39 = arith.cmpi ne, %37, %38 : vector<32x1xi32>
    %c0_i32_21 = arith.constant 0 : i32
    %40 = vector.broadcast %c0_i32_21 : i32 to vector<32x1xi32>
    %41 = arith.cmpi slt, %37, %40 : vector<32x1xi32>
    %c0_i32_22 = arith.constant 0 : i32
    %42 = arith.cmpi slt, %35, %c0_i32_22 : i32
    %43 = vector.broadcast %42 : i1 to vector<32x1xi1>
    %44 = vector.broadcast %43 : vector<32x1xi1> to vector<32x1xi1>
    %45 = arith.xori %41, %44 : vector<32x1xi1>
    %46 = arith.andi %45, %39 : vector<32x1xi1>
    %47 = vector.broadcast %35 : i32 to vector<32x1xi32>
    %48 = arith.addi %37, %47 : vector<32x1xi32>
    %49 = arith.select %46, %48, %37 : vector<32x1xi1>, vector<32x1xi32>
    %c-2_i32 = arith.constant -2 : i32
    %50 = vector.broadcast %c-2_i32 : i32 to vector<32x1xi32>
    %51 = arith.addi %49, %50 : vector<32x1xi32>
    %c0_i32_23 = arith.constant 0 : i32
    %52 = vector.broadcast %c0_i32_23 : i32 to vector<32x1xi32>
    %53 = arith.cmpi sge, %51, %52 : vector<32x1xi32>
    %c-2_i32_24 = arith.constant -2 : i32
    %54 = vector.broadcast %c-2_i32_24 : i32 to vector<32x1xi32>
    %55 = arith.addi %49, %54 : vector<32x1xi32>
    %c4_i32_25 = arith.constant 4 : i32
    %56 = vector.broadcast %c4_i32_25 : i32 to vector<32x1xi32>
    %57 = arith.cmpi slt, %55, %56 : vector<32x1xi32>
    %58 = arith.andi %53, %57 : vector<32x1xi1>
    %c-1_i32 = arith.constant -1 : i32
    %59 = vector.broadcast %c-1_i32 : i32 to vector<32x1xi32>
    %60 = arith.addi %49, %59 : vector<32x1xi32>
    %c0_i32_26 = arith.constant 0 : i32
    %61 = vector.broadcast %c0_i32_26 : i32 to vector<32x1xi32>
    %62 = arith.cmpi sge, %60, %61 : vector<32x1xi32>
    %c-1_i32_27 = arith.constant -1 : i32
    %63 = vector.broadcast %c-1_i32_27 : i32 to vector<32x1xi32>
    %64 = arith.addi %49, %63 : vector<32x1xi32>
    %c4_i32_28 = arith.constant 4 : i32
    %65 = vector.broadcast %c4_i32_28 : i32 to vector<32x1xi32>
    %66 = arith.cmpi slt, %64, %65 : vector<32x1xi32>
    %67 = arith.andi %62, %66 : vector<32x1xi1>
    %c1_i32_29 = arith.constant 1 : i32
    %68 = vector.broadcast %c1_i32_29 : i32 to vector<32x1xi32>
    %69 = arith.addi %49, %68 : vector<32x1xi32>
    %c0_i32_30 = arith.constant 0 : i32
    %70 = vector.broadcast %c0_i32_30 : i32 to vector<32x1xi32>
    %71 = arith.cmpi sge, %69, %70 : vector<32x1xi32>
    %c1_i32_31 = arith.constant 1 : i32
    %72 = vector.broadcast %c1_i32_31 : i32 to vector<32x1xi32>
    %73 = arith.addi %49, %72 : vector<32x1xi32>
    %c4_i32_32 = arith.constant 4 : i32
    %74 = vector.broadcast %c4_i32_32 : i32 to vector<32x1xi32>
    %75 = arith.cmpi slt, %73, %74 : vector<32x1xi32>
    %76 = arith.andi %71, %75 : vector<32x1xi1>
    %c2_i32 = arith.constant 2 : i32
    %77 = vector.broadcast %c2_i32 : i32 to vector<32x1xi32>
    %78 = arith.addi %49, %77 : vector<32x1xi32>
    %c0_i32_33 = arith.constant 0 : i32
    %79 = vector.broadcast %c0_i32_33 : i32 to vector<32x1xi32>
    %80 = arith.cmpi sge, %78, %79 : vector<32x1xi32>
    %c2_i32_34 = arith.constant 2 : i32
    %81 = vector.broadcast %c2_i32_34 : i32 to vector<32x1xi32>
    %82 = arith.addi %49, %81 : vector<32x1xi32>
    %c4_i32_35 = arith.constant 4 : i32
    %83 = vector.broadcast %c4_i32_35 : i32 to vector<32x1xi32>
    %84 = arith.cmpi slt, %82, %83 : vector<32x1xi32>
    %85 = arith.andi %80, %84 : vector<32x1xi1>
    %c0_36 = arith.constant 0 : index
    %c0_37 = arith.constant 0 : index
    %c0_38 = arith.constant 0 : index
    %86 = vector.load %arg8[%c0_36, %c0_37, %c0_38] : memref<2x42x256xbf16, #tpu.memory_space<vmem>>, vector<1x42x256xbf16>
    %87 = vector.shape_cast %86 : vector<1x42x256xbf16> to vector<42x256xbf16>
    %c1_39 = arith.constant 1 : index
    %c0_40 = arith.constant 0 : index
    %c0_41 = arith.constant 0 : index
    %88 = vector.load %arg8[%c1_39, %c0_40, %c0_41] : memref<2x42x256xbf16, #tpu.memory_space<vmem>>, vector<1x42x256xbf16>
    %89 = vector.shape_cast %88 : vector<1x42x256xbf16> to vector<42x256xbf16>
    %cst_42 = arith.constant 0.000000e+00 : f32
    %90 = vector.broadcast %cst_42 : f32 to vector<32x128xf32>
    %cst_43 = arith.constant 0.000000e+00 : f32
    %91 = vector.broadcast %cst_43 : f32 to vector<32x128xf32>
    %92 = vector.extract_strided_slice %87 {offsets = [6, 0], sizes = [16, 256], strides = [1, 1]} : vector<42x256xbf16> to vector<16x256xbf16>
    %93 = vector.extract_strided_slice %89 {offsets = [6, 0], sizes = [16, 256], strides = [1, 1]} : vector<42x256xbf16> to vector<16x256xbf16>
    %94 = tpu.concatenate %92, %93 in 0 : vector<16x256xbf16>, vector<16x256xbf16> -> vector<32x256xbf16>
    %cst_44 = arith.constant 0.000000e+00 : bf16
    %95 = vector.broadcast %cst_44 : bf16 to vector<32x256xbf16>
    %96 = vector.shape_cast %58 : vector<32x1xi1> to vector<32x1xi1>
    %97 = vector.broadcast %96 : vector<32x1xi1> to vector<32x256xi1>
    %98 = arith.select %97, %94, %95 : vector<32x256xi1>, vector<32x256xbf16>
    %99 = vector.extract_strided_slice %98 {offsets = [0, 128], sizes = [32, 128], strides = [1, 1]} : vector<32x256xbf16> to vector<32x128xbf16>
    %c0_45 = arith.constant 0 : index
    %c0_46 = arith.constant 0 : index
    %c0_47 = arith.constant 0 : index
    %100 = vector.load %arg5[%c0_45, %c0_46, %c0_47] : memref<25x128x128xbf16, #tpu.memory_space<vmem>>, vector<1x128x128xbf16>
    %101 = vector.shape_cast %100 : vector<1x128x128xbf16> to vector<128x128xbf16>
    %cst_48 = arith.constant dense<0.000000e+00> : vector<32x128xf32>
    %102 = tpu.matmul %99, %101, %cst_48 {dimension_numbers = #tpu.dot_dimension_numbers<[1], [0], [0], [1], [0, 0, 1, 1], [], []>} : vector<32x128xbf16>, vector<128x128xbf16>, vector<32x128xf32> -> vector<32x128xf32>
    %103 = arith.addf %91, %102 : vector<32x128xf32>
    %104 = vector.extract_strided_slice %87 {offsets = [7, 0], sizes = [16, 256], strides = [1, 1]} : vector<42x256xbf16> to vector<16x256xbf16>
    %105 = vector.extract_strided_slice %89 {offsets = [7, 0], sizes = [16, 256], strides = [1, 1]} : vector<42x256xbf16> to vector<16x256xbf16>
    %106 = tpu.concatenate %104, %105 in 0 : vector<16x256xbf16>, vector<16x256xbf16> -> vector<32x256xbf16>
    %cst_49 = arith.constant 0.000000e+00 : bf16
    %107 = vector.broadcast %cst_49 : bf16 to vector<32x256xbf16>
    %108 = vector.shape_cast %67 : vector<32x1xi1> to vector<32x1xi1>
    %109 = vector.broadcast %108 : vector<32x1xi1> to vector<32x256xi1>
    %110 = arith.select %109, %106, %107 : vector<32x256xi1>, vector<32x256xbf16>
    %111 = vector.extract_strided_slice %110 {offsets = [0, 128], sizes = [32, 128], strides = [1, 1]} : vector<32x256xbf16> to vector<32x128xbf16>
    %c1_50 = arith.constant 1 : index
    %c0_51 = arith.constant 0 : index
    %c0_52 = arith.constant 0 : index
    %112 = vector.load %arg5[%c1_50, %c0_51, %c0_52] : memref<25x128x128xbf16, #tpu.memory_space<vmem>>, vector<1x128x128xbf16>
    %113 = vector.shape_cast %112 : vector<1x128x128xbf16> to vector<128x128xbf16>
    %cst_53 = arith.constant dense<0.000000e+00> : vector<32x128xf32>
    %114 = tpu.matmul %111, %113, %cst_53 {dimension_numbers = #tpu.dot_dimension_numbers<[1], [0], [0], [1], [0, 0, 1, 1], [], []>} : vector<32x128xbf16>, vector<128x128xbf16>, vector<32x128xf32> -> vector<32x128xf32>
    %115 = arith.addf %103, %114 : vector<32x128xf32>
    %116 = vector.extract_strided_slice %87 {offsets = [8, 0], sizes = [16, 256], strides = [1, 1]} : vector<42x256xbf16> to vector<16x256xbf16>
    %117 = vector.extract_strided_slice %89 {offsets = [8, 0], sizes = [16, 256], strides = [1, 1]} : vector<42x256xbf16> to vector<16x256xbf16>
    %118 = tpu.concatenate %116, %117 in 0 : vector<16x256xbf16>, vector<16x256xbf16> -> vector<32x256xbf16>
    %119 = vector.extract_strided_slice %118 {offsets = [0, 128], sizes = [32, 128], strides = [1, 1]} : vector<32x256xbf16> to vector<32x128xbf16>
    %c2 = arith.constant 2 : index
    %c0_54 = arith.constant 0 : index
    %c0_55 = arith.constant 0 : index
    %120 = vector.load %arg5[%c2, %c0_54, %c0_55] : memref<25x128x128xbf16, #tpu.memory_space<vmem>>, vector<1x128x128xbf16>
    %121 = vector.shape_cast %120 : vector<1x128x128xbf16> to vector<128x128xbf16>
    %cst_56 = arith.constant dense<0.000000e+00> : vector<32x128xf32>
    %122 = tpu.matmul %119, %121, %cst_56 {dimension_numbers = #tpu.dot_dimension_numbers<[1], [0], [0], [1], [0, 0, 1, 1], [], []>} : vector<32x128xbf16>, vector<128x128xbf16>, vector<32x128xf32> -> vector<32x128xf32>
    %123 = arith.addf %115, %122 : vector<32x128xf32>
    %124 = vector.extract_strided_slice %87 {offsets = [9, 0], sizes = [16, 256], strides = [1, 1]} : vector<42x256xbf16> to vector<16x256xbf16>
    %125 = vector.extract_strided_slice %89 {offsets = [9, 0], sizes = [16, 256], strides = [1, 1]} : vector<42x256xbf16> to vector<16x256xbf16>
    %126 = tpu.concatenate %124, %125 in 0 : vector<16x256xbf16>, vector<16x256xbf16> -> vector<32x256xbf16>
    %cst_57 = arith.constant 0.000000e+00 : bf16
    %127 = vector.broadcast %cst_57 : bf16 to vector<32x256xbf16>
    %128 = vector.shape_cast %76 : vector<32x1xi1> to vector<32x1xi1>
    %129 = vector.broadcast %128 : vector<32x1xi1> to vector<32x256xi1>
    %130 = arith.select %129, %126, %127 : vector<32x256xi1>, vector<32x256xbf16>
    %131 = vector.extract_strided_slice %130 {offsets = [0, 128], sizes = [32, 128], strides = [1, 1]} : vector<32x256xbf16> to vector<32x128xbf16>
    %c3 = arith.constant 3 : index
    %c0_58 = arith.constant 0 : index
    %c0_59 = arith.constant 0 : index
    %132 = vector.load %arg5[%c3, %c0_58, %c0_59] : memref<25x128x128xbf16, #tpu.memory_space<vmem>>, vector<1x128x128xbf16>
    %133 = vector.shape_cast %132 : vector<1x128x128xbf16> to vector<128x128xbf16>
    %cst_60 = arith.constant dense<0.000000e+00> : vector<32x128xf32>
    %134 = tpu.matmul %131, %133, %cst_60 {dimension_numbers = #tpu.dot_dimension_numbers<[1], [0], [0], [1], [0, 0, 1, 1], [], []>} : vector<32x128xbf16>, vector<128x128xbf16>, vector<32x128xf32> -> vector<32x128xf32>
    %135 = arith.addf %123, %134 : vector<32x128xf32>
    %136 = vector.extract_strided_slice %87 {offsets = [10, 0], sizes = [16, 256], strides = [1, 1]} : vector<42x256xbf16> to vector<16x256xbf16>
    %137 = vector.extract_strided_slice %89 {offsets = [10, 0], sizes = [16, 256], strides = [1, 1]} : vector<42x256xbf16> to vector<16x256xbf16>
    %138 = tpu.concatenate %136, %137 in 0 : vector<16x256xbf16>, vector<16x256xbf16> -> vector<32x256xbf16>
    %cst_61 = arith.constant 0.000000e+00 : bf16
    %139 = vector.broadcast %cst_61 : bf16 to vector<32x256xbf16>
    %140 = vector.shape_cast %85 : vector<32x1xi1> to vector<32x1xi1>
    %141 = vector.broadcast %140 : vector<32x1xi1> to vector<32x256xi1>
    %142 = arith.select %141, %138, %139 : vector<32x256xi1>, vector<32x256xbf16>
    %143 = vector.extract_strided_slice %142 {offsets = [0, 128], sizes = [32, 128], strides = [1, 1]} : vector<32x256xbf16> to vector<32x128xbf16>
    %c4 = arith.constant 4 : index
    %c0_62 = arith.constant 0 : index
    %c0_63 = arith.constant 0 : index
    %144 = vector.load %arg5[%c4, %c0_62, %c0_63] : memref<25x128x128xbf16, #tpu.memory_space<vmem>>, vector<1x128x128xbf16>
    %145 = vector.shape_cast %144 : vector<1x128x128xbf16> to vector<128x128xbf16>
    %cst_64 = arith.constant dense<0.000000e+00> : vector<32x128xf32>
    %146 = tpu.matmul %143, %145, %cst_64 {dimension_numbers = #tpu.dot_dimension_numbers<[1], [0], [0], [1], [0, 0, 1, 1], [], []>} : vector<32x128xbf16>, vector<128x128xbf16>, vector<32x128xf32> -> vector<32x128xf32>
    %147 = arith.addf %135, %146 : vector<32x128xf32>
    %148 = vector.extract_strided_slice %87 {offsets = [10, 0], sizes = [16, 256], strides = [1, 1]} : vector<42x256xbf16> to vector<16x256xbf16>
    %149 = vector.extract_strided_slice %89 {offsets = [10, 0], sizes = [16, 256], strides = [1, 1]} : vector<42x256xbf16> to vector<16x256xbf16>
    %150 = tpu.concatenate %148, %149 in 0 : vector<16x256xbf16>, vector<16x256xbf16> -> vector<32x256xbf16>
    %cst_65 = arith.constant 0.000000e+00 : bf16
    %151 = vector.broadcast %cst_65 : bf16 to vector<32x256xbf16>
    %152 = vector.shape_cast %58 : vector<32x1xi1> to vector<32x1xi1>
    %153 = vector.broadcast %152 : vector<32x1xi1> to vector<32x256xi1>
    %154 = arith.select %153, %150, %151 : vector<32x256xi1>, vector<32x256xbf16>
    %155 = vector.extract_strided_slice %154 {offsets = [0, 128], sizes = [32, 128], strides = [1, 1]} : vector<32x256xbf16> to vector<32x128xbf16>
    %c5 = arith.constant 5 : index
    %c0_66 = arith.constant 0 : index
    %c0_67 = arith.constant 0 : index
    %156 = vector.load %arg5[%c5, %c0_66, %c0_67] : memref<25x128x128xbf16, #tpu.memory_space<vmem>>, vector<1x128x128xbf16>
    %157 = vector.shape_cast %156 : vector<1x128x128xbf16> to vector<128x128xbf16>
    %cst_68 = arith.constant dense<0.000000e+00> : vector<32x128xf32>
    %158 = tpu.matmul %155, %157, %cst_68 {dimension_numbers = #tpu.dot_dimension_numbers<[1], [0], [0], [1], [0, 0, 1, 1], [], []>} : vector<32x128xbf16>, vector<128x128xbf16>, vector<32x128xf32> -> vector<32x128xf32>
    %159 = arith.addf %147, %158 : vector<32x128xf32>
    %160 = vector.extract_strided_slice %87 {offsets = [11, 0], sizes = [16, 256], strides = [1, 1]} : vector<42x256xbf16> to vector<16x256xbf16>
    %161 = vector.extract_strided_slice %89 {offsets = [11, 0], sizes = [16, 256], strides = [1, 1]} : vector<42x256xbf16> to vector<16x256xbf16>
    %162 = tpu.concatenate %160, %161 in 0 : vector<16x256xbf16>, vector<16x256xbf16> -> vector<32x256xbf16>
    %cst_69 = arith.constant 0.000000e+00 : bf16
    %163 = vector.broadcast %cst_69 : bf16 to vector<32x256xbf16>
    %164 = vector.shape_cast %67 : vector<32x1xi1> to vector<32x1xi1>
    %165 = vector.broadcast %164 : vector<32x1xi1> to vector<32x256xi1>
    %166 = arith.select %165, %162, %163 : vector<32x256xi1>, vector<32x256xbf16>
    %167 = vector.extract_strided_slice %166 {offsets = [0, 128], sizes = [32, 128], strides = [1, 1]} : vector<32x256xbf16> to vector<32x128xbf16>
    %c6 = arith.constant 6 : index
    %c0_70 = arith.constant 0 : index
    %c0_71 = arith.constant 0 : index
    %168 = vector.load %arg5[%c6, %c0_70, %c0_71] : memref<25x128x128xbf16, #tpu.memory_space<vmem>>, vector<1x128x128xbf16>
    %169 = vector.shape_cast %168 : vector<1x128x128xbf16> to vector<128x128xbf16>
    %cst_72 = arith.constant dense<0.000000e+00> : vector<32x128xf32>
    %170 = tpu.matmul %167, %169, %cst_72 {dimension_numbers = #tpu.dot_dimension_numbers<[1], [0], [0], [1], [0, 0, 1, 1], [], []>} : vector<32x128xbf16>, vector<128x128xbf16>, vector<32x128xf32> -> vector<32x128xf32>
    %171 = arith.addf %159, %170 : vector<32x128xf32>
    %172 = vector.extract_strided_slice %166 {offsets = [0, 0], sizes = [32, 128], strides = [1, 1]} : vector<32x256xbf16> to vector<32x128xbf16>
    %c0_73 = arith.constant 0 : index
    %c0_74 = arith.constant 0 : index
    %c0_75 = arith.constant 0 : index
    %173 = vector.load %arg4[%c0_73, %c0_74, %c0_75] : memref<9x128x128xbf16, #tpu.memory_space<vmem>>, vector<1x128x128xbf16>
    %174 = vector.shape_cast %173 : vector<1x128x128xbf16> to vector<128x128xbf16>
    %cst_76 = arith.constant dense<0.000000e+00> : vector<32x128xf32>
    %175 = tpu.matmul %172, %174, %cst_76 {dimension_numbers = #tpu.dot_dimension_numbers<[1], [0], [0], [1], [0, 0, 1, 1], [], []>} : vector<32x128xbf16>, vector<128x128xbf16>, vector<32x128xf32> -> vector<32x128xf32>
    %176 = arith.addf %90, %175 : vector<32x128xf32>
    %177 = vector.extract_strided_slice %87 {offsets = [12, 0], sizes = [16, 256], strides = [1, 1]} : vector<42x256xbf16> to vector<16x256xbf16>
    %178 = vector.extract_strided_slice %89 {offsets = [12, 0], sizes = [16, 256], strides = [1, 1]} : vector<42x256xbf16> to vector<16x256xbf16>
    %179 = tpu.concatenate %177, %178 in 0 : vector<16x256xbf16>, vector<16x256xbf16> -> vector<32x256xbf16>
    %180 = vector.extract_strided_slice %179 {offsets = [0, 128], sizes = [32, 128], strides = [1, 1]} : vector<32x256xbf16> to vector<32x128xbf16>
    %c7 = arith.constant 7 : index
    %c0_77 = arith.constant 0 : index
    %c0_78 = arith.constant 0 : index
    %181 = vector.load %arg5[%c7, %c0_77, %c0_78] : memref<25x128x128xbf16, #tpu.memory_space<vmem>>, vector<1x128x128xbf16>
    %182 = vector.shape_cast %181 : vector<1x128x128xbf16> to vector<128x128xbf16>
    %cst_79 = arith.constant dense<0.000000e+00> : vector<32x128xf32>
    %183 = tpu.matmul %180, %182, %cst_79 {dimension_numbers = #tpu.dot_dimension_numbers<[1], [0], [0], [1], [0, 0, 1, 1], [], []>} : vector<32x128xbf16>, vector<128x128xbf16>, vector<32x128xf32> -> vector<32x128xf32>
    %184 = arith.addf %171, %183 : vector<32x128xf32>
    %185 = vector.extract_strided_slice %179 {offsets = [0, 0], sizes = [32, 128], strides = [1, 1]} : vector<32x256xbf16> to vector<32x128xbf16>
    %c1_80 = arith.constant 1 : index
    %c0_81 = arith.constant 0 : index
    %c0_82 = arith.constant 0 : index
    %186 = vector.load %arg4[%c1_80, %c0_81, %c0_82] : memref<9x128x128xbf16, #tpu.memory_space<vmem>>, vector<1x128x128xbf16>
    %187 = vector.shape_cast %186 : vector<1x128x128xbf16> to vector<128x128xbf16>
    %cst_83 = arith.constant dense<0.000000e+00> : vector<32x128xf32>
    %188 = tpu.matmul %185, %187, %cst_83 {dimension_numbers = #tpu.dot_dimension_numbers<[1], [0], [0], [1], [0, 0, 1, 1], [], []>} : vector<32x128xbf16>, vector<128x128xbf16>, vector<32x128xf32> -> vector<32x128xf32>
    %189 = arith.addf %176, %188 : vector<32x128xf32>
    %190 = vector.extract_strided_slice %87 {offsets = [13, 0], sizes = [16, 256], strides = [1, 1]} : vector<42x256xbf16> to vector<16x256xbf16>
    %191 = vector.extract_strided_slice %89 {offsets = [13, 0], sizes = [16, 256], strides = [1, 1]} : vector<42x256xbf16> to vector<16x256xbf16>
    %192 = tpu.concatenate %190, %191 in 0 : vector<16x256xbf16>, vector<16x256xbf16> -> vector<32x256xbf16>
    %cst_84 = arith.constant 0.000000e+00 : bf16
    %193 = vector.broadcast %cst_84 : bf16 to vector<32x256xbf16>
    %194 = vector.shape_cast %76 : vector<32x1xi1> to vector<32x1xi1>
    %195 = vector.broadcast %194 : vector<32x1xi1> to vector<32x256xi1>
    %196 = arith.select %195, %192, %193 : vector<32x256xi1>, vector<32x256xbf16>
    %197 = vector.extract_strided_slice %196 {offsets = [0, 128], sizes = [32, 128], strides = [1, 1]} : vector<32x256xbf16> to vector<32x128xbf16>
    %c8 = arith.constant 8 : index
    %c0_85 = arith.constant 0 : index
    %c0_86 = arith.constant 0 : index
    %198 = vector.load %arg5[%c8, %c0_85, %c0_86] : memref<25x128x128xbf16, #tpu.memory_space<vmem>>, vector<1x128x128xbf16>
    %199 = vector.shape_cast %198 : vector<1x128x128xbf16> to vector<128x128xbf16>
    %cst_87 = arith.constant dense<0.000000e+00> : vector<32x128xf32>
    %200 = tpu.matmul %197, %199, %cst_87 {dimension_numbers = #tpu.dot_dimension_numbers<[1], [0], [0], [1], [0, 0, 1, 1], [], []>} : vector<32x128xbf16>, vector<128x128xbf16>, vector<32x128xf32> -> vector<32x128xf32>
    %201 = arith.addf %184, %200 : vector<32x128xf32>
    %202 = vector.extract_strided_slice %196 {offsets = [0, 0], sizes = [32, 128], strides = [1, 1]} : vector<32x256xbf16> to vector<32x128xbf16>
    %c2_88 = arith.constant 2 : index
    %c0_89 = arith.constant 0 : index
    %c0_90 = arith.constant 0 : index
    %203 = vector.load %arg4[%c2_88, %c0_89, %c0_90] : memref<9x128x128xbf16, #tpu.memory_space<vmem>>, vector<1x128x128xbf16>
    %204 = vector.shape_cast %203 : vector<1x128x128xbf16> to vector<128x128xbf16>
    %cst_91 = arith.constant dense<0.000000e+00> : vector<32x128xf32>
    %205 = tpu.matmul %202, %204, %cst_91 {dimension_numbers = #tpu.dot_dimension_numbers<[1], [0], [0], [1], [0, 0, 1, 1], [], []>} : vector<32x128xbf16>, vector<128x128xbf16>, vector<32x128xf32> -> vector<32x128xf32>
    %206 = arith.addf %189, %205 : vector<32x128xf32>
    %207 = vector.extract_strided_slice %87 {offsets = [14, 0], sizes = [16, 256], strides = [1, 1]} : vector<42x256xbf16> to vector<16x256xbf16>
    %208 = vector.extract_strided_slice %89 {offsets = [14, 0], sizes = [16, 256], strides = [1, 1]} : vector<42x256xbf16> to vector<16x256xbf16>
    %209 = tpu.concatenate %207, %208 in 0 : vector<16x256xbf16>, vector<16x256xbf16> -> vector<32x256xbf16>
    %cst_92 = arith.constant 0.000000e+00 : bf16
    %210 = vector.broadcast %cst_92 : bf16 to vector<32x256xbf16>
    %211 = vector.shape_cast %85 : vector<32x1xi1> to vector<32x1xi1>
    %212 = vector.broadcast %211 : vector<32x1xi1> to vector<32x256xi1>
    %213 = arith.select %212, %209, %210 : vector<32x256xi1>, vector<32x256xbf16>
    %214 = vector.extract_strided_slice %213 {offsets = [0, 128], sizes = [32, 128], strides = [1, 1]} : vector<32x256xbf16> to vector<32x128xbf16>
    %c9 = arith.constant 9 : index
    %c0_93 = arith.constant 0 : index
    %c0_94 = arith.constant 0 : index
    %215 = vector.load %arg5[%c9, %c0_93, %c0_94] : memref<25x128x128xbf16, #tpu.memory_space<vmem>>, vector<1x128x128xbf16>
    %216 = vector.shape_cast %215 : vector<1x128x128xbf16> to vector<128x128xbf16>
    %cst_95 = arith.constant dense<0.000000e+00> : vector<32x128xf32>
    %217 = tpu.matmul %214, %216, %cst_95 {dimension_numbers = #tpu.dot_dimension_numbers<[1], [0], [0], [1], [0, 0, 1, 1], [], []>} : vector<32x128xbf16>, vector<128x128xbf16>, vector<32x128xf32> -> vector<32x128xf32>
    %218 = arith.addf %201, %217 : vector<32x128xf32>
    %219 = vector.extract_strided_slice %87 {offsets = [14, 0], sizes = [16, 256], strides = [1, 1]} : vector<42x256xbf16> to vector<16x256xbf16>
    %220 = vector.extract_strided_slice %89 {offsets = [14, 0], sizes = [16, 256], strides = [1, 1]} : vector<42x256xbf16> to vector<16x256xbf16>
    %221 = tpu.concatenate %219, %220 in 0 : vector<16x256xbf16>, vector<16x256xbf16> -> vector<32x256xbf16>
    %cst_96 = arith.constant 0.000000e+00 : bf16
    %222 = vector.broadcast %cst_96 : bf16 to vector<32x256xbf16>
    %223 = vector.shape_cast %58 : vector<32x1xi1> to vector<32x1xi1>
    %224 = vector.broadcast %223 : vector<32x1xi1> to vector<32x256xi1>
    %225 = arith.select %224, %221, %222 : vector<32x256xi1>, vector<32x256xbf16>
    %226 = vector.extract_strided_slice %225 {offsets = [0, 128], sizes = [32, 128], strides = [1, 1]} : vector<32x256xbf16> to vector<32x128xbf16>
    %c10 = arith.constant 10 : index
    %c0_97 = arith.constant 0 : index
    %c0_98 = arith.constant 0 : index
    %227 = vector.load %arg5[%c10, %c0_97, %c0_98] : memref<25x128x128xbf16, #tpu.memory_space<vmem>>, vector<1x128x128xbf16>
    %228 = vector.shape_cast %227 : vector<1x128x128xbf16> to vector<128x128xbf16>
    %cst_99 = arith.constant dense<0.000000e+00> : vector<32x128xf32>
    %229 = tpu.matmul %226, %228, %cst_99 {dimension_numbers = #tpu.dot_dimension_numbers<[1], [0], [0], [1], [0, 0, 1, 1], [], []>} : vector<32x128xbf16>, vector<128x128xbf16>, vector<32x128xf32> -> vector<32x128xf32>
    %230 = arith.addf %218, %229 : vector<32x128xf32>
    %231 = vector.extract_strided_slice %87 {offsets = [15, 0], sizes = [16, 256], strides = [1, 1]} : vector<42x256xbf16> to vector<16x256xbf16>
    %232 = vector.extract_strided_slice %89 {offsets = [15, 0], sizes = [16, 256], strides = [1, 1]} : vector<42x256xbf16> to vector<16x256xbf16>
    %233 = tpu.concatenate %231, %232 in 0 : vector<16x256xbf16>, vector<16x256xbf16> -> vector<32x256xbf16>
    %cst_100 = arith.constant 0.000000e+00 : bf16
    %234 = vector.broadcast %cst_100 : bf16 to vector<32x256xbf16>
    %235 = vector.shape_cast %67 : vector<32x1xi1> to vector<32x1xi1>
    %236 = vector.broadcast %235 : vector<32x1xi1> to vector<32x256xi1>
    %237 = arith.select %236, %233, %234 : vector<32x256xi1>, vector<32x256xbf16>
    %238 = vector.extract_strided_slice %237 {offsets = [0, 128], sizes = [32, 128], strides = [1, 1]} : vector<32x256xbf16> to vector<32x128xbf16>
    %c11 = arith.constant 11 : index
    %c0_101 = arith.constant 0 : index
    %c0_102 = arith.constant 0 : index
    %239 = vector.load %arg5[%c11, %c0_101, %c0_102] : memref<25x128x128xbf16, #tpu.memory_space<vmem>>, vector<1x128x128xbf16>
    %240 = vector.shape_cast %239 : vector<1x128x128xbf16> to vector<128x128xbf16>
    %cst_103 = arith.constant dense<0.000000e+00> : vector<32x128xf32>
    %241 = tpu.matmul %238, %240, %cst_103 {dimension_numbers = #tpu.dot_dimension_numbers<[1], [0], [0], [1], [0, 0, 1, 1], [], []>} : vector<32x128xbf16>, vector<128x128xbf16>, vector<32x128xf32> -> vector<32x128xf32>
    %242 = arith.addf %230, %241 : vector<32x128xf32>
    %243 = vector.extract_strided_slice %237 {offsets = [0, 0], sizes = [32, 128], strides = [1, 1]} : vector<32x256xbf16> to vector<32x128xbf16>
    %c3_104 = arith.constant 3 : index
    %c0_105 = arith.constant 0 : index
    %c0_106 = arith.constant 0 : index
    %244 = vector.load %arg4[%c3_104, %c0_105, %c0_106] : memref<9x128x128xbf16, #tpu.memory_space<vmem>>, vector<1x128x128xbf16>
    %245 = vector.shape_cast %244 : vector<1x128x128xbf16> to vector<128x128xbf16>
    %cst_107 = arith.constant dense<0.000000e+00> : vector<32x128xf32>
    %246 = tpu.matmul %243, %245, %cst_107 {dimension_numbers = #tpu.dot_dimension_numbers<[1], [0], [0], [1], [0, 0, 1, 1], [], []>} : vector<32x128xbf16>, vector<128x128xbf16>, vector<32x128xf32> -> vector<32x128xf32>
    %247 = arith.addf %206, %246 : vector<32x128xf32>
    %248 = vector.extract_strided_slice %87 {offsets = [16, 0], sizes = [16, 256], strides = [1, 1]} : vector<42x256xbf16> to vector<16x256xbf16>
    %249 = vector.extract_strided_slice %89 {offsets = [16, 0], sizes = [16, 256], strides = [1, 1]} : vector<42x256xbf16> to vector<16x256xbf16>
    %250 = tpu.concatenate %248, %249 in 0 : vector<16x256xbf16>, vector<16x256xbf16> -> vector<32x256xbf16>
    %251 = vector.extract_strided_slice %250 {offsets = [0, 128], sizes = [32, 128], strides = [1, 1]} : vector<32x256xbf16> to vector<32x128xbf16>
    %c12 = arith.constant 12 : index
    %c0_108 = arith.constant 0 : index
    %c0_109 = arith.constant 0 : index
    %252 = vector.load %arg5[%c12, %c0_108, %c0_109] : memref<25x128x128xbf16, #tpu.memory_space<vmem>>, vector<1x128x128xbf16>
    %253 = vector.shape_cast %252 : vector<1x128x128xbf16> to vector<128x128xbf16>
    %cst_110 = arith.constant dense<0.000000e+00> : vector<32x128xf32>
    %254 = tpu.matmul %251, %253, %cst_110 {dimension_numbers = #tpu.dot_dimension_numbers<[1], [0], [0], [1], [0, 0, 1, 1], [], []>} : vector<32x128xbf16>, vector<128x128xbf16>, vector<32x128xf32> -> vector<32x128xf32>
    %255 = arith.addf %242, %254 : vector<32x128xf32>
    %256 = vector.extract_strided_slice %250 {offsets = [0, 0], sizes = [32, 128], strides = [1, 1]} : vector<32x256xbf16> to vector<32x128xbf16>
    %c4_111 = arith.constant 4 : index
    %c0_112 = arith.constant 0 : index
    %c0_113 = arith.constant 0 : index
    %257 = vector.load %arg4[%c4_111, %c0_112, %c0_113] : memref<9x128x128xbf16, #tpu.memory_space<vmem>>, vector<1x128x128xbf16>
    %258 = vector.shape_cast %257 : vector<1x128x128xbf16> to vector<128x128xbf16>
    %cst_114 = arith.constant dense<0.000000e+00> : vector<32x128xf32>
    %259 = tpu.matmul %256, %258, %cst_114 {dimension_numbers = #tpu.dot_dimension_numbers<[1], [0], [0], [1], [0, 0, 1, 1], [], []>} : vector<32x128xbf16>, vector<128x128xbf16>, vector<32x128xf32> -> vector<32x128xf32>
    %260 = arith.addf %247, %259 : vector<32x128xf32>
    %261 = vector.extract_strided_slice %87 {offsets = [17, 0], sizes = [16, 256], strides = [1, 1]} : vector<42x256xbf16> to vector<16x256xbf16>
    %262 = vector.extract_strided_slice %89 {offsets = [17, 0], sizes = [16, 256], strides = [1, 1]} : vector<42x256xbf16> to vector<16x256xbf16>
    %263 = tpu.concatenate %261, %262 in 0 : vector<16x256xbf16>, vector<16x256xbf16> -> vector<32x256xbf16>
    %cst_115 = arith.constant 0.000000e+00 : bf16
    %264 = vector.broadcast %cst_115 : bf16 to vector<32x256xbf16>
    %265 = vector.shape_cast %76 : vector<32x1xi1> to vector<32x1xi1>
    %266 = vector.broadcast %265 : vector<32x1xi1> to vector<32x256xi1>
    %267 = arith.select %266, %263, %264 : vector<32x256xi1>, vector<32x256xbf16>
    %268 = vector.extract_strided_slice %267 {offsets = [0, 128], sizes = [32, 128], strides = [1, 1]} : vector<32x256xbf16> to vector<32x128xbf16>
    %c13 = arith.constant 13 : index
    %c0_116 = arith.constant 0 : index
    %c0_117 = arith.constant 0 : index
    %269 = vector.load %arg5[%c13, %c0_116, %c0_117] : memref<25x128x128xbf16, #tpu.memory_space<vmem>>, vector<1x128x128xbf16>
    %270 = vector.shape_cast %269 : vector<1x128x128xbf16> to vector<128x128xbf16>
    %cst_118 = arith.constant dense<0.000000e+00> : vector<32x128xf32>
    %271 = tpu.matmul %268, %270, %cst_118 {dimension_numbers = #tpu.dot_dimension_numbers<[1], [0], [0], [1], [0, 0, 1, 1], [], []>} : vector<32x128xbf16>, vector<128x128xbf16>, vector<32x128xf32> -> vector<32x128xf32>
    %272 = arith.addf %255, %271 : vector<32x128xf32>
    %273 = vector.extract_strided_slice %267 {offsets = [0, 0], sizes = [32, 128], strides = [1, 1]} : vector<32x256xbf16> to vector<32x128xbf16>
    %c5_119 = arith.constant 5 : index
    %c0_120 = arith.constant 0 : index
    %c0_121 = arith.constant 0 : index
    %274 = vector.load %arg4[%c5_119, %c0_120, %c0_121] : memref<9x128x128xbf16, #tpu.memory_space<vmem>>, vector<1x128x128xbf16>
    %275 = vector.shape_cast %274 : vector<1x128x128xbf16> to vector<128x128xbf16>
    %cst_122 = arith.constant dense<0.000000e+00> : vector<32x128xf32>
    %276 = tpu.matmul %273, %275, %cst_122 {dimension_numbers = #tpu.dot_dimension_numbers<[1], [0], [0], [1], [0, 0, 1, 1], [], []>} : vector<32x128xbf16>, vector<128x128xbf16>, vector<32x128xf32> -> vector<32x128xf32>
    %277 = arith.addf %260, %276 : vector<32x128xf32>
    %278 = vector.extract_strided_slice %87 {offsets = [18, 0], sizes = [16, 256], strides = [1, 1]} : vector<42x256xbf16> to vector<16x256xbf16>
    %279 = vector.extract_strided_slice %89 {offsets = [18, 0], sizes = [16, 256], strides = [1, 1]} : vector<42x256xbf16> to vector<16x256xbf16>
    %280 = tpu.concatenate %278, %279 in 0 : vector<16x256xbf16>, vector<16x256xbf16> -> vector<32x256xbf16>
    %cst_123 = arith.constant 0.000000e+00 : bf16
    %281 = vector.broadcast %cst_123 : bf16 to vector<32x256xbf16>
    %282 = vector.shape_cast %85 : vector<32x1xi1> to vector<32x1xi1>
    %283 = vector.broadcast %282 : vector<32x1xi1> to vector<32x256xi1>
    %284 = arith.select %283, %280, %281 : vector<32x256xi1>, vector<32x256xbf16>
    %285 = vector.extract_strided_slice %284 {offsets = [0, 128], sizes = [32, 128], strides = [1, 1]} : vector<32x256xbf16> to vector<32x128xbf16>
    %c14 = arith.constant 14 : index
    %c0_124 = arith.constant 0 : index
    %c0_125 = arith.constant 0 : index
    %286 = vector.load %arg5[%c14, %c0_124, %c0_125] : memref<25x128x128xbf16, #tpu.memory_space<vmem>>, vector<1x128x128xbf16>
    %287 = vector.shape_cast %286 : vector<1x128x128xbf16> to vector<128x128xbf16>
    %cst_126 = arith.constant dense<0.000000e+00> : vector<32x128xf32>
    %288 = tpu.matmul %285, %287, %cst_126 {dimension_numbers = #tpu.dot_dimension_numbers<[1], [0], [0], [1], [0, 0, 1, 1], [], []>} : vector<32x128xbf16>, vector<128x128xbf16>, vector<32x128xf32> -> vector<32x128xf32>
    %289 = arith.addf %272, %288 : vector<32x128xf32>
    %290 = vector.extract_strided_slice %87 {offsets = [18, 0], sizes = [16, 256], strides = [1, 1]} : vector<42x256xbf16> to vector<16x256xbf16>
    %291 = vector.extract_strided_slice %89 {offsets = [18, 0], sizes = [16, 256], strides = [1, 1]} : vector<42x256xbf16> to vector<16x256xbf16>
    %292 = tpu.concatenate %290, %291 in 0 : vector<16x256xbf16>, vector<16x256xbf16> -> vector<32x256xbf16>
    %cst_127 = arith.constant 0.000000e+00 : bf16
    %293 = vector.broadcast %cst_127 : bf16 to vector<32x256xbf16>
    %294 = vector.shape_cast %58 : vector<32x1xi1> to vector<32x1xi1>
    %295 = vector.broadcast %294 : vector<32x1xi1> to vector<32x256xi1>
    %296 = arith.select %295, %292, %293 : vector<32x256xi1>, vector<32x256xbf16>
    %297 = vector.extract_strided_slice %296 {offsets = [0, 128], sizes = [32, 128], strides = [1, 1]} : vector<32x256xbf16> to vector<32x128xbf16>
    %c15 = arith.constant 15 : index
    %c0_128 = arith.constant 0 : index
    %c0_129 = arith.constant 0 : index
    %298 = vector.load %arg5[%c15, %c0_128, %c0_129] : memref<25x128x128xbf16, #tpu.memory_space<vmem>>, vector<1x128x128xbf16>
    %299 = vector.shape_cast %298 : vector<1x128x128xbf16> to vector<128x128xbf16>
    %cst_130 = arith.constant dense<0.000000e+00> : vector<32x128xf32>
    %300 = tpu.matmul %297, %299, %cst_130 {dimension_numbers = #tpu.dot_dimension_numbers<[1], [0], [0], [1], [0, 0, 1, 1], [], []>} : vector<32x128xbf16>, vector<128x128xbf16>, vector<32x128xf32> -> vector<32x128xf32>
    %301 = arith.addf %289, %300 : vector<32x128xf32>
    %302 = vector.extract_strided_slice %87 {offsets = [19, 0], sizes = [16, 256], strides = [1, 1]} : vector<42x256xbf16> to vector<16x256xbf16>
    %303 = vector.extract_strided_slice %89 {offsets = [19, 0], sizes = [16, 256], strides = [1, 1]} : vector<42x256xbf16> to vector<16x256xbf16>
    %304 = tpu.concatenate %302, %303 in 0 : vector<16x256xbf16>, vector<16x256xbf16> -> vector<32x256xbf16>
    %cst_131 = arith.constant 0.000000e+00 : bf16
    %305 = vector.broadcast %cst_131 : bf16 to vector<32x256xbf16>
    %306 = vector.shape_cast %67 : vector<32x1xi1> to vector<32x1xi1>
    %307 = vector.broadcast %306 : vector<32x1xi1> to vector<32x256xi1>
    %308 = arith.select %307, %304, %305 : vector<32x256xi1>, vector<32x256xbf16>
    %309 = vector.extract_strided_slice %308 {offsets = [0, 128], sizes = [32, 128], strides = [1, 1]} : vector<32x256xbf16> to vector<32x128xbf16>
    %c16_132 = arith.constant 16 : index
    %c0_133 = arith.constant 0 : index
    %c0_134 = arith.constant 0 : index
    %310 = vector.load %arg5[%c16_132, %c0_133, %c0_134] : memref<25x128x128xbf16, #tpu.memory_space<vmem>>, vector<1x128x128xbf16>
    %311 = vector.shape_cast %310 : vector<1x128x128xbf16> to vector<128x128xbf16>
    %cst_135 = arith.constant dense<0.000000e+00> : vector<32x128xf32>
    %312 = tpu.matmul %309, %311, %cst_135 {dimension_numbers = #tpu.dot_dimension_numbers<[1], [0], [0], [1], [0, 0, 1, 1], [], []>} : vector<32x128xbf16>, vector<128x128xbf16>, vector<32x128xf32> -> vector<32x128xf32>
    %313 = arith.addf %301, %312 : vector<32x128xf32>
    %314 = vector.extract_strided_slice %308 {offsets = [0, 0], sizes = [32, 128], strides = [1, 1]} : vector<32x256xbf16> to vector<32x128xbf16>
    %c6_136 = arith.constant 6 : index
    %c0_137 = arith.constant 0 : index
    %c0_138 = arith.constant 0 : index
    %315 = vector.load %arg4[%c6_136, %c0_137, %c0_138] : memref<9x128x128xbf16, #tpu.memory_space<vmem>>, vector<1x128x128xbf16>
    %316 = vector.shape_cast %315 : vector<1x128x128xbf16> to vector<128x128xbf16>
    %cst_139 = arith.constant dense<0.000000e+00> : vector<32x128xf32>
    %317 = tpu.matmul %314, %316, %cst_139 {dimension_numbers = #tpu.dot_dimension_numbers<[1], [0], [0], [1], [0, 0, 1, 1], [], []>} : vector<32x128xbf16>, vector<128x128xbf16>, vector<32x128xf32> -> vector<32x128xf32>
    %318 = arith.addf %277, %317 : vector<32x128xf32>
    %319 = vector.extract_strided_slice %87 {offsets = [20, 0], sizes = [16, 256], strides = [1, 1]} : vector<42x256xbf16> to vector<16x256xbf16>
    %320 = vector.extract_strided_slice %89 {offsets = [20, 0], sizes = [16, 256], strides = [1, 1]} : vector<42x256xbf16> to vector<16x256xbf16>
    %321 = tpu.concatenate %319, %320 in 0 : vector<16x256xbf16>, vector<16x256xbf16> -> vector<32x256xbf16>
    %322 = vector.extract_strided_slice %321 {offsets = [0, 128], sizes = [32, 128], strides = [1, 1]} : vector<32x256xbf16> to vector<32x128xbf16>
    %c17 = arith.constant 17 : index
    %c0_140 = arith.constant 0 : index
    %c0_141 = arith.constant 0 : index
    %323 = vector.load %arg5[%c17, %c0_140, %c0_141] : memref<25x128x128xbf16, #tpu.memory_space<vmem>>, vector<1x128x128xbf16>
    %324 = vector.shape_cast %323 : vector<1x128x128xbf16> to vector<128x128xbf16>
    %cst_142 = arith.constant dense<0.000000e+00> : vector<32x128xf32>
    %325 = tpu.matmul %322, %324, %cst_142 {dimension_numbers = #tpu.dot_dimension_numbers<[1], [0], [0], [1], [0, 0, 1, 1], [], []>} : vector<32x128xbf16>, vector<128x128xbf16>, vector<32x128xf32> -> vector<32x128xf32>
    %326 = arith.addf %313, %325 : vector<32x128xf32>
    %327 = vector.extract_strided_slice %321 {offsets = [0, 0], sizes = [32, 128], strides = [1, 1]} : vector<32x256xbf16> to vector<32x128xbf16>
    %c7_143 = arith.constant 7 : index
    %c0_144 = arith.constant 0 : index
    %c0_145 = arith.constant 0 : index
    %328 = vector.load %arg4[%c7_143, %c0_144, %c0_145] : memref<9x128x128xbf16, #tpu.memory_space<vmem>>, vector<1x128x128xbf16>
    %329 = vector.shape_cast %328 : vector<1x128x128xbf16> to vector<128x128xbf16>
    %cst_146 = arith.constant dense<0.000000e+00> : vector<32x128xf32>
    %330 = tpu.matmul %327, %329, %cst_146 {dimension_numbers = #tpu.dot_dimension_numbers<[1], [0], [0], [1], [0, 0, 1, 1], [], []>} : vector<32x128xbf16>, vector<128x128xbf16>, vector<32x128xf32> -> vector<32x128xf32>
    %331 = arith.addf %318, %330 : vector<32x128xf32>
    %332 = vector.extract_strided_slice %87 {offsets = [21, 0], sizes = [16, 256], strides = [1, 1]} : vector<42x256xbf16> to vector<16x256xbf16>
    %333 = vector.extract_strided_slice %89 {offsets = [21, 0], sizes = [16, 256], strides = [1, 1]} : vector<42x256xbf16> to vector<16x256xbf16>
    %334 = tpu.concatenate %332, %333 in 0 : vector<16x256xbf16>, vector<16x256xbf16> -> vector<32x256xbf16>
    %cst_147 = arith.constant 0.000000e+00 : bf16
    %335 = vector.broadcast %cst_147 : bf16 to vector<32x256xbf16>
    %336 = vector.shape_cast %76 : vector<32x1xi1> to vector<32x1xi1>
    %337 = vector.broadcast %336 : vector<32x1xi1> to vector<32x256xi1>
    %338 = arith.select %337, %334, %335 : vector<32x256xi1>, vector<32x256xbf16>
    %339 = vector.extract_strided_slice %338 {offsets = [0, 128], sizes = [32, 128], strides = [1, 1]} : vector<32x256xbf16> to vector<32x128xbf16>
    %c18 = arith.constant 18 : index
    %c0_148 = arith.constant 0 : index
    %c0_149 = arith.constant 0 : index
    %340 = vector.load %arg5[%c18, %c0_148, %c0_149] : memref<25x128x128xbf16, #tpu.memory_space<vmem>>, vector<1x128x128xbf16>
    %341 = vector.shape_cast %340 : vector<1x128x128xbf16> to vector<128x128xbf16>
    %cst_150 = arith.constant dense<0.000000e+00> : vector<32x128xf32>
    %342 = tpu.matmul %339, %341, %cst_150 {dimension_numbers = #tpu.dot_dimension_numbers<[1], [0], [0], [1], [0, 0, 1, 1], [], []>} : vector<32x128xbf16>, vector<128x128xbf16>, vector<32x128xf32> -> vector<32x128xf32>
    %343 = arith.addf %326, %342 : vector<32x128xf32>
    %344 = vector.extract_strided_slice %338 {offsets = [0, 0], sizes = [32, 128], strides = [1, 1]} : vector<32x256xbf16> to vector<32x128xbf16>
    %c8_151 = arith.constant 8 : index
    %c0_152 = arith.constant 0 : index
    %c0_153 = arith.constant 0 : index
    %345 = vector.load %arg4[%c8_151, %c0_152, %c0_153] : memref<9x128x128xbf16, #tpu.memory_space<vmem>>, vector<1x128x128xbf16>
    %346 = vector.shape_cast %345 : vector<1x128x128xbf16> to vector<128x128xbf16>
    %cst_154 = arith.constant dense<0.000000e+00> : vector<32x128xf32>
    %347 = tpu.matmul %344, %346, %cst_154 {dimension_numbers = #tpu.dot_dimension_numbers<[1], [0], [0], [1], [0, 0, 1, 1], [], []>} : vector<32x128xbf16>, vector<128x128xbf16>, vector<32x128xf32> -> vector<32x128xf32>
    %348 = arith.addf %331, %347 : vector<32x128xf32>
    %349 = vector.extract_strided_slice %87 {offsets = [22, 0], sizes = [16, 256], strides = [1, 1]} : vector<42x256xbf16> to vector<16x256xbf16>
    %350 = vector.extract_strided_slice %89 {offsets = [22, 0], sizes = [16, 256], strides = [1, 1]} : vector<42x256xbf16> to vector<16x256xbf16>
    %351 = tpu.concatenate %349, %350 in 0 : vector<16x256xbf16>, vector<16x256xbf16> -> vector<32x256xbf16>
    %cst_155 = arith.constant 0.000000e+00 : bf16
    %352 = vector.broadcast %cst_155 : bf16 to vector<32x256xbf16>
    %353 = vector.shape_cast %85 : vector<32x1xi1> to vector<32x1xi1>
    %354 = vector.broadcast %353 : vector<32x1xi1> to vector<32x256xi1>
    %355 = arith.select %354, %351, %352 : vector<32x256xi1>, vector<32x256xbf16>
    %356 = vector.extract_strided_slice %355 {offsets = [0, 128], sizes = [32, 128], strides = [1, 1]} : vector<32x256xbf16> to vector<32x128xbf16>
    %c19 = arith.constant 19 : index
    %c0_156 = arith.constant 0 : index
    %c0_157 = arith.constant 0 : index
    %357 = vector.load %arg5[%c19, %c0_156, %c0_157] : memref<25x128x128xbf16, #tpu.memory_space<vmem>>, vector<1x128x128xbf16>
    %358 = vector.shape_cast %357 : vector<1x128x128xbf16> to vector<128x128xbf16>
    %cst_158 = arith.constant dense<0.000000e+00> : vector<32x128xf32>
    %359 = tpu.matmul %356, %358, %cst_158 {dimension_numbers = #tpu.dot_dimension_numbers<[1], [0], [0], [1], [0, 0, 1, 1], [], []>} : vector<32x128xbf16>, vector<128x128xbf16>, vector<32x128xf32> -> vector<32x128xf32>
    %360 = arith.addf %343, %359 : vector<32x128xf32>
    %361 = vector.extract_strided_slice %87 {offsets = [22, 0], sizes = [16, 256], strides = [1, 1]} : vector<42x256xbf16> to vector<16x256xbf16>
    %362 = vector.extract_strided_slice %89 {offsets = [22, 0], sizes = [16, 256], strides = [1, 1]} : vector<42x256xbf16> to vector<16x256xbf16>
    %363 = tpu.concatenate %361, %362 in 0 : vector<16x256xbf16>, vector<16x256xbf16> -> vector<32x256xbf16>
    %cst_159 = arith.constant 0.000000e+00 : bf16
    %364 = vector.broadcast %cst_159 : bf16 to vector<32x256xbf16>
    %365 = vector.shape_cast %58 : vector<32x1xi1> to vector<32x1xi1>
    %366 = vector.broadcast %365 : vector<32x1xi1> to vector<32x256xi1>
    %367 = arith.select %366, %363, %364 : vector<32x256xi1>, vector<32x256xbf16>
    %368 = vector.extract_strided_slice %367 {offsets = [0, 128], sizes = [32, 128], strides = [1, 1]} : vector<32x256xbf16> to vector<32x128xbf16>
    %c20 = arith.constant 20 : index
    %c0_160 = arith.constant 0 : index
    %c0_161 = arith.constant 0 : index
    %369 = vector.load %arg5[%c20, %c0_160, %c0_161] : memref<25x128x128xbf16, #tpu.memory_space<vmem>>, vector<1x128x128xbf16>
    %370 = vector.shape_cast %369 : vector<1x128x128xbf16> to vector<128x128xbf16>
    %cst_162 = arith.constant dense<0.000000e+00> : vector<32x128xf32>
    %371 = tpu.matmul %368, %370, %cst_162 {dimension_numbers = #tpu.dot_dimension_numbers<[1], [0], [0], [1], [0, 0, 1, 1], [], []>} : vector<32x128xbf16>, vector<128x128xbf16>, vector<32x128xf32> -> vector<32x128xf32>
    %372 = arith.addf %360, %371 : vector<32x128xf32>
    %373 = vector.extract_strided_slice %87 {offsets = [23, 0], sizes = [16, 256], strides = [1, 1]} : vector<42x256xbf16> to vector<16x256xbf16>
    %374 = vector.extract_strided_slice %89 {offsets = [23, 0], sizes = [16, 256], strides = [1, 1]} : vector<42x256xbf16> to vector<16x256xbf16>
    %375 = tpu.concatenate %373, %374 in 0 : vector<16x256xbf16>, vector<16x256xbf16> -> vector<32x256xbf16>
    %cst_163 = arith.constant 0.000000e+00 : bf16
    %376 = vector.broadcast %cst_163 : bf16 to vector<32x256xbf16>
    %377 = vector.shape_cast %67 : vector<32x1xi1> to vector<32x1xi1>
    %378 = vector.broadcast %377 : vector<32x1xi1> to vector<32x256xi1>
    %379 = arith.select %378, %375, %376 : vector<32x256xi1>, vector<32x256xbf16>
    %380 = vector.extract_strided_slice %379 {offsets = [0, 128], sizes = [32, 128], strides = [1, 1]} : vector<32x256xbf16> to vector<32x128xbf16>
    %c21 = arith.constant 21 : index
    %c0_164 = arith.constant 0 : index
    %c0_165 = arith.constant 0 : index
    %381 = vector.load %arg5[%c21, %c0_164, %c0_165] : memref<25x128x128xbf16, #tpu.memory_space<vmem>>, vector<1x128x128xbf16>
    %382 = vector.shape_cast %381 : vector<1x128x128xbf16> to vector<128x128xbf16>
    %cst_166 = arith.constant dense<0.000000e+00> : vector<32x128xf32>
    %383 = tpu.matmul %380, %382, %cst_166 {dimension_numbers = #tpu.dot_dimension_numbers<[1], [0], [0], [1], [0, 0, 1, 1], [], []>} : vector<32x128xbf16>, vector<128x128xbf16>, vector<32x128xf32> -> vector<32x128xf32>
    %384 = arith.addf %372, %383 : vector<32x128xf32>
    %385 = vector.extract_strided_slice %87 {offsets = [24, 0], sizes = [16, 256], strides = [1, 1]} : vector<42x256xbf16> to vector<16x256xbf16>
    %386 = vector.extract_strided_slice %89 {offsets = [24, 0], sizes = [16, 256], strides = [1, 1]} : vector<42x256xbf16> to vector<16x256xbf16>
    %387 = tpu.concatenate %385, %386 in 0 : vector<16x256xbf16>, vector<16x256xbf16> -> vector<32x256xbf16>
    %388 = vector.extract_strided_slice %387 {offsets = [0, 128], sizes = [32, 128], strides = [1, 1]} : vector<32x256xbf16> to vector<32x128xbf16>
    %c22 = arith.constant 22 : index
    %c0_167 = arith.constant 0 : index
    %c0_168 = arith.constant 0 : index
    %389 = vector.load %arg5[%c22, %c0_167, %c0_168] : memref<25x128x128xbf16, #tpu.memory_space<vmem>>, vector<1x128x128xbf16>
    %390 = vector.shape_cast %389 : vector<1x128x128xbf16> to vector<128x128xbf16>
    %cst_169 = arith.constant dense<0.000000e+00> : vector<32x128xf32>
    %391 = tpu.matmul %388, %390, %cst_169 {dimension_numbers = #tpu.dot_dimension_numbers<[1], [0], [0], [1], [0, 0, 1, 1], [], []>} : vector<32x128xbf16>, vector<128x128xbf16>, vector<32x128xf32> -> vector<32x128xf32>
    %392 = arith.addf %384, %391 : vector<32x128xf32>
    %393 = vector.extract_strided_slice %87 {offsets = [25, 0], sizes = [16, 256], strides = [1, 1]} : vector<42x256xbf16> to vector<16x256xbf16>
    %394 = vector.extract_strided_slice %89 {offsets = [25, 0], sizes = [16, 256], strides = [1, 1]} : vector<42x256xbf16> to vector<16x256xbf16>
    %395 = tpu.concatenate %393, %394 in 0 : vector<16x256xbf16>, vector<16x256xbf16> -> vector<32x256xbf16>
    %cst_170 = arith.constant 0.000000e+00 : bf16
    %396 = vector.broadcast %cst_170 : bf16 to vector<32x256xbf16>
    %397 = vector.shape_cast %76 : vector<32x1xi1> to vector<32x1xi1>
    %398 = vector.broadcast %397 : vector<32x1xi1> to vector<32x256xi1>
    %399 = arith.select %398, %395, %396 : vector<32x256xi1>, vector<32x256xbf16>
    %400 = vector.extract_strided_slice %399 {offsets = [0, 128], sizes = [32, 128], strides = [1, 1]} : vector<32x256xbf16> to vector<32x128xbf16>
    %c23 = arith.constant 23 : index
    %c0_171 = arith.constant 0 : index
    %c0_172 = arith.constant 0 : index
    %401 = vector.load %arg5[%c23, %c0_171, %c0_172] : memref<25x128x128xbf16, #tpu.memory_space<vmem>>, vector<1x128x128xbf16>
    %402 = vector.shape_cast %401 : vector<1x128x128xbf16> to vector<128x128xbf16>
    %cst_173 = arith.constant dense<0.000000e+00> : vector<32x128xf32>
    %403 = tpu.matmul %400, %402, %cst_173 {dimension_numbers = #tpu.dot_dimension_numbers<[1], [0], [0], [1], [0, 0, 1, 1], [], []>} : vector<32x128xbf16>, vector<128x128xbf16>, vector<32x128xf32> -> vector<32x128xf32>
    %404 = arith.addf %392, %403 : vector<32x128xf32>
    %405 = vector.extract_strided_slice %87 {offsets = [26, 0], sizes = [16, 256], strides = [1, 1]} : vector<42x256xbf16> to vector<16x256xbf16>
    %406 = vector.extract_strided_slice %89 {offsets = [26, 0], sizes = [16, 256], strides = [1, 1]} : vector<42x256xbf16> to vector<16x256xbf16>
    %407 = tpu.concatenate %405, %406 in 0 : vector<16x256xbf16>, vector<16x256xbf16> -> vector<32x256xbf16>
    %cst_174 = arith.constant 0.000000e+00 : bf16
    %408 = vector.broadcast %cst_174 : bf16 to vector<32x256xbf16>
    %409 = vector.shape_cast %85 : vector<32x1xi1> to vector<32x1xi1>
    %410 = vector.broadcast %409 : vector<32x1xi1> to vector<32x256xi1>
    %411 = arith.select %410, %407, %408 : vector<32x256xi1>, vector<32x256xbf16>
    %412 = vector.extract_strided_slice %411 {offsets = [0, 128], sizes = [32, 128], strides = [1, 1]} : vector<32x256xbf16> to vector<32x128xbf16>
    %c24 = arith.constant 24 : index
    %c0_175 = arith.constant 0 : index
    %c0_176 = arith.constant 0 : index
    %413 = vector.load %arg5[%c24, %c0_175, %c0_176] : memref<25x128x128xbf16, #tpu.memory_space<vmem>>, vector<1x128x128xbf16>
    %414 = vector.shape_cast %413 : vector<1x128x128xbf16> to vector<128x128xbf16>
    %cst_177 = arith.constant dense<0.000000e+00> : vector<32x128xf32>
    %415 = tpu.matmul %412, %414, %cst_177 {dimension_numbers = #tpu.dot_dimension_numbers<[1], [0], [0], [1], [0, 0, 1, 1], [], []>} : vector<32x128xbf16>, vector<128x128xbf16>, vector<32x128xf32> -> vector<32x128xf32>
    %416 = arith.addf %404, %415 : vector<32x128xf32>
    %417 = vector.extract_strided_slice %348 {offsets = [0, 0], sizes = [16, 128], strides = [1, 1]} : vector<32x128xf32> to vector<16x128xf32>
    %418 = arith.truncf %417 : vector<16x128xf32> to vector<16x128xbf16>
    %c0_178 = arith.constant 0 : index
    %c0_179 = arith.constant 0 : index
    %c0_180 = arith.constant 0 : index
    %419 = vector.load %arg6[%c0_178, %c0_179, %c0_180] : memref<2x16x256xbf16, #tpu.memory_space<vmem>>, vector<1x16x128xbf16>
    %420 = vector.shape_cast %419 : vector<1x16x128xbf16> to vector<16x128xbf16>
    %421 = vector.shape_cast %418 : vector<16x128xbf16> to vector<1x16x128xbf16>
    tpu.vector_store %arg6[%c0_178, %c0_179, %c0_180], %421 {strides = array<i32>} : memref<2x16x256xbf16, #tpu.memory_space<vmem>>, vector<1x16x128xbf16>,
    %422 = vector.extract_strided_slice %416 {offsets = [0, 0], sizes = [16, 128], strides = [1, 1]} : vector<32x128xf32> to vector<16x128xf32>
    %423 = arith.truncf %422 : vector<16x128xf32> to vector<16x128xbf16>
    %c0_181 = arith.constant 0 : index
    %c0_182 = arith.constant 0 : index
    %c128 = arith.constant 128 : index
    %424 = vector.load %arg6[%c0_181, %c0_182, %c128] : memref<2x16x256xbf16, #tpu.memory_space<vmem>>, vector<1x16x128xbf16>
    %425 = vector.shape_cast %424 : vector<1x16x128xbf16> to vector<16x128xbf16>
    %426 = vector.shape_cast %423 : vector<16x128xbf16> to vector<1x16x128xbf16>
    tpu.vector_store %arg6[%c0_181, %c0_182, %c128], %426 {strides = array<i32>} : memref<2x16x256xbf16, #tpu.memory_space<vmem>>, vector<1x16x128xbf16>,
    %427 = vector.extract_strided_slice %348 {offsets = [16, 0], sizes = [16, 128], strides = [1, 1]} : vector<32x128xf32> to vector<16x128xf32>
    %428 = arith.truncf %427 : vector<16x128xf32> to vector<16x128xbf16>
    %c1_183 = arith.constant 1 : index
    %c0_184 = arith.constant 0 : index
    %c0_185 = arith.constant 0 : index
    %429 = vector.load %arg6[%c1_183, %c0_184, %c0_185] : memref<2x16x256xbf16, #tpu.memory_space<vmem>>, vector<1x16x128xbf16>
    %430 = vector.shape_cast %429 : vector<1x16x128xbf16> to vector<16x128xbf16>
    %431 = vector.shape_cast %428 : vector<16x128xbf16> to vector<1x16x128xbf16>
    tpu.vector_store %arg6[%c1_183, %c0_184, %c0_185], %431 {strides = array<i32>} : memref<2x16x256xbf16, #tpu.memory_space<vmem>>, vector<1x16x128xbf16>,
    %432 = vector.extract_strided_slice %416 {offsets = [16, 0], sizes = [16, 128], strides = [1, 1]} : vector<32x128xf32> to vector<16x128xf32>
    %433 = arith.truncf %432 : vector<16x128xf32> to vector<16x128xbf16>
    %c1_186 = arith.constant 1 : index
    %c0_187 = arith.constant 0 : index
    %c128_188 = arith.constant 128 : index
    %434 = vector.load %arg6[%c1_186, %c0_187, %c128_188] : memref<2x16x256xbf16, #tpu.memory_space<vmem>>, vector<1x16x128xbf16>
    %435 = vector.shape_cast %434 : vector<1x16x128xbf16> to vector<16x128xbf16>
    %436 = vector.shape_cast %433 : vector<16x128xbf16> to vector<1x16x128xbf16>
    tpu.vector_store %arg6[%c1_186, %c0_187, %c128_188], %436 {strides = array<i32>} : memref<2x16x256xbf16, #tpu.memory_space<vmem>>, vector<1x16x128xbf16>,
    %cst_189 = arith.constant dense<0.000000e+00> : vector<128xf32>
    %437 = vector.multi_reduction <add>, %348, %cst_189 [0] : vector<32x128xf32> to vector<128xf32>
    %438 = vector.shape_cast %437 : vector<128xf32> to vector<1x128xf32>
    %cst_190 = arith.constant dense<0.000000e+00> : vector<128xf32>
    %439 = vector.multi_reduction <add>, %416, %cst_190 [0] : vector<32x128xf32> to vector<128xf32>
    %440 = vector.shape_cast %439 : vector<128xf32> to vector<1x128xf32>
    %441 = tpu.concatenate %438, %440 in 1 : vector<1x128xf32>, vector<1x128xf32> -> vector<1x256xf32>
    %442 = arith.mulf %348, %348 : vector<32x128xf32>
    %cst_191 = arith.constant dense<0.000000e+00> : vector<128xf32>
    %443 = vector.multi_reduction <add>, %442, %cst_191 [0] : vector<32x128xf32> to vector<128xf32>
    %444 = vector.shape_cast %443 : vector<128xf32> to vector<1x128xf32>
    %445 = arith.mulf %416, %416 : vector<32x128xf32>
    %cst_192 = arith.constant dense<0.000000e+00> : vector<128xf32>
    %446 = vector.multi_reduction <add>, %445, %cst_192 [0] : vector<32x128xf32> to vector<128xf32>
    %447 = vector.shape_cast %446 : vector<128xf32> to vector<1x128xf32>
    %448 = tpu.concatenate %444, %447 in 1 : vector<1x128xf32>, vector<1x128xf32> -> vector<1x256xf32>
    %449 = tpu.concatenate %441, %448 in 0 : vector<1x256xf32>, vector<1x256xf32> -> vector<2x256xf32>
    %c0_193 = arith.constant 0 : index
    %c0_194 = arith.constant 0 : index
    %c0_195 = arith.constant 0 : index
    %450 = vector.load %arg7[%c0_193, %c0_194, %c0_195] : memref<1x2x256xf32, #tpu.memory_space<vmem>>, vector<1x2x256xf32>
    %451 = vector.shape_cast %450 : vector<1x2x256xf32> to vector<2x256xf32>
    %452 = vector.shape_cast %449 : vector<2x256xf32> to vector<1x2x256xf32>
    tpu.vector_store %arg7[%c0_193, %c0_194, %c0_195], %452 {strides = array<i32>} : memref<1x2x256xf32, #tpu.memory_space<vmem>>, vector<1x2x256xf32>,
    return
  }
  func.func @transform_0(%arg0: i32) -> (i32, i32, i32) {
    %c0_i32 = arith.constant 0 : i32
    %c0_i32_0 = arith.constant 0 : i32
    %c0_i32_1 = arith.constant 0 : i32
    return %arg0, %c0_i32, %c0_i32_0 : i32, i32, i32
  }
  func.func @transform_1(%arg0: i32) -> (i32, i32) {
    %c0_i32 = arith.constant 0 : i32
    %c0_i32_0 = arith.constant 0 : i32
    %c0_i32_1 = arith.constant 0 : i32
    return %c0_i32, %c0_i32_0 : i32, i32
  }
  func.func @transform_2(%arg0: i32) -> (i32, i32) {
    %c0_i32 = arith.constant 0 : i32
    %c0_i32_0 = arith.constant 0 : i32
    %c0_i32_1 = arith.constant 0 : i32
    return %c0_i32, %c0_i32_0 : i32, i32
  }
  func.func @transform_3(%arg0: i32) -> (i32, i32, i32) {
    %c0_i32 = arith.constant 0 : i32
    %c0_i32_0 = arith.constant 0 : i32
    %c0_i32_1 = arith.constant 0 : i32
    %c0_i32_2 = arith.constant 0 : i32
    return %c0_i32, %c0_i32_0, %c0_i32_1 : i32, i32, i32
  }
  func.func @transform_4(%arg0: i32) -> (i32, i32, i32) {
    %c0_i32 = arith.constant 0 : i32
    %c0_i32_0 = arith.constant 0 : i32
    %c0_i32_1 = arith.constant 0 : i32
    %c0_i32_2 = arith.constant 0 : i32
    return %c0_i32, %c0_i32_0, %c0_i32_1 : i32, i32, i32
  }
  func.func @transform_5(%arg0: i32) -> (i32, i32, i32) {
    %c0_i32 = arith.constant 0 : i32
    %c0_i32_0 = arith.constant 0 : i32
    %c0_i32_1 = arith.constant 0 : i32
    return %arg0, %c0_i32, %c0_i32_0 : i32, i32, i32
  }
  func.func @transform_6(%arg0: i32) -> (i32, i32, i32) {
    %c0_i32 = arith.constant 0 : i32
    %c0_i32_0 = arith.constant 0 : i32
    %c0_i32_1 = arith.constant 0 : i32
    return %arg0, %c0_i32, %c0_i32_0 : i32, i32, i32
  }
}

</mosaic_0001>

<llo_original>
// kernel: gam_attention_pallas.5
$region0: #{gam_attention_pallas.5}
  #allocation0 [shape = 'u32[]', space=smem, size = 0x4, offset = 0x4, fixed_abs, tag = 'smem constant byte address 0x4 - core index']
  #allocation1 [shape = 'u32[144,128]{1,0:T(1,128)}', space=vmem, size = 0x12000, scoped, tag = 'internal scratch']
  %s0 = inlined_call_operand.vmem [shape: f32[2,16,128], index: 0, kind: input, shape index: {}]
  %s1 = inlined_call_operand.vmem [shape: bf16[2,16,256], index: 1, kind: input, shape index: {}]
  %s2 = inlined_call_operand.vmem [shape: f32[1,256], index: 2, kind: input, shape index: {}]
  %s3 = inlined_call_operand.vmem [shape: f32[1,256], index: 3, kind: input, shape index: {}]
  %s4 = inlined_call_operand.hbm [shape: f32[2,16,128], index: 4, kind: output, shape index: {}]
  %s5 = sld [smem:[#allocation0]]
  $region26: #{gam_attention_pallas.5} parent=0
    _
  %s7 = ssub.s32 1, %s5
  %s8 = scalar_select 0, %s7, %s5
  $region1: #{gam_attention_pallas.5} parent=0
    #allocation2 [shape = 'u8[16384]{0}', space=vmem, size = 0x4000, scoped, tag = 'output window, operand 0, single buffered']
    #allocation3 [shape = 's32[1]{0}', space=sflag, size = 0x4, scoped, tag = 'scoped memory for gam_attention_pallas.5']
    %9 = vsyncpa [#allocation3], 0
    // Predicated region
    $region2: #{gam_attention_pallas.5} parent=1 // pred_check
      _
    $region3: #{gam_attention_pallas.5} parent=1 // pred_check_branch
      %11 = sbr.rel (0) target = $region5
    $region4: #{gam_attention_pallas.5} parent=1 // pred_region
      _
    $region5: #{gam_attention_pallas.5} parent=1 // pred_fallthru
      _
    // Predicated region
    $region6: #{gam_attention_pallas.5} parent=1 // pred_check
      _
    $region7: #{gam_attention_pallas.5} parent=1 // pred_check_branch
      %13 = sbr.rel (0) target = $region9
    $region8: #{gam_attention_pallas.5} parent=1 // pred_region
      _
    $region9: #{gam_attention_pallas.5} parent=1 // pred_fallthru
      _
    // Predicated region
    $region10: #{gam_attention_pallas.5} parent=1 // pred_check
      _
    $region11: #{gam_attention_pallas.5} parent=1 // pred_check_branch
      %15 = sbr.rel (0) target = $region13
    $region12: #{gam_attention_pallas.5} parent=1 // pred_region
      _
    $region13: #{gam_attention_pallas.5} parent=1 // pred_fallthru
      _
    // Predicated region
    $region14: #{gam_attention_pallas.5} parent=1 // pred_check
      _
    $region15: #{gam_attention_pallas.5} parent=1 // pred_check_branch
      %17 = sbr.rel (0) target = $region17
    $region16: #{gam_attention_pallas.5} parent=1 // pred_region
      _
    $region17: #{gam_attention_pallas.5} parent=1 // pred_fallthru
      _
    %v18 = vld [vmem:[%s1] sm:$0xff]
    %v19 = vld [vmem:[%s1 + $0x8] sm:$0xff]
    %v20 = vunpack.c.l.bf16 %v18
    %v21 = vunpack.c.h.bf16 %v18
    %v22 = vunpack.c.l.bf16 %v19
    %v23 = vunpack.c.h.bf16 %v19
    %v24 = vld [vmem:[%s2] sm:$0x3]
    %v26 = vlaneseq
    %v27 = vshrl.u32 %v26, 7
    %v28 = vsub.s32 0, %v27
    %v29 = vrot.slane %v24, %v28
    %v30 = vlaneseq
    %v31 = vshrl.u32 %v30, 7
    %v32 = vsub.s32 1, %v31
    %v33 = vrot.slane %v24, %v32
    %v36 = vmul.f32 %v20, %v29
    %v37 = vmul.f32 %v21, %v33
    %v38 = vmul.f32 %v22, %v29
    %v39 = vmul.f32 %v23, %v33
    %v40 = vld [vmem:[%s3] sm:$0x3]
    %v42 = vlaneseq
    %v43 = vshrl.u32 %v42, 7
    %v44 = vsub.s32 0, %v43
    %v45 = vrot.slane %v40, %v44
    %v46 = vlaneseq
    %v47 = vshrl.u32 %v46, 7
    %v48 = vsub.s32 1, %v47
    %v49 = vrot.slane %v40, %v48
    %v52 = vadd.f32 %v36, %v45
    %v53 = vadd.f32 %v37, %v49
    %v54 = vadd.f32 %v38, %v45
    %v55 = vadd.f32 %v39, %v49
    %v56 = vadd.f32 %v52, %v53
    %v57 = vadd.f32 %v54, %v55
    %v58 = vld [vmem:[%s0] sm:$0xff]
    %v59 = vld [vmem:[%s0 + $0x8] sm:$0xff]
    %v60 = vsub.f32 0.0, %v56
    %v61 = vsub.f32 0.0, %v57
    %v62 = vmul.f32 %v60, 1.442695
    %v63 = vpow.pop %v62
    %v64 = vmul.f32 %v61, 1.442695
    %v65 = vpow.pop %v64
    %v66 = vadd.f32 %v63, 1.0
    %v67 = vadd.f32 %v65, 1.0
    %v68 = vrcp.pop %v66
    %v69 = vrcp.pop %v67
    %v70 = vmul.f32 %v58, %v68
    %v71 = vmul.f32 %v59, %v69
    %72 = vst [vmem:[#allocation2] sm:$0xff] %v70
    %73 = vst [vmem:[#allocation2 + $0x8] sm:$0xff] %v71
    %s74 = scalar_lea.vmem %s1, 16
    %v75 = vld [vmem:[%s74] sm:$0xff]
    %v76 = vld [vmem:[%s74 + $0x8] sm:$0xff]
    %v77 = vunpack.c.l.bf16 %v75
    %v78 = vunpack.c.h.bf16 %v75
    %v79 = vunpack.c.l.bf16 %v76
    %v80 = vunpack.c.h.bf16 %v76
    %v81 = vld [vmem:[%s2] sm:$0x3]
    %v83 = vlaneseq
    %v84 = vshrl.u32 %v83, 7
    %v85 = vsub.s32 0, %v84
    %v86 = vrot.slane %v81, %v85
    %v87 = vlaneseq
    %v88 = vshrl.u32 %v87, 7
    %v89 = vsub.s32 1, %v88
    %v90 = vrot.slane %v81, %v89
    %v93 = vmul.f32 %v77, %v86
    %v94 = vmul.f32 %v78, %v90
    %v95 = vmul.f32 %v79, %v86
    %v96 = vmul.f32 %v80, %v90
    %v97 = vld [vmem:[%s3] sm:$0x3]
    %v99 = vlaneseq
    %v100 = vshrl.u32 %v99, 7
    %v101 = vsub.s32 0, %v100
    %v102 = vrot.slane %v97, %v101
    %v103 = vlaneseq
    %v104 = vshrl.u32 %v103, 7
    %v105 = vsub.s32 1, %v104
    %v106 = vrot.slane %v97, %v105
    %v109 = vadd.f32 %v93, %v102
    %v110 = vadd.f32 %v94, %v106
    %v111 = vadd.f32 %v95, %v102
    %v112 = vadd.f32 %v96, %v106
    %v113 = vadd.f32 %v109, %v110
    %v114 = vadd.f32 %v111, %v112
    %s115 = scalar_lea.vmem %s0, 16
    %v116 = vld [vmem:[%s115] sm:$0xff]
    %v117 = vld [vmem:[%s115 + $0x8] sm:$0xff]
    %v118 = vsub.f32 0.0, %v113
    %v119 = vsub.f32 0.0, %v114
    %v120 = vmul.f32 %v118, 1.442695
    %v121 = vpow.pop %v120
    %v122 = vmul.f32 %v119, 1.442695
    %v123 = vpow.pop %v122
    %v124 = vadd.f32 %v121, 1.0
    %v125 = vadd.f32 %v123, 1.0
    %v126 = vrcp.pop %v124
    %v127 = vrcp.pop %v125
    %v128 = vmul.f32 %v116, %v126
    %v129 = vmul.f32 %v117, %v127
    %s130 = scalar_lea.vmem [#allocation2], 16
    %131 = vst [vmem:[%s130] sm:$0xff] %v128
    %132 = vst [vmem:[%s130 + $0x8] sm:$0xff] %v129
    // Predicated region
    $region18: #{gam_attention_pallas.5} parent=1 // pred_check
      _
    $region19: #{gam_attention_pallas.5} parent=1 // pred_check_branch
      %134 = sbr.rel (0) target = $region21
    $region20: #{gam_attention_pallas.5} parent=1 // pred_region
      %s136 = ssub.s32 512, 512
      %137 = vsyncadd [#allocation3], %s136
      %s138 = sshll.u32 [#allocation2], 4
      %s139 = int_to_ptr.vmem [resolvable:$true] %s138
      %144 = dma.vmem_to_hbm [thread:$0]  %s139, 512, %s4, [#allocation3], 128, 128, 8
    $region21: #{gam_attention_pallas.5} parent=1 // pred_fallthru
      _
    // Predicated region
    $region22: #{gam_attention_pallas.5} parent=1 // pred_check
      _
    $region23: #{gam_attention_pallas.5} parent=1 // pred_check_branch
      %146 = sbr.rel (0) target = $region25
    $region24: #{gam_attention_pallas.5} parent=1 // pred_region
      %147 = dma.done [#allocation3], 512
    $region25: #{gam_attention_pallas.5} parent=1 // pred_fallthru
      _
    %148 = vsyncpa [#allocation3], 1

// kernel: gam_attention_pallas.3
$region0: #{gam_attention_pallas.3}
  #allocation0 [shape = 'u32[]', space=smem, size = 0x4, offset = 0x4, fixed_abs, tag = 'smem constant byte address 0x4 - core index']
  #allocation1 [shape = 'u32[144,128]{1,0:T(1,128)}', space=vmem, size = 0x12000, scoped, tag = 'internal scratch']
  #allocation2 [shape = 'bf16[2,42,128]{2,1,0:T(8,128)(2,1)}', space=vmem, size = 0x6000, scoped, tag = 'scratch operand']
  %s0 = inlined_call_operand.vmem [shape: f32[2,16,128], index: 0, kind: input, shape index: {}]
  %s1 = inlined_call_operand.vmem [shape: bf16[128,16], index: 1, kind: input, shape index: {}]
  %s2 = inlined_call_operand.vmem [shape: f32[128,1], index: 2, kind: input, shape index: {}]
  %s3 = inlined_call_operand.vmem [shape: bf16[16,128], index: 3, kind: input, shape index: {}]
  %s4 = inlined_call_operand.vmem [shape: f32[16,1], index: 4, kind: input, shape index: {}]
  %s5 = inlined_call_operand.vmem [shape: bf16[9,128,256], index: 5, kind: input, shape index: {}]
  %s6 = inlined_call_operand.vmem [shape: bf16[16,128,128], index: 6, kind: input, shape index: {}]
  %s7 = inlined_call_operand.vmem [shape: f32[2,16,128], index: 7, kind: output, shape index: {0}]
  %s8 = inlined_call_operand.vmem [shape: bf16[2,16,256], index: 8, kind: output, shape index: {1}]
  %s9 = inlined_call_operand.vmem [shape: f32[1,2,256], index: 9, kind: output, shape index: {2}]
  %10 = xla_tuple %s7, %s8, %s9
  %s11 = sld [smem:[#allocation0]]
  $region58: #{gam_attention_pallas.3} parent=0
    _
  %s13 = ssub.s32 1, %s11
  %s14 = scalar_select 0, %s13, %s11
  // Predicated region
  $region2: #{gam_attention_pallas.3} parent=0 // pred_check
    _
  $region3: #{gam_attention_pallas.3} parent=0 // pred_check_branch
    %16 = sbr.rel (0) target = $region5
  $region4: #{gam_attention_pallas.3} parent=0 // pred_region
    _
  $region5: #{gam_attention_pallas.3} parent=0 // pred_fallthru
    _
  // Predicated region
  $region6: #{gam_attention_pallas.3} parent=0 // pred_check
    _
  $region7: #{gam_attention_pallas.3} parent=0 // pred_check_branch
    %18 = sbr.rel (0) target = $region9
  $region8: #{gam_attention_pallas.3} parent=0 // pred_region
    _
  $region9: #{gam_attention_pallas.3} parent=0 // pred_fallthru
    _
  // Predicated region
  $region10: #{gam_attention_pallas.3} parent=0 // pred_check
    _
  $region11: #{gam_attention_pallas.3} parent=0 // pred_check_branch
    %20 = sbr.rel (0) target = $region13
  $region12: #{gam_attention_pallas.3} parent=0 // pred_region
    _
  $region13: #{gam_attention_pallas.3} parent=0 // pred_fallthru
    _
  // Predicated region
  $region14: #{gam_attention_pallas.3} parent=0 // pred_check
    _
  $region15: #{gam_attention_pallas.3} parent=0 // pred_check_branch
    %22 = sbr.rel (0) target = $region17
  $region16: #{gam_attention_pallas.3} parent=0 // pred_region
    _
  $region17: #{gam_attention_pallas.3} parent=0 // pred_fallthru
    _
  // Predicated region
  $region18: #{gam_attention_pallas.3} parent=0 // pred_check
    _
  $region19: #{gam_attention_pallas.3} parent=0 // pred_check_branch
    %24 = sbr.rel (0) target = $region21
  $region20: #{gam_attention_pallas.3} parent=0 // pred_region
    _
  $region21: #{gam_attention_pallas.3} parent=0 // pred_fallthru
    _
  // Predicated region
  $region22: #{gam_attention_pallas.3} parent=0 // pred_check
    _
  $region23: #{gam_attention_pallas.3} parent=0 // pred_check_branch
    %26 = sbr.rel (0) target = $region25
  $region24: #{gam_attention_pallas.3} parent=0 // pred_region
    _
  $region25: #{gam_attention_pallas.3} parent=0 // pred_fallthru
    _
  // Predicated region
  $region26: #{gam_attention_pallas.3} parent=0 // pred_check
    _
  $region27: #{gam_attention_pallas.3} parent=0 // pred_check_branch
    %28 = sbr.rel (0) target = $region29
  $region28: #{gam_attention_pallas.3} parent=0 // pred_region
    _
  $region29: #{gam_attention_pallas.3} parent=0 // pred_fallthru
    _
  %p32 = scmp.eq.s32.totalorder 0, 0
  // Predicated region
  $region30: #{gam_attention_pallas.3} parent=0 // pred_check
    %p33 = pneg %p32
  $region31: #{gam_attention_pallas.3} parent=0 // pred_check_branch
    %35 = sbr.rel (%p33) target = $region33
  $region32: #{gam_attention_pallas.3} parent=0 // pred_region
    %36 = vst [vmem:[#allocation2] sm:$0xf] 0
    %37 = vst [vmem:[#allocation2 + $0x4] sm:$0xf] 0
    %38 = vst [vmem:[#allocation2 + $0x8] sm:$0xf] 0
    %39 = vst [vmem:[#allocation2 + $0xc] sm:$0xf] 0
    %40 = vst [vmem:[#allocation2 + $0x10] sm:$0xf] 0
    %41 = vst [vmem:[#allocation2 + $0x14] sm:$0x1] 0
    %42 = vst [vmem:[#allocation2 + $0x18] sm:$0xf] 0
    %43 = vst [vmem:[#allocation2 + $0x1c] sm:$0xf] 0
    %44 = vst [vmem:[#allocation2 + $0x20] sm:$0xf] 0
    %45 = vst [vmem:[#allocation2 + $0x24] sm:$0xf] 0
    %46 = vst [vmem:[#allocation2 + $0x28] sm:$0xf] 0
    %47 = vst [vmem:[#allocation2 + $0x2c] sm:$0x1] 0
  $region33: #{gam_attention_pallas.3} parent=0 // pred_fallthru
    _
  %v48 = vld [vmem:[%s0] sm:$0xff]
  %v49 = vld [vmem:[%s0 + $0x8] sm:$0xff]
  %v50 = vld [vmem:[%s1] sm:$0xf]
  %v51 = vld [vmem:[%s1 + $0x4] sm:$0xf]
  %v52 = vld [vmem:[%s1 + $0x8] sm:$0xf]
  %v53 = vld [vmem:[%s1 + $0xc] sm:$0xf]
  %v54 = vld [vmem:[%s1 + $0x10] sm:$0xf]
  %v55 = vld [vmem:[%s1 + $0x14] sm:$0xf]
  %v56 = vld [vmem:[%s1 + $0x18] sm:$0xf]
  %v57 = vld [vmem:[%s1 + $0x1c] sm:$0xf]
  %v58 = vld [vmem:[%s1 + $0x20] sm:$0xf]
  %v59 = vld [vmem:[%s1 + $0x24] sm:$0xf]
  %v60 = vld [vmem:[%s1 + $0x28] sm:$0xf]
  %v61 = vld [vmem:[%s1 + $0x2c] sm:$0xf]
  %v62 = vld [vmem:[%s1 + $0x30] sm:$0xf]
  %v63 = vld [vmem:[%s1 + $0x34] sm:$0xf]
  %v64 = vld [vmem:[%s1 + $0x38] sm:$0xf]
  %v65 = vld [vmem:[%s1 + $0x3c] sm:$0xf]
  %v66 = vpack.c.bf16 %v49, %v48
  %v67 = vld [vmem:[%s2] sm:$0xff]
  %v68 = vld [vmem:[%s2 + $0x8] sm:$0xff]
  %v69 = vld [vmem:[%s2 + $0x10] sm:$0xff]
  %v70 = vld [vmem:[%s2 + $0x18] sm:$0xff]
  %v71 = vld [vmem:[%s2 + $0x20] sm:$0xff]
  %v72 = vld [vmem:[%s2 + $0x28] sm:$0xff]
  %v73 = vld [vmem:[%s2 + $0x30] sm:$0xff]
  %v74 = vld [vmem:[%s2 + $0x38] sm:$0xff]
  %v75 = vld [vmem:[%s2 + $0x40] sm:$0xff]
  %v76 = vld [vmem:[%s2 + $0x48] sm:$0xff]
  %v77 = vld [vmem:[%s2 + $0x50] sm:$0xff]
  %v78 = vld [vmem:[%s2 + $0x58] sm:$0xff]
  %v79 = vld [vmem:[%s2 + $0x60] sm:$0xff]
  %v80 = vld [vmem:[%s2 + $0x68] sm:$0xff]
  %v81 = vld [vmem:[%s2 + $0x70] sm:$0xff]
  %v82 = vld [vmem:[%s2 + $0x78] sm:$0xff]
  %84 = vset.pattern.permute.xlu0 0
  %85 = vperm.xlu0 %84, %v67
  %v86 = vpop.permute.xlu0 %85
  %89 = vset.pattern.permute.xlu0 0
  %90 = vperm.xlu0 %89, %v68
  %v91 = vpop.permute.xlu0 %90
  %94 = vset.pattern.permute.xlu0 0
  %95 = vperm.xlu0 %94, %v69
  %v96 = vpop.permute.xlu0 %95
  %99 = vset.pattern.permute.xlu0 0
  %100 = vperm.xlu0 %99, %v70
  %v101 = vpop.permute.xlu0 %100
  %104 = vset.pattern.permute.xlu0 0
  %105 = vperm.xlu0 %104, %v71
  %v106 = vpop.permute.xlu0 %105
  %109 = vset.pattern.permute.xlu0 0
  %110 = vperm.xlu0 %109, %v72
  %v111 = vpop.permute.xlu0 %110
  %114 = vset.pattern.permute.xlu0 0
  %115 = vperm.xlu0 %114, %v73
  %v116 = vpop.permute.xlu0 %115
  %119 = vset.pattern.permute.xlu0 0
  %120 = vperm.xlu0 %119, %v74
  %v121 = vpop.permute.xlu0 %120
  %124 = vset.pattern.permute.xlu0 0
  %125 = vperm.xlu0 %124, %v75
  %v126 = vpop.permute.xlu0 %125
  %129 = vset.pattern.permute.xlu0 0
  %130 = vperm.xlu0 %129, %v76
  %v131 = vpop.permute.xlu0 %130
  %134 = vset.pattern.permute.xlu0 0
  %135 = vperm.xlu0 %134, %v77
  %v136 = vpop.permute.xlu0 %135
  %139 = vset.pattern.permute.xlu0 0
  %140 = vperm.xlu0 %139, %v78
  %v141 = vpop.permute.xlu0 %140
  %144 = vset.pattern.permute.xlu0 0
  %145 = vperm.xlu0 %144, %v79
  %v146 = vpop.permute.xlu0 %145
  %149 = vset.pattern.permute.xlu0 0
  %150 = vperm.xlu0 %149, %v80
  %v151 = vpop.permute.xlu0 %150
  %154 = vset.pattern.permute.xlu0 0
  %155 = vperm.xlu0 %154, %v81
  %v156 = vpop.permute.xlu0 %155
  %159 = vset.pattern.permute.xlu0 0
  %160 = vperm.xlu0 %159, %v82
  %v161 = vpop.permute.xlu0 %160
  %v179 = vunpack.c.l.b16 %v50
  %v180 = vunpack.c.l.b16 %v51
  %v181 = vunpack.c.l.b16 %v52
  %v182 = vunpack.c.l.b16 %v53
  %v183 = vunpack.c.l.b16 %v54
  %v184 = vunpack.c.l.b16 %v55
  %v185 = vunpack.c.l.b16 %v56
  %v186 = vunpack.c.l.b16 %v57
  %v187 = vunpack.c.l.b16 %v58
  %v188 = vunpack.c.l.b16 %v59
  %v189 = vunpack.c.l.b16 %v60
  %v190 = vunpack.c.l.b16 %v61
  %v191 = vunpack.c.l.b16 %v62
  %v192 = vunpack.c.l.b16 %v63
  %v193 = vunpack.c.l.b16 %v64
  %v194 = vunpack.c.l.b16 %v65
  %v195 = vpack.c.b16 %v180, %v179
  %v196 = vpack.c.b16 %v182, %v181
  %v197 = vpack.c.b16 %v184, %v183
  %v198 = vpack.c.b16 %v186, %v185
  %v199 = vpack.c.b16 %v188, %v187
  %v200 = vpack.c.b16 %v190, %v189
  %v201 = vpack.c.b16 %v192, %v191
  %v202 = vpack.c.b16 %v194, %v193
  %vm203 = vcmask 130048
  %v205 = vsel %vm203, %v195, 0
  %v208 = vsel %vm203, %v196, 0
  %v211 = vsel %vm203, %v197, 0
  %v214 = vsel %vm203, %v198, 0
  %v217 = vsel %vm203, %v199, 0
  %v220 = vsel %vm203, %v200, 0
  %v223 = vsel %vm203, %v201, 0
  %v226 = vsel %vm203, %v202, 0
  %228 = vmatprep.subr.bf16.mxu0 0
  %229 = vmatpush1.bf16.msra.mxu0 0
  %230 = vmatprep.subr.bf16.mxu0 0
  %231 = vmatpush1.bf16.msra.mxu0 0
  %232 = vmatprep.subr.bf16.mxu0 0
  %233 = vmatpush1.bf16.msra.mxu0 0
  %234 = vmatprep.subr.bf16.mxu0 0
  %235 = vmatpush1.bf16.msra.mxu0 0
  %236 = vmatprep.subr.bf16.mxu0 0
  %237 = vmatpush1.bf16.msra.mxu0 0
  %238 = vmatprep.subr.bf16.mxu0 0
  %239 = vmatpush1.bf16.msra.mxu0 0
  %240 = vmatprep.subr.bf16.mxu0 0
  %241 = vmatpush1.bf16.msra.mxu0 0
  %242 = vmatprep.subr.bf16.mxu0 0
  %243 = vmatpush1.bf16.msra.mxu0 %v66
  %244 = vmatprep.subr.bf16.mxu0 0
  %245 = vmatpush2.bf16.msra.mxu0 0
  %246 = vmatprep.subr.bf16.mxu0 0
  %247 = vmatpush2.bf16.msra.mxu0 0
  %248 = vmatprep.subr.bf16.mxu0 0
  %249 = vmatpush2.bf16.msra.mxu0 0
  %250 = vmatprep.subr.bf16.mxu0 0
  %251 = vmatpush2.bf16.msra.mxu0 0
  %252 = vmatprep.subr.bf16.mxu0 0
  %253 = vmatpush2.bf16.msra.mxu0 0
  %254 = vmatprep.subr.bf16.mxu0 0
  %255 = vmatpush2.bf16.msra.mxu0 0
  %256 = vmatprep.subr.bf16.mxu0 0
  %257 = vmatpush2.bf16.msra.mxu0 0
  %258 = vmatprep.subr.bf16.mxu0 0
  %259 = vmatpush2.bf16.msra.mxu0 0
  %260 = vmatprep.mubr.bf16.mxu0 0
  %261 = vmatmul.mubr.bf16.gmra.mxu0 %v205
  %v262 = vpop.f32.mrf.mxu0
  %v263 = vadd.f32 %v86, %v262
  %v264 = vpop.f32.mrf.mxu0
  %v265 = vpop.f32.mrf.mxu0
  %v266 = vadd.f32 %v91, %v265
  %v267 = vpop.f32.mrf.mxu0
  %268 = vmatprep.mubr.bf16.mxu0 0
  %269 = vmatmul.mubr.bf16.gmra.mxu0 %v208
  %v270 = vpop.f32.mrf.mxu0
  %v271 = vadd.f32 %v96, %v270
  %v272 = vpop.f32.mrf.mxu0
  %v273 = vpop.f32.mrf.mxu0
  %v274 = vadd.f32 %v101, %v273
  %v275 = vpop.f32.mrf.mxu0
  %276 = vmatprep.mubr.bf16.mxu0 0
  %277 = vmatmul.mubr.bf16.gmra.mxu0 %v211
  %v278 = vpop.f32.mrf.mxu0
  %v279 = vadd.f32 %v106, %v278
  %v280 = vpop.f32.mrf.mxu0
  %v281 = vpop.f32.mrf.mxu0
  %v282 = vadd.f32 %v111, %v281
  %v283 = vpop.f32.mrf.mxu0
  %284 = vmatprep.mubr.bf16.mxu0 0
  %285 = vmatmul.mubr.bf16.gmra.mxu0 %v214
  %v286 = vpop.f32.mrf.mxu0
  %v287 = vadd.f32 %v116, %v286
  %v288 = vpop.f32.mrf.mxu0
  %v289 = vpop.f32.mrf.mxu0
  %v290 = vadd.f32 %v121, %v289
  %v291 = vpop.f32.mrf.mxu0
  %292 = vmatprep.mubr.bf16.mxu0 0
  %293 = vmatmul.mubr.bf16.gmra.mxu0 %v217
  %v294 = vpop.f32.mrf.mxu0
  %v295 = vadd.f32 %v126, %v294
  %v296 = vpop.f32.mrf.mxu0
  %v297 = vpop.f32.mrf.mxu0
  %v298 = vadd.f32 %v131, %v297
  %v299 = vpop.f32.mrf.mxu0
  %300 = vmatprep.mubr.bf16.mxu0 0
  %301 = vmatmul.mubr.bf16.gmra.mxu0 %v220
  %v302 = vpop.f32.mrf.mxu0
  %v303 = vadd.f32 %v136, %v302
  %v304 = vpop.f32.mrf.mxu0
  %v305 = vpop.f32.mrf.mxu0
  %v306 = vadd.f32 %v141, %v305
  %v307 = vpop.f32.mrf.mxu0
  %308 = vmatprep.mubr.bf16.mxu0 0
  %309 = vmatmul.mubr.bf16.gmra.mxu0 %v223
  %v310 = vpop.f32.mrf.mxu0
  %v311 = vadd.f32 %v146, %v310
  %v312 = vpop.f32.mrf.mxu0
  %v313 = vpop.f32.mrf.mxu0
  %v314 = vadd.f32 %v151, %v313
  %v315 = vpop.f32.mrf.mxu0
  %316 = vmatprep.mubr.bf16.mxu0 0
  %317 = vmatmul.mubr.bf16.gmra.mxu0 %v226
  %v318 = vpop.f32.mrf.mxu0
  %v319 = vadd.f32 %v156, %v318
  %v320 = vpop.f32.mrf.mxu0
  %v321 = vpop.f32.mrf.mxu0
  %v322 = vadd.f32 %v161, %v321
  %v323 = vpop.f32.mrf.mxu0
  %324 = vdwg.mxu0
  %v325 = vmax.f32 %v263, 0.0
  %v326 = vmax.f32 %v266, 0.0
  %v327 = vmax.f32 %v271, 0.0
  %v328 = vmax.f32 %v274, 0.0
  %v329 = vmax.f32 %v279, 0.0
  %v330 = vmax.f32 %v282, 0.0
  %v331 = vmax.f32 %v287, 0.0
  %v332 = vmax.f32 %v290, 0.0
  %v333 = vmax.f32 %v295, 0.0
  %v334 = vmax.f32 %v298, 0.0
  %v335 = vmax.f32 %v303, 0.0
  %v336 = vmax.f32 %v306, 0.0
  %v337 = vmax.f32 %v311, 0.0
  %v338 = vmax.f32 %v314, 0.0
  %v339 = vmax.f32 %v319, 0.0
  %v340 = vmax.f32 %v322, 0.0
  %v341 = vld [vmem:[%s3] sm:$0xf]
  %v342 = vld [vmem:[%s3 + $0x4] sm:$0xf]
  %v343 = vpack.c.bf16 %v326, %v325
  %v344 = vpack.c.bf16 %v328, %v327
  %v345 = vpack.c.bf16 %v330, %v329
  %v346 = vpack.c.bf16 %v332, %v331
  %v347 = vpack.c.bf16 %v334, %v333
  %v348 = vpack.c.bf16 %v336, %v335
  %v349 = vpack.c.bf16 %v338, %v337
  %v350 = vpack.c.bf16 %v340, %v339
  %v351 = vld [vmem:[%s4] sm:$0xff]
  %v352 = vld [vmem:[%s4 + $0x8] sm:$0xff]
  %354 = vset.pattern.permute.xlu0 0
  %355 = vperm.xlu0 %354, %v351
  %v356 = vpop.permute.xlu0 %355
  %359 = vset.pattern.permute.xlu0 0
  %360 = vperm.xlu0 %359, %v352
  %v361 = vpop.permute.xlu0 %360
  %v365 = vunpack.c.l.b16 %v341
  %v366 = vunpack.c.l.b16 %v342
  %v367 = vpack.c.b16 %v366, %v365
  %369 = vmatprep.subr.bf16.mxu0 0
  %370 = vmatpush1.bf16.msra.mxu0 %v350
  %371 = vmatprep.subr.bf16.mxu0 0
  %372 = vmatpush1.bf16.msra.mxu0 %v349
  %373 = vmatprep.subr.bf16.mxu0 0
  %374 = vmatpush1.bf16.msra.mxu0 %v348
  %375 = vmatprep.subr.bf16.mxu0 0
  %376 = vmatpush1.bf16.msra.mxu0 %v347
  %377 = vmatprep.subr.bf16.mxu0 0
  %378 = vmatpush1.bf16.msra.mxu0 %v346
  %379 = vmatprep.subr.bf16.mxu0 0
  %380 = vmatpush1.bf16.msra.mxu0 %v345
  %381 = vmatprep.subr.bf16.mxu0 0
  %382 = vmatpush1.bf16.msra.mxu0 %v344
  %383 = vmatprep.subr.bf16.mxu0 0
  %384 = vmatpush1.bf16.msra.mxu0 %v343
  %385 = vmatprep.subr.bf16.mxu0 0
  %386 = vmatpush2.bf16.msra.mxu0 0
  %387 = vmatprep.subr.bf16.mxu0 0
  %388 = vmatpush2.bf16.msra.mxu0 0
  %389 = vmatprep.subr.bf16.mxu0 0
  %390 = vmatpush2.bf16.msra.mxu0 0
  %391 = vmatprep.subr.bf16.mxu0 0
  %392 = vmatpush2.bf16.msra.mxu0 0
  %393 = vmatprep.subr.bf16.mxu0 0
  %394 = vmatpush2.bf16.msra.mxu0 0
  %395 = vmatprep.subr.bf16.mxu0 0
  %396 = vmatpush2.bf16.msra.mxu0 0
  %397 = vmatprep.subr.bf16.mxu0 0
  %398 = vmatpush2.bf16.msra.mxu0 0
  %399 = vmatprep.subr.bf16.mxu0 0
  %400 = vmatpush2.bf16.msra.mxu0 0
  %401 = vmatprep.mubr.bf16.mxu0 0
  %402 = vmatmul.mubr.bf16.gmra.mxu0 %v367
  %v403 = vpop.f32.mrf.mxu0
  %v404 = vadd.f32 %v356, %v403
  %v405 = vpop.f32.mrf.mxu0
  %v406 = vpop.f32.mrf.mxu0
  %v407 = vadd.f32 %v361, %v406
  %v408 = vpop.f32.mrf.mxu0
  %409 = vdwg.mxu0
  %v410 = vsub.f32 0.0, %v404
  %v411 = vsub.f32 0.0, %v407
  %v412 = vmul.f32 %v410, 1.442695
  %v413 = vpow.pop %v412
  %v414 = vmul.f32 %v411, 1.442695
  %v415 = vpow.pop %v414
  %v416 = vadd.f32 %v413, 1.0
  %v417 = vadd.f32 %v415, 1.0
  %v418 = vrcp.pop %v416
  %v419 = vrcp.pop %v417
  %v420 = vmul.f32 %v48, %v418
  %v421 = vmul.f32 %v49, %v419
  %422 = vst [vmem:[%s7] sm:$0xff] %v420
  %423 = vst [vmem:[%s7 + $0x8] sm:$0xff] %v421
  %v424 = vpack.c.bf16 %v421, %v420
  %v426 = vunpack.c.l.b16 %v424
  %v427 = vunpack.c.h.b16 %v424
  %v428 = vpack.c.b16 %v426, %v426
  %v429 = vpack.c.b16 %v427, %v427
  %432 = vst [vmem:[#allocation2 + $0x8] sm:$0xf] %v428
  %433 = vst [vmem:[#allocation2 + $0xc] sm:$0xf] %v429
  %s434 = scalar_lea.vmem %s0, 16
  %v435 = vld [vmem:[%s434] sm:$0xff]
  %v436 = vld [vmem:[%s434 + $0x8] sm:$0xff]
  %v437 = vld [vmem:[%s1] sm:$0xf]
  %v438 = vld [vmem:[%s1 + $0x4] sm:$0xf]
  %v439 = vld [vmem:[%s1 + $0x8] sm:$0xf]
  %v440 = vld [vmem:[%s1 + $0xc] sm:$0xf]
  %v441 = vld [vmem:[%s1 + $0x10] sm:$0xf]
  %v442 = vld [vmem:[%s1 + $0x14] sm:$0xf]
  %v443 = vld [vmem:[%s1 + $0x18] sm:$0xf]
  %v444 = vld [vmem:[%s1 + $0x1c] sm:$0xf]
  %v445 = vld [vmem:[%s1 + $0x20] sm:$0xf]
  %v446 = vld [vmem:[%s1 + $0x24] sm:$0xf]
  %v447 = vld [vmem:[%s1 + $0x28] sm:$0xf]
  %v448 = vld [vmem:[%s1 + $0x2c] sm:$0xf]
  %v449 = vld [vmem:[%s1 + $0x30] sm:$0xf]
  %v450 = vld [vmem:[%s1 + $0x34] sm:$0xf]
  %v451 = vld [vmem:[%s1 + $0x38] sm:$0xf]
  %v452 = vld [vmem:[%s1 + $0x3c] sm:$0xf]
  %v453 = vpack.c.bf16 %v436, %v435
  %v454 = vld [vmem:[%s2] sm:$0xff]
  %v455 = vld [vmem:[%s2 + $0x8] sm:$0xff]
  %v456 = vld [vmem:[%s2 + $0x10] sm:$0xff]
  %v457 = vld [vmem:[%s2 + $0x18] sm:$0xff]
  %v458 = vld [vmem:[%s2 + $0x20] sm:$0xff]
  %v459 = vld [vmem:[%s2 + $0x28] sm:$0xff]
  %v460 = vld [vmem:[%s2 + $0x30] sm:$0xff]
  %v461 = vld [vmem:[%s2 + $0x38] sm:$0xff]
  %v462 = vld [vmem:[%s2 + $0x40] sm:$0xff]
  %v463 = vld [vmem:[%s2 + $0x48] sm:$0xff]
  %v464 = vld [vmem:[%s2 + $0x50] sm:$0xff]
  %v465 = vld [vmem:[%s2 + $0x58] sm:$0xff]
  %v466 = vld [vmem:[%s2 + $0x60] sm:$0xff]
  %v467 = vld [vmem:[%s2 + $0x68] sm:$0xff]
  %v468 = vld [vmem:[%s2 + $0x70] sm:$0xff]
  %v469 = vld [vmem:[%s2 + $0x78] sm:$0xff]
  %471 = vset.pattern.permute.xlu0 0
  %472 = vperm.xlu0 %471, %v454
  %v473 = vpop.permute.xlu0 %472
  %476 = vset.pattern.permute.xlu0 0
  %477 = vperm.xlu0 %476, %v455
  %v478 = vpop.permute.xlu0 %477
  %481 = vset.pattern.permute.xlu0 0
  %482 = vperm.xlu0 %481, %v456
  %v483 = vpop.permute.xlu0 %482
  %486 = vset.pattern.permute.xlu0 0
  %487 = vperm.xlu0 %486, %v457
  %v488 = vpop.permute.xlu0 %487
  %491 = vset.pattern.permute.xlu0 0
  %492 = vperm.xlu0 %491, %v458
  %v493 = vpop.permute.xlu0 %492
  %496 = vset.pattern.permute.xlu0 0
  %497 = vperm.xlu0 %496, %v459
  %v498 = vpop.permute.xlu0 %497
  %501 = vset.pattern.permute.xlu0 0
  %502 = vperm.xlu0 %501, %v460
  %v503 = vpop.permute.xlu0 %502
  %506 = vset.pattern.permute.xlu0 0
  %507 = vperm.xlu0 %506, %v461
  %v508 = vpop.permute.xlu0 %507
  %511 = vset.pattern.permute.xlu0 0
  %512 = vperm.xlu0 %511, %v462
  %v513 = vpop.permute.xlu0 %512
  %516 = vset.pattern.permute.xlu0 0
  %517 = vperm.xlu0 %516, %v463
  %v518 = vpop.permute.xlu0 %517
  %521 = vset.pattern.permute.xlu0 0
  %522 = vperm.xlu0 %521, %v464
  %v523 = vpop.permute.xlu0 %522
  %526 = vset.pattern.permute.xlu0 0
  %527 = vperm.xlu0 %526, %v465
  %v528 = vpop.permute.xlu0 %527
  %531 = vset.pattern.permute.xlu0 0
  %532 = vperm.xlu0 %531, %v466
  %v533 = vpop.permute.xlu0 %532
  %536 = vset.pattern.permute.xlu0 0
  %537 = vperm.xlu0 %536, %v467
  %v538 = vpop.permute.xlu0 %537
  %541 = vset.pattern.permute.xlu0 0
  %542 = vperm.xlu0 %541, %v468
  %v543 = vpop.permute.xlu0 %542
  %546 = vset.pattern.permute.xlu0 0
  %547 = vperm.xlu0 %546, %v469
  %v548 = vpop.permute.xlu0 %547
  %v566 = vunpack.c.l.b16 %v437
  %v567 = vunpack.c.l.b16 %v438
  %v568 = vunpack.c.l.b16 %v439
  %v569 = vunpack.c.l.b16 %v440
  %v570 = vunpack.c.l.b16 %v441
  %v571 = vunpack.c.l.b16 %v442
  %v572 = vunpack.c.l.b16 %v443
  %v573 = vunpack.c.l.b16 %v444
  %v574 = vunpack.c.l.b16 %v445
  %v575 = vunpack.c.l.b16 %v446
  %v576 = vunpack.c.l.b16 %v447
  %v577 = vunpack.c.l.b16 %v448
  %v578 = vunpack.c.l.b16 %v449
  %v579 = vunpack.c.l.b16 %v450
  %v580 = vunpack.c.l.b16 %v451
  %v581 = vunpack.c.l.b16 %v452
  %v582 = vpack.c.b16 %v567, %v566
  %v583 = vpack.c.b16 %v569, %v568
  %v584 = vpack.c.b16 %v571, %v570
  %v585 = vpack.c.b16 %v573, %v572
  %v586 = vpack.c.b16 %v575, %v574
  %v587 = vpack.c.b16 %v577, %v576
  %v588 = vpack.c.b16 %v579, %v578
  %v589 = vpack.c.b16 %v581, %v580
  %v591 = vsel %vm203, %v582, 0
  %v594 = vsel %vm203, %v583, 0
  %v597 = vsel %vm203, %v584, 0
  %v600 = vsel %vm203, %v585, 0
  %v603 = vsel %vm203, %v586, 0
  %v606 = vsel %vm203, %v587, 0
  %v609 = vsel %vm203, %v588, 0
  %v612 = vsel %vm203, %v589, 0
  %614 = vmatprep.subr.bf16.mxu0 0
  %615 = vmatpush1.bf16.msra.mxu0 0
  %616 = vmatprep.subr.bf16.mxu0 0
  %617 = vmatpush1.bf16.msra.mxu0 0
  %618 = vmatprep.subr.bf16.mxu0 0
  %619 = vmatpush1.bf16.msra.mxu0 0
  %620 = vmatprep.subr.bf16.mxu0 0
  %621 = vmatpush1.bf16.msra.mxu0 0
  %622 = vmatprep.subr.bf16.mxu0 0
  %623 = vmatpush1.bf16.msra.mxu0 0
  %624 = vmatprep.subr.bf16.mxu0 0
  %625 = vmatpush1.bf16.msra.mxu0 0
  %626 = vmatprep.subr.bf16.mxu0 0
  %627 = vmatpush1.bf16.msra.mxu0 0
  %628 = vmatprep.subr.bf16.mxu0 0
  %629 = vmatpush1.bf16.msra.mxu0 %v453
  %630 = vmatprep.subr.bf16.mxu0 0
  %631 = vmatpush2.bf16.msra.mxu0 0
  %632 = vmatprep.subr.bf16.mxu0 0
  %633 = vmatpush2.bf16.msra.mxu0 0
  %634 = vmatprep.subr.bf16.mxu0 0
  %635 = vmatpush2.bf16.msra.mxu0 0
  %636 = vmatprep.subr.bf16.mxu0 0
  %637 = vmatpush2.bf16.msra.mxu0 0
  %638 = vmatprep.subr.bf16.mxu0 0
  %639 = vmatpush2.bf16.msra.mxu0 0
  %640 = vmatprep.subr.bf16.mxu0 0
  %641 = vmatpush2.bf16.msra.mxu0 0
  %642 = vmatprep.subr.bf16.mxu0 0
  %643 = vmatpush2.bf16.msra.mxu0 0
  %644 = vmatprep.subr.bf16.mxu0 0
  %645 = vmatpush2.bf16.msra.mxu0 0
  %646 = vmatprep.mubr.bf16.mxu0 0
  %647 = vmatmul.mubr.bf16.gmra.mxu0 %v591
  %v648 = vpop.f32.mrf.mxu0
  %v649 = vadd.f32 %v473, %v648
  %v650 = vpop.f32.mrf.mxu0
  %v651 = vpop.f32.mrf.mxu0
  %v652 = vadd.f32 %v478, %v651
  %v653 = vpop.f32.mrf.mxu0
  %654 = vmatprep.mubr.bf16.mxu0 0
  %655 = vmatmul.mubr.bf16.gmra.mxu0 %v594
  %v656 = vpop.f32.mrf.mxu0
  %v657 = vadd.f32 %v483, %v656
  %v658 = vpop.f32.mrf.mxu0
  %v659 = vpop.f32.mrf.mxu0
  %v660 = vadd.f32 %v488, %v659
  %v661 = vpop.f32.mrf.mxu0
  %662 = vmatprep.mubr.bf16.mxu0 0
  %663 = vmatmul.mubr.bf16.gmra.mxu0 %v597
  %v664 = vpop.f32.mrf.mxu0
  %v665 = vadd.f32 %v493, %v664
  %v666 = vpop.f32.mrf.mxu0
  %v667 = vpop.f32.mrf.mxu0
  %v668 = vadd.f32 %v498, %v667
  %v669 = vpop.f32.mrf.mxu0
  %670 = vmatprep.mubr.bf16.mxu0 0
  %671 = vmatmul.mubr.bf16.gmra.mxu0 %v600
  %v672 = vpop.f32.mrf.mxu0
  %v673 = vadd.f32 %v503, %v672
  %v674 = vpop.f32.mrf.mxu0
  %v675 = vpop.f32.mrf.mxu0
  %v676 = vadd.f32 %v508, %v675
  %v677 = vpop.f32.mrf.mxu0
  %678 = vmatprep.mubr.bf16.mxu0 0
  %679 = vmatmul.mubr.bf16.gmra.mxu0 %v603
  %v680 = vpop.f32.mrf.mxu0
  %v681 = vadd.f32 %v513, %v680
  %v682 = vpop.f32.mrf.mxu0
  %v683 = vpop.f32.mrf.mxu0
  %v684 = vadd.f32 %v518, %v683
  %v685 = vpop.f32.mrf.mxu0
  %686 = vmatprep.mubr.bf16.mxu0 0
  %687 = vmatmul.mubr.bf16.gmra.mxu0 %v606
  %v688 = vpop.f32.mrf.mxu0
  %v689 = vadd.f32 %v523, %v688
  %v690 = vpop.f32.mrf.mxu0
  %v691 = vpop.f32.mrf.mxu0
  %v692 = vadd.f32 %v528, %v691
  %v693 = vpop.f32.mrf.mxu0
  %694 = vmatprep.mubr.bf16.mxu0 0
  %695 = vmatmul.mubr.bf16.gmra.mxu0 %v609
  %v696 = vpop.f32.mrf.mxu0
  %v697 = vadd.f32 %v533, %v696
  %v698 = vpop.f32.mrf.mxu0
  %v699 = vpop.f32.mrf.mxu0
  %v700 = vadd.f32 %v538, %v699
  %v701 = vpop.f32.mrf.mxu0
  %702 = vmatprep.mubr.bf16.mxu0 0
  %703 = vmatmul.mubr.bf16.gmra.mxu0 %v612
  %v704 = vpop.f32.mrf.mxu0
  %v705 = vadd.f32 %v543, %v704
  %v706 = vpop.f32.mrf.mxu0
  %v707 = vpop.f32.mrf.mxu0
  %v708 = vadd.f32 %v548, %v707
  %v709 = vpop.f32.mrf.mxu0
  %710 = vdwg.mxu0
  %v711 = vmax.f32 %v649, 0.0
  %v712 = vmax.f32 %v652, 0.0
  %v713 = vmax.f32 %v657, 0.0
  %v714 = vmax.f32 %v660, 0.0
  %v715 = vmax.f32 %v665, 0.0
  %v716 = vmax.f32 %v668, 0.0
  %v717 = vmax.f32 %v673, 0.0
  %v718 = vmax.f32 %v676, 0.0
  %v719 = vmax.f32 %v681, 0.0
  %v720 = vmax.f32 %v684, 0.0
  %v721 = vmax.f32 %v689, 0.0
  %v722 = vmax.f32 %v692, 0.0
  %v723 = vmax.f32 %v697, 0.0
  %v724 = vmax.f32 %v700, 0.0
  %v725 = vmax.f32 %v705, 0.0
  %v726 = vmax.f32 %v708, 0.0
  %v727 = vld [vmem:[%s3] sm:$0xf]
  %v728 = vld [vmem:[%s3 + $0x4] sm:$0xf]
  %v729 = vpack.c.bf16 %v712, %v711
  %v730 = vpack.c.bf16 %v714, %v713
  %v731 = vpack.c.bf16 %v716, %v715
  %v732 = vpack.c.bf16 %v718, %v717
  %v733 = vpack.c.bf16 %v720, %v719
  %v734 = vpack.c.bf16 %v722, %v721
  %v735 = vpack.c.bf16 %v724, %v723
  %v736 = vpack.c.bf16 %v726, %v725
  %v737 = vld [vmem:[%s4] sm:$0xff]
  %v738 = vld [vmem:[%s4 + $0x8] sm:$0xff]
  %740 = vset.pattern.permute.xlu0 0
  %741 = vperm.xlu0 %740, %v737
  %v742 = vpop.permute.xlu0 %741
  %745 = vset.pattern.permute.xlu0 0
  %746 = vperm.xlu0 %745, %v738
  %v747 = vpop.permute.xlu0 %746
  %v751 = vunpack.c.l.b16 %v727
  %v752 = vunpack.c.l.b16 %v728
  %v753 = vpack.c.b16 %v752, %v751
  %755 = vmatprep.subr.bf16.mxu0 0
  %756 = vmatpush1.bf16.msra.mxu0 %v736
  %757 = vmatprep.subr.bf16.mxu0 0
  %758 = vmatpush1.bf16.msra.mxu0 %v735
  %759 = vmatprep.subr.bf16.mxu0 0
  %760 = vmatpush1.bf16.msra.mxu0 %v734
  %761 = vmatprep.subr.bf16.mxu0 0
  %762 = vmatpush1.bf16.msra.mxu0 %v733
  %763 = vmatprep.subr.bf16.mxu0 0
  %764 = vmatpush1.bf16.msra.mxu0 %v732
  %765 = vmatprep.subr.bf16.mxu0 0
  %766 = vmatpush1.bf16.msra.mxu0 %v731
  %767 = vmatprep.subr.bf16.mxu0 0
  %768 = vmatpush1.bf16.msra.mxu0 %v730
  %769 = vmatprep.subr.bf16.mxu0 0
  %770 = vmatpush1.bf16.msra.mxu0 %v729
  %771 = vmatprep.subr.bf16.mxu0 0
  %772 = vmatpush2.bf16.msra.mxu0 0
  %773 = vmatprep.subr.bf16.mxu0 0
  %774 = vmatpush2.bf16.msra.mxu0 0
  %775 = vmatprep.subr.bf16.mxu0 0
  %776 = vmatpush2.bf16.msra.mxu0 0
  %777 = vmatprep.subr.bf16.mxu0 0
  %778 = vmatpush2.bf16.msra.mxu0 0
  %779 = vmatprep.subr.bf16.mxu0 0
  %780 = vmatpush2.bf16.msra.mxu0 0
  %781 = vmatprep.subr.bf16.mxu0 0
  %782 = vmatpush2.bf16.msra.mxu0 0
  %783 = vmatprep.subr.bf16.mxu0 0
  %784 = vmatpush2.bf16.msra.mxu0 0
  %785 = vmatprep.subr.bf16.mxu0 0
  %786 = vmatpush2.bf16.msra.mxu0 0
  %787 = vmatprep.mubr.bf16.mxu0 0
  %788 = vmatmul.mubr.bf16.gmra.mxu0 %v753
  %v789 = vpop.f32.mrf.mxu0
  %v790 = vadd.f32 %v742, %v789
  %v791 = vpop.f32.mrf.mxu0
  %v792 = vpop.f32.mrf.mxu0
  %v793 = vadd.f32 %v747, %v792
  %v794 = vpop.f32.mrf.mxu0
  %795 = vdwg.mxu0
  %v796 = vsub.f32 0.0, %v790
  %v797 = vsub.f32 0.0, %v793
  %v798 = vmul.f32 %v796, 1.442695
  %v799 = vpow.pop %v798
  %v800 = vmul.f32 %v797, 1.442695
  %v801 = vpow.pop %v800
  %v802 = vadd.f32 %v799, 1.0
  %v803 = vadd.f32 %v801, 1.0
  %v804 = vrcp.pop %v802
  %v805 = vrcp.pop %v803
  %v806 = vmul.f32 %v435, %v804
  %v807 = vmul.f32 %v436, %v805
  %s808 = scalar_lea.vmem %s7, 16
  %809 = vst [vmem:[%s808] sm:$0xff] %v806
  %810 = vst [vmem:[%s808 + $0x8] sm:$0xff] %v807
  %v811 = vpack.c.bf16 %v807, %v806
  %v813 = vunpack.c.l.b16 %v811
  %v814 = vunpack.c.h.b16 %v811
  %v815 = vpack.c.b16 %v813, %v813
  %v816 = vpack.c.b16 %v814, %v814
  %s819 = scalar_lea.vmem [#allocation2], 24
  %820 = vst [vmem:[%s819 + $0x8] sm:$0xf] %v815
  %821 = vst [vmem:[%s819 + $0xc] sm:$0xf] %v816
  %v822 = vlaneseq
  %v823 = vshrl.u32 %v822, 7
  %v824 = vadd.s32 %v823, 8
  %v825 = vadd.s32 %v823, 16
  %v826 = vadd.s32 %v823, 24
  %vm827 = vcmp.lt.s32.totalorder %v823, 0
  %v828 = vsub.s32 0, %v823
  %v829 = vsel %vm827, %v828, %v823
  %v830 = vshrl.u32 %v829, 2
  %v831 = vand.u32 %v829, 3
  %v832 = vsub.s32 0, %v831
  %v833 = vsel %vm827, %v832, %v831
  %vm834 = vcmp.lt.s32.totalorder %v824, 0
  %v835 = vsub.s32 0, %v824
  %v836 = vsel %vm834, %v835, %v824
  %v837 = vshrl.u32 %v836, 2
  %v838 = vand.u32 %v836, 3
  %v839 = vsub.s32 0, %v838
  %v840 = vsel %vm834, %v839, %v838
  %vm841 = vcmp.lt.s32.totalorder %v825, 0
  %v842 = vsub.s32 0, %v825
  %v843 = vsel %vm841, %v842, %v825
  %v844 = vshrl.u32 %v843, 2
  %v845 = vand.u32 %v843, 3
  %v846 = vsub.s32 0, %v845
  %v847 = vsel %vm841, %v846, %v845
  %vm848 = vcmp.lt.s32.totalorder %v826, 0
  %v849 = vsub.s32 0, %v826
  %v850 = vsel %vm848, %v849, %v826
  %v851 = vshrl.u32 %v850, 2
  %v852 = vand.u32 %v850, 3
  %v853 = vsub.s32 0, %v852
  %v854 = vsel %vm848, %v853, %v852
  %vm855 = vcmp.ne.s32.totalorder %v833, 0
  %vm856 = vcmp.ne.s32.totalorder %v840, 0
  %vm857 = vcmp.ne.s32.totalorder %v847, 0
  %vm858 = vcmp.ne.s32.totalorder %v854, 0
  %vm859 = vcmp.lt.s32.totalorder %v833, 0
  %vm860 = vcmp.lt.s32.totalorder %v840, 0
  %vm861 = vcmp.lt.s32.totalorder %v847, 0
  %vm862 = vcmp.lt.s32.totalorder %v854, 0
  %vm863 = vmand %vm859, %vm855
  %vm864 = vmand %vm860, %vm856
  %vm865 = vmand %vm861, %vm857
  %vm866 = vmand %vm862, %vm858
  %v867 = vadd.s32 %v833, 4
  %v868 = vadd.s32 %v840, 4
  %v869 = vadd.s32 %v847, 4
  %v870 = vadd.s32 %v854, 4
  %v871 = vsel %vm863, %v867, %v833
  %v872 = vsel %vm864, %v868, %v840
  %v873 = vsel %vm865, %v869, %v847
  %v874 = vsel %vm866, %v870, %v854
  %v875 = vadd.s32 %v871, 4294967294
  %v876 = vadd.s32 %v872, 4294967294
  %v877 = vadd.s32 %v873, 4294967294
  %v878 = vadd.s32 %v874, 4294967294
  %vm879 = vcmp.ge.s32.totalorder %v875, 0
  %vm880 = vcmp.ge.s32.totalorder %v876, 0
  %vm881 = vcmp.ge.s32.totalorder %v877, 0
  %vm882 = vcmp.ge.s32.totalorder %v878, 0
  %vm883 = vcmp.lt.s32.totalorder %v875, 4
  %vm884 = vcmp.lt.s32.totalorder %v876, 4
  %vm885 = vcmp.lt.s32.totalorder %v877, 4
  %vm886 = vcmp.lt.s32.totalorder %v878, 4
  %vm887 = vmand %vm879, %vm883
  %vm888 = vmand %vm880, %vm884
  %vm889 = vmand %vm881, %vm885
  %vm890 = vmand %vm882, %vm886
  %v891 = vadd.s32 %v871, 4294967295
  %v892 = vadd.s32 %v872, 4294967295
  %v893 = vadd.s32 %v873, 4294967295
  %v894 = vadd.s32 %v874, 4294967295
  %vm895 = vcmp.ge.s32.totalorder %v891, 0
  %vm896 = vcmp.ge.s32.totalorder %v892, 0
  %vm897 = vcmp.ge.s32.totalorder %v893, 0
  %vm898 = vcmp.ge.s32.totalorder %v894, 0
  %vm899 = vcmp.lt.s32.totalorder %v891, 4
  %vm900 = vcmp.lt.s32.totalorder %v892, 4
  %vm901 = vcmp.lt.s32.totalorder %v893, 4
  %vm902 = vcmp.lt.s32.totalorder %v894, 4
  %vm903 = vmand %vm895, %vm899
  %vm904 = vmand %vm896, %vm900
  %vm905 = vmand %vm897, %vm901
  %vm906 = vmand %vm898, %vm902
  %v907 = vadd.s32 %v871, 1
  %v908 = vadd.s32 %v872, 1
  %v909 = vadd.s32 %v873, 1
  %v910 = vadd.s32 %v874, 1
  %vm911 = vcmp.ge.s32.totalorder %v907, 0
  %vm912 = vcmp.ge.s32.totalorder %v908, 0
  %vm913 = vcmp.ge.s32.totalorder %v909, 0
  %vm914 = vcmp.ge.s32.totalorder %v910, 0
  %vm915 = vcmp.lt.s32.totalorder %v907, 4
  %vm916 = vcmp.lt.s32.totalorder %v908, 4
  %vm917 = vcmp.lt.s32.totalorder %v909, 4
  %vm918 = vcmp.lt.s32.totalorder %v910, 4
  %vm919 = vmand %vm911, %vm915
  %vm920 = vmand %vm912, %vm916
  %vm921 = vmand %vm913, %vm917
  %vm922 = vmand %vm914, %vm918
  %v923 = vadd.s32 %v871, 2
  %v924 = vadd.s32 %v872, 2
  %v925 = vadd.s32 %v873, 2
  %v926 = vadd.s32 %v874, 2
  %vm927 = vcmp.ge.s32.totalorder %v923, 0
  %vm928 = vcmp.ge.s32.totalorder %v924, 0
  %vm929 = vcmp.ge.s32.totalorder %v925, 0
  %vm930 = vcmp.ge.s32.totalorder %v926, 0
  %vm931 = vcmp.lt.s32.totalorder %v923, 4
  %vm932 = vcmp.lt.s32.totalorder %v924, 4
  %vm933 = vcmp.lt.s32.totalorder %v925, 4
  %vm934 = vcmp.lt.s32.totalorder %v926, 4
  %vm935 = vmand %vm927, %vm931
  %vm936 = vmand %vm928, %vm932
  %vm937 = vmand %vm929, %vm933
  %vm938 = vmand %vm930, %vm934
  %v939 = vld [vmem:[#allocation2] sm:$0xf]
  %v940 = vld [vmem:[#allocation2 + $0x4] sm:$0xf]
  %v941 = vld [vmem:[#allocation2 + $0x8] sm:$0xf]
  %v942 = vld [vmem:[#allocation2 + $0xc] sm:$0xf]
  %v943 = vld [vmem:[#allocation2 + $0x10] sm:$0xf]
  %v944 = vld [vmem:[#allocation2 + $0x14] sm:$0x1]
  %v945 = vld [vmem:[%s819] sm:$0xf]
  %v946 = vld [vmem:[%s819 + $0x4] sm:$0xf]
  %v947 = vld [vmem:[%s819 + $0x8] sm:$0xf]
  %v948 = vld [vmem:[%s819 + $0xc] sm:$0xf]
  %v949 = vld [vmem:[%s819 + $0x10] sm:$0xf]
  %v950 = vld [vmem:[%s819 + $0x14] sm:$0x1]
  %v954 = vunpack.c.l.b16 %v939
  %v955 = vunpack.c.l.b16 %v940
  %v956 = vunpack.c.l.b16 %v941
  %v957 = vpack.c.b16 %v955, %v954
  %v958 = vpack.c.b16 %v956, %v956
  %vm959 = vcmask 1044480
  %v960 = vrot.slane %v957, 3
  %v961 = vrot.slane %v958, 3
  %v962 = vsel %vm959, %v960, %v961
  %v967 = vunpack.c.l.b16 %v945
  %v968 = vunpack.c.l.b16 %v946
  %v969 = vunpack.c.l.b16 %v947
  %v970 = vpack.c.b16 %v968, %v967
  %v971 = vpack.c.b16 %v969, %v969
  %v972 = vrot.slane %v970, 3
  %v973 = vrot.slane %v971, 3
  %v974 = vsel %vm959, %v972, %v973
  %v976 = vsel %vm887, 1, 0
  %v977 = vsel %vm888, 1, 0
  %v978 = vsel %vm889, 1, 0
  %v979 = vsel %vm890, 1, 0
  %vm980 = vcmp.eq.s32.totalorder %v976, 1
  %vm981 = vcmp.eq.s32.totalorder %v977, 1
  %vm982 = vcmp.eq.s32.totalorder %v978, 1
  %vm983 = vcmp.eq.s32.totalorder %v979, 1
  %vm984 = vmpackc.low %vm980, %vm980
  %vm985 = vmpackc.low %vm981, %vm981
  %vm986 = vmpackc.low %vm982, %vm982
  %vm987 = vmpackc.low %vm983, %vm983
  %v988 = vsel %vm984, 65537, 0
  %v989 = vsel %vm985, 65537, 0
  %v990 = vsel %vm986, 65537, 0
  %v991 = vsel %vm987, 65537, 0
  %v992 = vunpack.c.l.b16 %v988
  %v993 = vunpack.c.l.b16 %v989
  %v994 = vunpack.c.l.b16 %v990
  %v995 = vunpack.c.l.b16 %v991
  %v996 = vpack.c.b16 %v993, %v992
  %v997 = vpack.c.b16 %v995, %v994
  %vm998 = vcmp.ne.s16.totalorder %v996, 0
  %vm999 = vcmp.ne.s16.totalorder %v997, 0
  %v1000 = vsel %vm998, %v962, 0
  %v1001 = vsel %vm999, %v974, 0
  %v1002 = vld [vmem:[%s6] sm:$0xf]
  %v1003 = vld [vmem:[%s6 + $0x4] sm:$0xf]
  %v1004 = vld [vmem:[%s6 + $0x8] sm:$0xf]
  %v1005 = vld [vmem:[%s6 + $0xc] sm:$0xf]
  %v1006 = vld [vmem:[%s6 + $0x10] sm:$0xf]
  %v1007 = vld [vmem:[%s6 + $0x14] sm:$0xf]
  %v1008 = vld [vmem:[%s6 + $0x18] sm:$0xf]
  %v1009 = vld [vmem:[%s6 + $0x1c] sm:$0xf]
  %v1010 = vld [vmem:[%s6 + $0x20] sm:$0xf]
  %v1011 = vld [vmem:[%s6 + $0x24] sm:$0xf]
  %v1012 = vld [vmem:[%s6 + $0x28] sm:$0xf]
  %v1013 = vld [vmem:[%s6 + $0x2c] sm:$0xf]
  %v1014 = vld [vmem:[%s6 + $0x30] sm:$0xf]
  %v1015 = vld [vmem:[%s6 + $0x34] sm:$0xf]
  %v1016 = vld [vmem:[%s6 + $0x38] sm:$0xf]
  %v1017 = vld [vmem:[%s6 + $0x3c] sm:$0xf]
  %vm1018 = vsmask.f32 4352
  %v1020 = vshrl.u32 %v957, 16
  %v1022 = vrot.slane %v1020, 3
  %v1023 = vshll.u32 %v957, 16
  %v1025 = vrot.slane %v1023, 4
  %v1026 = vor.u32 %v1022, %v1025
  %v1028 = vshrl.u32 %v958, 16
  %v1030 = vrot.slane %v1028, 3
  %v1031 = vshll.u32 %v958, 16
  %v1033 = vrot.slane %v1031, 4
  %v1034 = vor.u32 %v1030, %v1033
  %v1035 = vsel %vm1018, %v1026, %v1034
  %v1038 = vshrl.u32 %v970, 16
  %v1040 = vrot.slane %v1038, 3
  %v1041 = vshll.u32 %v970, 16
  %v1043 = vrot.slane %v1041, 4
  %v1044 = vor.u32 %v1040, %v1043
  %v1046 = vshrl.u32 %v971, 16
  %v1048 = vrot.slane %v1046, 3
  %v1049 = vshll.u32 %v971, 16
  %v1051 = vrot.slane %v1049, 4
  %v1052 = vor.u32 %v1048, %v1051
  %v1053 = vsel %vm1018, %v1044, %v1052
  %v1055 = vsel %vm903, 1, 0
  %v1056 = vsel %vm904, 1, 0
  %v1057 = vsel %vm905, 1, 0
  %v1058 = vsel %vm906, 1, 0
  %vm1059 = vcmp.eq.s32.totalorder %v1055, 1
  %vm1060 = vcmp.eq.s32.totalorder %v1056, 1
  %vm1061 = vcmp.eq.s32.totalorder %v1057, 1
  %vm1062 = vcmp.eq.s32.totalorder %v1058, 1
  %vm1063 = vmpackc.low %vm1059, %vm1059
  %vm1064 = vmpackc.low %vm1060, %vm1060
  %vm1065 = vmpackc.low %vm1061, %vm1061
  %vm1066 = vmpackc.low %vm1062, %vm1062
  %v1067 = vsel %vm1063, 65537, 0
  %v1068 = vsel %vm1064, 65537, 0
  %v1069 = vsel %vm1065, 65537, 0
  %v1070 = vsel %vm1066, 65537, 0
  %v1071 = vunpack.c.l.b16 %v1067
  %v1072 = vunpack.c.l.b16 %v1068
  %v1073 = vunpack.c.l.b16 %v1069
  %v1074 = vunpack.c.l.b16 %v1070
  %v1075 = vpack.c.b16 %v1072, %v1071
  %v1076 = vpack.c.b16 %v1074, %v1073
  %vm1077 = vcmp.ne.s16.totalorder %v1075, 0
  %vm1078 = vcmp.ne.s16.totalorder %v1076, 0
  %v1079 = vsel %vm1077, %v1035, 0
  %v1080 = vsel %vm1078, %v1053, 0
  %s1081 = scalar_lea.vmem %s6, 64
  %v1082 = vld [vmem:[%s1081] sm:$0xf]
  %v1083 = vld [vmem:[%s1081 + $0x4] sm:$0xf]
  %v1084 = vld [vmem:[%s1081 + $0x8] sm:$0xf]
  %v1085 = vld [vmem:[%s1081 + $0xc] sm:$0xf]
  %v1086 = vld [vmem:[%s1081 + $0x10] sm:$0xf]
  %v1087 = vld [vmem:[%s1081 + $0x14] sm:$0xf]
  %v1088 = vld [vmem:[%s1081 + $0x18] sm:$0xf]
  %v1089 = vld [vmem:[%s1081 + $0x1c] sm:$0xf]
  %v1090 = vld [vmem:[%s1081 + $0x20] sm:$0xf]
  %v1091 = vld [vmem:[%s1081 + $0x24] sm:$0xf]
  %v1092 = vld [vmem:[%s1081 + $0x28] sm:$0xf]
  %v1093 = vld [vmem:[%s1081 + $0x2c] sm:$0xf]
  %v1094 = vld [vmem:[%s1081 + $0x30] sm:$0xf]
  %v1095 = vld [vmem:[%s1081 + $0x34] sm:$0xf]
  %v1096 = vld [vmem:[%s1081 + $0x38] sm:$0xf]
  %v1097 = vld [vmem:[%s1081 + $0x3c] sm:$0xf]
  %v1114 = vunpack.c.l.b16 %v1082
  %v1115 = vunpack.c.l.b16 %v1083
  %v1116 = vunpack.c.l.b16 %v1084
  %v1117 = vunpack.c.l.b16 %v1085
  %v1118 = vunpack.c.l.b16 %v1086
  %v1119 = vunpack.c.l.b16 %v1087
  %v1120 = vunpack.c.l.b16 %v1088
  %v1121 = vunpack.c.l.b16 %v1089
  %v1122 = vunpack.c.l.b16 %v1090
  %v1123 = vunpack.c.l.b16 %v1091
  %v1124 = vunpack.c.l.b16 %v1092
  %v1125 = vunpack.c.l.b16 %v1093
  %v1126 = vunpack.c.l.b16 %v1094
  %v1127 = vunpack.c.l.b16 %v1095
  %v1128 = vunpack.c.l.b16 %v1096
  %v1129 = vunpack.c.l.b16 %v1097
  %v1130 = vpack.c.b16 %v1115, %v1114
  %v1131 = vpack.c.b16 %v1117, %v1116
  %v1132 = vpack.c.b16 %v1119, %v1118
  %v1133 = vpack.c.b16 %v1121, %v1120
  %v1134 = vpack.c.b16 %v1123, %v1122
  %v1135 = vpack.c.b16 %v1125, %v1124
  %v1136 = vpack.c.b16 %v1127, %v1126
  %v1137 = vpack.c.b16 %v1129, %v1128
  %1146 = vmatprep.subr.bf16.mxu0 0
  %1147 = vmatpush1.bf16.msra.mxu0 %v1137
  %1148 = vmatprep.subr.bf16.mxu0 0
  %1149 = vmatpush1.bf16.msra.mxu0 %v1136
  %1150 = vmatprep.subr.bf16.mxu0 0
  %1151 = vmatpush1.bf16.msra.mxu0 %v1135
  %1152 = vmatprep.subr.bf16.mxu0 0
  %1153 = vmatpush1.bf16.msra.mxu0 %v1134
  %1154 = vmatprep.subr.bf16.mxu0 0
  %1155 = vmatpush1.bf16.msra.mxu0 %v1133
  %1156 = vmatprep.subr.bf16.mxu0 0
  %1157 = vmatpush1.bf16.msra.mxu0 %v1132
  %1158 = vmatprep.subr.bf16.mxu0 0
  %1159 = vmatpush1.bf16.msra.mxu0 %v1131
  %1160 = vmatprep.subr.bf16.mxu0 0
  %1161 = vmatpush1.bf16.msra.mxu0 %v1130
  %1162 = vmatprep.subr.bf16.mxu0 0
  %1163 = vmatpush2.bf16.msra.mxu0 0
  %1164 = vmatprep.subr.bf16.mxu0 0
  %1165 = vmatpush2.bf16.msra.mxu0 0
  %1166 = vmatprep.subr.bf16.mxu0 0
  %1167 = vmatpush2.bf16.msra.mxu0 0
  %1168 = vmatprep.subr.bf16.mxu0 0
  %1169 = vmatpush2.bf16.msra.mxu0 0
  %1170 = vmatprep.subr.bf16.mxu0 0
  %1171 = vmatpush2.bf16.msra.mxu0 0
  %1172 = vmatprep.subr.bf16.mxu0 0
  %1173 = vmatpush2.bf16.msra.mxu0 0
  %1174 = vmatprep.subr.bf16.mxu0 0
  %1175 = vmatpush2.bf16.msra.mxu0 0
  %1176 = vmatprep.subr.bf16.mxu0 0
  %1177 = vmatpush2.bf16.msra.mxu0 0
  %1178 = vmatprep.mubr.bf16.mxu0 0
  %1179 = vmatmul.mubr.bf16.gmra.mxu0 %v1079
  %v1180 = vpop.f32.mrf.mxu0
  %v1181 = vadd.f32 0.0, %v1180
  %v1182 = vpop.f32.mrf.mxu0
  %v1183 = vpop.f32.mrf.mxu0
  %v1184 = vadd.f32 0.0, %v1183
  %v1185 = vpop.f32.mrf.mxu0
  %1186 = vmatprep.mubr.bf16.mxu0 0
  %1187 = vmatmul.mubr.bf16.gmra.mxu0 %v1080
  %v1188 = vpop.f32.mrf.mxu0
  %v1189 = vadd.f32 0.0, %v1188
  %v1190 = vpop.f32.mrf.mxu0
  %v1191 = vpop.f32.mrf.mxu0
  %v1192 = vadd.f32 0.0, %v1191
  %v1193 = vpop.f32.mrf.mxu0
  %1194 = vdwg.mxu0
  %v1211 = vunpack.c.l.b16 %v1002
  %v1212 = vunpack.c.l.b16 %v1003
  %v1213 = vunpack.c.l.b16 %v1004
  %v1214 = vunpack.c.l.b16 %v1005
  %v1215 = vunpack.c.l.b16 %v1006
  %v1216 = vunpack.c.l.b16 %v1007
  %v1217 = vunpack.c.l.b16 %v1008
  %v1218 = vunpack.c.l.b16 %v1009
  %v1219 = vunpack.c.l.b16 %v1010
  %v1220 = vunpack.c.l.b16 %v1011
  %v1221 = vunpack.c.l.b16 %v1012
  %v1222 = vunpack.c.l.b16 %v1013
  %v1223 = vunpack.c.l.b16 %v1014
  %v1224 = vunpack.c.l.b16 %v1015
  %v1225 = vunpack.c.l.b16 %v1016
  %v1226 = vunpack.c.l.b16 %v1017
  %v1227 = vpack.c.b16 %v1212, %v1211
  %v1228 = vpack.c.b16 %v1214, %v1213
  %v1229 = vpack.c.b16 %v1216, %v1215
  %v1230 = vpack.c.b16 %v1218, %v1217
  %v1231 = vpack.c.b16 %v1220, %v1219
  %v1232 = vpack.c.b16 %v1222, %v1221
  %v1233 = vpack.c.b16 %v1224, %v1223
  %v1234 = vpack.c.b16 %v1226, %v1225
  %1243 = vmatprep.subr.bf16.mxu0 0
  %1244 = vmatpush1.bf16.msra.mxu0 %v1234
  %1245 = vmatprep.subr.bf16.mxu0 0
  %1246 = vmatpush1.bf16.msra.mxu0 %v1233
  %1247 = vmatprep.subr.bf16.mxu0 0
  %1248 = vmatpush1.bf16.msra.mxu0 %v1232
  %1249 = vmatprep.subr.bf16.mxu0 0
  %1250 = vmatpush1.bf16.msra.mxu0 %v1231
  %1251 = vmatprep.subr.bf16.mxu0 0
  %1252 = vmatpush1.bf16.msra.mxu0 %v1230
  %1253 = vmatprep.subr.bf16.mxu0 0
  %1254 = vmatpush1.bf16.msra.mxu0 %v1229
  %1255 = vmatprep.subr.bf16.mxu0 0
  %1256 = vmatpush1.bf16.msra.mxu0 %v1228
  %1257 = vmatprep.subr.bf16.mxu0 0
  %1258 = vmatpush1.bf16.msra.mxu0 %v1227
  %1259 = vmatprep.subr.bf16.mxu0 0
  %1260 = vmatpush2.bf16.msra.mxu0 0
  %1261 = vmatprep.subr.bf16.mxu0 0
  %1262 = vmatpush2.bf16.msra.mxu0 0
  %1263 = vmatprep.subr.bf16.mxu0 0
  %1264 = vmatpush2.bf16.msra.mxu0 0
  %1265 = vmatprep.subr.bf16.mxu0 0
  %1266 = vmatpush2.bf16.msra.mxu0 0
  %1267 = vmatprep.subr.bf16.mxu0 0
  %1268 = vmatpush2.bf16.msra.mxu0 0
  %1269 = vmatprep.subr.bf16.mxu0 0
  %1270 = vmatpush2.bf16.msra.mxu0 0
  %1271 = vmatprep.subr.bf16.mxu0 0
  %1272 = vmatpush2.bf16.msra.mxu0 0
  %1273 = vmatprep.subr.bf16.mxu0 0
  %1274 = vmatpush2.bf16.msra.mxu0 0
  %1275 = vmatprep.mubr.bf16.mxu0 0
  %1276 = vmatmul.mubr.bf16.gmra.mxu0 %v1000
  %v1277 = vpop.f32.mrf.mxu0
  %v1278 = vadd.f32 %v1181, %v1277
  %v1279 = vpop.f32.mrf.mxu0
  %v1280 = vpop.f32.mrf.mxu0
  %v1281 = vadd.f32 %v1184, %v1280
  %v1282 = vpop.f32.mrf.mxu0
  %1283 = vmatprep.mubr.bf16.mxu0 0
  %1284 = vmatmul.mubr.bf16.gmra.mxu0 %v1001
  %v1285 = vpop.f32.mrf.mxu0
  %v1286 = vadd.f32 %v1189, %v1285
  %v1287 = vpop.f32.mrf.mxu0
  %v1288 = vpop.f32.mrf.mxu0
  %v1289 = vadd.f32 %v1192, %v1288
  %v1290 = vpop.f32.mrf.mxu0
  %1291 = vdwg.mxu0
  %v1292 = vpack.c.b16 %v956, %v955
  %v1294 = vpack.c.b16 %v969, %v968
  %s1296 = scalar_lea.vmem %s6, 128
  %v1297 = vld [vmem:[%s1296] sm:$0xf]
  %v1298 = vld [vmem:[%s1296 + $0x4] sm:$0xf]
  %v1299 = vld [vmem:[%s1296 + $0x8] sm:$0xf]
  %v1300 = vld [vmem:[%s1296 + $0xc] sm:$0xf]
  %v1301 = vld [vmem:[%s1296 + $0x10] sm:$0xf]
  %v1302 = vld [vmem:[%s1296 + $0x14] sm:$0xf]
  %v1303 = vld [vmem:[%s1296 + $0x18] sm:$0xf]
  %v1304 = vld [vmem:[%s1296 + $0x1c] sm:$0xf]
  %v1305 = vld [vmem:[%s1296 + $0x20] sm:$0xf]
  %v1306 = vld [vmem:[%s1296 + $0x24] sm:$0xf]
  %v1307 = vld [vmem:[%s1296 + $0x28] sm:$0xf]
  %v1308 = vld [vmem:[%s1296 + $0x2c] sm:$0xf]
  %v1309 = vld [vmem:[%s1296 + $0x30] sm:$0xf]
  %v1310 = vld [vmem:[%s1296 + $0x34] sm:$0xf]
  %v1311 = vld [vmem:[%s1296 + $0x38] sm:$0xf]
  %v1312 = vld [vmem:[%s1296 + $0x3c] sm:$0xf]
  %v1329 = vunpack.c.l.b16 %v1297
  %v1330 = vunpack.c.l.b16 %v1298
  %v1331 = vunpack.c.l.b16 %v1299
  %v1332 = vunpack.c.l.b16 %v1300
  %v1333 = vunpack.c.l.b16 %v1301
  %v1334 = vunpack.c.l.b16 %v1302
  %v1335 = vunpack.c.l.b16 %v1303
  %v1336 = vunpack.c.l.b16 %v1304
  %v1337 = vunpack.c.l.b16 %v1305
  %v1338 = vunpack.c.l.b16 %v1306
  %v1339 = vunpack.c.l.b16 %v1307
  %v1340 = vunpack.c.l.b16 %v1308
  %v1341 = vunpack.c.l.b16 %v1309
  %v1342 = vunpack.c.l.b16 %v1310
  %v1343 = vunpack.c.l.b16 %v1311
  %v1344 = vunpack.c.l.b16 %v1312
  %v1345 = vpack.c.b16 %v1330, %v1329
  %v1346 = vpack.c.b16 %v1332, %v1331
  %v1347 = vpack.c.b16 %v1334, %v1333
  %v1348 = vpack.c.b16 %v1336, %v1335
  %v1349 = vpack.c.b16 %v1338, %v1337
  %v1350 = vpack.c.b16 %v1340, %v1339
  %v1351 = vpack.c.b16 %v1342, %v1341
  %v1352 = vpack.c.b16 %v1344, %v1343
  %1361 = vmatprep.subr.bf16.mxu0 0
  %1362 = vmatpush1.bf16.msra.mxu0 %v1352
  %1363 = vmatprep.subr.bf16.mxu0 0
  %1364 = vmatpush1.bf16.msra.mxu0 %v1351
  %1365 = vmatprep.subr.bf16.mxu0 0
  %1366 = vmatpush1.bf16.msra.mxu0 %v1350
  %1367 = vmatprep.subr.bf16.mxu0 0
  %1368 = vmatpush1.bf16.msra.mxu0 %v1349
  %1369 = vmatprep.subr.bf16.mxu0 0
  %1370 = vmatpush1.bf16.msra.mxu0 %v1348
  %1371 = vmatprep.subr.bf16.mxu0 0
  %1372 = vmatpush1.bf16.msra.mxu0 %v1347
  %1373 = vmatprep.subr.bf16.mxu0 0
  %1374 = vmatpush1.bf16.msra.mxu0 %v1346
  %1375 = vmatprep.subr.bf16.mxu0 0
  %1376 = vmatpush1.bf16.msra.mxu0 %v1345
  %1377 = vmatprep.subr.bf16.mxu0 0
  %1378 = vmatpush2.bf16.msra.mxu0 0
  %1379 = vmatprep.subr.bf16.mxu0 0
  %1380 = vmatpush2.bf16.msra.mxu0 0
  %1381 = vmatprep.subr.bf16.mxu0 0
  %1382 = vmatpush2.bf16.msra.mxu0 0
  %1383 = vmatprep.subr.bf16.mxu0 0
  %1384 = vmatpush2.bf16.msra.mxu0 0
  %1385 = vmatprep.subr.bf16.mxu0 0
  %1386 = vmatpush2.bf16.msra.mxu0 0
  %1387 = vmatprep.subr.bf16.mxu0 0
  %1388 = vmatpush2.bf16.msra.mxu0 0
  %1389 = vmatprep.subr.bf16.mxu0 0
  %1390 = vmatpush2.bf16.msra.mxu0 0
  %1391 = vmatprep.subr.bf16.mxu0 0
  %1392 = vmatpush2.bf16.msra.mxu0 0
  %1393 = vmatprep.mubr.bf16.mxu0 0
  %1394 = vmatmul.mubr.bf16.gmra.mxu0 %v1292
  %v1395 = vpop.f32.mrf.mxu0
  %v1396 = vadd.f32 0.0, %v1395
  %v1397 = vpop.f32.mrf.mxu0
  %v1398 = vpop.f32.mrf.mxu0
  %v1399 = vadd.f32 0.0, %v1398
  %v1400 = vpop.f32.mrf.mxu0
  %1401 = vmatprep.mubr.bf16.mxu0 0
  %1402 = vmatmul.mubr.bf16.gmra.mxu0 %v1294
  %v1403 = vpop.f32.mrf.mxu0
  %v1404 = vadd.f32 0.0, %v1403
  %v1405 = vpop.f32.mrf.mxu0
  %v1406 = vpop.f32.mrf.mxu0
  %v1407 = vadd.f32 0.0, %v1406
  %v1408 = vpop.f32.mrf.mxu0
  %1409 = vdwg.mxu0
  %v1410 = vadd.f32 %v1278, %v1396
  %v1411 = vadd.f32 %v1281, %v1399
  %v1412 = vadd.f32 %v1286, %v1404
  %v1413 = vadd.f32 %v1289, %v1407
  %v1415 = vunpack.c.l.b16 %v942
  %v1416 = vpack.c.b16 %v1415, %v1415
  %vm1417 = vsmask.f32 7424
  %v1419 = vshrl.u32 %v1292, 16
  %v1421 = vshll.u32 %v1292, 16
  %v1423 = vrot.slane %v1421, 1
  %v1424 = vor.u32 %v1419, %v1423
  %v1426 = vshll.u32 %v1416, 16
  %v1428 = vrot.slane %v1426, 1
  %v1429 = vsel %vm1417, %v1424, %v1428
  %v1432 = vunpack.c.l.b16 %v948
  %v1433 = vpack.c.b16 %v1432, %v1432
  %v1435 = vshrl.u32 %v1294, 16
  %v1437 = vshll.u32 %v1294, 16
  %v1439 = vrot.slane %v1437, 1
  %v1440 = vor.u32 %v1435, %v1439
  %v1442 = vshll.u32 %v1433, 16
  %v1444 = vrot.slane %v1442, 1
  %v1445 = vsel %vm1417, %v1440, %v1444
  %v1447 = vsel %vm919, 1, 0
  %v1448 = vsel %vm920, 1, 0
  %v1449 = vsel %vm921, 1, 0
  %v1450 = vsel %vm922, 1, 0
  %vm1451 = vcmp.eq.s32.totalorder %v1447, 1
  %vm1452 = vcmp.eq.s32.totalorder %v1448, 1
  %vm1453 = vcmp.eq.s32.totalorder %v1449, 1
  %vm1454 = vcmp.eq.s32.totalorder %v1450, 1
  %vm1455 = vmpackc.low %vm1451, %vm1451
  %vm1456 = vmpackc.low %vm1452, %vm1452
  %vm1457 = vmpackc.low %vm1453, %vm1453
  %vm1458 = vmpackc.low %vm1454, %vm1454
  %v1459 = vsel %vm1455, 65537, 0
  %v1460 = vsel %vm1456, 65537, 0
  %v1461 = vsel %vm1457, 65537, 0
  %v1462 = vsel %vm1458, 65537, 0
  %v1463 = vunpack.c.l.b16 %v1459
  %v1464 = vunpack.c.l.b16 %v1460
  %v1465 = vunpack.c.l.b16 %v1461
  %v1466 = vunpack.c.l.b16 %v1462
  %v1467 = vpack.c.b16 %v1464, %v1463
  %v1468 = vpack.c.b16 %v1466, %v1465
  %vm1469 = vcmp.ne.s16.totalorder %v1467, 0
  %vm1470 = vcmp.ne.s16.totalorder %v1468, 0
  %v1471 = vsel %vm1469, %v1429, 0
  %v1472 = vsel %vm1470, %v1445, 0
  %s1473 = scalar_lea.vmem %s6, 192
  %v1474 = vld [vmem:[%s1473] sm:$0xf]
  %v1475 = vld [vmem:[%s1473 + $0x4] sm:$0xf]
  %v1476 = vld [vmem:[%s1473 + $0x8] sm:$0xf]
  %v1477 = vld [vmem:[%s1473 + $0xc] sm:$0xf]
  %v1478 = vld [vmem:[%s1473 + $0x10] sm:$0xf]
  %v1479 = vld [vmem:[%s1473 + $0x14] sm:$0xf]
  %v1480 = vld [vmem:[%s1473 + $0x18] sm:$0xf]
  %v1481 = vld [vmem:[%s1473 + $0x1c] sm:$0xf]
  %v1482 = vld [vmem:[%s1473 + $0x20] sm:$0xf]
  %v1483 = vld [vmem:[%s1473 + $0x24] sm:$0xf]
  %v1484 = vld [vmem:[%s1473 + $0x28] sm:$0xf]
  %v1485 = vld [vmem:[%s1473 + $0x2c] sm:$0xf]
  %v1486 = vld [vmem:[%s1473 + $0x30] sm:$0xf]
  %v1487 = vld [vmem:[%s1473 + $0x34] sm:$0xf]
  %v1488 = vld [vmem:[%s1473 + $0x38] sm:$0xf]
  %v1489 = vld [vmem:[%s1473 + $0x3c] sm:$0xf]
  %v1506 = vunpack.c.l.b16 %v1474
  %v1507 = vunpack.c.l.b16 %v1475
  %v1508 = vunpack.c.l.b16 %v1476
  %v1509 = vunpack.c.l.b16 %v1477
  %v1510 = vunpack.c.l.b16 %v1478
  %v1511 = vunpack.c.l.b16 %v1479
  %v1512 = vunpack.c.l.b16 %v1480
  %v1513 = vunpack.c.l.b16 %v1481
  %v1514 = vunpack.c.l.b16 %v1482
  %v1515 = vunpack.c.l.b16 %v1483
  %v1516 = vunpack.c.l.b16 %v1484
  %v1517 = vunpack.c.l.b16 %v1485
  %v1518 = vunpack.c.l.b16 %v1486
  %v1519 = vunpack.c.l.b16 %v1487
  %v1520 = vunpack.c.l.b16 %v1488
  %v1521 = vunpack.c.l.b16 %v1489
  %v1522 = vpack.c.b16 %v1507, %v1506
  %v1523 = vpack.c.b16 %v1509, %v1508
  %v1524 = vpack.c.b16 %v1511, %v1510
  %v1525 = vpack.c.b16 %v1513, %v1512
  %v1526 = vpack.c.b16 %v1515, %v1514
  %v1527 = vpack.c.b16 %v1517, %v1516
  %v1528 = vpack.c.b16 %v1519, %v1518
  %v1529 = vpack.c.b16 %v1521, %v1520
  %1538 = vmatprep.subr.bf16.mxu0 0
  %1539 = vmatpush1.bf16.msra.mxu0 %v1529
  %1540 = vmatprep.subr.bf16.mxu0 0
  %1541 = vmatpush1.bf16.msra.mxu0 %v1528
  %1542 = vmatprep.subr.bf16.mxu0 0
  %1543 = vmatpush1.bf16.msra.mxu0 %v1527
  %1544 = vmatprep.subr.bf16.mxu0 0
  %1545 = vmatpush1.bf16.msra.mxu0 %v1526
  %1546 = vmatprep.subr.bf16.mxu0 0
  %1547 = vmatpush1.bf16.msra.mxu0 %v1525
  %1548 = vmatprep.subr.bf16.mxu0 0
  %1549 = vmatpush1.bf16.msra.mxu0 %v1524
  %1550 = vmatprep.subr.bf16.mxu0 0
  %1551 = vmatpush1.bf16.msra.mxu0 %v1523
  %1552 = vmatprep.subr.bf16.mxu0 0
  %1553 = vmatpush1.bf16.msra.mxu0 %v1522
  %1554 = vmatprep.subr.bf16.mxu0 0
  %1555 = vmatpush2.bf16.msra.mxu0 0
  %1556 = vmatprep.subr.bf16.mxu0 0
  %1557 = vmatpush2.bf16.msra.mxu0 0
  %1558 = vmatprep.subr.bf16.mxu0 0
  %1559 = vmatpush2.bf16.msra.mxu0 0
  %1560 = vmatprep.subr.bf16.mxu0 0
  %1561 = vmatpush2.bf16.msra.mxu0 0
  %1562 = vmatprep.subr.bf16.mxu0 0
  %1563 = vmatpush2.bf16.msra.mxu0 0
  %1564 = vmatprep.subr.bf16.mxu0 0
  %1565 = vmatpush2.bf16.msra.mxu0 0
  %1566 = vmatprep.subr.bf16.mxu0 0
  %1567 = vmatpush2.bf16.msra.mxu0 0
  %1568 = vmatprep.subr.bf16.mxu0 0
  %1569 = vmatpush2.bf16.msra.mxu0 0
  %1570 = vmatprep.mubr.bf16.mxu0 0
  %1571 = vmatmul.mubr.bf16.gmra.mxu0 %v1471
  %v1572 = vpop.f32.mrf.mxu0
  %v1573 = vadd.f32 0.0, %v1572
  %v1574 = vpop.f32.mrf.mxu0
  %v1575 = vpop.f32.mrf.mxu0
  %v1576 = vadd.f32 0.0, %v1575
  %v1577 = vpop.f32.mrf.mxu0
  %1578 = vmatprep.mubr.bf16.mxu0 0
  %1579 = vmatmul.mubr.bf16.gmra.mxu0 %v1472
  %v1580 = vpop.f32.mrf.mxu0
  %v1581 = vadd.f32 0.0, %v1580
  %v1582 = vpop.f32.mrf.mxu0
  %v1583 = vpop.f32.mrf.mxu0
  %v1584 = vadd.f32 0.0, %v1583
  %v1585 = vpop.f32.mrf.mxu0
  %1586 = vdwg.mxu0
  %v1587 = vadd.f32 %v1410, %v1573
  %v1588 = vadd.f32 %v1411, %v1576
  %v1589 = vadd.f32 %v1412, %v1581
  %v1590 = vadd.f32 %v1413, %v1584
  %vm1591 = vcmask 1046528
  %v1592 = vrot.slane %v1292, 1
  %v1593 = vrot.slane %v1416, 1
  %v1594 = vsel %vm1591, %v1592, %v1593
  %v1596 = vrot.slane %v1294, 1
  %v1597 = vrot.slane %v1433, 1
  %v1598 = vsel %vm1591, %v1596, %v1597
  %v1600 = vsel %vm935, 1, 0
  %v1601 = vsel %vm936, 1, 0
  %v1602 = vsel %vm937, 1, 0
  %v1603 = vsel %vm938, 1, 0
  %vm1604 = vcmp.eq.s32.totalorder %v1600, 1
  %vm1605 = vcmp.eq.s32.totalorder %v1601, 1
  %vm1606 = vcmp.eq.s32.totalorder %v1602, 1
  %vm1607 = vcmp.eq.s32.totalorder %v1603, 1
  %vm1608 = vmpackc.low %vm1604, %vm1604
  %vm1609 = vmpackc.low %vm1605, %vm1605
  %vm1610 = vmpackc.low %vm1606, %vm1606
  %vm1611 = vmpackc.low %vm1607, %vm1607
  %v1612 = vsel %vm1608, 65537, 0
  %v1613 = vsel %vm1609, 65537, 0
  %v1614 = vsel %vm1610, 65537, 0
  %v1615 = vsel %vm1611, 65537, 0
  %v1616 = vunpack.c.l.b16 %v1612
  %v1617 = vunpack.c.l.b16 %v1613
  %v1618 = vunpack.c.l.b16 %v1614
  %v1619 = vunpack.c.l.b16 %v1615
  %v1620 = vpack.c.b16 %v1617, %v1616
  %v1621 = vpack.c.b16 %v1619, %v1618
  %vm1622 = vcmp.ne.s16.totalorder %v1620, 0
  %vm1623 = vcmp.ne.s16.totalorder %v1621, 0
  %v1624 = vsel %vm1622, %v1594, 0
  %v1625 = vsel %vm1623, %v1598, 0
  %s1626 = scalar_lea.vmem %s6, 256
  %v1627 = vld [vmem:[%s1626] sm:$0xf]
  %v1628 = vld [vmem:[%s1626 + $0x4] sm:$0xf]
  %v1629 = vld [vmem:[%s1626 + $0x8] sm:$0xf]
  %v1630 = vld [vmem:[%s1626 + $0xc] sm:$0xf]
  %v1631 = vld [vmem:[%s1626 + $0x10] sm:$0xf]
  %v1632 = vld [vmem:[%s1626 + $0x14] sm:$0xf]
  %v1633 = vld [vmem:[%s1626 + $0x18] sm:$0xf]
  %v1634 = vld [vmem:[%s1626 + $0x1c] sm:$0xf]
  %v1635 = vld [vmem:[%s1626 + $0x20] sm:$0xf]
  %v1636 = vld [vmem:[%s1626 + $0x24] sm:$0xf]
  %v1637 = vld [vmem:[%s1626 + $0x28] sm:$0xf]
  %v1638 = vld [vmem:[%s1626 + $0x2c] sm:$0xf]
  %v1639 = vld [vmem:[%s1626 + $0x30] sm:$0xf]
  %v1640 = vld [vmem:[%s1626 + $0x34] sm:$0xf]
  %v1641 = vld [vmem:[%s1626 + $0x38] sm:$0xf]
  %v1642 = vld [vmem:[%s1626 + $0x3c] sm:$0xf]
  %v1659 = vunpack.c.l.b16 %v1627
  %v1660 = vunpack.c.l.b16 %v1628
  %v1661 = vunpack.c.l.b16 %v1629
  %v1662 = vunpack.c.l.b16 %v1630
  %v1663 = vunpack.c.l.b16 %v1631
  %v1664 = vunpack.c.l.b16 %v1632
  %v1665 = vunpack.c.l.b16 %v1633
  %v1666 = vunpack.c.l.b16 %v1634
  %v1667 = vunpack.c.l.b16 %v1635
  %v1668 = vunpack.c.l.b16 %v1636
  %v1669 = vunpack.c.l.b16 %v1637
  %v1670 = vunpack.c.l.b16 %v1638
  %v1671 = vunpack.c.l.b16 %v1639
  %v1672 = vunpack.c.l.b16 %v1640
  %v1673 = vunpack.c.l.b16 %v1641
  %v1674 = vunpack.c.l.b16 %v1642
  %v1675 = vpack.c.b16 %v1660, %v1659
  %v1676 = vpack.c.b16 %v1662, %v1661
  %v1677 = vpack.c.b16 %v1664, %v1663
  %v1678 = vpack.c.b16 %v1666, %v1665
  %v1679 = vpack.c.b16 %v1668, %v1667
  %v1680 = vpack.c.b16 %v1670, %v1669
  %v1681 = vpack.c.b16 %v1672, %v1671
  %v1682 = vpack.c.b16 %v1674, %v1673
  %1691 = vmatprep.subr.bf16.mxu0 0
  %1692 = vmatpush1.bf16.msra.mxu0 %v1682
  %1693 = vmatprep.subr.bf16.mxu0 0
  %1694 = vmatpush1.bf16.msra.mxu0 %v1681
  %1695 = vmatprep.subr.bf16.mxu0 0
  %1696 = vmatpush1.bf16.msra.mxu0 %v1680
  %1697 = vmatprep.subr.bf16.mxu0 0
  %1698 = vmatpush1.bf16.msra.mxu0 %v1679
  %1699 = vmatprep.subr.bf16.mxu0 0
  %1700 = vmatpush1.bf16.msra.mxu0 %v1678
  %1701 = vmatprep.subr.bf16.mxu0 0
  %1702 = vmatpush1.bf16.msra.mxu0 %v1677
  %1703 = vmatprep.subr.bf16.mxu0 0
  %1704 = vmatpush1.bf16.msra.mxu0 %v1676
  %1705 = vmatprep.subr.bf16.mxu0 0
  %1706 = vmatpush1.bf16.msra.mxu0 %v1675
  %1707 = vmatprep.subr.bf16.mxu0 0
  %1708 = vmatpush2.bf16.msra.mxu0 0
  %1709 = vmatprep.subr.bf16.mxu0 0
  %1710 = vmatpush2.bf16.msra.mxu0 0
  %1711 = vmatprep.subr.bf16.mxu0 0
  %1712 = vmatpush2.bf16.msra.mxu0 0
  %1713 = vmatprep.subr.bf16.mxu0 0
  %1714 = vmatpush2.bf16.msra.mxu0 0
  %1715 = vmatprep.subr.bf16.mxu0 0
  %1716 = vmatpush2.bf16.msra.mxu0 0
  %1717 = vmatprep.subr.bf16.mxu0 0
  %1718 = vmatpush2.bf16.msra.mxu0 0
  %1719 = vmatprep.subr.bf16.mxu0 0
  %1720 = vmatpush2.bf16.msra.mxu0 0
  %1721 = vmatprep.subr.bf16.mxu0 0
  %1722 = vmatpush2.bf16.msra.mxu0 0
  %1723 = vmatprep.mubr.bf16.mxu0 0
  %1724 = vmatmul.mubr.bf16.gmra.mxu0 %v1624
  %v1725 = vpop.f32.mrf.mxu0
  %v1726 = vadd.f32 0.0, %v1725
  %v1727 = vpop.f32.mrf.mxu0
  %v1728 = vpop.f32.mrf.mxu0
  %v1729 = vadd.f32 0.0, %v1728
  %v1730 = vpop.f32.mrf.mxu0
  %1731 = vmatprep.mubr.bf16.mxu0 0
  %1732 = vmatmul.mubr.bf16.gmra.mxu0 %v1625
  %v1733 = vpop.f32.mrf.mxu0
  %v1734 = vadd.f32 0.0, %v1733
  %v1735 = vpop.f32.mrf.mxu0
  %v1736 = vpop.f32.mrf.mxu0
  %v1737 = vadd.f32 0.0, %v1736
  %v1738 = vpop.f32.mrf.mxu0
  %1739 = vdwg.mxu0
  %v1740 = vadd.f32 %v1587, %v1726
  %v1741 = vadd.f32 %v1588, %v1729
  %v1742 = vadd.f32 %v1589, %v1734
  %v1743 = vadd.f32 %v1590, %v1737
  %v1744 = vsel %vm998, %v1594, 0
  %v1745 = vsel %vm999, %v1598, 0
  %s1746 = scalar_lea.vmem %s6, 320
  %v1747 = vld [vmem:[%s1746] sm:$0xf]
  %v1748 = vld [vmem:[%s1746 + $0x4] sm:$0xf]
  %v1749 = vld [vmem:[%s1746 + $0x8] sm:$0xf]
  %v1750 = vld [vmem:[%s1746 + $0xc] sm:$0xf]
  %v1751 = vld [vmem:[%s1746 + $0x10] sm:$0xf]
  %v1752 = vld [vmem:[%s1746 + $0x14] sm:$0xf]
  %v1753 = vld [vmem:[%s1746 + $0x18] sm:$0xf]
  %v1754 = vld [vmem:[%s1746 + $0x1c] sm:$0xf]
  %v1755 = vld [vmem:[%s1746 + $0x20] sm:$0xf]
  %v1756 = vld [vmem:[%s1746 + $0x24] sm:$0xf]
  %v1757 = vld [vmem:[%s1746 + $0x28] sm:$0xf]
  %v1758 = vld [vmem:[%s1746 + $0x2c] sm:$0xf]
  %v1759 = vld [vmem:[%s1746 + $0x30] sm:$0xf]
  %v1760 = vld [vmem:[%s1746 + $0x34] sm:$0xf]
  %v1761 = vld [vmem:[%s1746 + $0x38] sm:$0xf]
  %v1762 = vld [vmem:[%s1746 + $0x3c] sm:$0xf]
  %v1779 = vunpack.c.l.b16 %v1747
  %v1780 = vunpack.c.l.b16 %v1748
  %v1781 = vunpack.c.l.b16 %v1749
  %v1782 = vunpack.c.l.b16 %v1750
  %v1783 = vunpack.c.l.b16 %v1751
  %v1784 = vunpack.c.l.b16 %v1752
  %v1785 = vunpack.c.l.b16 %v1753
  %v1786 = vunpack.c.l.b16 %v1754
  %v1787 = vunpack.c.l.b16 %v1755
  %v1788 = vunpack.c.l.b16 %v1756
  %v1789 = vunpack.c.l.b16 %v1757
  %v1790 = vunpack.c.l.b16 %v1758
  %v1791 = vunpack.c.l.b16 %v1759
  %v1792 = vunpack.c.l.b16 %v1760
  %v1793 = vunpack.c.l.b16 %v1761
  %v1794 = vunpack.c.l.b16 %v1762
  %v1795 = vpack.c.b16 %v1780, %v1779
  %v1796 = vpack.c.b16 %v1782, %v1781
  %v1797 = vpack.c.b16 %v1784, %v1783
  %v1798 = vpack.c.b16 %v1786, %v1785
  %v1799 = vpack.c.b16 %v1788, %v1787
  %v1800 = vpack.c.b16 %v1790, %v1789
  %v1801 = vpack.c.b16 %v1792, %v1791
  %v1802 = vpack.c.b16 %v1794, %v1793
  %1811 = vmatprep.subr.bf16.mxu0 0
  %1812 = vmatpush1.bf16.msra.mxu0 %v1802
  %1813 = vmatprep.subr.bf16.mxu0 0
  %1814 = vmatpush1.bf16.msra.mxu0 %v1801
  %1815 = vmatprep.subr.bf16.mxu0 0
  %1816 = vmatpush1.bf16.msra.mxu0 %v1800
  %1817 = vmatprep.subr.bf16.mxu0 0
  %1818 = vmatpush1.bf16.msra.mxu0 %v1799
  %1819 = vmatprep.subr.bf16.mxu0 0
  %1820 = vmatpush1.bf16.msra.mxu0 %v1798
  %1821 = vmatprep.subr.bf16.mxu0 0
  %1822 = vmatpush1.bf16.msra.mxu0 %v1797
  %1823 = vmatprep.subr.bf16.mxu0 0
  %1824 = vmatpush1.bf16.msra.mxu0 %v1796
  %1825 = vmatprep.subr.bf16.mxu0 0
  %1826 = vmatpush1.bf16.msra.mxu0 %v1795
  %1827 = vmatprep.subr.bf16.mxu0 0
  %1828 = vmatpush2.bf16.msra.mxu0 0
  %1829 = vmatprep.subr.bf16.mxu0 0
  %1830 = vmatpush2.bf16.msra.mxu0 0
  %1831 = vmatprep.subr.bf16.mxu0 0
  %1832 = vmatpush2.bf16.msra.mxu0 0
  %1833 = vmatprep.subr.bf16.mxu0 0
  %1834 = vmatpush2.bf16.msra.mxu0 0
  %1835 = vmatprep.subr.bf16.mxu0 0
  %1836 = vmatpush2.bf16.msra.mxu0 0
  %1837 = vmatprep.subr.bf16.mxu0 0
  %1838 = vmatpush2.bf16.msra.mxu0 0
  %1839 = vmatprep.subr.bf16.mxu0 0
  %1840 = vmatpush2.bf16.msra.mxu0 0
  %1841 = vmatprep.subr.bf16.mxu0 0
  %1842 = vmatpush2.bf16.msra.mxu0 0
  %1843 = vmatprep.mubr.bf16.mxu0 0
  %1844 = vmatmul.mubr.bf16.gmra.mxu0 %v1744
  %v1845 = vpop.f32.mrf.mxu0
  %v1846 = vadd.f32 0.0, %v1845
  %v1847 = vpop.f32.mrf.mxu0
  %v1848 = vpop.f32.mrf.mxu0
  %v1849 = vadd.f32 0.0, %v1848
  %v1850 = vpop.f32.mrf.mxu0
  %1851 = vmatprep.mubr.bf16.mxu0 0
  %1852 = vmatmul.mubr.bf16.gmra.mxu0 %v1745
  %v1853 = vpop.f32.mrf.mxu0
  %v1854 = vadd.f32 0.0, %v1853
  %v1855 = vpop.f32.mrf.mxu0
  %v1856 = vpop.f32.mrf.mxu0
  %v1857 = vadd.f32 0.0, %v1856
  %v1858 = vpop.f32.mrf.mxu0
  %1859 = vdwg.mxu0
  %v1860 = vadd.f32 %v1740, %v1846
  %v1861 = vadd.f32 %v1741, %v1849
  %v1862 = vadd.f32 %v1742, %v1854
  %v1863 = vadd.f32 %v1743, %v1857
  %vm1864 = vsmask.f32 6400
  %v1865 = vrot.slane %v1419, 1
  %v1866 = vrot.slane %v1421, 2
  %v1867 = vor.u32 %v1865, %v1866
  %v1868 = vshrl.u32 %v1416, 16
  %v1870 = vrot.slane %v1868, 1
  %v1871 = vrot.slane %v1426, 2
  %v1872 = vor.u32 %v1870, %v1871
  %v1873 = vsel %vm1864, %v1867, %v1872
  %v1875 = vrot.slane %v1435, 1
  %v1876 = vrot.slane %v1437, 2
  %v1877 = vor.u32 %v1875, %v1876
  %v1878 = vshrl.u32 %v1433, 16
  %v1880 = vrot.slane %v1878, 1
  %v1881 = vrot.slane %v1442, 2
  %v1882 = vor.u32 %v1880, %v1881
  %v1883 = vsel %vm1864, %v1877, %v1882
  %v1885 = vsel %vm1077, %v1873, 0
  %v1886 = vsel %vm1078, %v1883, 0
  %v1887 = vld [vmem:[%s5] sm:$0xff]
  %v1888 = vld [vmem:[%s5 + $0x8] sm:$0xff]
  %v1889 = vld [vmem:[%s5 + $0x10] sm:$0xff]
  %v1890 = vld [vmem:[%s5 + $0x18] sm:$0xff]
  %v1891 = vld [vmem:[%s5 + $0x20] sm:$0xff]
  %v1892 = vld [vmem:[%s5 + $0x28] sm:$0xff]
  %v1893 = vld [vmem:[%s5 + $0x30] sm:$0xff]
  %v1894 = vld [vmem:[%s5 + $0x38] sm:$0xff]
  %v1895 = vld [vmem:[%s5 + $0x40] sm:$0xff]
  %v1896 = vld [vmem:[%s5 + $0x48] sm:$0xff]
  %v1897 = vld [vmem:[%s5 + $0x50] sm:$0xff]
  %v1898 = vld [vmem:[%s5 + $0x58] sm:$0xff]
  %v1899 = vld [vmem:[%s5 + $0x60] sm:$0xff]
  %v1900 = vld [vmem:[%s5 + $0x68] sm:$0xff]
  %v1901 = vld [vmem:[%s5 + $0x70] sm:$0xff]
  %v1902 = vld [vmem:[%s5 + $0x78] sm:$0xff]
  %vm1903 = vcmask 1045504
  %v1904 = vrot.slane %v1292, 2
  %v1905 = vrot.slane %v1416, 2
  %v1906 = vsel %vm1903, %v1904, %v1905
  %v1908 = vrot.slane %v1294, 2
  %v1909 = vrot.slane %v1433, 2
  %v1910 = vsel %vm1903, %v1908, %v1909
  %s1912 = scalar_lea.vmem %s5, 128
  %v1913 = vld [vmem:[%s1912] sm:$0xff]
  %v1914 = vld [vmem:[%s1912 + $0x8] sm:$0xff]
  %v1915 = vld [vmem:[%s1912 + $0x10] sm:$0xff]
  %v1916 = vld [vmem:[%s1912 + $0x18] sm:$0xff]
  %v1917 = vld [vmem:[%s1912 + $0x20] sm:$0xff]
  %v1918 = vld [vmem:[%s1912 + $0x28] sm:$0xff]
  %v1919 = vld [vmem:[%s1912 + $0x30] sm:$0xff]
  %v1920 = vld [vmem:[%s1912 + $0x38] sm:$0xff]
  %v1921 = vld [vmem:[%s1912 + $0x40] sm:$0xff]
  %v1922 = vld [vmem:[%s1912 + $0x48] sm:$0xff]
  %v1923 = vld [vmem:[%s1912 + $0x50] sm:$0xff]
  %v1924 = vld [vmem:[%s1912 + $0x58] sm:$0xff]
  %v1925 = vld [vmem:[%s1912 + $0x60] sm:$0xff]
  %v1926 = vld [vmem:[%s1912 + $0x68] sm:$0xff]
  %v1927 = vld [vmem:[%s1912 + $0x70] sm:$0xff]
  %v1928 = vld [vmem:[%s1912 + $0x78] sm:$0xff]
  %v1945 = vunpack.c.l.b16 %v1913
  %v1946 = vunpack.c.h.b16 %v1913
  %v1947 = vunpack.c.l.b16 %v1914
  %v1948 = vunpack.c.h.b16 %v1914
  %v1949 = vunpack.c.l.b16 %v1915
  %v1950 = vunpack.c.h.b16 %v1915
  %v1951 = vunpack.c.l.b16 %v1916
  %v1952 = vunpack.c.h.b16 %v1916
  %v1953 = vunpack.c.l.b16 %v1917
  %v1954 = vunpack.c.h.b16 %v1917
  %v1955 = vunpack.c.l.b16 %v1918
  %v1956 = vunpack.c.h.b16 %v1918
  %v1957 = vunpack.c.l.b16 %v1919
  %v1958 = vunpack.c.h.b16 %v1919
  %v1959 = vunpack.c.l.b16 %v1920
  %v1960 = vunpack.c.h.b16 %v1920
  %v1961 = vunpack.c.l.b16 %v1921
  %v1962 = vunpack.c.h.b16 %v1921
  %v1963 = vunpack.c.l.b16 %v1922
  %v1964 = vunpack.c.h.b16 %v1922
  %v1965 = vunpack.c.l.b16 %v1923
  %v1966 = vunpack.c.h.b16 %v1923
  %v1967 = vunpack.c.l.b16 %v1924
  %v1968 = vunpack.c.h.b16 %v1924
  %v1969 = vunpack.c.l.b16 %v1925
  %v1970 = vunpack.c.h.b16 %v1925
  %v1971 = vunpack.c.l.b16 %v1926
  %v1972 = vunpack.c.h.b16 %v1926
  %v1973 = vunpack.c.l.b16 %v1927
  %v1974 = vunpack.c.h.b16 %v1927
  %v1975 = vunpack.c.l.b16 %v1928
  %v1976 = vunpack.c.h.b16 %v1928
  %v1977 = vpack.c.b16 %v1947, %v1945
  %v1978 = vpack.c.b16 %v1948, %v1946
  %v1979 = vpack.c.b16 %v1951, %v1949
  %v1980 = vpack.c.b16 %v1952, %v1950
  %v1981 = vpack.c.b16 %v1955, %v1953
  %v1982 = vpack.c.b16 %v1956, %v1954
  %v1983 = vpack.c.b16 %v1959, %v1957
  %v1984 = vpack.c.b16 %v1960, %v1958
  %v1985 = vpack.c.b16 %v1963, %v1961
  %v1986 = vpack.c.b16 %v1964, %v1962
  %v1987 = vpack.c.b16 %v1967, %v1965
  %v1988 = vpack.c.b16 %v1968, %v1966
  %v1989 = vpack.c.b16 %v1971, %v1969
  %v1990 = vpack.c.b16 %v1972, %v1970
  %v1991 = vpack.c.b16 %v1975, %v1973
  %v1992 = vpack.c.b16 %v1976, %v1974
  %2009 = vmatprep.subr.bf16.mxu0 %v1992
  %2010 = vmatpush1.bf16.msra.mxu0 %v1991
  %2011 = vmatprep.subr.bf16.mxu0 %v1990
  %2012 = vmatpush1.bf16.msra.mxu0 %v1989
  %2013 = vmatprep.subr.bf16.mxu0 %v1988
  %2014 = vmatpush1.bf16.msra.mxu0 %v1987
  %2015 = vmatprep.subr.bf16.mxu0 %v1986
  %2016 = vmatpush1.bf16.msra.mxu0 %v1985
  %2017 = vmatprep.subr.bf16.mxu0 %v1984
  %2018 = vmatpush1.bf16.msra.mxu0 %v1983
  %2019 = vmatprep.subr.bf16.mxu0 %v1982
  %2020 = vmatpush1.bf16.msra.mxu0 %v1981
  %2021 = vmatprep.subr.bf16.mxu0 %v1980
  %2022 = vmatpush1.bf16.msra.mxu0 %v1979
  %2023 = vmatprep.subr.bf16.mxu0 %v1978
  %2024 = vmatpush1.bf16.msra.mxu0 %v1977
  %2025 = vmatprep.subr.bf16.mxu0 0
  %2026 = vmatpush2.bf16.msra.mxu0 0
  %2027 = vmatprep.subr.bf16.mxu0 0
  %2028 = vmatpush2.bf16.msra.mxu0 0
  %2029 = vmatprep.subr.bf16.mxu0 0
  %2030 = vmatpush2.bf16.msra.mxu0 0
  %2031 = vmatprep.subr.bf16.mxu0 0
  %2032 = vmatpush2.bf16.msra.mxu0 0
  %2033 = vmatprep.subr.bf16.mxu0 0
  %2034 = vmatpush2.bf16.msra.mxu0 0
  %2035 = vmatprep.subr.bf16.mxu0 0
  %2036 = vmatpush2.bf16.msra.mxu0 0
  %2037 = vmatprep.subr.bf16.mxu0 0
  %2038 = vmatpush2.bf16.msra.mxu0 0
  %2039 = vmatprep.subr.bf16.mxu0 0
  %2040 = vmatpush2.bf16.msra.mxu0 0
  %2041 = vmatprep.mubr.bf16.mxu0 0
  %2042 = vmatmul.mubr.bf16.gmra.mxu0 %v1906
  %v2043 = vpop.f32.mrf.mxu0
  %v2044 = vadd.f32 0.0, %v2043
  %v2045 = vpop.f32.mrf.mxu0
  %v2046 = vadd.f32 0.0, %v2045
  %v2047 = vpop.f32.mrf.mxu0
  %v2048 = vadd.f32 0.0, %v2047
  %v2049 = vpop.f32.mrf.mxu0
  %v2050 = vadd.f32 0.0, %v2049
  %2051 = vmatprep.mubr.bf16.mxu0 0
  %2052 = vmatmul.mubr.bf16.gmra.mxu0 %v1910
  %v2053 = vpop.f32.mrf.mxu0
  %v2054 = vadd.f32 0.0, %v2053
  %v2055 = vpop.f32.mrf.mxu0
  %v2056 = vadd.f32 0.0, %v2055
  %v2057 = vpop.f32.mrf.mxu0
  %v2058 = vadd.f32 0.0, %v2057
  %v2059 = vpop.f32.mrf.mxu0
  %v2060 = vadd.f32 0.0, %v2059
  %2061 = vdwg.mxu0
  %v2078 = vunpack.c.l.b16 %v1887
  %v2079 = vunpack.c.h.b16 %v1887
  %v2080 = vunpack.c.l.b16 %v1888
  %v2081 = vunpack.c.h.b16 %v1888
  %v2082 = vunpack.c.l.b16 %v1889
  %v2083 = vunpack.c.h.b16 %v1889
  %v2084 = vunpack.c.l.b16 %v1890
  %v2085 = vunpack.c.h.b16 %v1890
  %v2086 = vunpack.c.l.b16 %v1891
  %v2087 = vunpack.c.h.b16 %v1891
  %v2088 = vunpack.c.l.b16 %v1892
  %v2089 = vunpack.c.h.b16 %v1892
  %v2090 = vunpack.c.l.b16 %v1893
  %v2091 = vunpack.c.h.b16 %v1893
  %v2092 = vunpack.c.l.b16 %v1894
  %v2093 = vunpack.c.h.b16 %v1894
  %v2094 = vunpack.c.l.b16 %v1895
  %v2095 = vunpack.c.h.b16 %v1895
  %v2096 = vunpack.c.l.b16 %v1896
  %v2097 = vunpack.c.h.b16 %v1896
  %v2098 = vunpack.c.l.b16 %v1897
  %v2099 = vunpack.c.h.b16 %v1897
  %v2100 = vunpack.c.l.b16 %v1898
  %v2101 = vunpack.c.h.b16 %v1898
  %v2102 = vunpack.c.l.b16 %v1899
  %v2103 = vunpack.c.h.b16 %v1899
  %v2104 = vunpack.c.l.b16 %v1900
  %v2105 = vunpack.c.h.b16 %v1900
  %v2106 = vunpack.c.l.b16 %v1901
  %v2107 = vunpack.c.h.b16 %v1901
  %v2108 = vunpack.c.l.b16 %v1902
  %v2109 = vunpack.c.h.b16 %v1902
  %v2110 = vpack.c.b16 %v2080, %v2078
  %v2111 = vpack.c.b16 %v2081, %v2079
  %v2112 = vpack.c.b16 %v2084, %v2082
  %v2113 = vpack.c.b16 %v2085, %v2083
  %v2114 = vpack.c.b16 %v2088, %v2086
  %v2115 = vpack.c.b16 %v2089, %v2087
  %v2116 = vpack.c.b16 %v2092, %v2090
  %v2117 = vpack.c.b16 %v2093, %v2091
  %v2118 = vpack.c.b16 %v2096, %v2094
  %v2119 = vpack.c.b16 %v2097, %v2095
  %v2120 = vpack.c.b16 %v2100, %v2098
  %v2121 = vpack.c.b16 %v2101, %v2099
  %v2122 = vpack.c.b16 %v2104, %v2102
  %v2123 = vpack.c.b16 %v2105, %v2103
  %v2124 = vpack.c.b16 %v2108, %v2106
  %v2125 = vpack.c.b16 %v2109, %v2107
  %2142 = vmatprep.subr.bf16.mxu0 %v2125
  %2143 = vmatpush1.bf16.msra.mxu0 %v2124
  %2144 = vmatprep.subr.bf16.mxu0 %v2123
  %2145 = vmatpush1.bf16.msra.mxu0 %v2122
  %2146 = vmatprep.subr.bf16.mxu0 %v2121
  %2147 = vmatpush1.bf16.msra.mxu0 %v2120
  %2148 = vmatprep.subr.bf16.mxu0 %v2119
  %2149 = vmatpush1.bf16.msra.mxu0 %v2118
  %2150 = vmatprep.subr.bf16.mxu0 %v2117
  %2151 = vmatpush1.bf16.msra.mxu0 %v2116
  %2152 = vmatprep.subr.bf16.mxu0 %v2115
  %2153 = vmatpush1.bf16.msra.mxu0 %v2114
  %2154 = vmatprep.subr.bf16.mxu0 %v2113
  %2155 = vmatpush1.bf16.msra.mxu0 %v2112
  %2156 = vmatprep.subr.bf16.mxu0 %v2111
  %2157 = vmatpush1.bf16.msra.mxu0 %v2110
  %2158 = vmatprep.subr.bf16.mxu0 0
  %2159 = vmatpush2.bf16.msra.mxu0 0
  %2160 = vmatprep.subr.bf16.mxu0 0
  %2161 = vmatpush2.bf16.msra.mxu0 0
  %2162 = vmatprep.subr.bf16.mxu0 0
  %2163 = vmatpush2.bf16.msra.mxu0 0
  %2164 = vmatprep.subr.bf16.mxu0 0
  %2165 = vmatpush2.bf16.msra.mxu0 0
  %2166 = vmatprep.subr.bf16.mxu0 0
  %2167 = vmatpush2.bf16.msra.mxu0 0
  %2168 = vmatprep.subr.bf16.mxu0 0
  %2169 = vmatpush2.bf16.msra.mxu0 0
  %2170 = vmatprep.subr.bf16.mxu0 0
  %2171 = vmatpush2.bf16.msra.mxu0 0
  %2172 = vmatprep.subr.bf16.mxu0 0
  %2173 = vmatpush2.bf16.msra.mxu0 0
  %2174 = vmatprep.mubr.bf16.mxu0 0
  %2175 = vmatmul.mubr.bf16.gmra.mxu0 %v1885
  %v2176 = vpop.f32.mrf.mxu0
  %v2177 = vadd.f32 %v2044, %v2176
  %v2178 = vpop.f32.mrf.mxu0
  %v2179 = vadd.f32 %v2046, %v2178
  %v2180 = vpop.f32.mrf.mxu0
  %v2181 = vadd.f32 %v2048, %v2180
  %v2182 = vpop.f32.mrf.mxu0
  %v2183 = vadd.f32 %v2050, %v2182
  %2184 = vmatprep.mubr.bf16.mxu0 0
  %2185 = vmatmul.mubr.bf16.gmra.mxu0 %v1886
  %v2186 = vpop.f32.mrf.mxu0
  %v2187 = vadd.f32 %v2054, %v2186
  %v2188 = vpop.f32.mrf.mxu0
  %v2189 = vadd.f32 %v2056, %v2188
  %v2190 = vpop.f32.mrf.mxu0
  %v2191 = vadd.f32 %v2058, %v2190
  %v2192 = vpop.f32.mrf.mxu0
  %v2193 = vadd.f32 %v2060, %v2192
  %2194 = vdwg.mxu0
  %vm2195 = vsmask.f32 5376
  %v2196 = vrot.slane %v1419, 2
  %v2197 = vrot.slane %v1421, 3
  %v2198 = vor.u32 %v2196, %v2197
  %v2199 = vrot.slane %v1868, 2
  %v2200 = vrot.slane %v1426, 3
  %v2201 = vor.u32 %v2199, %v2200
  %v2202 = vsel %vm2195, %v2198, %v2201
  %v2204 = vrot.slane %v1435, 2
  %v2205 = vrot.slane %v1437, 3
  %v2206 = vor.u32 %v2204, %v2205
  %v2207 = vrot.slane %v1878, 2
  %v2208 = vrot.slane %v1442, 3
  %v2209 = vor.u32 %v2207, %v2208
  %v2210 = vsel %vm2195, %v2206, %v2209
  %v2212 = vsel %vm1469, %v2202, 0
  %v2213 = vsel %vm1470, %v2210, 0
  %s2214 = scalar_lea.vmem %s5, 256
  %v2215 = vld [vmem:[%s2214] sm:$0xff]
  %v2216 = vld [vmem:[%s2214 + $0x8] sm:$0xff]
  %v2217 = vld [vmem:[%s2214 + $0x10] sm:$0xff]
  %v2218 = vld [vmem:[%s2214 + $0x18] sm:$0xff]
  %v2219 = vld [vmem:[%s2214 + $0x20] sm:$0xff]
  %v2220 = vld [vmem:[%s2214 + $0x28] sm:$0xff]
  %v2221 = vld [vmem:[%s2214 + $0x30] sm:$0xff]
  %v2222 = vld [vmem:[%s2214 + $0x38] sm:$0xff]
  %v2223 = vld [vmem:[%s2214 + $0x40] sm:$0xff]
  %v2224 = vld [vmem:[%s2214 + $0x48] sm:$0xff]
  %v2225 = vld [vmem:[%s2214 + $0x50] sm:$0xff]
  %v2226 = vld [vmem:[%s2214 + $0x58] sm:$0xff]
  %v2227 = vld [vmem:[%s2214 + $0x60] sm:$0xff]
  %v2228 = vld [vmem:[%s2214 + $0x68] sm:$0xff]
  %v2229 = vld [vmem:[%s2214 + $0x70] sm:$0xff]
  %v2230 = vld [vmem:[%s2214 + $0x78] sm:$0xff]
  %v2247 = vunpack.c.l.b16 %v2215
  %v2248 = vunpack.c.h.b16 %v2215
  %v2249 = vunpack.c.l.b16 %v2216
  %v2250 = vunpack.c.h.b16 %v2216
  %v2251 = vunpack.c.l.b16 %v2217
  %v2252 = vunpack.c.h.b16 %v2217
  %v2253 = vunpack.c.l.b16 %v2218
  %v2254 = vunpack.c.h.b16 %v2218
  %v2255 = vunpack.c.l.b16 %v2219
  %v2256 = vunpack.c.h.b16 %v2219
  %v2257 = vunpack.c.l.b16 %v2220
  %v2258 = vunpack.c.h.b16 %v2220
  %v2259 = vunpack.c.l.b16 %v2221
  %v2260 = vunpack.c.h.b16 %v2221
  %v2261 = vunpack.c.l.b16 %v2222
  %v2262 = vunpack.c.h.b16 %v2222
  %v2263 = vunpack.c.l.b16 %v2223
  %v2264 = vunpack.c.h.b16 %v2223
  %v2265 = vunpack.c.l.b16 %v2224
  %v2266 = vunpack.c.h.b16 %v2224
  %v2267 = vunpack.c.l.b16 %v2225
  %v2268 = vunpack.c.h.b16 %v2225
  %v2269 = vunpack.c.l.b16 %v2226
  %v2270 = vunpack.c.h.b16 %v2226
  %v2271 = vunpack.c.l.b16 %v2227
  %v2272 = vunpack.c.h.b16 %v2227
  %v2273 = vunpack.c.l.b16 %v2228
  %v2274 = vunpack.c.h.b16 %v2228
  %v2275 = vunpack.c.l.b16 %v2229
  %v2276 = vunpack.c.h.b16 %v2229
  %v2277 = vunpack.c.l.b16 %v2230
  %v2278 = vunpack.c.h.b16 %v2230
  %v2279 = vpack.c.b16 %v2249, %v2247
  %v2280 = vpack.c.b16 %v2250, %v2248
  %v2281 = vpack.c.b16 %v2253, %v2251
  %v2282 = vpack.c.b16 %v2254, %v2252
  %v2283 = vpack.c.b16 %v2257, %v2255
  %v2284 = vpack.c.b16 %v2258, %v2256
  %v2285 = vpack.c.b16 %v2261, %v2259
  %v2286 = vpack.c.b16 %v2262, %v2260
  %v2287 = vpack.c.b16 %v2265, %v2263
  %v2288 = vpack.c.b16 %v2266, %v2264
  %v2289 = vpack.c.b16 %v2269, %v2267
  %v2290 = vpack.c.b16 %v2270, %v2268
  %v2291 = vpack.c.b16 %v2273, %v2271
  %v2292 = vpack.c.b16 %v2274, %v2272
  %v2293 = vpack.c.b16 %v2277, %v2275
  %v2294 = vpack.c.b16 %v2278, %v2276
  %2311 = vmatprep.subr.bf16.mxu0 %v2294
  %2312 = vmatpush1.bf16.msra.mxu0 %v2293
  %2313 = vmatprep.subr.bf16.mxu0 %v2292
  %2314 = vmatpush1.bf16.msra.mxu0 %v2291
  %2315 = vmatprep.subr.bf16.mxu0 %v2290
  %2316 = vmatpush1.bf16.msra.mxu0 %v2289
  %2317 = vmatprep.subr.bf16.mxu0 %v2288
  %2318 = vmatpush1.bf16.msra.mxu0 %v2287
  %2319 = vmatprep.subr.bf16.mxu0 %v2286
  %2320 = vmatpush1.bf16.msra.mxu0 %v2285
  %2321 = vmatprep.subr.bf16.mxu0 %v2284
  %2322 = vmatpush1.bf16.msra.mxu0 %v2283
  %2323 = vmatprep.subr.bf16.mxu0 %v2282
  %2324 = vmatpush1.bf16.msra.mxu0 %v2281
  %2325 = vmatprep.subr.bf16.mxu0 %v2280
  %2326 = vmatpush1.bf16.msra.mxu0 %v2279
  %2327 = vmatprep.subr.bf16.mxu0 0
  %2328 = vmatpush2.bf16.msra.mxu0 0
  %2329 = vmatprep.subr.bf16.mxu0 0
  %2330 = vmatpush2.bf16.msra.mxu0 0
  %2331 = vmatprep.subr.bf16.mxu0 0
  %2332 = vmatpush2.bf16.msra.mxu0 0
  %2333 = vmatprep.subr.bf16.mxu0 0
  %2334 = vmatpush2.bf16.msra.mxu0 0
  %2335 = vmatprep.subr.bf16.mxu0 0
  %2336 = vmatpush2.bf16.msra.mxu0 0
  %2337 = vmatprep.subr.bf16.mxu0 0
  %2338 = vmatpush2.bf16.msra.mxu0 0
  %2339 = vmatprep.subr.bf16.mxu0 0
  %2340 = vmatpush2.bf16.msra.mxu0 0
  %2341 = vmatprep.subr.bf16.mxu0 0
  %2342 = vmatpush2.bf16.msra.mxu0 0
  %2343 = vmatprep.mubr.bf16.mxu0 0
  %2344 = vmatmul.mubr.bf16.gmra.mxu0 %v2212
  %v2345 = vpop.f32.mrf.mxu0
  %v2346 = vadd.f32 0.0, %v2345
  %v2347 = vpop.f32.mrf.mxu0
  %v2348 = vadd.f32 0.0, %v2347
  %v2349 = vpop.f32.mrf.mxu0
  %v2350 = vadd.f32 0.0, %v2349
  %v2351 = vpop.f32.mrf.mxu0
  %v2352 = vadd.f32 0.0, %v2351
  %2353 = vmatprep.mubr.bf16.mxu0 0
  %2354 = vmatmul.mubr.bf16.gmra.mxu0 %v2213
  %v2355 = vpop.f32.mrf.mxu0
  %v2356 = vadd.f32 0.0, %v2355
  %v2357 = vpop.f32.mrf.mxu0
  %v2358 = vadd.f32 0.0, %v2357
  %v2359 = vpop.f32.mrf.mxu0
  %v2360 = vadd.f32 0.0, %v2359
  %v2361 = vpop.f32.mrf.mxu0
  %v2362 = vadd.f32 0.0, %v2361
  %2363 = vdwg.mxu0
  %v2364 = vadd.f32 %v2177, %v2346
  %v2365 = vadd.f32 %v2179, %v2348
  %v2366 = vadd.f32 %v2181, %v2350
  %v2367 = vadd.f32 %v2183, %v2352
  %v2368 = vadd.f32 %v2187, %v2356
  %v2369 = vadd.f32 %v2189, %v2358
  %v2370 = vadd.f32 %v2191, %v2360
  %v2371 = vadd.f32 %v2193, %v2362
  %v2372 = vrot.slane %v1292, 3
  %v2373 = vrot.slane %v1416, 3
  %v2374 = vsel %vm959, %v2372, %v2373
  %v2376 = vrot.slane %v1294, 3
  %v2377 = vrot.slane %v1433, 3
  %v2378 = vsel %vm959, %v2376, %v2377
  %v2380 = vsel %vm1622, %v2374, 0
  %v2381 = vsel %vm1623, %v2378, 0
  %s2382 = scalar_lea.vmem %s6, 384
  %v2383 = vld [vmem:[%s2382] sm:$0xf]
  %v2384 = vld [vmem:[%s2382 + $0x4] sm:$0xf]
  %v2385 = vld [vmem:[%s2382 + $0x8] sm:$0xf]
  %v2386 = vld [vmem:[%s2382 + $0xc] sm:$0xf]
  %v2387 = vld [vmem:[%s2382 + $0x10] sm:$0xf]
  %v2388 = vld [vmem:[%s2382 + $0x14] sm:$0xf]
  %v2389 = vld [vmem:[%s2382 + $0x18] sm:$0xf]
  %v2390 = vld [vmem:[%s2382 + $0x1c] sm:$0xf]
  %v2391 = vld [vmem:[%s2382 + $0x20] sm:$0xf]
  %v2392 = vld [vmem:[%s2382 + $0x24] sm:$0xf]
  %v2393 = vld [vmem:[%s2382 + $0x28] sm:$0xf]
  %v2394 = vld [vmem:[%s2382 + $0x2c] sm:$0xf]
  %v2395 = vld [vmem:[%s2382 + $0x30] sm:$0xf]
  %v2396 = vld [vmem:[%s2382 + $0x34] sm:$0xf]
  %v2397 = vld [vmem:[%s2382 + $0x38] sm:$0xf]
  %v2398 = vld [vmem:[%s2382 + $0x3c] sm:$0xf]
  %v2415 = vunpack.c.l.b16 %v2383
  %v2416 = vunpack.c.l.b16 %v2384
  %v2417 = vunpack.c.l.b16 %v2385
  %v2418 = vunpack.c.l.b16 %v2386
  %v2419 = vunpack.c.l.b16 %v2387
  %v2420 = vunpack.c.l.b16 %v2388
  %v2421 = vunpack.c.l.b16 %v2389
  %v2422 = vunpack.c.l.b16 %v2390
  %v2423 = vunpack.c.l.b16 %v2391
  %v2424 = vunpack.c.l.b16 %v2392
  %v2425 = vunpack.c.l.b16 %v2393
  %v2426 = vunpack.c.l.b16 %v2394
  %v2427 = vunpack.c.l.b16 %v2395
  %v2428 = vunpack.c.l.b16 %v2396
  %v2429 = vunpack.c.l.b16 %v2397
  %v2430 = vunpack.c.l.b16 %v2398
  %v2431 = vpack.c.b16 %v2416, %v2415
  %v2432 = vpack.c.b16 %v2418, %v2417
  %v2433 = vpack.c.b16 %v2420, %v2419
  %v2434 = vpack.c.b16 %v2422, %v2421
  %v2435 = vpack.c.b16 %v2424, %v2423
  %v2436 = vpack.c.b16 %v2426, %v2425
  %v2437 = vpack.c.b16 %v2428, %v2427
  %v2438 = vpack.c.b16 %v2430, %v2429
  %2447 = vmatprep.subr.bf16.mxu0 0
  %2448 = vmatpush1.bf16.msra.mxu0 %v2438
  %2449 = vmatprep.subr.bf16.mxu0 0
  %2450 = vmatpush1.bf16.msra.mxu0 %v2437
  %2451 = vmatprep.subr.bf16.mxu0 0
  %2452 = vmatpush1.bf16.msra.mxu0 %v2436
  %2453 = vmatprep.subr.bf16.mxu0 0
  %2454 = vmatpush1.bf16.msra.mxu0 %v2435
  %2455 = vmatprep.subr.bf16.mxu0 0
  %2456 = vmatpush1.bf16.msra.mxu0 %v2434
  %2457 = vmatprep.subr.bf16.mxu0 0
  %2458 = vmatpush1.bf16.msra.mxu0 %v2433
  %2459 = vmatprep.subr.bf16.mxu0 0
  %2460 = vmatpush1.bf16.msra.mxu0 %v2432
  %2461 = vmatprep.subr.bf16.mxu0 0
  %2462 = vmatpush1.bf16.msra.mxu0 %v2431
  %2463 = vmatprep.subr.bf16.mxu0 0
  %2464 = vmatpush2.bf16.msra.mxu0 0
  %2465 = vmatprep.subr.bf16.mxu0 0
  %2466 = vmatpush2.bf16.msra.mxu0 0
  %2467 = vmatprep.subr.bf16.mxu0 0
  %2468 = vmatpush2.bf16.msra.mxu0 0
  %2469 = vmatprep.subr.bf16.mxu0 0
  %2470 = vmatpush2.bf16.msra.mxu0 0
  %2471 = vmatprep.subr.bf16.mxu0 0
  %2472 = vmatpush2.bf16.msra.mxu0 0
  %2473 = vmatprep.subr.bf16.mxu0 0
  %2474 = vmatpush2.bf16.msra.mxu0 0
  %2475 = vmatprep.subr.bf16.mxu0 0
  %2476 = vmatpush2.bf16.msra.mxu0 0
  %2477 = vmatprep.subr.bf16.mxu0 0
  %2478 = vmatpush2.bf16.msra.mxu0 0
  %2479 = vmatprep.mubr.bf16.mxu0 0
  %2480 = vmatmul.mubr.bf16.gmra.mxu0 %v2380
  %v2481 = vpop.f32.mrf.mxu0
  %v2482 = vadd.f32 0.0, %v2481
  %v2483 = vpop.f32.mrf.mxu0
  %v2484 = vpop.f32.mrf.mxu0
  %v2485 = vadd.f32 0.0, %v2484
  %v2486 = vpop.f32.mrf.mxu0
  %2487 = vmatprep.mubr.bf16.mxu0 0
  %2488 = vmatmul.mubr.bf16.gmra.mxu0 %v2381
  %v2489 = vpop.f32.mrf.mxu0
  %v2490 = vadd.f32 0.0, %v2489
  %v2491 = vpop.f32.mrf.mxu0
  %v2492 = vpop.f32.mrf.mxu0
  %v2493 = vadd.f32 0.0, %v2492
  %v2494 = vpop.f32.mrf.mxu0
  %2495 = vdwg.mxu0
  %v2496 = vadd.f32 %v1860, %v2482
  %v2497 = vadd.f32 %v1861, %v2485
  %v2498 = vadd.f32 %v1862, %v2490
  %v2499 = vadd.f32 %v1863, %v2493
  %v2500 = vsel %vm998, %v2374, 0
  %v2501 = vsel %vm999, %v2378, 0
  %s2502 = scalar_lea.vmem %s6, 448
  %v2503 = vld [vmem:[%s2502] sm:$0xf]
  %v2504 = vld [vmem:[%s2502 + $0x4] sm:$0xf]
  %v2505 = vld [vmem:[%s2502 + $0x8] sm:$0xf]
  %v2506 = vld [vmem:[%s2502 + $0xc] sm:$0xf]
  %v2507 = vld [vmem:[%s2502 + $0x10] sm:$0xf]
  %v2508 = vld [vmem:[%s2502 + $0x14] sm:$0xf]
  %v2509 = vld [vmem:[%s2502 + $0x18] sm:$0xf]
  %v2510 = vld [vmem:[%s2502 + $0x1c] sm:$0xf]
  %v2511 = vld [vmem:[%s2502 + $0x20] sm:$0xf]
  %v2512 = vld [vmem:[%s2502 + $0x24] sm:$0xf]
  %v2513 = vld [vmem:[%s2502 + $0x28] sm:$0xf]
  %v2514 = vld [vmem:[%s2502 + $0x2c] sm:$0xf]
  %v2515 = vld [vmem:[%s2502 + $0x30] sm:$0xf]
  %v2516 = vld [vmem:[%s2502 + $0x34] sm:$0xf]
  %v2517 = vld [vmem:[%s2502 + $0x38] sm:$0xf]
  %v2518 = vld [vmem:[%s2502 + $0x3c] sm:$0xf]
  %v2535 = vunpack.c.l.b16 %v2503
  %v2536 = vunpack.c.l.b16 %v2504
  %v2537 = vunpack.c.l.b16 %v2505
  %v2538 = vunpack.c.l.b16 %v2506
  %v2539 = vunpack.c.l.b16 %v2507
  %v2540 = vunpack.c.l.b16 %v2508
  %v2541 = vunpack.c.l.b16 %v2509
  %v2542 = vunpack.c.l.b16 %v2510
  %v2543 = vunpack.c.l.b16 %v2511
  %v2544 = vunpack.c.l.b16 %v2512
  %v2545 = vunpack.c.l.b16 %v2513
  %v2546 = vunpack.c.l.b16 %v2514
  %v2547 = vunpack.c.l.b16 %v2515
  %v2548 = vunpack.c.l.b16 %v2516
  %v2549 = vunpack.c.l.b16 %v2517
  %v2550 = vunpack.c.l.b16 %v2518
  %v2551 = vpack.c.b16 %v2536, %v2535
  %v2552 = vpack.c.b16 %v2538, %v2537
  %v2553 = vpack.c.b16 %v2540, %v2539
  %v2554 = vpack.c.b16 %v2542, %v2541
  %v2555 = vpack.c.b16 %v2544, %v2543
  %v2556 = vpack.c.b16 %v2546, %v2545
  %v2557 = vpack.c.b16 %v2548, %v2547
  %v2558 = vpack.c.b16 %v2550, %v2549
  %2567 = vmatprep.subr.bf16.mxu0 0
  %2568 = vmatpush1.bf16.msra.mxu0 %v2558
  %2569 = vmatprep.subr.bf16.mxu0 0
  %2570 = vmatpush1.bf16.msra.mxu0 %v2557
  %2571 = vmatprep.subr.bf16.mxu0 0
  %2572 = vmatpush1.bf16.msra.mxu0 %v2556
  %2573 = vmatprep.subr.bf16.mxu0 0
  %2574 = vmatpush1.bf16.msra.mxu0 %v2555
  %2575 = vmatprep.subr.bf16.mxu0 0
  %2576 = vmatpush1.bf16.msra.mxu0 %v2554
  %2577 = vmatprep.subr.bf16.mxu0 0
  %2578 = vmatpush1.bf16.msra.mxu0 %v2553
  %2579 = vmatprep.subr.bf16.mxu0 0
  %2580 = vmatpush1.bf16.msra.mxu0 %v2552
  %2581 = vmatprep.subr.bf16.mxu0 0
  %2582 = vmatpush1.bf16.msra.mxu0 %v2551
  %2583 = vmatprep.subr.bf16.mxu0 0
  %2584 = vmatpush2.bf16.msra.mxu0 0
  %2585 = vmatprep.subr.bf16.mxu0 0
  %2586 = vmatpush2.bf16.msra.mxu0 0
  %2587 = vmatprep.subr.bf16.mxu0 0
  %2588 = vmatpush2.bf16.msra.mxu0 0
  %2589 = vmatprep.subr.bf16.mxu0 0
  %2590 = vmatpush2.bf16.msra.mxu0 0
  %2591 = vmatprep.subr.bf16.mxu0 0
  %2592 = vmatpush2.bf16.msra.mxu0 0
  %2593 = vmatprep.subr.bf16.mxu0 0
  %2594 = vmatpush2.bf16.msra.mxu0 0
  %2595 = vmatprep.subr.bf16.mxu0 0
  %2596 = vmatpush2.bf16.msra.mxu0 0
  %2597 = vmatprep.subr.bf16.mxu0 0
  %2598 = vmatpush2.bf16.msra.mxu0 0
  %2599 = vmatprep.mubr.bf16.mxu0 0
  %2600 = vmatmul.mubr.bf16.gmra.mxu0 %v2500
  %v2601 = vpop.f32.mrf.mxu0
  %v2602 = vadd.f32 0.0, %v2601
  %v2603 = vpop.f32.mrf.mxu0
  %v2604 = vpop.f32.mrf.mxu0
  %v2605 = vadd.f32 0.0, %v2604
  %v2606 = vpop.f32.mrf.mxu0
  %2607 = vmatprep.mubr.bf16.mxu0 0
  %2608 = vmatmul.mubr.bf16.gmra.mxu0 %v2501
  %v2609 = vpop.f32.mrf.mxu0
  %v2610 = vadd.f32 0.0, %v2609
  %v2611 = vpop.f32.mrf.mxu0
  %v2612 = vpop.f32.mrf.mxu0
  %v2613 = vadd.f32 0.0, %v2612
  %v2614 = vpop.f32.mrf.mxu0
  %2615 = vdwg.mxu0
  %v2616 = vadd.f32 %v2496, %v2602
  %v2617 = vadd.f32 %v2497, %v2605
  %v2618 = vadd.f32 %v2498, %v2610
  %v2619 = vadd.f32 %v2499, %v2613
  %v2620 = vrot.slane %v1419, 3
  %v2621 = vrot.slane %v1421, 4
  %v2622 = vor.u32 %v2620, %v2621
  %v2623 = vrot.slane %v1868, 3
  %v2624 = vrot.slane %v1426, 4
  %v2625 = vor.u32 %v2623, %v2624
  %v2626 = vsel %vm1018, %v2622, %v2625
  %v2628 = vrot.slane %v1435, 3
  %v2629 = vrot.slane %v1437, 4
  %v2630 = vor.u32 %v2628, %v2629
  %v2631 = vrot.slane %v1878, 3
  %v2632 = vrot.slane %v1442, 4
  %v2633 = vor.u32 %v2631, %v2632
  %v2634 = vsel %vm1018, %v2630, %v2633
  %v2636 = vsel %vm1077, %v2626, 0
  %v2637 = vsel %vm1078, %v2634, 0
  %s2638 = scalar_lea.vmem %s5, 384
  %v2639 = vld [vmem:[%s2638] sm:$0xff]
  %v2640 = vld [vmem:[%s2638 + $0x8] sm:$0xff]
  %v2641 = vld [vmem:[%s2638 + $0x10] sm:$0xff]
  %v2642 = vld [vmem:[%s2638 + $0x18] sm:$0xff]
  %v2643 = vld [vmem:[%s2638 + $0x20] sm:$0xff]
  %v2644 = vld [vmem:[%s2638 + $0x28] sm:$0xff]
  %v2645 = vld [vmem:[%s2638 + $0x30] sm:$0xff]
  %v2646 = vld [vmem:[%s2638 + $0x38] sm:$0xff]
  %v2647 = vld [vmem:[%s2638 + $0x40] sm:$0xff]
  %v2648 = vld [vmem:[%s2638 + $0x48] sm:$0xff]
  %v2649 = vld [vmem:[%s2638 + $0x50] sm:$0xff]
  %v2650 = vld [vmem:[%s2638 + $0x58] sm:$0xff]
  %v2651 = vld [vmem:[%s2638 + $0x60] sm:$0xff]
  %v2652 = vld [vmem:[%s2638 + $0x68] sm:$0xff]
  %v2653 = vld [vmem:[%s2638 + $0x70] sm:$0xff]
  %v2654 = vld [vmem:[%s2638 + $0x78] sm:$0xff]
  %v2671 = vunpack.c.l.b16 %v2639
  %v2672 = vunpack.c.h.b16 %v2639
  %v2673 = vunpack.c.l.b16 %v2640
  %v2674 = vunpack.c.h.b16 %v2640
  %v2675 = vunpack.c.l.b16 %v2641
  %v2676 = vunpack.c.h.b16 %v2641
  %v2677 = vunpack.c.l.b16 %v2642
  %v2678 = vunpack.c.h.b16 %v2642
  %v2679 = vunpack.c.l.b16 %v2643
  %v2680 = vunpack.c.h.b16 %v2643
  %v2681 = vunpack.c.l.b16 %v2644
  %v2682 = vunpack.c.h.b16 %v2644
  %v2683 = vunpack.c.l.b16 %v2645
  %v2684 = vunpack.c.h.b16 %v2645
  %v2685 = vunpack.c.l.b16 %v2646
  %v2686 = vunpack.c.h.b16 %v2646
  %v2687 = vunpack.c.l.b16 %v2647
  %v2688 = vunpack.c.h.b16 %v2647
  %v2689 = vunpack.c.l.b16 %v2648
  %v2690 = vunpack.c.h.b16 %v2648
  %v2691 = vunpack.c.l.b16 %v2649
  %v2692 = vunpack.c.h.b16 %v2649
  %v2693 = vunpack.c.l.b16 %v2650
  %v2694 = vunpack.c.h.b16 %v2650
  %v2695 = vunpack.c.l.b16 %v2651
  %v2696 = vunpack.c.h.b16 %v2651
  %v2697 = vunpack.c.l.b16 %v2652
  %v2698 = vunpack.c.h.b16 %v2652
  %v2699 = vunpack.c.l.b16 %v2653
  %v2700 = vunpack.c.h.b16 %v2653
  %v2701 = vunpack.c.l.b16 %v2654
  %v2702 = vunpack.c.h.b16 %v2654
  %v2703 = vpack.c.b16 %v2673, %v2671
  %v2704 = vpack.c.b16 %v2674, %v2672
  %v2705 = vpack.c.b16 %v2677, %v2675
  %v2706 = vpack.c.b16 %v2678, %v2676
  %v2707 = vpack.c.b16 %v2681, %v2679
  %v2708 = vpack.c.b16 %v2682, %v2680
  %v2709 = vpack.c.b16 %v2685, %v2683
  %v2710 = vpack.c.b16 %v2686, %v2684
  %v2711 = vpack.c.b16 %v2689, %v2687
  %v2712 = vpack.c.b16 %v2690, %v2688
  %v2713 = vpack.c.b16 %v2693, %v2691
  %v2714 = vpack.c.b16 %v2694, %v2692
  %v2715 = vpack.c.b16 %v2697, %v2695
  %v2716 = vpack.c.b16 %v2698, %v2696
  %v2717 = vpack.c.b16 %v2701, %v2699
  %v2718 = vpack.c.b16 %v2702, %v2700
  %2735 = vmatprep.subr.bf16.mxu0 %v2718
  %2736 = vmatpush1.bf16.msra.mxu0 %v2717
  %2737 = vmatprep.subr.bf16.mxu0 %v2716
  %2738 = vmatpush1.bf16.msra.mxu0 %v2715
  %2739 = vmatprep.subr.bf16.mxu0 %v2714
  %2740 = vmatpush1.bf16.msra.mxu0 %v2713
  %2741 = vmatprep.subr.bf16.mxu0 %v2712
  %2742 = vmatpush1.bf16.msra.mxu0 %v2711
  %2743 = vmatprep.subr.bf16.mxu0 %v2710
  %2744 = vmatpush1.bf16.msra.mxu0 %v2709
  %2745 = vmatprep.subr.bf16.mxu0 %v2708
  %2746 = vmatpush1.bf16.msra.mxu0 %v2707
  %2747 = vmatprep.subr.bf16.mxu0 %v2706
  %2748 = vmatpush1.bf16.msra.mxu0 %v2705
  %2749 = vmatprep.subr.bf16.mxu0 %v2704
  %2750 = vmatpush1.bf16.msra.mxu0 %v2703
  %2751 = vmatprep.subr.bf16.mxu0 0
  %2752 = vmatpush2.bf16.msra.mxu0 0
  %2753 = vmatprep.subr.bf16.mxu0 0
  %2754 = vmatpush2.bf16.msra.mxu0 0
  %2755 = vmatprep.subr.bf16.mxu0 0
  %2756 = vmatpush2.bf16.msra.mxu0 0
  %2757 = vmatprep.subr.bf16.mxu0 0
  %2758 = vmatpush2.bf16.msra.mxu0 0
  %2759 = vmatprep.subr.bf16.mxu0 0
  %2760 = vmatpush2.bf16.msra.mxu0 0
  %2761 = vmatprep.subr.bf16.mxu0 0
  %2762 = vmatpush2.bf16.msra.mxu0 0
  %2763 = vmatprep.subr.bf16.mxu0 0
  %2764 = vmatpush2.bf16.msra.mxu0 0
  %2765 = vmatprep.subr.bf16.mxu0 0
  %2766 = vmatpush2.bf16.msra.mxu0 0
  %2767 = vmatprep.mubr.bf16.mxu0 0
  %2768 = vmatmul.mubr.bf16.gmra.mxu0 %v2636
  %v2769 = vpop.f32.mrf.mxu0
  %v2770 = vadd.f32 0.0, %v2769
  %v2771 = vpop.f32.mrf.mxu0
  %v2772 = vadd.f32 0.0, %v2771
  %v2773 = vpop.f32.mrf.mxu0
  %v2774 = vadd.f32 0.0, %v2773
  %v2775 = vpop.f32.mrf.mxu0
  %v2776 = vadd.f32 0.0, %v2775
  %2777 = vmatprep.mubr.bf16.mxu0 0
  %2778 = vmatmul.mubr.bf16.gmra.mxu0 %v2637
  %v2779 = vpop.f32.mrf.mxu0
  %v2780 = vadd.f32 0.0, %v2779
  %v2781 = vpop.f32.mrf.mxu0
  %v2782 = vadd.f32 0.0, %v2781
  %v2783 = vpop.f32.mrf.mxu0
  %v2784 = vadd.f32 0.0, %v2783
  %v2785 = vpop.f32.mrf.mxu0
  %v2786 = vadd.f32 0.0, %v2785
  %2787 = vdwg.mxu0
  %v2788 = vadd.f32 %v2364, %v2770
  %v2789 = vadd.f32 %v2365, %v2772
  %v2790 = vadd.f32 %v2366, %v2774
  %v2791 = vadd.f32 %v2367, %v2776
  %v2792 = vadd.f32 %v2368, %v2780
  %v2793 = vadd.f32 %v2369, %v2782
  %v2794 = vadd.f32 %v2370, %v2784
  %v2795 = vadd.f32 %v2371, %v2786
  %v2796 = vpack.c.b16 %v1415, %v956
  %v2798 = vpack.c.b16 %v1432, %v969
  %s2800 = scalar_lea.vmem %s5, 512
  %v2801 = vld [vmem:[%s2800] sm:$0xff]
  %v2802 = vld [vmem:[%s2800 + $0x8] sm:$0xff]
  %v2803 = vld [vmem:[%s2800 + $0x10] sm:$0xff]
  %v2804 = vld [vmem:[%s2800 + $0x18] sm:$0xff]
  %v2805 = vld [vmem:[%s2800 + $0x20] sm:$0xff]
  %v2806 = vld [vmem:[%s2800 + $0x28] sm:$0xff]
  %v2807 = vld [vmem:[%s2800 + $0x30] sm:$0xff]
  %v2808 = vld [vmem:[%s2800 + $0x38] sm:$0xff]
  %v2809 = vld [vmem:[%s2800 + $0x40] sm:$0xff]
  %v2810 = vld [vmem:[%s2800 + $0x48] sm:$0xff]
  %v2811 = vld [vmem:[%s2800 + $0x50] sm:$0xff]
  %v2812 = vld [vmem:[%s2800 + $0x58] sm:$0xff]
  %v2813 = vld [vmem:[%s2800 + $0x60] sm:$0xff]
  %v2814 = vld [vmem:[%s2800 + $0x68] sm:$0xff]
  %v2815 = vld [vmem:[%s2800 + $0x70] sm:$0xff]
  %v2816 = vld [vmem:[%s2800 + $0x78] sm:$0xff]
  %v2833 = vunpack.c.l.b16 %v2801
  %v2834 = vunpack.c.h.b16 %v2801
  %v2835 = vunpack.c.l.b16 %v2802
  %v2836 = vunpack.c.h.b16 %v2802
  %v2837 = vunpack.c.l.b16 %v2803
  %v2838 = vunpack.c.h.b16 %v2803
  %v2839 = vunpack.c.l.b16 %v2804
  %v2840 = vunpack.c.h.b16 %v2804
  %v2841 = vunpack.c.l.b16 %v2805
  %v2842 = vunpack.c.h.b16 %v2805
  %v2843 = vunpack.c.l.b16 %v2806
  %v2844 = vunpack.c.h.b16 %v2806
  %v2845 = vunpack.c.l.b16 %v2807
  %v2846 = vunpack.c.h.b16 %v2807
  %v2847 = vunpack.c.l.b16 %v2808
  %v2848 = vunpack.c.h.b16 %v2808
  %v2849 = vunpack.c.l.b16 %v2809
  %v2850 = vunpack.c.h.b16 %v2809
  %v2851 = vunpack.c.l.b16 %v2810
  %v2852 = vunpack.c.h.b16 %v2810
  %v2853 = vunpack.c.l.b16 %v2811
  %v2854 = vunpack.c.h.b16 %v2811
  %v2855 = vunpack.c.l.b16 %v2812
  %v2856 = vunpack.c.h.b16 %v2812
  %v2857 = vunpack.c.l.b16 %v2813
  %v2858 = vunpack.c.h.b16 %v2813
  %v2859 = vunpack.c.l.b16 %v2814
  %v2860 = vunpack.c.h.b16 %v2814
  %v2861 = vunpack.c.l.b16 %v2815
  %v2862 = vunpack.c.h.b16 %v2815
  %v2863 = vunpack.c.l.b16 %v2816
  %v2864 = vunpack.c.h.b16 %v2816
  %v2865 = vpack.c.b16 %v2835, %v2833
  %v2866 = vpack.c.b16 %v2836, %v2834
  %v2867 = vpack.c.b16 %v2839, %v2837
  %v2868 = vpack.c.b16 %v2840, %v2838
  %v2869 = vpack.c.b16 %v2843, %v2841
  %v2870 = vpack.c.b16 %v2844, %v2842
  %v2871 = vpack.c.b16 %v2847, %v2845
  %v2872 = vpack.c.b16 %v2848, %v2846
  %v2873 = vpack.c.b16 %v2851, %v2849
  %v2874 = vpack.c.b16 %v2852, %v2850
  %v2875 = vpack.c.b16 %v2855, %v2853
  %v2876 = vpack.c.b16 %v2856, %v2854
  %v2877 = vpack.c.b16 %v2859, %v2857
  %v2878 = vpack.c.b16 %v2860, %v2858
  %v2879 = vpack.c.b16 %v2863, %v2861
  %v2880 = vpack.c.b16 %v2864, %v2862
  %2897 = vmatprep.subr.bf16.mxu0 %v2880
  %2898 = vmatpush1.bf16.msra.mxu0 %v2879
  %2899 = vmatprep.subr.bf16.mxu0 %v2878
  %2900 = vmatpush1.bf16.msra.mxu0 %v2877
  %2901 = vmatprep.subr.bf16.mxu0 %v2876
  %2902 = vmatpush1.bf16.msra.mxu0 %v2875
  %2903 = vmatprep.subr.bf16.mxu0 %v2874
  %2904 = vmatpush1.bf16.msra.mxu0 %v2873
  %2905 = vmatprep.subr.bf16.mxu0 %v2872
  %2906 = vmatpush1.bf16.msra.mxu0 %v2871
  %2907 = vmatprep.subr.bf16.mxu0 %v2870
  %2908 = vmatpush1.bf16.msra.mxu0 %v2869
  %2909 = vmatprep.subr.bf16.mxu0 %v2868
  %2910 = vmatpush1.bf16.msra.mxu0 %v2867
  %2911 = vmatprep.subr.bf16.mxu0 %v2866
  %2912 = vmatpush1.bf16.msra.mxu0 %v2865
  %2913 = vmatprep.subr.bf16.mxu0 0
  %2914 = vmatpush2.bf16.msra.mxu0 0
  %2915 = vmatprep.subr.bf16.mxu0 0
  %2916 = vmatpush2.bf16.msra.mxu0 0
  %2917 = vmatprep.subr.bf16.mxu0 0
  %2918 = vmatpush2.bf16.msra.mxu0 0
  %2919 = vmatprep.subr.bf16.mxu0 0
  %2920 = vmatpush2.bf16.msra.mxu0 0
  %2921 = vmatprep.subr.bf16.mxu0 0
  %2922 = vmatpush2.bf16.msra.mxu0 0
  %2923 = vmatprep.subr.bf16.mxu0 0
  %2924 = vmatpush2.bf16.msra.mxu0 0
  %2925 = vmatprep.subr.bf16.mxu0 0
  %2926 = vmatpush2.bf16.msra.mxu0 0
  %2927 = vmatprep.subr.bf16.mxu0 0
  %2928 = vmatpush2.bf16.msra.mxu0 0
  %2929 = vmatprep.mubr.bf16.mxu0 0
  %2930 = vmatmul.mubr.bf16.gmra.mxu0 %v2796
  %v2931 = vpop.f32.mrf.mxu0
  %v2932 = vadd.f32 0.0, %v2931
  %v2933 = vpop.f32.mrf.mxu0
  %v2934 = vadd.f32 0.0, %v2933
  %v2935 = vpop.f32.mrf.mxu0
  %v2936 = vadd.f32 0.0, %v2935
  %v2937 = vpop.f32.mrf.mxu0
  %v2938 = vadd.f32 0.0, %v2937
  %2939 = vmatprep.mubr.bf16.mxu0 0
  %2940 = vmatmul.mubr.bf16.gmra.mxu0 %v2798
  %v2941 = vpop.f32.mrf.mxu0
  %v2942 = vadd.f32 0.0, %v2941
  %v2943 = vpop.f32.mrf.mxu0
  %v2944 = vadd.f32 0.0, %v2943
  %v2945 = vpop.f32.mrf.mxu0
  %v2946 = vadd.f32 0.0, %v2945
  %v2947 = vpop.f32.mrf.mxu0
  %v2948 = vadd.f32 0.0, %v2947
  %2949 = vdwg.mxu0
  %v2950 = vadd.f32 %v2788, %v2932
  %v2951 = vadd.f32 %v2789, %v2934
  %v2952 = vadd.f32 %v2790, %v2936
  %v2953 = vadd.f32 %v2791, %v2938
  %v2954 = vadd.f32 %v2792, %v2942
  %v2955 = vadd.f32 %v2793, %v2944
  %v2956 = vadd.f32 %v2794, %v2946
  %v2957 = vadd.f32 %v2795, %v2948
  %v2959 = vunpack.c.l.b16 %v943
  %v2960 = vpack.c.b16 %v2959, %v2959
  %v2962 = vshrl.u32 %v2796, 16
  %v2964 = vshll.u32 %v2796, 16
  %v2966 = vrot.slane %v2964, 1
  %v2967 = vor.u32 %v2962, %v2966
  %v2969 = vshll.u32 %v2960, 16
  %v2971 = vrot.slane %v2969, 1
  %v2972 = vsel %vm1417, %v2967, %v2971
  %v2975 = vunpack.c.l.b16 %v949
  %v2976 = vpack.c.b16 %v2975, %v2975
  %v2978 = vshrl.u32 %v2798, 16
  %v2980 = vshll.u32 %v2798, 16
  %v2982 = vrot.slane %v2980, 1
  %v2983 = vor.u32 %v2978, %v2982
  %v2985 = vshll.u32 %v2976, 16
  %v2987 = vrot.slane %v2985, 1
  %v2988 = vsel %vm1417, %v2983, %v2987
  %v2990 = vsel %vm1469, %v2972, 0
  %v2991 = vsel %vm1470, %v2988, 0
  %s2992 = scalar_lea.vmem %s5, 640
  %v2993 = vld [vmem:[%s2992] sm:$0xff]
  %v2994 = vld [vmem:[%s2992 + $0x8] sm:$0xff]
  %v2995 = vld [vmem:[%s2992 + $0x10] sm:$0xff]
  %v2996 = vld [vmem:[%s2992 + $0x18] sm:$0xff]
  %v2997 = vld [vmem:[%s2992 + $0x20] sm:$0xff]
  %v2998 = vld [vmem:[%s2992 + $0x28] sm:$0xff]
  %v2999 = vld [vmem:[%s2992 + $0x30] sm:$0xff]
  %v3000 = vld [vmem:[%s2992 + $0x38] sm:$0xff]
  %v3001 = vld [vmem:[%s2992 + $0x40] sm:$0xff]
  %v3002 = vld [vmem:[%s2992 + $0x48] sm:$0xff]
  %v3003 = vld [vmem:[%s2992 + $0x50] sm:$0xff]
  %v3004 = vld [vmem:[%s2992 + $0x58] sm:$0xff]
  %v3005 = vld [vmem:[%s2992 + $0x60] sm:$0xff]
  %v3006 = vld [vmem:[%s2992 + $0x68] sm:$0xff]
  %v3007 = vld [vmem:[%s2992 + $0x70] sm:$0xff]
  %v3008 = vld [vmem:[%s2992 + $0x78] sm:$0xff]
  %v3025 = vunpack.c.l.b16 %v2993
  %v3026 = vunpack.c.h.b16 %v2993
  %v3027 = vunpack.c.l.b16 %v2994
  %v3028 = vunpack.c.h.b16 %v2994
  %v3029 = vunpack.c.l.b16 %v2995
  %v3030 = vunpack.c.h.b16 %v2995
  %v3031 = vunpack.c.l.b16 %v2996
  %v3032 = vunpack.c.h.b16 %v2996
  %v3033 = vunpack.c.l.b16 %v2997
  %v3034 = vunpack.c.h.b16 %v2997
  %v3035 = vunpack.c.l.b16 %v2998
  %v3036 = vunpack.c.h.b16 %v2998
  %v3037 = vunpack.c.l.b16 %v2999
  %v3038 = vunpack.c.h.b16 %v2999
  %v3039 = vunpack.c.l.b16 %v3000
  %v3040 = vunpack.c.h.b16 %v3000
  %v3041 = vunpack.c.l.b16 %v3001
  %v3042 = vunpack.c.h.b16 %v3001
  %v3043 = vunpack.c.l.b16 %v3002
  %v3044 = vunpack.c.h.b16 %v3002
  %v3045 = vunpack.c.l.b16 %v3003
  %v3046 = vunpack.c.h.b16 %v3003
  %v3047 = vunpack.c.l.b16 %v3004
  %v3048 = vunpack.c.h.b16 %v3004
  %v3049 = vunpack.c.l.b16 %v3005
  %v3050 = vunpack.c.h.b16 %v3005
  %v3051 = vunpack.c.l.b16 %v3006
  %v3052 = vunpack.c.h.b16 %v3006
  %v3053 = vunpack.c.l.b16 %v3007
  %v3054 = vunpack.c.h.b16 %v3007
  %v3055 = vunpack.c.l.b16 %v3008
  %v3056 = vunpack.c.h.b16 %v3008
  %v3057 = vpack.c.b16 %v3027, %v3025
  %v3058 = vpack.c.b16 %v3028, %v3026
  %v3059 = vpack.c.b16 %v3031, %v3029
  %v3060 = vpack.c.b16 %v3032, %v3030
  %v3061 = vpack.c.b16 %v3035, %v3033
  %v3062 = vpack.c.b16 %v3036, %v3034
  %v3063 = vpack.c.b16 %v3039, %v3037
  %v3064 = vpack.c.b16 %v3040, %v3038
  %v3065 = vpack.c.b16 %v3043, %v3041
  %v3066 = vpack.c.b16 %v3044, %v3042
  %v3067 = vpack.c.b16 %v3047, %v3045
  %v3068 = vpack.c.b16 %v3048, %v3046
  %v3069 = vpack.c.b16 %v3051, %v3049
  %v3070 = vpack.c.b16 %v3052, %v3050
  %v3071 = vpack.c.b16 %v3055, %v3053
  %v3072 = vpack.c.b16 %v3056, %v3054
  %3089 = vmatprep.subr.bf16.mxu0 %v3072
  %3090 = vmatpush1.bf16.msra.mxu0 %v3071
  %3091 = vmatprep.subr.bf16.mxu0 %v3070
  %3092 = vmatpush1.bf16.msra.mxu0 %v3069
  %3093 = vmatprep.subr.bf16.mxu0 %v3068
  %3094 = vmatpush1.bf16.msra.mxu0 %v3067
  %3095 = vmatprep.subr.bf16.mxu0 %v3066
  %3096 = vmatpush1.bf16.msra.mxu0 %v3065
  %3097 = vmatprep.subr.bf16.mxu0 %v3064
  %3098 = vmatpush1.bf16.msra.mxu0 %v3063
  %3099 = vmatprep.subr.bf16.mxu0 %v3062
  %3100 = vmatpush1.bf16.msra.mxu0 %v3061
  %3101 = vmatprep.subr.bf16.mxu0 %v3060
  %3102 = vmatpush1.bf16.msra.mxu0 %v3059
  %3103 = vmatprep.subr.bf16.mxu0 %v3058
  %3104 = vmatpush1.bf16.msra.mxu0 %v3057
  %3105 = vmatprep.subr.bf16.mxu0 0
  %3106 = vmatpush2.bf16.msra.mxu0 0
  %3107 = vmatprep.subr.bf16.mxu0 0
  %3108 = vmatpush2.bf16.msra.mxu0 0
  %3109 = vmatprep.subr.bf16.mxu0 0
  %3110 = vmatpush2.bf16.msra.mxu0 0
  %3111 = vmatprep.subr.bf16.mxu0 0
  %3112 = vmatpush2.bf16.msra.mxu0 0
  %3113 = vmatprep.subr.bf16.mxu0 0
  %3114 = vmatpush2.bf16.msra.mxu0 0
  %3115 = vmatprep.subr.bf16.mxu0 0
  %3116 = vmatpush2.bf16.msra.mxu0 0
  %3117 = vmatprep.subr.bf16.mxu0 0
  %3118 = vmatpush2.bf16.msra.mxu0 0
  %3119 = vmatprep.subr.bf16.mxu0 0
  %3120 = vmatpush2.bf16.msra.mxu0 0
  %3121 = vmatprep.mubr.bf16.mxu0 0
  %3122 = vmatmul.mubr.bf16.gmra.mxu0 %v2990
  %v3123 = vpop.f32.mrf.mxu0
  %v3124 = vadd.f32 0.0, %v3123
  %v3125 = vpop.f32.mrf.mxu0
  %v3126 = vadd.f32 0.0, %v3125
  %v3127 = vpop.f32.mrf.mxu0
  %v3128 = vadd.f32 0.0, %v3127
  %v3129 = vpop.f32.mrf.mxu0
  %v3130 = vadd.f32 0.0, %v3129
  %3131 = vmatprep.mubr.bf16.mxu0 0
  %3132 = vmatmul.mubr.bf16.gmra.mxu0 %v2991
  %v3133 = vpop.f32.mrf.mxu0
  %v3134 = vadd.f32 0.0, %v3133
  %v3135 = vpop.f32.mrf.mxu0
  %v3136 = vadd.f32 0.0, %v3135
  %v3137 = vpop.f32.mrf.mxu0
  %v3138 = vadd.f32 0.0, %v3137
  %v3139 = vpop.f32.mrf.mxu0
  %v3140 = vadd.f32 0.0, %v3139
  %3141 = vdwg.mxu0
  %v3142 = vadd.f32 %v2950, %v3124
  %v3143 = vadd.f32 %v2951, %v3126
  %v3144 = vadd.f32 %v2952, %v3128
  %v3145 = vadd.f32 %v2953, %v3130
  %v3146 = vadd.f32 %v2954, %v3134
  %v3147 = vadd.f32 %v2955, %v3136
  %v3148 = vadd.f32 %v2956, %v3138
  %v3149 = vadd.f32 %v2957, %v3140
  %v3150 = vrot.slane %v2796, 1
  %v3151 = vrot.slane %v2960, 1
  %v3152 = vsel %vm1591, %v3150, %v3151
  %v3154 = vrot.slane %v2798, 1
  %v3155 = vrot.slane %v2976, 1
  %v3156 = vsel %vm1591, %v3154, %v3155
  %v3158 = vsel %vm1622, %v3152, 0
  %v3159 = vsel %vm1623, %v3156, 0
  %s3160 = scalar_lea.vmem %s6, 512
  %v3161 = vld [vmem:[%s3160] sm:$0xf]
  %v3162 = vld [vmem:[%s3160 + $0x4] sm:$0xf]
  %v3163 = vld [vmem:[%s3160 + $0x8] sm:$0xf]
  %v3164 = vld [vmem:[%s3160 + $0xc] sm:$0xf]
  %v3165 = vld [vmem:[%s3160 + $0x10] sm:$0xf]
  %v3166 = vld [vmem:[%s3160 + $0x14] sm:$0xf]
  %v3167 = vld [vmem:[%s3160 + $0x18] sm:$0xf]
  %v3168 = vld [vmem:[%s3160 + $0x1c] sm:$0xf]
  %v3169 = vld [vmem:[%s3160 + $0x20] sm:$0xf]
  %v3170 = vld [vmem:[%s3160 + $0x24] sm:$0xf]
  %v3171 = vld [vmem:[%s3160 + $0x28] sm:$0xf]
  %v3172 = vld [vmem:[%s3160 + $0x2c] sm:$0xf]
  %v3173 = vld [vmem:[%s3160 + $0x30] sm:$0xf]
  %v3174 = vld [vmem:[%s3160 + $0x34] sm:$0xf]
  %v3175 = vld [vmem:[%s3160 + $0x38] sm:$0xf]
  %v3176 = vld [vmem:[%s3160 + $0x3c] sm:$0xf]
  %v3193 = vunpack.c.l.b16 %v3161
  %v3194 = vunpack.c.l.b16 %v3162
  %v3195 = vunpack.c.l.b16 %v3163
  %v3196 = vunpack.c.l.b16 %v3164
  %v3197 = vunpack.c.l.b16 %v3165
  %v3198 = vunpack.c.l.b16 %v3166
  %v3199 = vunpack.c.l.b16 %v3167
  %v3200 = vunpack.c.l.b16 %v3168
  %v3201 = vunpack.c.l.b16 %v3169
  %v3202 = vunpack.c.l.b16 %v3170
  %v3203 = vunpack.c.l.b16 %v3171
  %v3204 = vunpack.c.l.b16 %v3172
  %v3205 = vunpack.c.l.b16 %v3173
  %v3206 = vunpack.c.l.b16 %v3174
  %v3207 = vunpack.c.l.b16 %v3175
  %v3208 = vunpack.c.l.b16 %v3176
  %v3209 = vpack.c.b16 %v3194, %v3193
  %v3210 = vpack.c.b16 %v3196, %v3195
  %v3211 = vpack.c.b16 %v3198, %v3197
  %v3212 = vpack.c.b16 %v3200, %v3199
  %v3213 = vpack.c.b16 %v3202, %v3201
  %v3214 = vpack.c.b16 %v3204, %v3203
  %v3215 = vpack.c.b16 %v3206, %v3205
  %v3216 = vpack.c.b16 %v3208, %v3207
  %3225 = vmatprep.subr.bf16.mxu0 0
  %3226 = vmatpush1.bf16.msra.mxu0 %v3216
  %3227 = vmatprep.subr.bf16.mxu0 0
  %3228 = vmatpush1.bf16.msra.mxu0 %v3215
  %3229 = vmatprep.subr.bf16.mxu0 0
  %3230 = vmatpush1.bf16.msra.mxu0 %v3214
  %3231 = vmatprep.subr.bf16.mxu0 0
  %3232 = vmatpush1.bf16.msra.mxu0 %v3213
  %3233 = vmatprep.subr.bf16.mxu0 0
  %3234 = vmatpush1.bf16.msra.mxu0 %v3212
  %3235 = vmatprep.subr.bf16.mxu0 0
  %3236 = vmatpush1.bf16.msra.mxu0 %v3211
  %3237 = vmatprep.subr.bf16.mxu0 0
  %3238 = vmatpush1.bf16.msra.mxu0 %v3210
  %3239 = vmatprep.subr.bf16.mxu0 0
  %3240 = vmatpush1.bf16.msra.mxu0 %v3209
  %3241 = vmatprep.subr.bf16.mxu0 0
  %3242 = vmatpush2.bf16.msra.mxu0 0
  %3243 = vmatprep.subr.bf16.mxu0 0
  %3244 = vmatpush2.bf16.msra.mxu0 0
  %3245 = vmatprep.subr.bf16.mxu0 0
  %3246 = vmatpush2.bf16.msra.mxu0 0
  %3247 = vmatprep.subr.bf16.mxu0 0
  %3248 = vmatpush2.bf16.msra.mxu0 0
  %3249 = vmatprep.subr.bf16.mxu0 0
  %3250 = vmatpush2.bf16.msra.mxu0 0
  %3251 = vmatprep.subr.bf16.mxu0 0
  %3252 = vmatpush2.bf16.msra.mxu0 0
  %3253 = vmatprep.subr.bf16.mxu0 0
  %3254 = vmatpush2.bf16.msra.mxu0 0
  %3255 = vmatprep.subr.bf16.mxu0 0
  %3256 = vmatpush2.bf16.msra.mxu0 0
  %3257 = vmatprep.mubr.bf16.mxu0 0
  %3258 = vmatmul.mubr.bf16.gmra.mxu0 %v3158
  %v3259 = vpop.f32.mrf.mxu0
  %v3260 = vadd.f32 0.0, %v3259
  %v3261 = vpop.f32.mrf.mxu0
  %v3262 = vpop.f32.mrf.mxu0
  %v3263 = vadd.f32 0.0, %v3262
  %v3264 = vpop.f32.mrf.mxu0
  %3265 = vmatprep.mubr.bf16.mxu0 0
  %3266 = vmatmul.mubr.bf16.gmra.mxu0 %v3159
  %v3267 = vpop.f32.mrf.mxu0
  %v3268 = vadd.f32 0.0, %v3267
  %v3269 = vpop.f32.mrf.mxu0
  %v3270 = vpop.f32.mrf.mxu0
  %v3271 = vadd.f32 0.0, %v3270
  %v3272 = vpop.f32.mrf.mxu0
  %3273 = vdwg.mxu0
  %v3274 = vadd.f32 %v2616, %v3260
  %v3275 = vadd.f32 %v2617, %v3263
  %v3276 = vadd.f32 %v2618, %v3268
  %v3277 = vadd.f32 %v2619, %v3271
  %v3278 = vsel %vm998, %v3152, 0
  %v3279 = vsel %vm999, %v3156, 0
  %s3280 = scalar_lea.vmem %s6, 576
  %v3281 = vld [vmem:[%s3280] sm:$0xf]
  %v3282 = vld [vmem:[%s3280 + $0x4] sm:$0xf]
  %v3283 = vld [vmem:[%s3280 + $0x8] sm:$0xf]
  %v3284 = vld [vmem:[%s3280 + $0xc] sm:$0xf]
  %v3285 = vld [vmem:[%s3280 + $0x10] sm:$0xf]
  %v3286 = vld [vmem:[%s3280 + $0x14] sm:$0xf]
  %v3287 = vld [vmem:[%s3280 + $0x18] sm:$0xf]
  %v3288 = vld [vmem:[%s3280 + $0x1c] sm:$0xf]
  %v3289 = vld [vmem:[%s3280 + $0x20] sm:$0xf]
  %v3290 = vld [vmem:[%s3280 + $0x24] sm:$0xf]
  %v3291 = vld [vmem:[%s3280 + $0x28] sm:$0xf]
  %v3292 = vld [vmem:[%s3280 + $0x2c] sm:$0xf]
  %v3293 = vld [vmem:[%s3280 + $0x30] sm:$0xf]
  %v3294 = vld [vmem:[%s3280 + $0x34] sm:$0xf]
  %v3295 = vld [vmem:[%s3280 + $0x38] sm:$0xf]
  %v3296 = vld [vmem:[%s3280 + $0x3c] sm:$0xf]
  %v3313 = vunpack.c.l.b16 %v3281
  %v3314 = vunpack.c.l.b16 %v3282
  %v3315 = vunpack.c.l.b16 %v3283
  %v3316 = vunpack.c.l.b16 %v3284
  %v3317 = vunpack.c.l.b16 %v3285
  %v3318 = vunpack.c.l.b16 %v3286
  %v3319 = vunpack.c.l.b16 %v3287
  %v3320 = vunpack.c.l.b16 %v3288
  %v3321 = vunpack.c.l.b16 %v3289
  %v3322 = vunpack.c.l.b16 %v3290
  %v3323 = vunpack.c.l.b16 %v3291
  %v3324 = vunpack.c.l.b16 %v3292
  %v3325 = vunpack.c.l.b16 %v3293
  %v3326 = vunpack.c.l.b16 %v3294
  %v3327 = vunpack.c.l.b16 %v3295
  %v3328 = vunpack.c.l.b16 %v3296
  %v3329 = vpack.c.b16 %v3314, %v3313
  %v3330 = vpack.c.b16 %v3316, %v3315
  %v3331 = vpack.c.b16 %v3318, %v3317
  %v3332 = vpack.c.b16 %v3320, %v3319
  %v3333 = vpack.c.b16 %v3322, %v3321
  %v3334 = vpack.c.b16 %v3324, %v3323
  %v3335 = vpack.c.b16 %v3326, %v3325
  %v3336 = vpack.c.b16 %v3328, %v3327
  %3345 = vmatprep.subr.bf16.mxu0 0
  %3346 = vmatpush1.bf16.msra.mxu0 %v3336
  %3347 = vmatprep.subr.bf16.mxu0 0
  %3348 = vmatpush1.bf16.msra.mxu0 %v3335
  %3349 = vmatprep.subr.bf16.mxu0 0
  %3350 = vmatpush1.bf16.msra.mxu0 %v3334
  %3351 = vmatprep.subr.bf16.mxu0 0
  %3352 = vmatpush1.bf16.msra.mxu0 %v3333
  %3353 = vmatprep.subr.bf16.mxu0 0
  %3354 = vmatpush1.bf16.msra.mxu0 %v3332
  %3355 = vmatprep.subr.bf16.mxu0 0
  %3356 = vmatpush1.bf16.msra.mxu0 %v3331
  %3357 = vmatprep.subr.bf16.mxu0 0
  %3358 = vmatpush1.bf16.msra.mxu0 %v3330
  %3359 = vmatprep.subr.bf16.mxu0 0
  %3360 = vmatpush1.bf16.msra.mxu0 %v3329
  %3361 = vmatprep.subr.bf16.mxu0 0
  %3362 = vmatpush2.bf16.msra.mxu0 0
  %3363 = vmatprep.subr.bf16.mxu0 0
  %3364 = vmatpush2.bf16.msra.mxu0 0
  %3365 = vmatprep.subr.bf16.mxu0 0
  %3366 = vmatpush2.bf16.msra.mxu0 0
  %3367 = vmatprep.subr.bf16.mxu0 0
  %3368 = vmatpush2.bf16.msra.mxu0 0
  %3369 = vmatprep.subr.bf16.mxu0 0
  %3370 = vmatpush2.bf16.msra.mxu0 0
  %3371 = vmatprep.subr.bf16.mxu0 0
  %3372 = vmatpush2.bf16.msra.mxu0 0
  %3373 = vmatprep.subr.bf16.mxu0 0
  %3374 = vmatpush2.bf16.msra.mxu0 0
  %3375 = vmatprep.subr.bf16.mxu0 0
  %3376 = vmatpush2.bf16.msra.mxu0 0
  %3377 = vmatprep.mubr.bf16.mxu0 0
  %3378 = vmatmul.mubr.bf16.gmra.mxu0 %v3278
  %v3379 = vpop.f32.mrf.mxu0
  %v3380 = vadd.f32 0.0, %v3379
  %v3381 = vpop.f32.mrf.mxu0
  %v3382 = vpop.f32.mrf.mxu0
  %v3383 = vadd.f32 0.0, %v3382
  %v3384 = vpop.f32.mrf.mxu0
  %3385 = vmatprep.mubr.bf16.mxu0 0
  %3386 = vmatmul.mubr.bf16.gmra.mxu0 %v3279
  %v3387 = vpop.f32.mrf.mxu0
  %v3388 = vadd.f32 0.0, %v3387
  %v3389 = vpop.f32.mrf.mxu0
  %v3390 = vpop.f32.mrf.mxu0
  %v3391 = vadd.f32 0.0, %v3390
  %v3392 = vpop.f32.mrf.mxu0
  %3393 = vdwg.mxu0
  %v3394 = vadd.f32 %v3274, %v3380
  %v3395 = vadd.f32 %v3275, %v3383
  %v3396 = vadd.f32 %v3276, %v3388
  %v3397 = vadd.f32 %v3277, %v3391
  %v3398 = vrot.slane %v2962, 1
  %v3399 = vrot.slane %v2964, 2
  %v3400 = vor.u32 %v3398, %v3399
  %v3401 = vshrl.u32 %v2960, 16
  %v3403 = vrot.slane %v3401, 1
  %v3404 = vrot.slane %v2969, 2
  %v3405 = vor.u32 %v3403, %v3404
  %v3406 = vsel %vm1864, %v3400, %v3405
  %v3408 = vrot.slane %v2978, 1
  %v3409 = vrot.slane %v2980, 2
  %v3410 = vor.u32 %v3408, %v3409
  %v3411 = vshrl.u32 %v2976, 16
  %v3413 = vrot.slane %v3411, 1
  %v3414 = vrot.slane %v2985, 2
  %v3415 = vor.u32 %v3413, %v3414
  %v3416 = vsel %vm1864, %v3410, %v3415
  %v3418 = vsel %vm1077, %v3406, 0
  %v3419 = vsel %vm1078, %v3416, 0
  %s3420 = scalar_lea.vmem %s5, 768
  %v3421 = vld [vmem:[%s3420] sm:$0xff]
  %v3422 = vld [vmem:[%s3420 + $0x8] sm:$0xff]
  %v3423 = vld [vmem:[%s3420 + $0x10] sm:$0xff]
  %v3424 = vld [vmem:[%s3420 + $0x18] sm:$0xff]
  %v3425 = vld [vmem:[%s3420 + $0x20] sm:$0xff]
  %v3426 = vld [vmem:[%s3420 + $0x28] sm:$0xff]
  %v3427 = vld [vmem:[%s3420 + $0x30] sm:$0xff]
  %v3428 = vld [vmem:[%s3420 + $0x38] sm:$0xff]
  %v3429 = vld [vmem:[%s3420 + $0x40] sm:$0xff]
  %v3430 = vld [vmem:[%s3420 + $0x48] sm:$0xff]
  %v3431 = vld [vmem:[%s3420 + $0x50] sm:$0xff]
  %v3432 = vld [vmem:[%s3420 + $0x58] sm:$0xff]
  %v3433 = vld [vmem:[%s3420 + $0x60] sm:$0xff]
  %v3434 = vld [vmem:[%s3420 + $0x68] sm:$0xff]
  %v3435 = vld [vmem:[%s3420 + $0x70] sm:$0xff]
  %v3436 = vld [vmem:[%s3420 + $0x78] sm:$0xff]
  %v3453 = vunpack.c.l.b16 %v3421
  %v3454 = vunpack.c.h.b16 %v3421
  %v3455 = vunpack.c.l.b16 %v3422
  %v3456 = vunpack.c.h.b16 %v3422
  %v3457 = vunpack.c.l.b16 %v3423
  %v3458 = vunpack.c.h.b16 %v3423
  %v3459 = vunpack.c.l.b16 %v3424
  %v3460 = vunpack.c.h.b16 %v3424
  %v3461 = vunpack.c.l.b16 %v3425
  %v3462 = vunpack.c.h.b16 %v3425
  %v3463 = vunpack.c.l.b16 %v3426
  %v3464 = vunpack.c.h.b16 %v3426
  %v3465 = vunpack.c.l.b16 %v3427
  %v3466 = vunpack.c.h.b16 %v3427
  %v3467 = vunpack.c.l.b16 %v3428
  %v3468 = vunpack.c.h.b16 %v3428
  %v3469 = vunpack.c.l.b16 %v3429
  %v3470 = vunpack.c.h.b16 %v3429
  %v3471 = vunpack.c.l.b16 %v3430
  %v3472 = vunpack.c.h.b16 %v3430
  %v3473 = vunpack.c.l.b16 %v3431
  %v3474 = vunpack.c.h.b16 %v3431
  %v3475 = vunpack.c.l.b16 %v3432
  %v3476 = vunpack.c.h.b16 %v3432
  %v3477 = vunpack.c.l.b16 %v3433
  %v3478 = vunpack.c.h.b16 %v3433
  %v3479 = vunpack.c.l.b16 %v3434
  %v3480 = vunpack.c.h.b16 %v3434
  %v3481 = vunpack.c.l.b16 %v3435
  %v3482 = vunpack.c.h.b16 %v3435
  %v3483 = vunpack.c.l.b16 %v3436
  %v3484 = vunpack.c.h.b16 %v3436
  %v3485 = vpack.c.b16 %v3455, %v3453
  %v3486 = vpack.c.b16 %v3456, %v3454
  %v3487 = vpack.c.b16 %v3459, %v3457
  %v3488 = vpack.c.b16 %v3460, %v3458
  %v3489 = vpack.c.b16 %v3463, %v3461
  %v3490 = vpack.c.b16 %v3464, %v3462
  %v3491 = vpack.c.b16 %v3467, %v3465
  %v3492 = vpack.c.b16 %v3468, %v3466
  %v3493 = vpack.c.b16 %v3471, %v3469
  %v3494 = vpack.c.b16 %v3472, %v3470
  %v3495 = vpack.c.b16 %v3475, %v3473
  %v3496 = vpack.c.b16 %v3476, %v3474
  %v3497 = vpack.c.b16 %v3479, %v3477
  %v3498 = vpack.c.b16 %v3480, %v3478
  %v3499 = vpack.c.b16 %v3483, %v3481
  %v3500 = vpack.c.b16 %v3484, %v3482
  %3517 = vmatprep.subr.bf16.mxu0 %v3500
  %3518 = vmatpush1.bf16.msra.mxu0 %v3499
  %3519 = vmatprep.subr.bf16.mxu0 %v3498
  %3520 = vmatpush1.bf16.msra.mxu0 %v3497
  %3521 = vmatprep.subr.bf16.mxu0 %v3496
  %3522 = vmatpush1.bf16.msra.mxu0 %v3495
  %3523 = vmatprep.subr.bf16.mxu0 %v3494
  %3524 = vmatpush1.bf16.msra.mxu0 %v3493
  %3525 = vmatprep.subr.bf16.mxu0 %v3492
  %3526 = vmatpush1.bf16.msra.mxu0 %v3491
  %3527 = vmatprep.subr.bf16.mxu0 %v3490
  %3528 = vmatpush1.bf16.msra.mxu0 %v3489
  %3529 = vmatprep.subr.bf16.mxu0 %v3488
  %3530 = vmatpush1.bf16.msra.mxu0 %v3487
  %3531 = vmatprep.subr.bf16.mxu0 %v3486
  %3532 = vmatpush1.bf16.msra.mxu0 %v3485
  %3533 = vmatprep.subr.bf16.mxu0 0
  %3534 = vmatpush2.bf16.msra.mxu0 0
  %3535 = vmatprep.subr.bf16.mxu0 0
  %3536 = vmatpush2.bf16.msra.mxu0 0
  %3537 = vmatprep.subr.bf16.mxu0 0
  %3538 = vmatpush2.bf16.msra.mxu0 0
  %3539 = vmatprep.subr.bf16.mxu0 0
  %3540 = vmatpush2.bf16.msra.mxu0 0
  %3541 = vmatprep.subr.bf16.mxu0 0
  %3542 = vmatpush2.bf16.msra.mxu0 0
  %3543 = vmatprep.subr.bf16.mxu0 0
  %3544 = vmatpush2.bf16.msra.mxu0 0
  %3545 = vmatprep.subr.bf16.mxu0 0
  %3546 = vmatpush2.bf16.msra.mxu0 0
  %3547 = vmatprep.subr.bf16.mxu0 0
  %3548 = vmatpush2.bf16.msra.mxu0 0
  %3549 = vmatprep.mubr.bf16.mxu0 0
  %3550 = vmatmul.mubr.bf16.gmra.mxu0 %v3418
  %v3551 = vpop.f32.mrf.mxu0
  %v3552 = vadd.f32 0.0, %v3551
  %v3553 = vpop.f32.mrf.mxu0
  %v3554 = vadd.f32 0.0, %v3553
  %v3555 = vpop.f32.mrf.mxu0
  %v3556 = vadd.f32 0.0, %v3555
  %v3557 = vpop.f32.mrf.mxu0
  %v3558 = vadd.f32 0.0, %v3557
  %3559 = vmatprep.mubr.bf16.mxu0 0
  %3560 = vmatmul.mubr.bf16.gmra.mxu0 %v3419
  %v3561 = vpop.f32.mrf.mxu0
  %v3562 = vadd.f32 0.0, %v3561
  %v3563 = vpop.f32.mrf.mxu0
  %v3564 = vadd.f32 0.0, %v3563
  %v3565 = vpop.f32.mrf.mxu0
  %v3566 = vadd.f32 0.0, %v3565
  %v3567 = vpop.f32.mrf.mxu0
  %v3568 = vadd.f32 0.0, %v3567
  %3569 = vdwg.mxu0
  %v3570 = vadd.f32 %v3142, %v3552
  %v3571 = vadd.f32 %v3143, %v3554
  %v3572 = vadd.f32 %v3144, %v3556
  %v3573 = vadd.f32 %v3145, %v3558
  %v3574 = vadd.f32 %v3146, %v3562
  %v3575 = vadd.f32 %v3147, %v3564
  %v3576 = vadd.f32 %v3148, %v3566
  %v3577 = vadd.f32 %v3149, %v3568
  %v3578 = vrot.slane %v2796, 2
  %v3579 = vrot.slane %v2960, 2
  %v3580 = vsel %vm1903, %v3578, %v3579
  %v3582 = vrot.slane %v2798, 2
  %v3583 = vrot.slane %v2976, 2
  %v3584 = vsel %vm1903, %v3582, %v3583
  %s3586 = scalar_lea.vmem %s5, 896
  %v3587 = vld [vmem:[%s3586] sm:$0xff]
  %v3588 = vld [vmem:[%s3586 + $0x8] sm:$0xff]
  %v3589 = vld [vmem:[%s3586 + $0x10] sm:$0xff]
  %v3590 = vld [vmem:[%s3586 + $0x18] sm:$0xff]
  %v3591 = vld [vmem:[%s3586 + $0x20] sm:$0xff]
  %v3592 = vld [vmem:[%s3586 + $0x28] sm:$0xff]
  %v3593 = vld [vmem:[%s3586 + $0x30] sm:$0xff]
  %v3594 = vld [vmem:[%s3586 + $0x38] sm:$0xff]
  %v3595 = vld [vmem:[%s3586 + $0x40] sm:$0xff]
  %v3596 = vld [vmem:[%s3586 + $0x48] sm:$0xff]
  %v3597 = vld [vmem:[%s3586 + $0x50] sm:$0xff]
  %v3598 = vld [vmem:[%s3586 + $0x58] sm:$0xff]
  %v3599 = vld [vmem:[%s3586 + $0x60] sm:$0xff]
  %v3600 = vld [vmem:[%s3586 + $0x68] sm:$0xff]
  %v3601 = vld [vmem:[%s3586 + $0x70] sm:$0xff]
  %v3602 = vld [vmem:[%s3586 + $0x78] sm:$0xff]
  %v3619 = vunpack.c.l.b16 %v3587
  %v3620 = vunpack.c.h.b16 %v3587
  %v3621 = vunpack.c.l.b16 %v3588
  %v3622 = vunpack.c.h.b16 %v3588
  %v3623 = vunpack.c.l.b16 %v3589
  %v3624 = vunpack.c.h.b16 %v3589
  %v3625 = vunpack.c.l.b16 %v3590
  %v3626 = vunpack.c.h.b16 %v3590
  %v3627 = vunpack.c.l.b16 %v3591
  %v3628 = vunpack.c.h.b16 %v3591
  %v3629 = vunpack.c.l.b16 %v3592
  %v3630 = vunpack.c.h.b16 %v3592
  %v3631 = vunpack.c.l.b16 %v3593
  %v3632 = vunpack.c.h.b16 %v3593
  %v3633 = vunpack.c.l.b16 %v3594
  %v3634 = vunpack.c.h.b16 %v3594
  %v3635 = vunpack.c.l.b16 %v3595
  %v3636 = vunpack.c.h.b16 %v3595
  %v3637 = vunpack.c.l.b16 %v3596
  %v3638 = vunpack.c.h.b16 %v3596
  %v3639 = vunpack.c.l.b16 %v3597
  %v3640 = vunpack.c.h.b16 %v3597
  %v3641 = vunpack.c.l.b16 %v3598
  %v3642 = vunpack.c.h.b16 %v3598
  %v3643 = vunpack.c.l.b16 %v3599
  %v3644 = vunpack.c.h.b16 %v3599
  %v3645 = vunpack.c.l.b16 %v3600
  %v3646 = vunpack.c.h.b16 %v3600
  %v3647 = vunpack.c.l.b16 %v3601
  %v3648 = vunpack.c.h.b16 %v3601
  %v3649 = vunpack.c.l.b16 %v3602
  %v3650 = vunpack.c.h.b16 %v3602
  %v3651 = vpack.c.b16 %v3621, %v3619
  %v3652 = vpack.c.b16 %v3622, %v3620
  %v3653 = vpack.c.b16 %v3625, %v3623
  %v3654 = vpack.c.b16 %v3626, %v3624
  %v3655 = vpack.c.b16 %v3629, %v3627
  %v3656 = vpack.c.b16 %v3630, %v3628
  %v3657 = vpack.c.b16 %v3633, %v3631
  %v3658 = vpack.c.b16 %v3634, %v3632
  %v3659 = vpack.c.b16 %v3637, %v3635
  %v3660 = vpack.c.b16 %v3638, %v3636
  %v3661 = vpack.c.b16 %v3641, %v3639
  %v3662 = vpack.c.b16 %v3642, %v3640
  %v3663 = vpack.c.b16 %v3645, %v3643
  %v3664 = vpack.c.b16 %v3646, %v3644
  %v3665 = vpack.c.b16 %v3649, %v3647
  %v3666 = vpack.c.b16 %v3650, %v3648
  %3683 = vmatprep.subr.bf16.mxu0 %v3666
  %3684 = vmatpush1.bf16.msra.mxu0 %v3665
  %3685 = vmatprep.subr.bf16.mxu0 %v3664
  %3686 = vmatpush1.bf16.msra.mxu0 %v3663
  %3687 = vmatprep.subr.bf16.mxu0 %v3662
  %3688 = vmatpush1.bf16.msra.mxu0 %v3661
  %3689 = vmatprep.subr.bf16.mxu0 %v3660
  %3690 = vmatpush1.bf16.msra.mxu0 %v3659
  %3691 = vmatprep.subr.bf16.mxu0 %v3658
  %3692 = vmatpush1.bf16.msra.mxu0 %v3657
  %3693 = vmatprep.subr.bf16.mxu0 %v3656
  %3694 = vmatpush1.bf16.msra.mxu0 %v3655
  %3695 = vmatprep.subr.bf16.mxu0 %v3654
  %3696 = vmatpush1.bf16.msra.mxu0 %v3653
  %3697 = vmatprep.subr.bf16.mxu0 %v3652
  %3698 = vmatpush1.bf16.msra.mxu0 %v3651
  %3699 = vmatprep.subr.bf16.mxu0 0
  %3700 = vmatpush2.bf16.msra.mxu0 0
  %3701 = vmatprep.subr.bf16.mxu0 0
  %3702 = vmatpush2.bf16.msra.mxu0 0
  %3703 = vmatprep.subr.bf16.mxu0 0
  %3704 = vmatpush2.bf16.msra.mxu0 0
  %3705 = vmatprep.subr.bf16.mxu0 0
  %3706 = vmatpush2.bf16.msra.mxu0 0
  %3707 = vmatprep.subr.bf16.mxu0 0
  %3708 = vmatpush2.bf16.msra.mxu0 0
  %3709 = vmatprep.subr.bf16.mxu0 0
  %3710 = vmatpush2.bf16.msra.mxu0 0
  %3711 = vmatprep.subr.bf16.mxu0 0
  %3712 = vmatpush2.bf16.msra.mxu0 0
  %3713 = vmatprep.subr.bf16.mxu0 0
  %3714 = vmatpush2.bf16.msra.mxu0 0
  %3715 = vmatprep.mubr.bf16.mxu0 0
  %3716 = vmatmul.mubr.bf16.gmra.mxu0 %v3580
  %v3717 = vpop.f32.mrf.mxu0
  %v3718 = vadd.f32 0.0, %v3717
  %v3719 = vpop.f32.mrf.mxu0
  %v3720 = vadd.f32 0.0, %v3719
  %v3721 = vpop.f32.mrf.mxu0
  %v3722 = vadd.f32 0.0, %v3721
  %v3723 = vpop.f32.mrf.mxu0
  %v3724 = vadd.f32 0.0, %v3723
  %3725 = vmatprep.mubr.bf16.mxu0 0
  %3726 = vmatmul.mubr.bf16.gmra.mxu0 %v3584
  %v3727 = vpop.f32.mrf.mxu0
  %v3728 = vadd.f32 0.0, %v3727
  %v3729 = vpop.f32.mrf.mxu0
  %v3730 = vadd.f32 0.0, %v3729
  %v3731 = vpop.f32.mrf.mxu0
  %v3732 = vadd.f32 0.0, %v3731
  %v3733 = vpop.f32.mrf.mxu0
  %v3734 = vadd.f32 0.0, %v3733
  %3735 = vdwg.mxu0
  %v3736 = vadd.f32 %v3570, %v3718
  %v3737 = vadd.f32 %v3571, %v3720
  %v3738 = vadd.f32 %v3572, %v3722
  %v3739 = vadd.f32 %v3573, %v3724
  %v3740 = vadd.f32 %v3574, %v3728
  %v3741 = vadd.f32 %v3575, %v3730
  %v3742 = vadd.f32 %v3576, %v3732
  %v3743 = vadd.f32 %v3577, %v3734
  %v3744 = vrot.slane %v2962, 2
  %v3745 = vrot.slane %v2964, 3
  %v3746 = vor.u32 %v3744, %v3745
  %v3747 = vrot.slane %v3401, 2
  %v3748 = vrot.slane %v2969, 3
  %v3749 = vor.u32 %v3747, %v3748
  %v3750 = vsel %vm2195, %v3746, %v3749
  %v3752 = vrot.slane %v2978, 2
  %v3753 = vrot.slane %v2980, 3
  %v3754 = vor.u32 %v3752, %v3753
  %v3755 = vrot.slane %v3411, 2
  %v3756 = vrot.slane %v2985, 3
  %v3757 = vor.u32 %v3755, %v3756
  %v3758 = vsel %vm2195, %v3754, %v3757
  %v3760 = vsel %vm1469, %v3750, 0
  %v3761 = vsel %vm1470, %v3758, 0
  %s3762 = scalar_lea.vmem %s5, 1024
  %v3763 = vld [vmem:[%s3762] sm:$0xff]
  %v3764 = vld [vmem:[%s3762 + $0x8] sm:$0xff]
  %v3765 = vld [vmem:[%s3762 + $0x10] sm:$0xff]
  %v3766 = vld [vmem:[%s3762 + $0x18] sm:$0xff]
  %v3767 = vld [vmem:[%s3762 + $0x20] sm:$0xff]
  %v3768 = vld [vmem:[%s3762 + $0x28] sm:$0xff]
  %v3769 = vld [vmem:[%s3762 + $0x30] sm:$0xff]
  %v3770 = vld [vmem:[%s3762 + $0x38] sm:$0xff]
  %v3771 = vld [vmem:[%s3762 + $0x40] sm:$0xff]
  %v3772 = vld [vmem:[%s3762 + $0x48] sm:$0xff]
  %v3773 = vld [vmem:[%s3762 + $0x50] sm:$0xff]
  %v3774 = vld [vmem:[%s3762 + $0x58] sm:$0xff]
  %v3775 = vld [vmem:[%s3762 + $0x60] sm:$0xff]
  %v3776 = vld [vmem:[%s3762 + $0x68] sm:$0xff]
  %v3777 = vld [vmem:[%s3762 + $0x70] sm:$0xff]
  %v3778 = vld [vmem:[%s3762 + $0x78] sm:$0xff]
  %v3795 = vunpack.c.l.b16 %v3763
  %v3796 = vunpack.c.h.b16 %v3763
  %v3797 = vunpack.c.l.b16 %v3764
  %v3798 = vunpack.c.h.b16 %v3764
  %v3799 = vunpack.c.l.b16 %v3765
  %v3800 = vunpack.c.h.b16 %v3765
  %v3801 = vunpack.c.l.b16 %v3766
  %v3802 = vunpack.c.h.b16 %v3766
  %v3803 = vunpack.c.l.b16 %v3767
  %v3804 = vunpack.c.h.b16 %v3767
  %v3805 = vunpack.c.l.b16 %v3768
  %v3806 = vunpack.c.h.b16 %v3768
  %v3807 = vunpack.c.l.b16 %v3769
  %v3808 = vunpack.c.h.b16 %v3769
  %v3809 = vunpack.c.l.b16 %v3770
  %v3810 = vunpack.c.h.b16 %v3770
  %v3811 = vunpack.c.l.b16 %v3771
  %v3812 = vunpack.c.h.b16 %v3771
  %v3813 = vunpack.c.l.b16 %v3772
  %v3814 = vunpack.c.h.b16 %v3772
  %v3815 = vunpack.c.l.b16 %v3773
  %v3816 = vunpack.c.h.b16 %v3773
  %v3817 = vunpack.c.l.b16 %v3774
  %v3818 = vunpack.c.h.b16 %v3774
  %v3819 = vunpack.c.l.b16 %v3775
  %v3820 = vunpack.c.h.b16 %v3775
  %v3821 = vunpack.c.l.b16 %v3776
  %v3822 = vunpack.c.h.b16 %v3776
  %v3823 = vunpack.c.l.b16 %v3777
  %v3824 = vunpack.c.h.b16 %v3777
  %v3825 = vunpack.c.l.b16 %v3778
  %v3826 = vunpack.c.h.b16 %v3778
  %v3827 = vpack.c.b16 %v3797, %v3795
  %v3828 = vpack.c.b16 %v3798, %v3796
  %v3829 = vpack.c.b16 %v3801, %v3799
  %v3830 = vpack.c.b16 %v3802, %v3800
  %v3831 = vpack.c.b16 %v3805, %v3803
  %v3832 = vpack.c.b16 %v3806, %v3804
  %v3833 = vpack.c.b16 %v3809, %v3807
  %v3834 = vpack.c.b16 %v3810, %v3808
  %v3835 = vpack.c.b16 %v3813, %v3811
  %v3836 = vpack.c.b16 %v3814, %v3812
  %v3837 = vpack.c.b16 %v3817, %v3815
  %v3838 = vpack.c.b16 %v3818, %v3816
  %v3839 = vpack.c.b16 %v3821, %v3819
  %v3840 = vpack.c.b16 %v3822, %v3820
  %v3841 = vpack.c.b16 %v3825, %v3823
  %v3842 = vpack.c.b16 %v3826, %v3824
  %3859 = vmatprep.subr.bf16.mxu0 %v3842
  %3860 = vmatpush1.bf16.msra.mxu0 %v3841
  %3861 = vmatprep.subr.bf16.mxu0 %v3840
  %3862 = vmatpush1.bf16.msra.mxu0 %v3839
  %3863 = vmatprep.subr.bf16.mxu0 %v3838
  %3864 = vmatpush1.bf16.msra.mxu0 %v3837
  %3865 = vmatprep.subr.bf16.mxu0 %v3836
  %3866 = vmatpush1.bf16.msra.mxu0 %v3835
  %3867 = vmatprep.subr.bf16.mxu0 %v3834
  %3868 = vmatpush1.bf16.msra.mxu0 %v3833
  %3869 = vmatprep.subr.bf16.mxu0 %v3832
  %3870 = vmatpush1.bf16.msra.mxu0 %v3831
  %3871 = vmatprep.subr.bf16.mxu0 %v3830
  %3872 = vmatpush1.bf16.msra.mxu0 %v3829
  %3873 = vmatprep.subr.bf16.mxu0 %v3828
  %3874 = vmatpush1.bf16.msra.mxu0 %v3827
  %3875 = vmatprep.subr.bf16.mxu0 0
  %3876 = vmatpush2.bf16.msra.mxu0 0
  %3877 = vmatprep.subr.bf16.mxu0 0
  %3878 = vmatpush2.bf16.msra.mxu0 0
  %3879 = vmatprep.subr.bf16.mxu0 0
  %3880 = vmatpush2.bf16.msra.mxu0 0
  %3881 = vmatprep.subr.bf16.mxu0 0
  %3882 = vmatpush2.bf16.msra.mxu0 0
  %3883 = vmatprep.subr.bf16.mxu0 0
  %3884 = vmatpush2.bf16.msra.mxu0 0
  %3885 = vmatprep.subr.bf16.mxu0 0
  %3886 = vmatpush2.bf16.msra.mxu0 0
  %3887 = vmatprep.subr.bf16.mxu0 0
  %3888 = vmatpush2.bf16.msra.mxu0 0
  %3889 = vmatprep.subr.bf16.mxu0 0
  %3890 = vmatpush2.bf16.msra.mxu0 0
  %3891 = vmatprep.mubr.bf16.mxu0 0
  %3892 = vmatmul.mubr.bf16.gmra.mxu0 %v3760
  %v3893 = vpop.f32.mrf.mxu0
  %v3894 = vadd.f32 0.0, %v3893
  %v3895 = vpop.f32.mrf.mxu0
  %v3896 = vadd.f32 0.0, %v3895
  %v3897 = vpop.f32.mrf.mxu0
  %v3898 = vadd.f32 0.0, %v3897
  %v3899 = vpop.f32.mrf.mxu0
  %v3900 = vadd.f32 0.0, %v3899
  %3901 = vmatprep.mubr.bf16.mxu0 0
  %3902 = vmatmul.mubr.bf16.gmra.mxu0 %v3761
  %v3903 = vpop.f32.mrf.mxu0
  %v3904 = vadd.f32 0.0, %v3903
  %v3905 = vpop.f32.mrf.mxu0
  %v3906 = vadd.f32 0.0, %v3905
  %v3907 = vpop.f32.mrf.mxu0
  %v3908 = vadd.f32 0.0, %v3907
  %v3909 = vpop.f32.mrf.mxu0
  %v3910 = vadd.f32 0.0, %v3909
  %3911 = vdwg.mxu0
  %v3912 = vadd.f32 %v3736, %v3894
  %v3913 = vadd.f32 %v3737, %v3896
  %v3914 = vadd.f32 %v3738, %v3898
  %v3915 = vadd.f32 %v3739, %v3900
  %v3916 = vadd.f32 %v3740, %v3904
  %v3917 = vadd.f32 %v3741, %v3906
  %v3918 = vadd.f32 %v3742, %v3908
  %v3919 = vadd.f32 %v3743, %v3910
  %v3920 = vrot.slane %v2796, 3
  %v3921 = vrot.slane %v2960, 3
  %v3922 = vsel %vm959, %v3920, %v3921
  %v3924 = vrot.slane %v2798, 3
  %v3925 = vrot.slane %v2976, 3
  %v3926 = vsel %vm959, %v3924, %v3925
  %v3928 = vsel %vm1622, %v3922, 0
  %v3929 = vsel %vm1623, %v3926, 0
  %s3930 = scalar_lea.vmem %s6, 640
  %v3931 = vld [vmem:[%s3930] sm:$0xf]
  %v3932 = vld [vmem:[%s3930 + $0x4] sm:$0xf]
  %v3933 = vld [vmem:[%s3930 + $0x8] sm:$0xf]
  %v3934 = vld [vmem:[%s3930 + $0xc] sm:$0xf]
  %v3935 = vld [vmem:[%s3930 + $0x10] sm:$0xf]
  %v3936 = vld [vmem:[%s3930 + $0x14] sm:$0xf]
  %v3937 = vld [vmem:[%s3930 + $0x18] sm:$0xf]
  %v3938 = vld [vmem:[%s3930 + $0x1c] sm:$0xf]
  %v3939 = vld [vmem:[%s3930 + $0x20] sm:$0xf]
  %v3940 = vld [vmem:[%s3930 + $0x24] sm:$0xf]
  %v3941 = vld [vmem:[%s3930 + $0x28] sm:$0xf]
  %v3942 = vld [vmem:[%s3930 + $0x2c] sm:$0xf]
  %v3943 = vld [vmem:[%s3930 + $0x30] sm:$0xf]
  %v3944 = vld [vmem:[%s3930 + $0x34] sm:$0xf]
  %v3945 = vld [vmem:[%s3930 + $0x38] sm:$0xf]
  %v3946 = vld [vmem:[%s3930 + $0x3c] sm:$0xf]
  %v3963 = vunpack.c.l.b16 %v3931
  %v3964 = vunpack.c.l.b16 %v3932
  %v3965 = vunpack.c.l.b16 %v3933
  %v3966 = vunpack.c.l.b16 %v3934
  %v3967 = vunpack.c.l.b16 %v3935
  %v3968 = vunpack.c.l.b16 %v3936
  %v3969 = vunpack.c.l.b16 %v3937
  %v3970 = vunpack.c.l.b16 %v3938
  %v3971 = vunpack.c.l.b16 %v3939
  %v3972 = vunpack.c.l.b16 %v3940
  %v3973 = vunpack.c.l.b16 %v3941
  %v3974 = vunpack.c.l.b16 %v3942
  %v3975 = vunpack.c.l.b16 %v3943
  %v3976 = vunpack.c.l.b16 %v3944
  %v3977 = vunpack.c.l.b16 %v3945
  %v3978 = vunpack.c.l.b16 %v3946
  %v3979 = vpack.c.b16 %v3964, %v3963
  %v3980 = vpack.c.b16 %v3966, %v3965
  %v3981 = vpack.c.b16 %v3968, %v3967
  %v3982 = vpack.c.b16 %v3970, %v3969
  %v3983 = vpack.c.b16 %v3972, %v3971
  %v3984 = vpack.c.b16 %v3974, %v3973
  %v3985 = vpack.c.b16 %v3976, %v3975
  %v3986 = vpack.c.b16 %v3978, %v3977
  %3995 = vmatprep.subr.bf16.mxu0 0
  %3996 = vmatpush1.bf16.msra.mxu0 %v3986
  %3997 = vmatprep.subr.bf16.mxu0 0
  %3998 = vmatpush1.bf16.msra.mxu0 %v3985
  %3999 = vmatprep.subr.bf16.mxu0 0
  %4000 = vmatpush1.bf16.msra.mxu0 %v3984
  %4001 = vmatprep.subr.bf16.mxu0 0
  %4002 = vmatpush1.bf16.msra.mxu0 %v3983
  %4003 = vmatprep.subr.bf16.mxu0 0
  %4004 = vmatpush1.bf16.msra.mxu0 %v3982
  %4005 = vmatprep.subr.bf16.mxu0 0
  %4006 = vmatpush1.bf16.msra.mxu0 %v3981
  %4007 = vmatprep.subr.bf16.mxu0 0
  %4008 = vmatpush1.bf16.msra.mxu0 %v3980
  %4009 = vmatprep.subr.bf16.mxu0 0
  %4010 = vmatpush1.bf16.msra.mxu0 %v3979
  %4011 = vmatprep.subr.bf16.mxu0 0
  %4012 = vmatpush2.bf16.msra.mxu0 0
  %4013 = vmatprep.subr.bf16.mxu0 0
  %4014 = vmatpush2.bf16.msra.mxu0 0
  %4015 = vmatprep.subr.bf16.mxu0 0
  %4016 = vmatpush2.bf16.msra.mxu0 0
  %4017 = vmatprep.subr.bf16.mxu0 0
  %4018 = vmatpush2.bf16.msra.mxu0 0
  %4019 = vmatprep.subr.bf16.mxu0 0
  %4020 = vmatpush2.bf16.msra.mxu0 0
  %4021 = vmatprep.subr.bf16.mxu0 0
  %4022 = vmatpush2.bf16.msra.mxu0 0
  %4023 = vmatprep.subr.bf16.mxu0 0
  %4024 = vmatpush2.bf16.msra.mxu0 0
  %4025 = vmatprep.subr.bf16.mxu0 0
  %4026 = vmatpush2.bf16.msra.mxu0 0
  %4027 = vmatprep.mubr.bf16.mxu0 0
  %4028 = vmatmul.mubr.bf16.gmra.mxu0 %v3928
  %v4029 = vpop.f32.mrf.mxu0
  %v4030 = vadd.f32 0.0, %v4029
  %v4031 = vpop.f32.mrf.mxu0
  %v4032 = vpop.f32.mrf.mxu0
  %v4033 = vadd.f32 0.0, %v4032
  %v4034 = vpop.f32.mrf.mxu0
  %4035 = vmatprep.mubr.bf16.mxu0 0
  %4036 = vmatmul.mubr.bf16.gmra.mxu0 %v3929
  %v4037 = vpop.f32.mrf.mxu0
  %v4038 = vadd.f32 0.0, %v4037
  %v4039 = vpop.f32.mrf.mxu0
  %v4040 = vpop.f32.mrf.mxu0
  %v4041 = vadd.f32 0.0, %v4040
  %v4042 = vpop.f32.mrf.mxu0
  %4043 = vdwg.mxu0
  %v4044 = vadd.f32 %v3394, %v4030
  %v4045 = vadd.f32 %v3395, %v4033
  %v4046 = vadd.f32 %v3396, %v4038
  %v4047 = vadd.f32 %v3397, %v4041
  %v4048 = vsel %vm998, %v3922, 0
  %v4049 = vsel %vm999, %v3926, 0
  %s4050 = scalar_lea.vmem %s6, 704
  %v4051 = vld [vmem:[%s4050] sm:$0xf]
  %v4052 = vld [vmem:[%s4050 + $0x4] sm:$0xf]
  %v4053 = vld [vmem:[%s4050 + $0x8] sm:$0xf]
  %v4054 = vld [vmem:[%s4050 + $0xc] sm:$0xf]
  %v4055 = vld [vmem:[%s4050 + $0x10] sm:$0xf]
  %v4056 = vld [vmem:[%s4050 + $0x14] sm:$0xf]
  %v4057 = vld [vmem:[%s4050 + $0x18] sm:$0xf]
  %v4058 = vld [vmem:[%s4050 + $0x1c] sm:$0xf]
  %v4059 = vld [vmem:[%s4050 + $0x20] sm:$0xf]
  %v4060 = vld [vmem:[%s4050 + $0x24] sm:$0xf]
  %v4061 = vld [vmem:[%s4050 + $0x28] sm:$0xf]
  %v4062 = vld [vmem:[%s4050 + $0x2c] sm:$0xf]
  %v4063 = vld [vmem:[%s4050 + $0x30] sm:$0xf]
  %v4064 = vld [vmem:[%s4050 + $0x34] sm:$0xf]
  %v4065 = vld [vmem:[%s4050 + $0x38] sm:$0xf]
  %v4066 = vld [vmem:[%s4050 + $0x3c] sm:$0xf]
  %v4083 = vunpack.c.l.b16 %v4051
  %v4084 = vunpack.c.l.b16 %v4052
  %v4085 = vunpack.c.l.b16 %v4053
  %v4086 = vunpack.c.l.b16 %v4054
  %v4087 = vunpack.c.l.b16 %v4055
  %v4088 = vunpack.c.l.b16 %v4056
  %v4089 = vunpack.c.l.b16 %v4057
  %v4090 = vunpack.c.l.b16 %v4058
  %v4091 = vunpack.c.l.b16 %v4059
  %v4092 = vunpack.c.l.b16 %v4060
  %v4093 = vunpack.c.l.b16 %v4061
  %v4094 = vunpack.c.l.b16 %v4062
  %v4095 = vunpack.c.l.b16 %v4063
  %v4096 = vunpack.c.l.b16 %v4064
  %v4097 = vunpack.c.l.b16 %v4065
  %v4098 = vunpack.c.l.b16 %v4066
  %v4099 = vpack.c.b16 %v4084, %v4083
  %v4100 = vpack.c.b16 %v4086, %v4085
  %v4101 = vpack.c.b16 %v4088, %v4087
  %v4102 = vpack.c.b16 %v4090, %v4089
  %v4103 = vpack.c.b16 %v4092, %v4091
  %v4104 = vpack.c.b16 %v4094, %v4093
  %v4105 = vpack.c.b16 %v4096, %v4095
  %v4106 = vpack.c.b16 %v4098, %v4097
  %4115 = vmatprep.subr.bf16.mxu0 0
  %4116 = vmatpush1.bf16.msra.mxu0 %v4106
  %4117 = vmatprep.subr.bf16.mxu0 0
  %4118 = vmatpush1.bf16.msra.mxu0 %v4105
  %4119 = vmatprep.subr.bf16.mxu0 0
  %4120 = vmatpush1.bf16.msra.mxu0 %v4104
  %4121 = vmatprep.subr.bf16.mxu0 0
  %4122 = vmatpush1.bf16.msra.mxu0 %v4103
  %4123 = vmatprep.subr.bf16.mxu0 0
  %4124 = vmatpush1.bf16.msra.mxu0 %v4102
  %4125 = vmatprep.subr.bf16.mxu0 0
  %4126 = vmatpush1.bf16.msra.mxu0 %v4101
  %4127 = vmatprep.subr.bf16.mxu0 0
  %4128 = vmatpush1.bf16.msra.mxu0 %v4100
  %4129 = vmatprep.subr.bf16.mxu0 0
  %4130 = vmatpush1.bf16.msra.mxu0 %v4099
  %4131 = vmatprep.subr.bf16.mxu0 0
  %4132 = vmatpush2.bf16.msra.mxu0 0
  %4133 = vmatprep.subr.bf16.mxu0 0
  %4134 = vmatpush2.bf16.msra.mxu0 0
  %4135 = vmatprep.subr.bf16.mxu0 0
  %4136 = vmatpush2.bf16.msra.mxu0 0
  %4137 = vmatprep.subr.bf16.mxu0 0
  %4138 = vmatpush2.bf16.msra.mxu0 0
  %4139 = vmatprep.subr.bf16.mxu0 0
  %4140 = vmatpush2.bf16.msra.mxu0 0
  %4141 = vmatprep.subr.bf16.mxu0 0
  %4142 = vmatpush2.bf16.msra.mxu0 0
  %4143 = vmatprep.subr.bf16.mxu0 0
  %4144 = vmatpush2.bf16.msra.mxu0 0
  %4145 = vmatprep.subr.bf16.mxu0 0
  %4146 = vmatpush2.bf16.msra.mxu0 0
  %4147 = vmatprep.mubr.bf16.mxu0 0
  %4148 = vmatmul.mubr.bf16.gmra.mxu0 %v4048
  %v4149 = vpop.f32.mrf.mxu0
  %v4150 = vadd.f32 0.0, %v4149
  %v4151 = vpop.f32.mrf.mxu0
  %v4152 = vpop.f32.mrf.mxu0
  %v4153 = vadd.f32 0.0, %v4152
  %v4154 = vpop.f32.mrf.mxu0
  %4155 = vmatprep.mubr.bf16.mxu0 0
  %4156 = vmatmul.mubr.bf16.gmra.mxu0 %v4049
  %v4157 = vpop.f32.mrf.mxu0
  %v4158 = vadd.f32 0.0, %v4157
  %v4159 = vpop.f32.mrf.mxu0
  %v4160 = vpop.f32.mrf.mxu0
  %v4161 = vadd.f32 0.0, %v4160
  %v4162 = vpop.f32.mrf.mxu0
  %4163 = vdwg.mxu0
  %v4164 = vadd.f32 %v4044, %v4150
  %v4165 = vadd.f32 %v4045, %v4153
  %v4166 = vadd.f32 %v4046, %v4158
  %v4167 = vadd.f32 %v4047, %v4161
  %v4168 = vrot.slane %v2962, 3
  %v4169 = vrot.slane %v2964, 4
  %v4170 = vor.u32 %v4168, %v4169
  %v4171 = vrot.slane %v3401, 3
  %v4172 = vrot.slane %v2969, 4
  %v4173 = vor.u32 %v4171, %v4172
  %v4174 = vsel %vm1018, %v4170, %v4173
  %v4176 = vrot.slane %v2978, 3
  %v4177 = vrot.slane %v2980, 4
  %v4178 = vor.u32 %v4176, %v4177
  %v4179 = vrot.slane %v3411, 3
  %v4180 = vrot.slane %v2985, 4
  %v4181 = vor.u32 %v4179, %v4180
  %v4182 = vsel %vm1018, %v4178, %v4181
  %v4184 = vsel %vm1077, %v4174, 0
  %v4185 = vsel %vm1078, %v4182, 0
  %s4186 = scalar_lea.vmem %s6, 768
  %v4187 = vld [vmem:[%s4186] sm:$0xf]
  %v4188 = vld [vmem:[%s4186 + $0x4] sm:$0xf]
  %v4189 = vld [vmem:[%s4186 + $0x8] sm:$0xf]
  %v4190 = vld [vmem:[%s4186 + $0xc] sm:$0xf]
  %v4191 = vld [vmem:[%s4186 + $0x10] sm:$0xf]
  %v4192 = vld [vmem:[%s4186 + $0x14] sm:$0xf]
  %v4193 = vld [vmem:[%s4186 + $0x18] sm:$0xf]
  %v4194 = vld [vmem:[%s4186 + $0x1c] sm:$0xf]
  %v4195 = vld [vmem:[%s4186 + $0x20] sm:$0xf]
  %v4196 = vld [vmem:[%s4186 + $0x24] sm:$0xf]
  %v4197 = vld [vmem:[%s4186 + $0x28] sm:$0xf]
  %v4198 = vld [vmem:[%s4186 + $0x2c] sm:$0xf]
  %v4199 = vld [vmem:[%s4186 + $0x30] sm:$0xf]
  %v4200 = vld [vmem:[%s4186 + $0x34] sm:$0xf]
  %v4201 = vld [vmem:[%s4186 + $0x38] sm:$0xf]
  %v4202 = vld [vmem:[%s4186 + $0x3c] sm:$0xf]
  %v4219 = vunpack.c.l.b16 %v4187
  %v4220 = vunpack.c.l.b16 %v4188
  %v4221 = vunpack.c.l.b16 %v4189
  %v4222 = vunpack.c.l.b16 %v4190
  %v4223 = vunpack.c.l.b16 %v4191
  %v4224 = vunpack.c.l.b16 %v4192
  %v4225 = vunpack.c.l.b16 %v4193
  %v4226 = vunpack.c.l.b16 %v4194
  %v4227 = vunpack.c.l.b16 %v4195
  %v4228 = vunpack.c.l.b16 %v4196
  %v4229 = vunpack.c.l.b16 %v4197
  %v4230 = vunpack.c.l.b16 %v4198
  %v4231 = vunpack.c.l.b16 %v4199
  %v4232 = vunpack.c.l.b16 %v4200
  %v4233 = vunpack.c.l.b16 %v4201
  %v4234 = vunpack.c.l.b16 %v4202
  %v4235 = vpack.c.b16 %v4220, %v4219
  %v4236 = vpack.c.b16 %v4222, %v4221
  %v4237 = vpack.c.b16 %v4224, %v4223
  %v4238 = vpack.c.b16 %v4226, %v4225
  %v4239 = vpack.c.b16 %v4228, %v4227
  %v4240 = vpack.c.b16 %v4230, %v4229
  %v4241 = vpack.c.b16 %v4232, %v4231
  %v4242 = vpack.c.b16 %v4234, %v4233
  %4251 = vmatprep.subr.bf16.mxu0 0
  %4252 = vmatpush1.bf16.msra.mxu0 %v4242
  %4253 = vmatprep.subr.bf16.mxu0 0
  %4254 = vmatpush1.bf16.msra.mxu0 %v4241
  %4255 = vmatprep.subr.bf16.mxu0 0
  %4256 = vmatpush1.bf16.msra.mxu0 %v4240
  %4257 = vmatprep.subr.bf16.mxu0 0
  %4258 = vmatpush1.bf16.msra.mxu0 %v4239
  %4259 = vmatprep.subr.bf16.mxu0 0
  %4260 = vmatpush1.bf16.msra.mxu0 %v4238
  %4261 = vmatprep.subr.bf16.mxu0 0
  %4262 = vmatpush1.bf16.msra.mxu0 %v4237
  %4263 = vmatprep.subr.bf16.mxu0 0
  %4264 = vmatpush1.bf16.msra.mxu0 %v4236
  %4265 = vmatprep.subr.bf16.mxu0 0
  %4266 = vmatpush1.bf16.msra.mxu0 %v4235
  %4267 = vmatprep.subr.bf16.mxu0 0
  %4268 = vmatpush2.bf16.msra.mxu0 0
  %4269 = vmatprep.subr.bf16.mxu0 0
  %4270 = vmatpush2.bf16.msra.mxu0 0
  %4271 = vmatprep.subr.bf16.mxu0 0
  %4272 = vmatpush2.bf16.msra.mxu0 0
  %4273 = vmatprep.subr.bf16.mxu0 0
  %4274 = vmatpush2.bf16.msra.mxu0 0
  %4275 = vmatprep.subr.bf16.mxu0 0
  %4276 = vmatpush2.bf16.msra.mxu0 0
  %4277 = vmatprep.subr.bf16.mxu0 0
  %4278 = vmatpush2.bf16.msra.mxu0 0
  %4279 = vmatprep.subr.bf16.mxu0 0
  %4280 = vmatpush2.bf16.msra.mxu0 0
  %4281 = vmatprep.subr.bf16.mxu0 0
  %4282 = vmatpush2.bf16.msra.mxu0 0
  %4283 = vmatprep.mubr.bf16.mxu0 0
  %4284 = vmatmul.mubr.bf16.gmra.mxu0 %v4184
  %v4285 = vpop.f32.mrf.mxu0
  %v4286 = vadd.f32 0.0, %v4285
  %v4287 = vpop.f32.mrf.mxu0
  %v4288 = vpop.f32.mrf.mxu0
  %v4289 = vadd.f32 0.0, %v4288
  %v4290 = vpop.f32.mrf.mxu0
  %4291 = vmatprep.mubr.bf16.mxu0 0
  %4292 = vmatmul.mubr.bf16.gmra.mxu0 %v4185
  %v4293 = vpop.f32.mrf.mxu0
  %v4294 = vadd.f32 0.0, %v4293
  %v4295 = vpop.f32.mrf.mxu0
  %v4296 = vpop.f32.mrf.mxu0
  %v4297 = vadd.f32 0.0, %v4296
  %v4298 = vpop.f32.mrf.mxu0
  %4299 = vdwg.mxu0
  %v4300 = vadd.f32 %v4164, %v4286
  %v4301 = vadd.f32 %v4165, %v4289
  %v4302 = vadd.f32 %v4166, %v4294
  %v4303 = vadd.f32 %v4167, %v4297
  %v4304 = vpack.c.b16 %v2959, %v1415
  %v4306 = vpack.c.b16 %v2975, %v1432
  %s4308 = scalar_lea.vmem %s6, 832
  %v4309 = vld [vmem:[%s4308] sm:$0xf]
  %v4310 = vld [vmem:[%s4308 + $0x4] sm:$0xf]
  %v4311 = vld [vmem:[%s4308 + $0x8] sm:$0xf]
  %v4312 = vld [vmem:[%s4308 + $0xc] sm:$0xf]
  %v4313 = vld [vmem:[%s4308 + $0x10] sm:$0xf]
  %v4314 = vld [vmem:[%s4308 + $0x14] sm:$0xf]
  %v4315 = vld [vmem:[%s4308 + $0x18] sm:$0xf]
  %v4316 = vld [vmem:[%s4308 + $0x1c] sm:$0xf]
  %v4317 = vld [vmem:[%s4308 + $0x20] sm:$0xf]
  %v4318 = vld [vmem:[%s4308 + $0x24] sm:$0xf]
  %v4319 = vld [vmem:[%s4308 + $0x28] sm:$0xf]
  %v4320 = vld [vmem:[%s4308 + $0x2c] sm:$0xf]
  %v4321 = vld [vmem:[%s4308 + $0x30] sm:$0xf]
  %v4322 = vld [vmem:[%s4308 + $0x34] sm:$0xf]
  %v4323 = vld [vmem:[%s4308 + $0x38] sm:$0xf]
  %v4324 = vld [vmem:[%s4308 + $0x3c] sm:$0xf]
  %v4341 = vunpack.c.l.b16 %v4309
  %v4342 = vunpack.c.l.b16 %v4310
  %v4343 = vunpack.c.l.b16 %v4311
  %v4344 = vunpack.c.l.b16 %v4312
  %v4345 = vunpack.c.l.b16 %v4313
  %v4346 = vunpack.c.l.b16 %v4314
  %v4347 = vunpack.c.l.b16 %v4315
  %v4348 = vunpack.c.l.b16 %v4316
  %v4349 = vunpack.c.l.b16 %v4317
  %v4350 = vunpack.c.l.b16 %v4318
  %v4351 = vunpack.c.l.b16 %v4319
  %v4352 = vunpack.c.l.b16 %v4320
  %v4353 = vunpack.c.l.b16 %v4321
  %v4354 = vunpack.c.l.b16 %v4322
  %v4355 = vunpack.c.l.b16 %v4323
  %v4356 = vunpack.c.l.b16 %v4324
  %v4357 = vpack.c.b16 %v4342, %v4341
  %v4358 = vpack.c.b16 %v4344, %v4343
  %v4359 = vpack.c.b16 %v4346, %v4345
  %v4360 = vpack.c.b16 %v4348, %v4347
  %v4361 = vpack.c.b16 %v4350, %v4349
  %v4362 = vpack.c.b16 %v4352, %v4351
  %v4363 = vpack.c.b16 %v4354, %v4353
  %v4364 = vpack.c.b16 %v4356, %v4355
  %4373 = vmatprep.subr.bf16.mxu0 0
  %4374 = vmatpush1.bf16.msra.mxu0 %v4364
  %4375 = vmatprep.subr.bf16.mxu0 0
  %4376 = vmatpush1.bf16.msra.mxu0 %v4363
  %4377 = vmatprep.subr.bf16.mxu0 0
  %4378 = vmatpush1.bf16.msra.mxu0 %v4362
  %4379 = vmatprep.subr.bf16.mxu0 0
  %4380 = vmatpush1.bf16.msra.mxu0 %v4361
  %4381 = vmatprep.subr.bf16.mxu0 0
  %4382 = vmatpush1.bf16.msra.mxu0 %v4360
  %4383 = vmatprep.subr.bf16.mxu0 0
  %4384 = vmatpush1.bf16.msra.mxu0 %v4359
  %4385 = vmatprep.subr.bf16.mxu0 0
  %4386 = vmatpush1.bf16.msra.mxu0 %v4358
  %4387 = vmatprep.subr.bf16.mxu0 0
  %4388 = vmatpush1.bf16.msra.mxu0 %v4357
  %4389 = vmatprep.subr.bf16.mxu0 0
  %4390 = vmatpush2.bf16.msra.mxu0 0
  %4391 = vmatprep.subr.bf16.mxu0 0
  %4392 = vmatpush2.bf16.msra.mxu0 0
  %4393 = vmatprep.subr.bf16.mxu0 0
  %4394 = vmatpush2.bf16.msra.mxu0 0
  %4395 = vmatprep.subr.bf16.mxu0 0
  %4396 = vmatpush2.bf16.msra.mxu0 0
  %4397 = vmatprep.subr.bf16.mxu0 0
  %4398 = vmatpush2.bf16.msra.mxu0 0
  %4399 = vmatprep.subr.bf16.mxu0 0
  %4400 = vmatpush2.bf16.msra.mxu0 0
  %4401 = vmatprep.subr.bf16.mxu0 0
  %4402 = vmatpush2.bf16.msra.mxu0 0
  %4403 = vmatprep.subr.bf16.mxu0 0
  %4404 = vmatpush2.bf16.msra.mxu0 0
  %4405 = vmatprep.mubr.bf16.mxu0 0
  %4406 = vmatmul.mubr.bf16.gmra.mxu0 %v4304
  %v4407 = vpop.f32.mrf.mxu0
  %v4408 = vadd.f32 0.0, %v4407
  %v4409 = vpop.f32.mrf.mxu0
  %v4410 = vpop.f32.mrf.mxu0
  %v4411 = vadd.f32 0.0, %v4410
  %v4412 = vpop.f32.mrf.mxu0
  %4413 = vmatprep.mubr.bf16.mxu0 0
  %4414 = vmatmul.mubr.bf16.gmra.mxu0 %v4306
  %v4415 = vpop.f32.mrf.mxu0
  %v4416 = vadd.f32 0.0, %v4415
  %v4417 = vpop.f32.mrf.mxu0
  %v4418 = vpop.f32.mrf.mxu0
  %v4419 = vadd.f32 0.0, %v4418
  %v4420 = vpop.f32.mrf.mxu0
  %4421 = vdwg.mxu0
  %v4422 = vadd.f32 %v4300, %v4408
  %v4423 = vadd.f32 %v4301, %v4411
  %v4424 = vadd.f32 %v4302, %v4416
  %v4425 = vadd.f32 %v4303, %v4419
  %v4427 = vunpack.c.l.b16 %v944
  %v4428 = vpack.c.b16 %v4427, %v4427
  %v4430 = vshrl.u32 %v4304, 16
  %v4432 = vshll.u32 %v4304, 16
  %v4434 = vrot.slane %v4432, 1
  %v4435 = vor.u32 %v4430, %v4434
  %v4437 = vshll.u32 %v4428, 16
  %v4439 = vrot.slane %v4437, 1
  %v4440 = vsel %vm1417, %v4435, %v4439
  %v4443 = vunpack.c.l.b16 %v950
  %v4444 = vpack.c.b16 %v4443, %v4443
  %v4446 = vshrl.u32 %v4306, 16
  %v4448 = vshll.u32 %v4306, 16
  %v4450 = vrot.slane %v4448, 1
  %v4451 = vor.u32 %v4446, %v4450
  %v4453 = vshll.u32 %v4444, 16
  %v4455 = vrot.slane %v4453, 1
  %v4456 = vsel %vm1417, %v4451, %v4455
  %v4458 = vsel %vm1469, %v4440, 0
  %v4459 = vsel %vm1470, %v4456, 0
  %s4460 = scalar_lea.vmem %s6, 896
  %v4461 = vld [vmem:[%s4460] sm:$0xf]
  %v4462 = vld [vmem:[%s4460 + $0x4] sm:$0xf]
  %v4463 = vld [vmem:[%s4460 + $0x8] sm:$0xf]
  %v4464 = vld [vmem:[%s4460 + $0xc] sm:$0xf]
  %v4465 = vld [vmem:[%s4460 + $0x10] sm:$0xf]
  %v4466 = vld [vmem:[%s4460 + $0x14] sm:$0xf]
  %v4467 = vld [vmem:[%s4460 + $0x18] sm:$0xf]
  %v4468 = vld [vmem:[%s4460 + $0x1c] sm:$0xf]
  %v4469 = vld [vmem:[%s4460 + $0x20] sm:$0xf]
  %v4470 = vld [vmem:[%s4460 + $0x24] sm:$0xf]
  %v4471 = vld [vmem:[%s4460 + $0x28] sm:$0xf]
  %v4472 = vld [vmem:[%s4460 + $0x2c] sm:$0xf]
  %v4473 = vld [vmem:[%s4460 + $0x30] sm:$0xf]
  %v4474 = vld [vmem:[%s4460 + $0x34] sm:$0xf]
  %v4475 = vld [vmem:[%s4460 + $0x38] sm:$0xf]
  %v4476 = vld [vmem:[%s4460 + $0x3c] sm:$0xf]
  %v4493 = vunpack.c.l.b16 %v4461
  %v4494 = vunpack.c.l.b16 %v4462
  %v4495 = vunpack.c.l.b16 %v4463
  %v4496 = vunpack.c.l.b16 %v4464
  %v4497 = vunpack.c.l.b16 %v4465
  %v4498 = vunpack.c.l.b16 %v4466
  %v4499 = vunpack.c.l.b16 %v4467
  %v4500 = vunpack.c.l.b16 %v4468
  %v4501 = vunpack.c.l.b16 %v4469
  %v4502 = vunpack.c.l.b16 %v4470
  %v4503 = vunpack.c.l.b16 %v4471
  %v4504 = vunpack.c.l.b16 %v4472
  %v4505 = vunpack.c.l.b16 %v4473
  %v4506 = vunpack.c.l.b16 %v4474
  %v4507 = vunpack.c.l.b16 %v4475
  %v4508 = vunpack.c.l.b16 %v4476
  %v4509 = vpack.c.b16 %v4494, %v4493
  %v4510 = vpack.c.b16 %v4496, %v4495
  %v4511 = vpack.c.b16 %v4498, %v4497
  %v4512 = vpack.c.b16 %v4500, %v4499
  %v4513 = vpack.c.b16 %v4502, %v4501
  %v4514 = vpack.c.b16 %v4504, %v4503
  %v4515 = vpack.c.b16 %v4506, %v4505
  %v4516 = vpack.c.b16 %v4508, %v4507
  %4525 = vmatprep.subr.bf16.mxu0 0
  %4526 = vmatpush1.bf16.msra.mxu0 %v4516
  %4527 = vmatprep.subr.bf16.mxu0 0
  %4528 = vmatpush1.bf16.msra.mxu0 %v4515
  %4529 = vmatprep.subr.bf16.mxu0 0
  %4530 = vmatpush1.bf16.msra.mxu0 %v4514
  %4531 = vmatprep.subr.bf16.mxu0 0
  %4532 = vmatpush1.bf16.msra.mxu0 %v4513
  %4533 = vmatprep.subr.bf16.mxu0 0
  %4534 = vmatpush1.bf16.msra.mxu0 %v4512
  %4535 = vmatprep.subr.bf16.mxu0 0
  %4536 = vmatpush1.bf16.msra.mxu0 %v4511
  %4537 = vmatprep.subr.bf16.mxu0 0
  %4538 = vmatpush1.bf16.msra.mxu0 %v4510
  %4539 = vmatprep.subr.bf16.mxu0 0
  %4540 = vmatpush1.bf16.msra.mxu0 %v4509
  %4541 = vmatprep.subr.bf16.mxu0 0
  %4542 = vmatpush2.bf16.msra.mxu0 0
  %4543 = vmatprep.subr.bf16.mxu0 0
  %4544 = vmatpush2.bf16.msra.mxu0 0
  %4545 = vmatprep.subr.bf16.mxu0 0
  %4546 = vmatpush2.bf16.msra.mxu0 0
  %4547 = vmatprep.subr.bf16.mxu0 0
  %4548 = vmatpush2.bf16.msra.mxu0 0
  %4549 = vmatprep.subr.bf16.mxu0 0
  %4550 = vmatpush2.bf16.msra.mxu0 0
  %4551 = vmatprep.subr.bf16.mxu0 0
  %4552 = vmatpush2.bf16.msra.mxu0 0
  %4553 = vmatprep.subr.bf16.mxu0 0
  %4554 = vmatpush2.bf16.msra.mxu0 0
  %4555 = vmatprep.subr.bf16.mxu0 0
  %4556 = vmatpush2.bf16.msra.mxu0 0
  %4557 = vmatprep.mubr.bf16.mxu0 0
  %4558 = vmatmul.mubr.bf16.gmra.mxu0 %v4458
  %v4559 = vpop.f32.mrf.mxu0
  %v4560 = vadd.f32 0.0, %v4559
  %v4561 = vpop.f32.mrf.mxu0
  %v4562 = vpop.f32.mrf.mxu0
  %v4563 = vadd.f32 0.0, %v4562
  %v4564 = vpop.f32.mrf.mxu0
  %4565 = vmatprep.mubr.bf16.mxu0 0
  %4566 = vmatmul.mubr.bf16.gmra.mxu0 %v4459
  %v4567 = vpop.f32.mrf.mxu0
  %v4568 = vadd.f32 0.0, %v4567
  %v4569 = vpop.f32.mrf.mxu0
  %v4570 = vpop.f32.mrf.mxu0
  %v4571 = vadd.f32 0.0, %v4570
  %v4572 = vpop.f32.mrf.mxu0
  %4573 = vdwg.mxu0
  %v4574 = vadd.f32 %v4422, %v4560
  %v4575 = vadd.f32 %v4423, %v4563
  %v4576 = vadd.f32 %v4424, %v4568
  %v4577 = vadd.f32 %v4425, %v4571
  %v4578 = vrot.slane %v4304, 1
  %v4579 = vrot.slane %v4428, 1
  %v4580 = vsel %vm1591, %v4578, %v4579
  %v4582 = vrot.slane %v4306, 1
  %v4583 = vrot.slane %v4444, 1
  %v4584 = vsel %vm1591, %v4582, %v4583
  %v4586 = vsel %vm1622, %v4580, 0
  %v4587 = vsel %vm1623, %v4584, 0
  %s4588 = scalar_lea.vmem %s6, 960
  %v4589 = vld [vmem:[%s4588] sm:$0xf]
  %v4590 = vld [vmem:[%s4588 + $0x4] sm:$0xf]
  %v4591 = vld [vmem:[%s4588 + $0x8] sm:$0xf]
  %v4592 = vld [vmem:[%s4588 + $0xc] sm:$0xf]
  %v4593 = vld [vmem:[%s4588 + $0x10] sm:$0xf]
  %v4594 = vld [vmem:[%s4588 + $0x14] sm:$0xf]
  %v4595 = vld [vmem:[%s4588 + $0x18] sm:$0xf]
  %v4596 = vld [vmem:[%s4588 + $0x1c] sm:$0xf]
  %v4597 = vld [vmem:[%s4588 + $0x20] sm:$0xf]
  %v4598 = vld [vmem:[%s4588 + $0x24] sm:$0xf]
  %v4599 = vld [vmem:[%s4588 + $0x28] sm:$0xf]
  %v4600 = vld [vmem:[%s4588 + $0x2c] sm:$0xf]
  %v4601 = vld [vmem:[%s4588 + $0x30] sm:$0xf]
  %v4602 = vld [vmem:[%s4588 + $0x34] sm:$0xf]
  %v4603 = vld [vmem:[%s4588 + $0x38] sm:$0xf]
  %v4604 = vld [vmem:[%s4588 + $0x3c] sm:$0xf]
  %v4621 = vunpack.c.l.b16 %v4589
  %v4622 = vunpack.c.l.b16 %v4590
  %v4623 = vunpack.c.l.b16 %v4591
  %v4624 = vunpack.c.l.b16 %v4592
  %v4625 = vunpack.c.l.b16 %v4593
  %v4626 = vunpack.c.l.b16 %v4594
  %v4627 = vunpack.c.l.b16 %v4595
  %v4628 = vunpack.c.l.b16 %v4596
  %v4629 = vunpack.c.l.b16 %v4597
  %v4630 = vunpack.c.l.b16 %v4598
  %v4631 = vunpack.c.l.b16 %v4599
  %v4632 = vunpack.c.l.b16 %v4600
  %v4633 = vunpack.c.l.b16 %v4601
  %v4634 = vunpack.c.l.b16 %v4602
  %v4635 = vunpack.c.l.b16 %v4603
  %v4636 = vunpack.c.l.b16 %v4604
  %v4637 = vpack.c.b16 %v4622, %v4621
  %v4638 = vpack.c.b16 %v4624, %v4623
  %v4639 = vpack.c.b16 %v4626, %v4625
  %v4640 = vpack.c.b16 %v4628, %v4627
  %v4641 = vpack.c.b16 %v4630, %v4629
  %v4642 = vpack.c.b16 %v4632, %v4631
  %v4643 = vpack.c.b16 %v4634, %v4633
  %v4644 = vpack.c.b16 %v4636, %v4635
  %4653 = vmatprep.subr.bf16.mxu0 0
  %4654 = vmatpush1.bf16.msra.mxu0 %v4644
  %4655 = vmatprep.subr.bf16.mxu0 0
  %4656 = vmatpush1.bf16.msra.mxu0 %v4643
  %4657 = vmatprep.subr.bf16.mxu0 0
  %4658 = vmatpush1.bf16.msra.mxu0 %v4642
  %4659 = vmatprep.subr.bf16.mxu0 0
  %4660 = vmatpush1.bf16.msra.mxu0 %v4641
  %4661 = vmatprep.subr.bf16.mxu0 0
  %4662 = vmatpush1.bf16.msra.mxu0 %v4640
  %4663 = vmatprep.subr.bf16.mxu0 0
  %4664 = vmatpush1.bf16.msra.mxu0 %v4639
  %4665 = vmatprep.subr.bf16.mxu0 0
  %4666 = vmatpush1.bf16.msra.mxu0 %v4638
  %4667 = vmatprep.subr.bf16.mxu0 0
  %4668 = vmatpush1.bf16.msra.mxu0 %v4637
  %4669 = vmatprep.subr.bf16.mxu0 0
  %4670 = vmatpush2.bf16.msra.mxu0 0
  %4671 = vmatprep.subr.bf16.mxu0 0
  %4672 = vmatpush2.bf16.msra.mxu0 0
  %4673 = vmatprep.subr.bf16.mxu0 0
  %4674 = vmatpush2.bf16.msra.mxu0 0
  %4675 = vmatprep.subr.bf16.mxu0 0
  %4676 = vmatpush2.bf16.msra.mxu0 0
  %4677 = vmatprep.subr.bf16.mxu0 0
  %4678 = vmatpush2.bf16.msra.mxu0 0
  %4679 = vmatprep.subr.bf16.mxu0 0
  %4680 = vmatpush2.bf16.msra.mxu0 0
  %4681 = vmatprep.subr.bf16.mxu0 0
  %4682 = vmatpush2.bf16.msra.mxu0 0
  %4683 = vmatprep.subr.bf16.mxu0 0
  %4684 = vmatpush2.bf16.msra.mxu0 0
  %4685 = vmatprep.mubr.bf16.mxu0 0
  %4686 = vmatmul.mubr.bf16.gmra.mxu0 %v4586
  %v4687 = vpop.f32.mrf.mxu0
  %v4688 = vadd.f32 0.0, %v4687
  %v4689 = vpop.f32.mrf.mxu0
  %v4690 = vpop.f32.mrf.mxu0
  %v4691 = vadd.f32 0.0, %v4690
  %v4692 = vpop.f32.mrf.mxu0
  %4693 = vmatprep.mubr.bf16.mxu0 0
  %4694 = vmatmul.mubr.bf16.gmra.mxu0 %v4587
  %v4695 = vpop.f32.mrf.mxu0
  %v4696 = vadd.f32 0.0, %v4695
  %v4697 = vpop.f32.mrf.mxu0
  %v4698 = vpop.f32.mrf.mxu0
  %v4699 = vadd.f32 0.0, %v4698
  %v4700 = vpop.f32.mrf.mxu0
  %4701 = vdwg.mxu0
  %v4702 = vadd.f32 %v4574, %v4688
  %v4703 = vadd.f32 %v4575, %v4691
  %v4704 = vadd.f32 %v4576, %v4696
  %v4705 = vadd.f32 %v4577, %v4699
  %v4706 = vadd.f32 %v3913, %v4702
  %v4707 = vadd.f32 %v3915, %v4703
  %v4708 = vadd.f32 %v3917, %v4704
  %v4709 = vadd.f32 %v3919, %v4705
  %v4710 = vpack.c.bf16 %v3914, %v3912
  %v4712 = vunpack.c.l.b16 %v4710
  %v4713 = vunpack.c.h.b16 %v4710
  %v4714 = vpack.c.b16 %v4712, %v4712
  %v4715 = vpack.c.b16 %v4713, %v4713
  %4718 = vst [vmem:[%s8] sm:$0xf] %v4714
  %4719 = vst [vmem:[%s8 + $0x8] sm:$0xf] %v4715
  %v4720 = vpack.c.bf16 %v4707, %v4706
  %v4722 = vunpack.c.l.b16 %v4720
  %v4723 = vunpack.c.h.b16 %v4720
  %v4724 = vpack.c.b16 %v4722, %v4722
  %v4725 = vpack.c.b16 %v4723, %v4723
  %4728 = vst [vmem:[%s8 + $0x4] sm:$0xf] %v4724
  %4729 = vst [vmem:[%s8 + $0xc] sm:$0xf] %v4725
  %v4730 = vpack.c.bf16 %v3918, %v3916
  %v4732 = vunpack.c.l.b16 %v4730
  %v4733 = vunpack.c.h.b16 %v4730
  %v4734 = vpack.c.b16 %v4732, %v4732
  %v4735 = vpack.c.b16 %v4733, %v4733
  %s4738 = scalar_lea.vmem %s8, 16
  %4739 = vst [vmem:[%s4738] sm:$0xf] %v4734
  %4740 = vst [vmem:[%s4738 + $0x8] sm:$0xf] %v4735
  %v4741 = vpack.c.bf16 %v4709, %v4708
  %v4743 = vunpack.c.l.b16 %v4741
  %v4744 = vunpack.c.h.b16 %v4741
  %v4745 = vpack.c.b16 %v4743, %v4743
  %v4746 = vpack.c.b16 %v4744, %v4744
  %4749 = vst [vmem:[%s4738 + $0x4] sm:$0xf] %v4745
  %4750 = vst [vmem:[%s4738 + $0xc] sm:$0xf] %v4746
  %v4751 = vadd.f32 %v3912, %v3914
  %v4752 = vadd.f32 %v4751, %v3916
  %v4753 = vadd.f32 %v4752, %v3918
  %v4754 = vrot.slane %v4753, 4
  %v4755 = vadd.f32 %v4753, %v4754
  %v4756 = vrot.slane %v4755, 2
  %v4757 = vadd.f32 %v4755, %v4756
  %v4758 = vrot.slane %v4757, 1
  %v4759 = vadd.f32 %v4757, %v4758
  %v4760 = vadd.f32 %v4706, %v4707
  %v4761 = vadd.f32 %v4760, %v4708
  %v4762 = vadd.f32 %v4761, %v4709
  %v4763 = vrot.slane %v4762, 4
  %v4764 = vadd.f32 %v4762, %v4763
  %v4765 = vrot.slane %v4764, 2
  %v4766 = vadd.f32 %v4764, %v4765
  %v4767 = vrot.slane %v4766, 1
  %v4768 = vadd.f32 %v4766, %v4767
  %v4769 = vmul.f32 %v3912, %v3912
  %v4770 = vmul.f32 %v3914, %v3914
  %v4771 = vmul.f32 %v3916, %v3916
  %v4772 = vmul.f32 %v3918, %v3918
  %v4773 = vadd.f32 %v4769, %v4770
  %v4774 = vadd.f32 %v4773, %v4771
  %v4775 = vadd.f32 %v4774, %v4772
  %v4776 = vrot.slane %v4775, 4
  %v4777 = vadd.f32 %v4775, %v4776
  %v4778 = vrot.slane %v4777, 2
  %v4779 = vadd.f32 %v4777, %v4778
  %v4780 = vrot.slane %v4779, 1
  %v4781 = vadd.f32 %v4779, %v4780
  %v4782 = vmul.f32 %v4706, %v4706
  %v4783 = vmul.f32 %v4707, %v4707
  %v4784 = vmul.f32 %v4708, %v4708
  %v4785 = vmul.f32 %v4709, %v4709
  %v4786 = vadd.f32 %v4782, %v4783
  %v4787 = vadd.f32 %v4786, %v4784
  %v4788 = vadd.f32 %v4787, %v4785
  %v4789 = vrot.slane %v4788, 4
  %v4790 = vadd.f32 %v4788, %v4789
  %v4791 = vrot.slane %v4790, 2
  %v4792 = vadd.f32 %v4790, %v4791
  %v4793 = vrot.slane %v4792, 1
  %v4794 = vadd.f32 %v4792, %v4793
  %v4797 = vrot.slane %v4781, 7
  %v4798 = vrot.slane %v4794, 7
  %vm4801 = vcmask 1040384
  %v4802 = vsel %vm4801, %v4759, %v4797
  %v4803 = vsel %vm4801, %v4768, %v4798
  %v4806 = vcombine.low %v4802, %v4803
  %v4808 = vunpack.c.l.s4 1983009808
  %v4809 = vunpack.c.0.s8 %v4808
  %v4810 = vlaneseq
  %v4811 = vshrl.u32 %v4810, 7
  %v4812 = vsub.s32 %v4809, %v4811
  %v4813 = vrot.slane %v4806, %v4812
  %4815 = vst [vmem:[%s9] sm:$0xf] %v4813
  // Predicated region
  $region34: #{gam_attention_pallas.3} parent=0 // pred_check
    _
  $region35: #{gam_attention_pallas.3} parent=0 // pred_check_branch
    %4817 = sbr.rel (0) target = $region37
  $region36: #{gam_attention_pallas.3} parent=0 // pred_region
    _
  $region37: #{gam_attention_pallas.3} parent=0 // pred_fallthru
    _
  // Predicated region
  $region38: #{gam_attention_pallas.3} parent=0 // pred_check
    _
  $region39: #{gam_attention_pallas.3} parent=0 // pred_check_branch
    %4819 = sbr.rel (0) target = $region41
  $region40: #{gam_attention_pallas.3} parent=0 // pred_region
    _
  $region41: #{gam_attention_pallas.3} parent=0 // pred_fallthru
    _
  // Predicated region
  $region42: #{gam_attention_pallas.3} parent=0 // pred_check
    _
  $region43: #{gam_attention_pallas.3} parent=0 // pred_check_branch
    %4821 = sbr.rel (0) target = $region45
  $region44: #{gam_attention_pallas.3} parent=0 // pred_region
    _
  $region45: #{gam_attention_pallas.3} parent=0 // pred_fallthru
    _
  // Predicated region
  $region46: #{gam_attention_pallas.3} parent=0 // pred_check
    _
  $region47: #{gam_attention_pallas.3} parent=0 // pred_check_branch
    %4823 = sbr.rel (0) target = $region49
  $region48: #{gam_attention_pallas.3} parent=0 // pred_region
    _
  $region49: #{gam_attention_pallas.3} parent=0 // pred_fallthru
    _
  // Predicated region
  $region50: #{gam_attention_pallas.3} parent=0 // pred_check
    _
  $region51: #{gam_attention_pallas.3} parent=0 // pred_check_branch
    %4825 = sbr.rel (0) target = $region53
  $region52: #{gam_attention_pallas.3} parent=0 // pred_region
    _
  $region53: #{gam_attention_pallas.3} parent=0 // pred_fallthru
    _
  // Predicated region
  $region54: #{gam_attention_pallas.3} parent=0 // pred_check
    _
  $region55: #{gam_attention_pallas.3} parent=0 // pred_check_branch
    %4827 = sbr.rel (0) target = $region57
  $region56: #{gam_attention_pallas.3} parent=0 // pred_region
    _
  $region57: #{gam_attention_pallas.3} parent=0 // pred_fallthru
    _

// kernel: gam_attention_pallas.4
$region0: #{gam_attention_pallas.4}
  #allocation0 [shape = 'u32[]', space=smem, size = 0x4, offset = 0x4, fixed_abs, tag = 'smem constant byte address 0x4 - core index']
  #allocation1 [shape = 'u32[144,128]{1,0:T(1,128)}', space=vmem, size = 0x12000, scoped, tag = 'internal scratch']
  #allocation2 [shape = 'bf16[2,42,256]{2,1,0:T(8,128)(2,1)}', space=vmem, size = 0xc000, scoped, tag = 'scratch operand']
  %s0 = inlined_call_operand.vmem [shape: bf16[2,16,256], index: 0, kind: input, shape index: {}]
  %s1 = inlined_call_operand.vmem [shape: f32[1,256], index: 1, kind: input, shape index: {}]
  %s2 = inlined_call_operand.vmem [shape: f32[1,256], index: 2, kind: input, shape index: {}]
  %s3 = inlined_call_operand.vmem [shape: bf16[9,128,128], index: 3, kind: input, shape index: {}]
  %s4 = inlined_call_operand.vmem [shape: bf16[25,128,128], index: 4, kind: input, shape index: {}]
  %s5 = inlined_call_operand.vmem [shape: bf16[2,16,256], index: 5, kind: output, shape index: {0}]
  %s6 = inlined_call_operand.vmem [shape: f32[1,2,256], index: 6, kind: output, shape index: {1}]
  %7 = xla_tuple %s5, %s6
  %s8 = sld [smem:[#allocation0]]
  $region42: #{gam_attention_pallas.4} parent=0
    _
  %s10 = ssub.s32 1, %s8
  %s11 = scalar_select 0, %s10, %s8
  // Predicated region
  $region2: #{gam_attention_pallas.4} parent=0 // pred_check
    _
  $region3: #{gam_attention_pallas.4} parent=0 // pred_check_branch
    %13 = sbr.rel (0) target = $region5
  $region4: #{gam_attention_pallas.4} parent=0 // pred_region
    _
  $region5: #{gam_attention_pallas.4} parent=0 // pred_fallthru
    _
  // Predicated region
  $region6: #{gam_attention_pallas.4} parent=0 // pred_check
    _
  $region7: #{gam_attention_pallas.4} parent=0 // pred_check_branch
    %15 = sbr.rel (0) target = $region9
  $region8: #{gam_attention_pallas.4} parent=0 // pred_region
    _
  $region9: #{gam_attention_pallas.4} parent=0 // pred_fallthru
    _
  // Predicated region
  $region10: #{gam_attention_pallas.4} parent=0 // pred_check
    _
  $region11: #{gam_attention_pallas.4} parent=0 // pred_check_branch
    %17 = sbr.rel (0) target = $region13
  $region12: #{gam_attention_pallas.4} parent=0 // pred_region
    _
  $region13: #{gam_attention_pallas.4} parent=0 // pred_fallthru
    _
  // Predicated region
  $region14: #{gam_attention_pallas.4} parent=0 // pred_check
    _
  $region15: #{gam_attention_pallas.4} parent=0 // pred_check_branch
    %19 = sbr.rel (0) target = $region17
  $region16: #{gam_attention_pallas.4} parent=0 // pred_region
    _
  $region17: #{gam_attention_pallas.4} parent=0 // pred_fallthru
    _
  // Predicated region
  $region18: #{gam_attention_pallas.4} parent=0 // pred_check
    _
  $region19: #{gam_attention_pallas.4} parent=0 // pred_check_branch
    %21 = sbr.rel (0) target = $region21
  $region20: #{gam_attention_pallas.4} parent=0 // pred_region
    _
  $region21: #{gam_attention_pallas.4} parent=0 // pred_fallthru
    _
  %p25 = scmp.eq.s32.totalorder 0, 0
  // Predicated region
  $region22: #{gam_attention_pallas.4} parent=0 // pred_check
    %p26 = pneg %p25
  $region23: #{gam_attention_pallas.4} parent=0 // pred_check_branch
    %28 = sbr.rel (%p26) target = $region25
  $region24: #{gam_attention_pallas.4} parent=0 // pred_region
    %29 = vst [vmem:[#allocation2] sm:$0xff] 0
    %30 = vst [vmem:[#allocation2 + $0x8] sm:$0xff] 0
    %31 = vst [vmem:[#allocation2 + $0x10] sm:$0xff] 0
    %32 = vst [vmem:[#allocation2 + $0x18] sm:$0xff] 0
    %33 = vst [vmem:[#allocation2 + $0x20] sm:$0xff] 0
    %34 = vst [vmem:[#allocation2 + $0x28] sm:$0x11] 0
    %35 = vst [vmem:[#allocation2 + $0x30] sm:$0xff] 0
    %36 = vst [vmem:[#allocation2 + $0x38] sm:$0xff] 0
    %37 = vst [vmem:[#allocation2 + $0x40] sm:$0xff] 0
    %38 = vst [vmem:[#allocation2 + $0x48] sm:$0xff] 0
    %39 = vst [vmem:[#allocation2 + $0x50] sm:$0xff] 0
    %40 = vst [vmem:[#allocation2 + $0x58] sm:$0x11] 0
  $region25: #{gam_attention_pallas.4} parent=0 // pred_fallthru
    _
  %v41 = vld [vmem:[%s0] sm:$0xff]
  %v42 = vld [vmem:[%s0 + $0x8] sm:$0xff]
  %v43 = vunpack.c.l.bf16 %v41
  %v44 = vunpack.c.h.bf16 %v41
  %v45 = vunpack.c.l.bf16 %v42
  %v46 = vunpack.c.h.bf16 %v42
  %v47 = vld [vmem:[%s1] sm:$0x3]
  %v49 = vlaneseq
  %v50 = vshrl.u32 %v49, 7
  %v51 = vsub.s32 0, %v50
  %v52 = vrot.slane %v47, %v51
  %v53 = vlaneseq
  %v54 = vshrl.u32 %v53, 7
  %v55 = vsub.s32 1, %v54
  %v56 = vrot.slane %v47, %v55
  %v59 = vmul.f32 %v43, %v52
  %v60 = vmul.f32 %v44, %v56
  %v61 = vmul.f32 %v45, %v52
  %v62 = vmul.f32 %v46, %v56
  %v63 = vld [vmem:[%s2] sm:$0x3]
  %v65 = vlaneseq
  %v66 = vshrl.u32 %v65, 7
  %v67 = vsub.s32 0, %v66
  %v68 = vrot.slane %v63, %v67
  %v69 = vlaneseq
  %v70 = vshrl.u32 %v69, 7
  %v71 = vsub.s32 1, %v70
  %v72 = vrot.slane %v63, %v71
  %v75 = vadd.f32 %v59, %v68
  %v76 = vadd.f32 %v60, %v72
  %v77 = vadd.f32 %v61, %v68
  %v78 = vadd.f32 %v62, %v72
  %v79 = vmax.f32 %v75, 0.0
  %v80 = vmax.f32 %v76, 0.0
  %v81 = vmax.f32 %v77, 0.0
  %v82 = vmax.f32 %v78, 0.0
  %v83 = vpack.c.bf16 %v81, %v79
  %v84 = vpack.c.bf16 %v82, %v80
  %v87 = vunpack.c.l.b16 %v83
  %v88 = vunpack.c.l.b16 %v84
  %v89 = vunpack.c.h.b16 %v83
  %v90 = vunpack.c.h.b16 %v84
  %v91 = vpack.c.b16 %v88, %v87
  %v92 = vpack.c.b16 %v90, %v89
  %95 = vst [vmem:[#allocation2 + $0x10] sm:$0xff] %v91
  %96 = vst [vmem:[#allocation2 + $0x18] sm:$0xff] %v92
  %s97 = scalar_lea.vmem %s0, 16
  %v98 = vld [vmem:[%s97] sm:$0xff]
  %v99 = vld [vmem:[%s97 + $0x8] sm:$0xff]
  %v100 = vunpack.c.l.bf16 %v98
  %v101 = vunpack.c.h.bf16 %v98
  %v102 = vunpack.c.l.bf16 %v99
  %v103 = vunpack.c.h.bf16 %v99
  %v104 = vld [vmem:[%s1] sm:$0x3]
  %v106 = vlaneseq
  %v107 = vshrl.u32 %v106, 7
  %v108 = vsub.s32 0, %v107
  %v109 = vrot.slane %v104, %v108
  %v110 = vlaneseq
  %v111 = vshrl.u32 %v110, 7
  %v112 = vsub.s32 1, %v111
  %v113 = vrot.slane %v104, %v112
  %v116 = vmul.f32 %v100, %v109
  %v117 = vmul.f32 %v101, %v113
  %v118 = vmul.f32 %v102, %v109
  %v119 = vmul.f32 %v103, %v113
  %v120 = vld [vmem:[%s2] sm:$0x3]
  %v122 = vlaneseq
  %v123 = vshrl.u32 %v122, 7
  %v124 = vsub.s32 0, %v123
  %v125 = vrot.slane %v120, %v124
  %v126 = vlaneseq
  %v127 = vshrl.u32 %v126, 7
  %v128 = vsub.s32 1, %v127
  %v129 = vrot.slane %v120, %v128
  %v132 = vadd.f32 %v116, %v125
  %v133 = vadd.f32 %v117, %v129
  %v134 = vadd.f32 %v118, %v125
  %v135 = vadd.f32 %v119, %v129
  %v136 = vmax.f32 %v132, 0.0
  %v137 = vmax.f32 %v133, 0.0
  %v138 = vmax.f32 %v134, 0.0
  %v139 = vmax.f32 %v135, 0.0
  %v140 = vpack.c.bf16 %v138, %v136
  %v141 = vpack.c.bf16 %v139, %v137
  %v144 = vunpack.c.l.b16 %v140
  %v145 = vunpack.c.l.b16 %v141
  %v146 = vunpack.c.h.b16 %v140
  %v147 = vunpack.c.h.b16 %v141
  %v148 = vpack.c.b16 %v145, %v144
  %v149 = vpack.c.b16 %v147, %v146
  %s152 = scalar_lea.vmem [#allocation2], 48
  %153 = vst [vmem:[%s152 + $0x10] sm:$0xff] %v148
  %154 = vst [vmem:[%s152 + $0x18] sm:$0xff] %v149
  %v155 = vlaneseq
  %v156 = vshrl.u32 %v155, 7
  %v157 = vadd.s32 %v156, 8
  %v158 = vadd.s32 %v156, 16
  %v159 = vadd.s32 %v156, 24
  %vm160 = vcmp.lt.s32.totalorder %v156, 0
  %v161 = vsub.s32 0, %v156
  %v162 = vsel %vm160, %v161, %v156
  %v163 = vshrl.u32 %v162, 2
  %v164 = vand.u32 %v162, 3
  %v165 = vsub.s32 0, %v164
  %v166 = vsel %vm160, %v165, %v164
  %vm167 = vcmp.lt.s32.totalorder %v157, 0
  %v168 = vsub.s32 0, %v157
  %v169 = vsel %vm167, %v168, %v157
  %v170 = vshrl.u32 %v169, 2
  %v171 = vand.u32 %v169, 3
  %v172 = vsub.s32 0, %v171
  %v173 = vsel %vm167, %v172, %v171
  %vm174 = vcmp.lt.s32.totalorder %v158, 0
  %v175 = vsub.s32 0, %v158
  %v176 = vsel %vm174, %v175, %v158
  %v177 = vshrl.u32 %v176, 2
  %v178 = vand.u32 %v176, 3
  %v179 = vsub.s32 0, %v178
  %v180 = vsel %vm174, %v179, %v178
  %vm181 = vcmp.lt.s32.totalorder %v159, 0
  %v182 = vsub.s32 0, %v159
  %v183 = vsel %vm181, %v182, %v159
  %v184 = vshrl.u32 %v183, 2
  %v185 = vand.u32 %v183, 3
  %v186 = vsub.s32 0, %v185
  %v187 = vsel %vm181, %v186, %v185
  %vm188 = vcmp.ne.s32.totalorder %v166, 0
  %vm189 = vcmp.ne.s32.totalorder %v173, 0
  %vm190 = vcmp.ne.s32.totalorder %v180, 0
  %vm191 = vcmp.ne.s32.totalorder %v187, 0
  %vm192 = vcmp.lt.s32.totalorder %v166, 0
  %vm193 = vcmp.lt.s32.totalorder %v173, 0
  %vm194 = vcmp.lt.s32.totalorder %v180, 0
  %vm195 = vcmp.lt.s32.totalorder %v187, 0
  %vm196 = vmand %vm192, %vm188
  %vm197 = vmand %vm193, %vm189
  %vm198 = vmand %vm194, %vm190
  %vm199 = vmand %vm195, %vm191
  %v200 = vadd.s32 %v166, 4
  %v201 = vadd.s32 %v173, 4
  %v202 = vadd.s32 %v180, 4
  %v203 = vadd.s32 %v187, 4
  %v204 = vsel %vm196, %v200, %v166
  %v205 = vsel %vm197, %v201, %v173
  %v206 = vsel %vm198, %v202, %v180
  %v207 = vsel %vm199, %v203, %v187
  %v208 = vadd.s32 %v204, 4294967294
  %v209 = vadd.s32 %v205, 4294967294
  %v210 = vadd.s32 %v206, 4294967294
  %v211 = vadd.s32 %v207, 4294967294
  %vm212 = vcmp.ge.s32.totalorder %v208, 0
  %vm213 = vcmp.ge.s32.totalorder %v209, 0
  %vm214 = vcmp.ge.s32.totalorder %v210, 0
  %vm215 = vcmp.ge.s32.totalorder %v211, 0
  %vm216 = vcmp.lt.s32.totalorder %v208, 4
  %vm217 = vcmp.lt.s32.totalorder %v209, 4
  %vm218 = vcmp.lt.s32.totalorder %v210, 4
  %vm219 = vcmp.lt.s32.totalorder %v211, 4
  %vm220 = vmand %vm212, %vm216
  %vm221 = vmand %vm213, %vm217
  %vm222 = vmand %vm214, %vm218
  %vm223 = vmand %vm215, %vm219
  %v224 = vadd.s32 %v204, 4294967295
  %v225 = vadd.s32 %v205, 4294967295
  %v226 = vadd.s32 %v206, 4294967295
  %v227 = vadd.s32 %v207, 4294967295
  %vm228 = vcmp.ge.s32.totalorder %v224, 0
  %vm229 = vcmp.ge.s32.totalorder %v225, 0
  %vm230 = vcmp.ge.s32.totalorder %v226, 0
  %vm231 = vcmp.ge.s32.totalorder %v227, 0
  %vm232 = vcmp.lt.s32.totalorder %v224, 4
  %vm233 = vcmp.lt.s32.totalorder %v225, 4
  %vm234 = vcmp.lt.s32.totalorder %v226, 4
  %vm235 = vcmp.lt.s32.totalorder %v227, 4
  %vm236 = vmand %vm228, %vm232
  %vm237 = vmand %vm229, %vm233
  %vm238 = vmand %vm230, %vm234
  %vm239 = vmand %vm231, %vm235
  %v240 = vadd.s32 %v204, 1
  %v241 = vadd.s32 %v205, 1
  %v242 = vadd.s32 %v206, 1
  %v243 = vadd.s32 %v207, 1
  %vm244 = vcmp.ge.s32.totalorder %v240, 0
  %vm245 = vcmp.ge.s32.totalorder %v241, 0
  %vm246 = vcmp.ge.s32.totalorder %v242, 0
  %vm247 = vcmp.ge.s32.totalorder %v243, 0
  %vm248 = vcmp.lt.s32.totalorder %v240, 4
  %vm249 = vcmp.lt.s32.totalorder %v241, 4
  %vm250 = vcmp.lt.s32.totalorder %v242, 4
  %vm251 = vcmp.lt.s32.totalorder %v243, 4
  %vm252 = vmand %vm244, %vm248
  %vm253 = vmand %vm245, %vm249
  %vm254 = vmand %vm246, %vm250
  %vm255 = vmand %vm247, %vm251
  %v256 = vadd.s32 %v204, 2
  %v257 = vadd.s32 %v205, 2
  %v258 = vadd.s32 %v206, 2
  %v259 = vadd.s32 %v207, 2
  %vm260 = vcmp.ge.s32.totalorder %v256, 0
  %vm261 = vcmp.ge.s32.totalorder %v257, 0
  %vm262 = vcmp.ge.s32.totalorder %v258, 0
  %vm263 = vcmp.ge.s32.totalorder %v259, 0
  %vm264 = vcmp.lt.s32.totalorder %v256, 4
  %vm265 = vcmp.lt.s32.totalorder %v257, 4
  %vm266 = vcmp.lt.s32.totalorder %v258, 4
  %vm267 = vcmp.lt.s32.totalorder %v259, 4
  %vm268 = vmand %vm260, %vm264
  %vm269 = vmand %vm261, %vm265
  %vm270 = vmand %vm262, %vm266
  %vm271 = vmand %vm263, %vm267
  %v272 = vld [vmem:[#allocation2] sm:$0xff]
  %v273 = vld [vmem:[#allocation2 + $0x8] sm:$0xff]
  %v274 = vld [vmem:[#allocation2 + $0x10] sm:$0xff]
  %v275 = vld [vmem:[#allocation2 + $0x18] sm:$0xff]
  %v276 = vld [vmem:[#allocation2 + $0x20] sm:$0xff]
  %v277 = vld [vmem:[#allocation2 + $0x28] sm:$0x11]
  %v278 = vld [vmem:[%s152] sm:$0xff]
  %v279 = vld [vmem:[%s152 + $0x8] sm:$0xff]
  %v280 = vld [vmem:[%s152 + $0x10] sm:$0xff]
  %v281 = vld [vmem:[%s152 + $0x18] sm:$0xff]
  %v282 = vld [vmem:[%s152 + $0x20] sm:$0xff]
  %v283 = vld [vmem:[%s152 + $0x28] sm:$0x11]
  %v287 = vunpack.c.h.b16 %v272
  %v288 = vunpack.c.h.b16 %v273
  %v289 = vunpack.c.h.b16 %v274
  %v290 = vpack.c.b16 %v288, %v287
  %v291 = vpack.c.b16 %v289, %v289
  %vm292 = vcmask 1044480
  %v293 = vrot.slane %v290, 3
  %v294 = vrot.slane %v291, 3
  %v295 = vsel %vm292, %v293, %v294
  %v300 = vunpack.c.h.b16 %v278
  %v301 = vunpack.c.h.b16 %v279
  %v302 = vunpack.c.h.b16 %v280
  %v303 = vpack.c.b16 %v301, %v300
  %v304 = vpack.c.b16 %v302, %v302
  %v305 = vrot.slane %v303, 3
  %v306 = vrot.slane %v304, 3
  %v307 = vsel %vm292, %v305, %v306
  %v309 = vsel %vm220, 1, 0
  %v310 = vsel %vm221, 1, 0
  %v311 = vsel %vm222, 1, 0
  %v312 = vsel %vm223, 1, 0
  %vm313 = vcmp.eq.s32.totalorder %v309, 1
  %vm314 = vcmp.eq.s32.totalorder %v310, 1
  %vm315 = vcmp.eq.s32.totalorder %v311, 1
  %vm316 = vcmp.eq.s32.totalorder %v312, 1
  %vm317 = vmpackc.low %vm313, %vm313
  %vm318 = vmpackc.low %vm314, %vm314
  %vm319 = vmpackc.low %vm315, %vm315
  %vm320 = vmpackc.low %vm316, %vm316
  %v321 = vsel %vm317, 65537, 0
  %v322 = vsel %vm318, 65537, 0
  %v323 = vsel %vm319, 65537, 0
  %v324 = vsel %vm320, 65537, 0
  %v325 = vunpack.c.l.b16 %v321
  %v326 = vunpack.c.l.b16 %v322
  %v327 = vunpack.c.l.b16 %v323
  %v328 = vunpack.c.l.b16 %v324
  %v329 = vpack.c.b16 %v326, %v325
  %v330 = vpack.c.b16 %v328, %v327
  %vm331 = vcmp.ne.s16.totalorder %v329, 0
  %vm332 = vcmp.ne.s16.totalorder %v330, 0
  %v333 = vsel %vm331, %v295, 0
  %v334 = vsel %vm332, %v307, 0
  %v335 = vld [vmem:[%s4] sm:$0xf]
  %v336 = vld [vmem:[%s4 + $0x4] sm:$0xf]
  %v337 = vld [vmem:[%s4 + $0x8] sm:$0xf]
  %v338 = vld [vmem:[%s4 + $0xc] sm:$0xf]
  %v339 = vld [vmem:[%s4 + $0x10] sm:$0xf]
  %v340 = vld [vmem:[%s4 + $0x14] sm:$0xf]
  %v341 = vld [vmem:[%s4 + $0x18] sm:$0xf]
  %v342 = vld [vmem:[%s4 + $0x1c] sm:$0xf]
  %v343 = vld [vmem:[%s4 + $0x20] sm:$0xf]
  %v344 = vld [vmem:[%s4 + $0x24] sm:$0xf]
  %v345 = vld [vmem:[%s4 + $0x28] sm:$0xf]
  %v346 = vld [vmem:[%s4 + $0x2c] sm:$0xf]
  %v347 = vld [vmem:[%s4 + $0x30] sm:$0xf]
  %v348 = vld [vmem:[%s4 + $0x34] sm:$0xf]
  %v349 = vld [vmem:[%s4 + $0x38] sm:$0xf]
  %v350 = vld [vmem:[%s4 + $0x3c] sm:$0xf]
  %vm351 = vsmask.f32 4352
  %v353 = vshrl.u32 %v290, 16
  %v355 = vrot.slane %v353, 3
  %v356 = vshll.u32 %v290, 16
  %v358 = vrot.slane %v356, 4
  %v359 = vor.u32 %v355, %v358
  %v361 = vshrl.u32 %v291, 16
  %v363 = vrot.slane %v361, 3
  %v364 = vshll.u32 %v291, 16
  %v366 = vrot.slane %v364, 4
  %v367 = vor.u32 %v363, %v366
  %v368 = vsel %vm351, %v359, %v367
  %v371 = vshrl.u32 %v303, 16
  %v373 = vrot.slane %v371, 3
  %v374 = vshll.u32 %v303, 16
  %v376 = vrot.slane %v374, 4
  %v377 = vor.u32 %v373, %v376
  %v379 = vshrl.u32 %v304, 16
  %v381 = vrot.slane %v379, 3
  %v382 = vshll.u32 %v304, 16
  %v384 = vrot.slane %v382, 4
  %v385 = vor.u32 %v381, %v384
  %v386 = vsel %vm351, %v377, %v385
  %v388 = vsel %vm236, 1, 0
  %v389 = vsel %vm237, 1, 0
  %v390 = vsel %vm238, 1, 0
  %v391 = vsel %vm239, 1, 0
  %vm392 = vcmp.eq.s32.totalorder %v388, 1
  %vm393 = vcmp.eq.s32.totalorder %v389, 1
  %vm394 = vcmp.eq.s32.totalorder %v390, 1
  %vm395 = vcmp.eq.s32.totalorder %v391, 1
  %vm396 = vmpackc.low %vm392, %vm392
  %vm397 = vmpackc.low %vm393, %vm393
  %vm398 = vmpackc.low %vm394, %vm394
  %vm399 = vmpackc.low %vm395, %vm395
  %v400 = vsel %vm396, 65537, 0
  %v401 = vsel %vm397, 65537, 0
  %v402 = vsel %vm398, 65537, 0
  %v403 = vsel %vm399, 65537, 0
  %v404 = vunpack.c.l.b16 %v400
  %v405 = vunpack.c.l.b16 %v401
  %v406 = vunpack.c.l.b16 %v402
  %v407 = vunpack.c.l.b16 %v403
  %v408 = vpack.c.b16 %v405, %v404
  %v409 = vpack.c.b16 %v407, %v406
  %vm410 = vcmp.ne.s16.totalorder %v408, 0
  %vm411 = vcmp.ne.s16.totalorder %v409, 0
  %v412 = vsel %vm410, %v368, 0
  %v413 = vsel %vm411, %v386, 0
  %s414 = scalar_lea.vmem %s4, 64
  %v415 = vld [vmem:[%s414] sm:$0xf]
  %v416 = vld [vmem:[%s414 + $0x4] sm:$0xf]
  %v417 = vld [vmem:[%s414 + $0x8] sm:$0xf]
  %v418 = vld [vmem:[%s414 + $0xc] sm:$0xf]
  %v419 = vld [vmem:[%s414 + $0x10] sm:$0xf]
  %v420 = vld [vmem:[%s414 + $0x14] sm:$0xf]
  %v421 = vld [vmem:[%s414 + $0x18] sm:$0xf]
  %v422 = vld [vmem:[%s414 + $0x1c] sm:$0xf]
  %v423 = vld [vmem:[%s414 + $0x20] sm:$0xf]
  %v424 = vld [vmem:[%s414 + $0x24] sm:$0xf]
  %v425 = vld [vmem:[%s414 + $0x28] sm:$0xf]
  %v426 = vld [vmem:[%s414 + $0x2c] sm:$0xf]
  %v427 = vld [vmem:[%s414 + $0x30] sm:$0xf]
  %v428 = vld [vmem:[%s414 + $0x34] sm:$0xf]
  %v429 = vld [vmem:[%s414 + $0x38] sm:$0xf]
  %v430 = vld [vmem:[%s414 + $0x3c] sm:$0xf]
  %v447 = vunpack.c.l.b16 %v415
  %v448 = vunpack.c.l.b16 %v416
  %v449 = vunpack.c.l.b16 %v417
  %v450 = vunpack.c.l.b16 %v418
  %v451 = vunpack.c.l.b16 %v419
  %v452 = vunpack.c.l.b16 %v420
  %v453 = vunpack.c.l.b16 %v421
  %v454 = vunpack.c.l.b16 %v422
  %v455 = vunpack.c.l.b16 %v423
  %v456 = vunpack.c.l.b16 %v424
  %v457 = vunpack.c.l.b16 %v425
  %v458 = vunpack.c.l.b16 %v426
  %v459 = vunpack.c.l.b16 %v427
  %v460 = vunpack.c.l.b16 %v428
  %v461 = vunpack.c.l.b16 %v429
  %v462 = vunpack.c.l.b16 %v430
  %v463 = vpack.c.b16 %v448, %v447
  %v464 = vpack.c.b16 %v450, %v449
  %v465 = vpack.c.b16 %v452, %v451
  %v466 = vpack.c.b16 %v454, %v453
  %v467 = vpack.c.b16 %v456, %v455
  %v468 = vpack.c.b16 %v458, %v457
  %v469 = vpack.c.b16 %v460, %v459
  %v470 = vpack.c.b16 %v462, %v461
  %479 = vmatprep.subr.bf16.mxu0 0
  %480 = vmatpush1.bf16.msra.mxu0 %v470
  %481 = vmatprep.subr.bf16.mxu0 0
  %482 = vmatpush1.bf16.msra.mxu0 %v469
  %483 = vmatprep.subr.bf16.mxu0 0
  %484 = vmatpush1.bf16.msra.mxu0 %v468
  %485 = vmatprep.subr.bf16.mxu0 0
  %486 = vmatpush1.bf16.msra.mxu0 %v467
  %487 = vmatprep.subr.bf16.mxu0 0
  %488 = vmatpush1.bf16.msra.mxu0 %v466
  %489 = vmatprep.subr.bf16.mxu0 0
  %490 = vmatpush1.bf16.msra.mxu0 %v465
  %491 = vmatprep.subr.bf16.mxu0 0
  %492 = vmatpush1.bf16.msra.mxu0 %v464
  %493 = vmatprep.subr.bf16.mxu0 0
  %494 = vmatpush1.bf16.msra.mxu0 %v463
  %495 = vmatprep.subr.bf16.mxu0 0
  %496 = vmatpush2.bf16.msra.mxu0 0
  %497 = vmatprep.subr.bf16.mxu0 0
  %498 = vmatpush2.bf16.msra.mxu0 0
  %499 = vmatprep.subr.bf16.mxu0 0
  %500 = vmatpush2.bf16.msra.mxu0 0
  %501 = vmatprep.subr.bf16.mxu0 0
  %502 = vmatpush2.bf16.msra.mxu0 0
  %503 = vmatprep.subr.bf16.mxu0 0
  %504 = vmatpush2.bf16.msra.mxu0 0
  %505 = vmatprep.subr.bf16.mxu0 0
  %506 = vmatpush2.bf16.msra.mxu0 0
  %507 = vmatprep.subr.bf16.mxu0 0
  %508 = vmatpush2.bf16.msra.mxu0 0
  %509 = vmatprep.subr.bf16.mxu0 0
  %510 = vmatpush2.bf16.msra.mxu0 0
  %511 = vmatprep.mubr.bf16.mxu0 0
  %512 = vmatmul.mubr.bf16.gmra.mxu0 %v412
  %v513 = vpop.f32.mrf.mxu0
  %v514 = vadd.f32 0.0, %v513
  %v515 = vpop.f32.mrf.mxu0
  %v516 = vpop.f32.mrf.mxu0
  %v517 = vadd.f32 0.0, %v516
  %v518 = vpop.f32.mrf.mxu0
  %519 = vmatprep.mubr.bf16.mxu0 0
  %520 = vmatmul.mubr.bf16.gmra.mxu0 %v413
  %v521 = vpop.f32.mrf.mxu0
  %v522 = vadd.f32 0.0, %v521
  %v523 = vpop.f32.mrf.mxu0
  %v524 = vpop.f32.mrf.mxu0
  %v525 = vadd.f32 0.0, %v524
  %v526 = vpop.f32.mrf.mxu0
  %527 = vdwg.mxu0
  %v544 = vunpack.c.l.b16 %v335
  %v545 = vunpack.c.l.b16 %v336
  %v546 = vunpack.c.l.b16 %v337
  %v547 = vunpack.c.l.b16 %v338
  %v548 = vunpack.c.l.b16 %v339
  %v549 = vunpack.c.l.b16 %v340
  %v550 = vunpack.c.l.b16 %v341
  %v551 = vunpack.c.l.b16 %v342
  %v552 = vunpack.c.l.b16 %v343
  %v553 = vunpack.c.l.b16 %v344
  %v554 = vunpack.c.l.b16 %v345
  %v555 = vunpack.c.l.b16 %v346
  %v556 = vunpack.c.l.b16 %v347
  %v557 = vunpack.c.l.b16 %v348
  %v558 = vunpack.c.l.b16 %v349
  %v559 = vunpack.c.l.b16 %v350
  %v560 = vpack.c.b16 %v545, %v544
  %v561 = vpack.c.b16 %v547, %v546
  %v562 = vpack.c.b16 %v549, %v548
  %v563 = vpack.c.b16 %v551, %v550
  %v564 = vpack.c.b16 %v553, %v552
  %v565 = vpack.c.b16 %v555, %v554
  %v566 = vpack.c.b16 %v557, %v556
  %v567 = vpack.c.b16 %v559, %v558
  %576 = vmatprep.subr.bf16.mxu0 0
  %577 = vmatpush1.bf16.msra.mxu0 %v567
  %578 = vmatprep.subr.bf16.mxu0 0
  %579 = vmatpush1.bf16.msra.mxu0 %v566
  %580 = vmatprep.subr.bf16.mxu0 0
  %581 = vmatpush1.bf16.msra.mxu0 %v565
  %582 = vmatprep.subr.bf16.mxu0 0
  %583 = vmatpush1.bf16.msra.mxu0 %v564
  %584 = vmatprep.subr.bf16.mxu0 0
  %585 = vmatpush1.bf16.msra.mxu0 %v563
  %586 = vmatprep.subr.bf16.mxu0 0
  %587 = vmatpush1.bf16.msra.mxu0 %v562
  %588 = vmatprep.subr.bf16.mxu0 0
  %589 = vmatpush1.bf16.msra.mxu0 %v561
  %590 = vmatprep.subr.bf16.mxu0 0
  %591 = vmatpush1.bf16.msra.mxu0 %v560
  %592 = vmatprep.subr.bf16.mxu0 0
  %593 = vmatpush2.bf16.msra.mxu0 0
  %594 = vmatprep.subr.bf16.mxu0 0
  %595 = vmatpush2.bf16.msra.mxu0 0
  %596 = vmatprep.subr.bf16.mxu0 0
  %597 = vmatpush2.bf16.msra.mxu0 0
  %598 = vmatprep.subr.bf16.mxu0 0
  %599 = vmatpush2.bf16.msra.mxu0 0
  %600 = vmatprep.subr.bf16.mxu0 0
  %601 = vmatpush2.bf16.msra.mxu0 0
  %602 = vmatprep.subr.bf16.mxu0 0
  %603 = vmatpush2.bf16.msra.mxu0 0
  %604 = vmatprep.subr.bf16.mxu0 0
  %605 = vmatpush2.bf16.msra.mxu0 0
  %606 = vmatprep.subr.bf16.mxu0 0
  %607 = vmatpush2.bf16.msra.mxu0 0
  %608 = vmatprep.mubr.bf16.mxu0 0
  %609 = vmatmul.mubr.bf16.gmra.mxu0 %v333
  %v610 = vpop.f32.mrf.mxu0
  %v611 = vadd.f32 %v514, %v610
  %v612 = vpop.f32.mrf.mxu0
  %v613 = vpop.f32.mrf.mxu0
  %v614 = vadd.f32 %v517, %v613
  %v615 = vpop.f32.mrf.mxu0
  %616 = vmatprep.mubr.bf16.mxu0 0
  %617 = vmatmul.mubr.bf16.gmra.mxu0 %v334
  %v618 = vpop.f32.mrf.mxu0
  %v619 = vadd.f32 %v522, %v618
  %v620 = vpop.f32.mrf.mxu0
  %v621 = vpop.f32.mrf.mxu0
  %v622 = vadd.f32 %v525, %v621
  %v623 = vpop.f32.mrf.mxu0
  %624 = vdwg.mxu0
  %v625 = vpack.c.b16 %v289, %v288
  %v627 = vpack.c.b16 %v302, %v301
  %s629 = scalar_lea.vmem %s4, 128
  %v630 = vld [vmem:[%s629] sm:$0xf]
  %v631 = vld [vmem:[%s629 + $0x4] sm:$0xf]
  %v632 = vld [vmem:[%s629 + $0x8] sm:$0xf]
  %v633 = vld [vmem:[%s629 + $0xc] sm:$0xf]
  %v634 = vld [vmem:[%s629 + $0x10] sm:$0xf]
  %v635 = vld [vmem:[%s629 + $0x14] sm:$0xf]
  %v636 = vld [vmem:[%s629 + $0x18] sm:$0xf]
  %v637 = vld [vmem:[%s629 + $0x1c] sm:$0xf]
  %v638 = vld [vmem:[%s629 + $0x20] sm:$0xf]
  %v639 = vld [vmem:[%s629 + $0x24] sm:$0xf]
  %v640 = vld [vmem:[%s629 + $0x28] sm:$0xf]
  %v641 = vld [vmem:[%s629 + $0x2c] sm:$0xf]
  %v642 = vld [vmem:[%s629 + $0x30] sm:$0xf]
  %v643 = vld [vmem:[%s629 + $0x34] sm:$0xf]
  %v644 = vld [vmem:[%s629 + $0x38] sm:$0xf]
  %v645 = vld [vmem:[%s629 + $0x3c] sm:$0xf]
  %v662 = vunpack.c.l.b16 %v630
  %v663 = vunpack.c.l.b16 %v631
  %v664 = vunpack.c.l.b16 %v632
  %v665 = vunpack.c.l.b16 %v633
  %v666 = vunpack.c.l.b16 %v634
  %v667 = vunpack.c.l.b16 %v635
  %v668 = vunpack.c.l.b16 %v636
  %v669 = vunpack.c.l.b16 %v637
  %v670 = vunpack.c.l.b16 %v638
  %v671 = vunpack.c.l.b16 %v639
  %v672 = vunpack.c.l.b16 %v640
  %v673 = vunpack.c.l.b16 %v641
  %v674 = vunpack.c.l.b16 %v642
  %v675 = vunpack.c.l.b16 %v643
  %v676 = vunpack.c.l.b16 %v644
  %v677 = vunpack.c.l.b16 %v645
  %v678 = vpack.c.b16 %v663, %v662
  %v679 = vpack.c.b16 %v665, %v664
  %v680 = vpack.c.b16 %v667, %v666
  %v681 = vpack.c.b16 %v669, %v668
  %v682 = vpack.c.b16 %v671, %v670
  %v683 = vpack.c.b16 %v673, %v672
  %v684 = vpack.c.b16 %v675, %v674
  %v685 = vpack.c.b16 %v677, %v676
  %694 = vmatprep.subr.bf16.mxu0 0
  %695 = vmatpush1.bf16.msra.mxu0 %v685
  %696 = vmatprep.subr.bf16.mxu0 0
  %697 = vmatpush1.bf16.msra.mxu0 %v684
  %698 = vmatprep.subr.bf16.mxu0 0
  %699 = vmatpush1.bf16.msra.mxu0 %v683
  %700 = vmatprep.subr.bf16.mxu0 0
  %701 = vmatpush1.bf16.msra.mxu0 %v682
  %702 = vmatprep.subr.bf16.mxu0 0
  %703 = vmatpush1.bf16.msra.mxu0 %v681
  %704 = vmatprep.subr.bf16.mxu0 0
  %705 = vmatpush1.bf16.msra.mxu0 %v680
  %706 = vmatprep.subr.bf16.mxu0 0
  %707 = vmatpush1.bf16.msra.mxu0 %v679
  %708 = vmatprep.subr.bf16.mxu0 0
  %709 = vmatpush1.bf16.msra.mxu0 %v678
  %710 = vmatprep.subr.bf16.mxu0 0
  %711 = vmatpush2.bf16.msra.mxu0 0
  %712 = vmatprep.subr.bf16.mxu0 0
  %713 = vmatpush2.bf16.msra.mxu0 0
  %714 = vmatprep.subr.bf16.mxu0 0
  %715 = vmatpush2.bf16.msra.mxu0 0
  %716 = vmatprep.subr.bf16.mxu0 0
  %717 = vmatpush2.bf16.msra.mxu0 0
  %718 = vmatprep.subr.bf16.mxu0 0
  %719 = vmatpush2.bf16.msra.mxu0 0
  %720 = vmatprep.subr.bf16.mxu0 0
  %721 = vmatpush2.bf16.msra.mxu0 0
  %722 = vmatprep.subr.bf16.mxu0 0
  %723 = vmatpush2.bf16.msra.mxu0 0
  %724 = vmatprep.subr.bf16.mxu0 0
  %725 = vmatpush2.bf16.msra.mxu0 0
  %726 = vmatprep.mubr.bf16.mxu0 0
  %727 = vmatmul.mubr.bf16.gmra.mxu0 %v625
  %v728 = vpop.f32.mrf.mxu0
  %v729 = vadd.f32 0.0, %v728
  %v730 = vpop.f32.mrf.mxu0
  %v731 = vpop.f32.mrf.mxu0
  %v732 = vadd.f32 0.0, %v731
  %v733 = vpop.f32.mrf.mxu0
  %734 = vmatprep.mubr.bf16.mxu0 0
  %735 = vmatmul.mubr.bf16.gmra.mxu0 %v627
  %v736 = vpop.f32.mrf.mxu0
  %v737 = vadd.f32 0.0, %v736
  %v738 = vpop.f32.mrf.mxu0
  %v739 = vpop.f32.mrf.mxu0
  %v740 = vadd.f32 0.0, %v739
  %v741 = vpop.f32.mrf.mxu0
  %742 = vdwg.mxu0
  %v743 = vadd.f32 %v611, %v729
  %v744 = vadd.f32 %v614, %v732
  %v745 = vadd.f32 %v619, %v737
  %v746 = vadd.f32 %v622, %v740
  %v748 = vunpack.c.h.b16 %v275
  %v749 = vpack.c.b16 %v748, %v748
  %vm750 = vsmask.f32 7424
  %v752 = vshrl.u32 %v625, 16
  %v754 = vshll.u32 %v625, 16
  %v756 = vrot.slane %v754, 1
  %v757 = vor.u32 %v752, %v756
  %v759 = vshll.u32 %v749, 16
  %v761 = vrot.slane %v759, 1
  %v762 = vsel %vm750, %v757, %v761
  %v765 = vunpack.c.h.b16 %v281
  %v766 = vpack.c.b16 %v765, %v765
  %v768 = vshrl.u32 %v627, 16
  %v770 = vshll.u32 %v627, 16
  %v772 = vrot.slane %v770, 1
  %v773 = vor.u32 %v768, %v772
  %v775 = vshll.u32 %v766, 16
  %v777 = vrot.slane %v775, 1
  %v778 = vsel %vm750, %v773, %v777
  %v780 = vsel %vm252, 1, 0
  %v781 = vsel %vm253, 1, 0
  %v782 = vsel %vm254, 1, 0
  %v783 = vsel %vm255, 1, 0
  %vm784 = vcmp.eq.s32.totalorder %v780, 1
  %vm785 = vcmp.eq.s32.totalorder %v781, 1
  %vm786 = vcmp.eq.s32.totalorder %v782, 1
  %vm787 = vcmp.eq.s32.totalorder %v783, 1
  %vm788 = vmpackc.low %vm784, %vm784
  %vm789 = vmpackc.low %vm785, %vm785
  %vm790 = vmpackc.low %vm786, %vm786
  %vm791 = vmpackc.low %vm787, %vm787
  %v792 = vsel %vm788, 65537, 0
  %v793 = vsel %vm789, 65537, 0
  %v794 = vsel %vm790, 65537, 0
  %v795 = vsel %vm791, 65537, 0
  %v796 = vunpack.c.l.b16 %v792
  %v797 = vunpack.c.l.b16 %v793
  %v798 = vunpack.c.l.b16 %v794
  %v799 = vunpack.c.l.b16 %v795
  %v800 = vpack.c.b16 %v797, %v796
  %v801 = vpack.c.b16 %v799, %v798
  %vm802 = vcmp.ne.s16.totalorder %v800, 0
  %vm803 = vcmp.ne.s16.totalorder %v801, 0
  %v804 = vsel %vm802, %v762, 0
  %v805 = vsel %vm803, %v778, 0
  %s806 = scalar_lea.vmem %s4, 192
  %v807 = vld [vmem:[%s806] sm:$0xf]
  %v808 = vld [vmem:[%s806 + $0x4] sm:$0xf]
  %v809 = vld [vmem:[%s806 + $0x8] sm:$0xf]
  %v810 = vld [vmem:[%s806 + $0xc] sm:$0xf]
  %v811 = vld [vmem:[%s806 + $0x10] sm:$0xf]
  %v812 = vld [vmem:[%s806 + $0x14] sm:$0xf]
  %v813 = vld [vmem:[%s806 + $0x18] sm:$0xf]
  %v814 = vld [vmem:[%s806 + $0x1c] sm:$0xf]
  %v815 = vld [vmem:[%s806 + $0x20] sm:$0xf]
  %v816 = vld [vmem:[%s806 + $0x24] sm:$0xf]
  %v817 = vld [vmem:[%s806 + $0x28] sm:$0xf]
  %v818 = vld [vmem:[%s806 + $0x2c] sm:$0xf]
  %v819 = vld [vmem:[%s806 + $0x30] sm:$0xf]
  %v820 = vld [vmem:[%s806 + $0x34] sm:$0xf]
  %v821 = vld [vmem:[%s806 + $0x38] sm:$0xf]
  %v822 = vld [vmem:[%s806 + $0x3c] sm:$0xf]
  %v839 = vunpack.c.l.b16 %v807
  %v840 = vunpack.c.l.b16 %v808
  %v841 = vunpack.c.l.b16 %v809
  %v842 = vunpack.c.l.b16 %v810
  %v843 = vunpack.c.l.b16 %v811
  %v844 = vunpack.c.l.b16 %v812
  %v845 = vunpack.c.l.b16 %v813
  %v846 = vunpack.c.l.b16 %v814
  %v847 = vunpack.c.l.b16 %v815
  %v848 = vunpack.c.l.b16 %v816
  %v849 = vunpack.c.l.b16 %v817
  %v850 = vunpack.c.l.b16 %v818
  %v851 = vunpack.c.l.b16 %v819
  %v852 = vunpack.c.l.b16 %v820
  %v853 = vunpack.c.l.b16 %v821
  %v854 = vunpack.c.l.b16 %v822
  %v855 = vpack.c.b16 %v840, %v839
  %v856 = vpack.c.b16 %v842, %v841
  %v857 = vpack.c.b16 %v844, %v843
  %v858 = vpack.c.b16 %v846, %v845
  %v859 = vpack.c.b16 %v848, %v847
  %v860 = vpack.c.b16 %v850, %v849
  %v861 = vpack.c.b16 %v852, %v851
  %v862 = vpack.c.b16 %v854, %v853
  %871 = vmatprep.subr.bf16.mxu0 0
  %872 = vmatpush1.bf16.msra.mxu0 %v862
  %873 = vmatprep.subr.bf16.mxu0 0
  %874 = vmatpush1.bf16.msra.mxu0 %v861
  %875 = vmatprep.subr.bf16.mxu0 0
  %876 = vmatpush1.bf16.msra.mxu0 %v860
  %877 = vmatprep.subr.bf16.mxu0 0
  %878 = vmatpush1.bf16.msra.mxu0 %v859
  %879 = vmatprep.subr.bf16.mxu0 0
  %880 = vmatpush1.bf16.msra.mxu0 %v858
  %881 = vmatprep.subr.bf16.mxu0 0
  %882 = vmatpush1.bf16.msra.mxu0 %v857
  %883 = vmatprep.subr.bf16.mxu0 0
  %884 = vmatpush1.bf16.msra.mxu0 %v856
  %885 = vmatprep.subr.bf16.mxu0 0
  %886 = vmatpush1.bf16.msra.mxu0 %v855
  %887 = vmatprep.subr.bf16.mxu0 0
  %888 = vmatpush2.bf16.msra.mxu0 0
  %889 = vmatprep.subr.bf16.mxu0 0
  %890 = vmatpush2.bf16.msra.mxu0 0
  %891 = vmatprep.subr.bf16.mxu0 0
  %892 = vmatpush2.bf16.msra.mxu0 0
  %893 = vmatprep.subr.bf16.mxu0 0
  %894 = vmatpush2.bf16.msra.mxu0 0
  %895 = vmatprep.subr.bf16.mxu0 0
  %896 = vmatpush2.bf16.msra.mxu0 0
  %897 = vmatprep.subr.bf16.mxu0 0
  %898 = vmatpush2.bf16.msra.mxu0 0
  %899 = vmatprep.subr.bf16.mxu0 0
  %900 = vmatpush2.bf16.msra.mxu0 0
  %901 = vmatprep.subr.bf16.mxu0 0
  %902 = vmatpush2.bf16.msra.mxu0 0
  %903 = vmatprep.mubr.bf16.mxu0 0
  %904 = vmatmul.mubr.bf16.gmra.mxu0 %v804
  %v905 = vpop.f32.mrf.mxu0
  %v906 = vadd.f32 0.0, %v905
  %v907 = vpop.f32.mrf.mxu0
  %v908 = vpop.f32.mrf.mxu0
  %v909 = vadd.f32 0.0, %v908
  %v910 = vpop.f32.mrf.mxu0
  %911 = vmatprep.mubr.bf16.mxu0 0
  %912 = vmatmul.mubr.bf16.gmra.mxu0 %v805
  %v913 = vpop.f32.mrf.mxu0
  %v914 = vadd.f32 0.0, %v913
  %v915 = vpop.f32.mrf.mxu0
  %v916 = vpop.f32.mrf.mxu0
  %v917 = vadd.f32 0.0, %v916
  %v918 = vpop.f32.mrf.mxu0
  %919 = vdwg.mxu0
  %v920 = vadd.f32 %v743, %v906
  %v921 = vadd.f32 %v744, %v909
  %v922 = vadd.f32 %v745, %v914
  %v923 = vadd.f32 %v746, %v917
  %vm924 = vcmask 1046528
  %v925 = vrot.slane %v625, 1
  %v926 = vrot.slane %v749, 1
  %v927 = vsel %vm924, %v925, %v926
  %v929 = vrot.slane %v627, 1
  %v930 = vrot.slane %v766, 1
  %v931 = vsel %vm924, %v929, %v930
  %v933 = vsel %vm268, 1, 0
  %v934 = vsel %vm269, 1, 0
  %v935 = vsel %vm270, 1, 0
  %v936 = vsel %vm271, 1, 0
  %vm937 = vcmp.eq.s32.totalorder %v933, 1
  %vm938 = vcmp.eq.s32.totalorder %v934, 1
  %vm939 = vcmp.eq.s32.totalorder %v935, 1
  %vm940 = vcmp.eq.s32.totalorder %v936, 1
  %vm941 = vmpackc.low %vm937, %vm937
  %vm942 = vmpackc.low %vm938, %vm938
  %vm943 = vmpackc.low %vm939, %vm939
  %vm944 = vmpackc.low %vm940, %vm940
  %v945 = vsel %vm941, 65537, 0
  %v946 = vsel %vm942, 65537, 0
  %v947 = vsel %vm943, 65537, 0
  %v948 = vsel %vm944, 65537, 0
  %v949 = vunpack.c.l.b16 %v945
  %v950 = vunpack.c.l.b16 %v946
  %v951 = vunpack.c.l.b16 %v947
  %v952 = vunpack.c.l.b16 %v948
  %v953 = vpack.c.b16 %v950, %v949
  %v954 = vpack.c.b16 %v952, %v951
  %vm955 = vcmp.ne.s16.totalorder %v953, 0
  %vm956 = vcmp.ne.s16.totalorder %v954, 0
  %v957 = vsel %vm955, %v927, 0
  %v958 = vsel %vm956, %v931, 0
  %s959 = scalar_lea.vmem %s4, 256
  %v960 = vld [vmem:[%s959] sm:$0xf]
  %v961 = vld [vmem:[%s959 + $0x4] sm:$0xf]
  %v962 = vld [vmem:[%s959 + $0x8] sm:$0xf]
  %v963 = vld [vmem:[%s959 + $0xc] sm:$0xf]
  %v964 = vld [vmem:[%s959 + $0x10] sm:$0xf]
  %v965 = vld [vmem:[%s959 + $0x14] sm:$0xf]
  %v966 = vld [vmem:[%s959 + $0x18] sm:$0xf]
  %v967 = vld [vmem:[%s959 + $0x1c] sm:$0xf]
  %v968 = vld [vmem:[%s959 + $0x20] sm:$0xf]
  %v969 = vld [vmem:[%s959 + $0x24] sm:$0xf]
  %v970 = vld [vmem:[%s959 + $0x28] sm:$0xf]
  %v971 = vld [vmem:[%s959 + $0x2c] sm:$0xf]
  %v972 = vld [vmem:[%s959 + $0x30] sm:$0xf]
  %v973 = vld [vmem:[%s959 + $0x34] sm:$0xf]
  %v974 = vld [vmem:[%s959 + $0x38] sm:$0xf]
  %v975 = vld [vmem:[%s959 + $0x3c] sm:$0xf]
  %v992 = vunpack.c.l.b16 %v960
  %v993 = vunpack.c.l.b16 %v961
  %v994 = vunpack.c.l.b16 %v962
  %v995 = vunpack.c.l.b16 %v963
  %v996 = vunpack.c.l.b16 %v964
  %v997 = vunpack.c.l.b16 %v965
  %v998 = vunpack.c.l.b16 %v966
  %v999 = vunpack.c.l.b16 %v967
  %v1000 = vunpack.c.l.b16 %v968
  %v1001 = vunpack.c.l.b16 %v969
  %v1002 = vunpack.c.l.b16 %v970
  %v1003 = vunpack.c.l.b16 %v971
  %v1004 = vunpack.c.l.b16 %v972
  %v1005 = vunpack.c.l.b16 %v973
  %v1006 = vunpack.c.l.b16 %v974
  %v1007 = vunpack.c.l.b16 %v975
  %v1008 = vpack.c.b16 %v993, %v992
  %v1009 = vpack.c.b16 %v995, %v994
  %v1010 = vpack.c.b16 %v997, %v996
  %v1011 = vpack.c.b16 %v999, %v998
  %v1012 = vpack.c.b16 %v1001, %v1000
  %v1013 = vpack.c.b16 %v1003, %v1002
  %v1014 = vpack.c.b16 %v1005, %v1004
  %v1015 = vpack.c.b16 %v1007, %v1006
  %1024 = vmatprep.subr.bf16.mxu0 0
  %1025 = vmatpush1.bf16.msra.mxu0 %v1015
  %1026 = vmatprep.subr.bf16.mxu0 0
  %1027 = vmatpush1.bf16.msra.mxu0 %v1014
  %1028 = vmatprep.subr.bf16.mxu0 0
  %1029 = vmatpush1.bf16.msra.mxu0 %v1013
  %1030 = vmatprep.subr.bf16.mxu0 0
  %1031 = vmatpush1.bf16.msra.mxu0 %v1012
  %1032 = vmatprep.subr.bf16.mxu0 0
  %1033 = vmatpush1.bf16.msra.mxu0 %v1011
  %1034 = vmatprep.subr.bf16.mxu0 0
  %1035 = vmatpush1.bf16.msra.mxu0 %v1010
  %1036 = vmatprep.subr.bf16.mxu0 0
  %1037 = vmatpush1.bf16.msra.mxu0 %v1009
  %1038 = vmatprep.subr.bf16.mxu0 0
  %1039 = vmatpush1.bf16.msra.mxu0 %v1008
  %1040 = vmatprep.subr.bf16.mxu0 0
  %1041 = vmatpush2.bf16.msra.mxu0 0
  %1042 = vmatprep.subr.bf16.mxu0 0
  %1043 = vmatpush2.bf16.msra.mxu0 0
  %1044 = vmatprep.subr.bf16.mxu0 0
  %1045 = vmatpush2.bf16.msra.mxu0 0
  %1046 = vmatprep.subr.bf16.mxu0 0
  %1047 = vmatpush2.bf16.msra.mxu0 0
  %1048 = vmatprep.subr.bf16.mxu0 0
  %1049 = vmatpush2.bf16.msra.mxu0 0
  %1050 = vmatprep.subr.bf16.mxu0 0
  %1051 = vmatpush2.bf16.msra.mxu0 0
  %1052 = vmatprep.subr.bf16.mxu0 0
  %1053 = vmatpush2.bf16.msra.mxu0 0
  %1054 = vmatprep.subr.bf16.mxu0 0
  %1055 = vmatpush2.bf16.msra.mxu0 0
  %1056 = vmatprep.mubr.bf16.mxu0 0
  %1057 = vmatmul.mubr.bf16.gmra.mxu0 %v957
  %v1058 = vpop.f32.mrf.mxu0
  %v1059 = vadd.f32 0.0, %v1058
  %v1060 = vpop.f32.mrf.mxu0
  %v1061 = vpop.f32.mrf.mxu0
  %v1062 = vadd.f32 0.0, %v1061
  %v1063 = vpop.f32.mrf.mxu0
  %1064 = vmatprep.mubr.bf16.mxu0 0
  %1065 = vmatmul.mubr.bf16.gmra.mxu0 %v958
  %v1066 = vpop.f32.mrf.mxu0
  %v1067 = vadd.f32 0.0, %v1066
  %v1068 = vpop.f32.mrf.mxu0
  %v1069 = vpop.f32.mrf.mxu0
  %v1070 = vadd.f32 0.0, %v1069
  %v1071 = vpop.f32.mrf.mxu0
  %1072 = vdwg.mxu0
  %v1073 = vadd.f32 %v920, %v1059
  %v1074 = vadd.f32 %v921, %v1062
  %v1075 = vadd.f32 %v922, %v1067
  %v1076 = vadd.f32 %v923, %v1070
  %v1077 = vsel %vm331, %v927, 0
  %v1078 = vsel %vm332, %v931, 0
  %s1079 = scalar_lea.vmem %s4, 320
  %v1080 = vld [vmem:[%s1079] sm:$0xf]
  %v1081 = vld [vmem:[%s1079 + $0x4] sm:$0xf]
  %v1082 = vld [vmem:[%s1079 + $0x8] sm:$0xf]
  %v1083 = vld [vmem:[%s1079 + $0xc] sm:$0xf]
  %v1084 = vld [vmem:[%s1079 + $0x10] sm:$0xf]
  %v1085 = vld [vmem:[%s1079 + $0x14] sm:$0xf]
  %v1086 = vld [vmem:[%s1079 + $0x18] sm:$0xf]
  %v1087 = vld [vmem:[%s1079 + $0x1c] sm:$0xf]
  %v1088 = vld [vmem:[%s1079 + $0x20] sm:$0xf]
  %v1089 = vld [vmem:[%s1079 + $0x24] sm:$0xf]
  %v1090 = vld [vmem:[%s1079 + $0x28] sm:$0xf]
  %v1091 = vld [vmem:[%s1079 + $0x2c] sm:$0xf]
  %v1092 = vld [vmem:[%s1079 + $0x30] sm:$0xf]
  %v1093 = vld [vmem:[%s1079 + $0x34] sm:$0xf]
  %v1094 = vld [vmem:[%s1079 + $0x38] sm:$0xf]
  %v1095 = vld [vmem:[%s1079 + $0x3c] sm:$0xf]
  %v1112 = vunpack.c.l.b16 %v1080
  %v1113 = vunpack.c.l.b16 %v1081
  %v1114 = vunpack.c.l.b16 %v1082
  %v1115 = vunpack.c.l.b16 %v1083
  %v1116 = vunpack.c.l.b16 %v1084
  %v1117 = vunpack.c.l.b16 %v1085
  %v1118 = vunpack.c.l.b16 %v1086
  %v1119 = vunpack.c.l.b16 %v1087
  %v1120 = vunpack.c.l.b16 %v1088
  %v1121 = vunpack.c.l.b16 %v1089
  %v1122 = vunpack.c.l.b16 %v1090
  %v1123 = vunpack.c.l.b16 %v1091
  %v1124 = vunpack.c.l.b16 %v1092
  %v1125 = vunpack.c.l.b16 %v1093
  %v1126 = vunpack.c.l.b16 %v1094
  %v1127 = vunpack.c.l.b16 %v1095
  %v1128 = vpack.c.b16 %v1113, %v1112
  %v1129 = vpack.c.b16 %v1115, %v1114
  %v1130 = vpack.c.b16 %v1117, %v1116
  %v1131 = vpack.c.b16 %v1119, %v1118
  %v1132 = vpack.c.b16 %v1121, %v1120
  %v1133 = vpack.c.b16 %v1123, %v1122
  %v1134 = vpack.c.b16 %v1125, %v1124
  %v1135 = vpack.c.b16 %v1127, %v1126
  %1144 = vmatprep.subr.bf16.mxu0 0
  %1145 = vmatpush1.bf16.msra.mxu0 %v1135
  %1146 = vmatprep.subr.bf16.mxu0 0
  %1147 = vmatpush1.bf16.msra.mxu0 %v1134
  %1148 = vmatprep.subr.bf16.mxu0 0
  %1149 = vmatpush1.bf16.msra.mxu0 %v1133
  %1150 = vmatprep.subr.bf16.mxu0 0
  %1151 = vmatpush1.bf16.msra.mxu0 %v1132
  %1152 = vmatprep.subr.bf16.mxu0 0
  %1153 = vmatpush1.bf16.msra.mxu0 %v1131
  %1154 = vmatprep.subr.bf16.mxu0 0
  %1155 = vmatpush1.bf16.msra.mxu0 %v1130
  %1156 = vmatprep.subr.bf16.mxu0 0
  %1157 = vmatpush1.bf16.msra.mxu0 %v1129
  %1158 = vmatprep.subr.bf16.mxu0 0
  %1159 = vmatpush1.bf16.msra.mxu0 %v1128
  %1160 = vmatprep.subr.bf16.mxu0 0
  %1161 = vmatpush2.bf16.msra.mxu0 0
  %1162 = vmatprep.subr.bf16.mxu0 0
  %1163 = vmatpush2.bf16.msra.mxu0 0
  %1164 = vmatprep.subr.bf16.mxu0 0
  %1165 = vmatpush2.bf16.msra.mxu0 0
  %1166 = vmatprep.subr.bf16.mxu0 0
  %1167 = vmatpush2.bf16.msra.mxu0 0
  %1168 = vmatprep.subr.bf16.mxu0 0
  %1169 = vmatpush2.bf16.msra.mxu0 0
  %1170 = vmatprep.subr.bf16.mxu0 0
  %1171 = vmatpush2.bf16.msra.mxu0 0
  %1172 = vmatprep.subr.bf16.mxu0 0
  %1173 = vmatpush2.bf16.msra.mxu0 0
  %1174 = vmatprep.subr.bf16.mxu0 0
  %1175 = vmatpush2.bf16.msra.mxu0 0
  %1176 = vmatprep.mubr.bf16.mxu0 0
  %1177 = vmatmul.mubr.bf16.gmra.mxu0 %v1077
  %v1178 = vpop.f32.mrf.mxu0
  %v1179 = vadd.f32 0.0, %v1178
  %v1180 = vpop.f32.mrf.mxu0
  %v1181 = vpop.f32.mrf.mxu0
  %v1182 = vadd.f32 0.0, %v1181
  %v1183 = vpop.f32.mrf.mxu0
  %1184 = vmatprep.mubr.bf16.mxu0 0
  %1185 = vmatmul.mubr.bf16.gmra.mxu0 %v1078
  %v1186 = vpop.f32.mrf.mxu0
  %v1187 = vadd.f32 0.0, %v1186
  %v1188 = vpop.f32.mrf.mxu0
  %v1189 = vpop.f32.mrf.mxu0
  %v1190 = vadd.f32 0.0, %v1189
  %v1191 = vpop.f32.mrf.mxu0
  %1192 = vdwg.mxu0
  %v1193 = vadd.f32 %v1073, %v1179
  %v1194 = vadd.f32 %v1074, %v1182
  %v1195 = vadd.f32 %v1075, %v1187
  %v1196 = vadd.f32 %v1076, %v1190
  %v1197 = vunpack.c.l.b16 %v273
  %v1198 = vunpack.c.l.b16 %v274
  %v1199 = vunpack.c.l.b16 %v275
  %v1200 = vpack.c.b16 %v1198, %v1197
  %v1201 = vpack.c.b16 %v1199, %v1199
  %vm1202 = vsmask.f32 6400
  %v1204 = vshrl.u32 %v1200, 16
  %v1206 = vrot.slane %v1204, 1
  %v1207 = vshll.u32 %v1200, 16
  %v1209 = vrot.slane %v1207, 2
  %v1210 = vor.u32 %v1206, %v1209
  %v1212 = vshrl.u32 %v1201, 16
  %v1214 = vrot.slane %v1212, 1
  %v1215 = vshll.u32 %v1201, 16
  %v1217 = vrot.slane %v1215, 2
  %v1218 = vor.u32 %v1214, %v1217
  %v1219 = vsel %vm1202, %v1210, %v1218
  %v1220 = vrot.slane %v752, 1
  %v1221 = vrot.slane %v754, 2
  %v1222 = vor.u32 %v1220, %v1221
  %v1223 = vshrl.u32 %v749, 16
  %v1225 = vrot.slane %v1223, 1
  %v1226 = vrot.slane %v759, 2
  %v1227 = vor.u32 %v1225, %v1226
  %v1228 = vsel %vm1202, %v1222, %v1227
  %v1231 = vunpack.c.l.b16 %v279
  %v1232 = vunpack.c.l.b16 %v280
  %v1233 = vunpack.c.l.b16 %v281
  %v1234 = vpack.c.b16 %v1232, %v1231
  %v1235 = vpack.c.b16 %v1233, %v1233
  %v1237 = vshrl.u32 %v1234, 16
  %v1239 = vrot.slane %v1237, 1
  %v1240 = vshll.u32 %v1234, 16
  %v1242 = vrot.slane %v1240, 2
  %v1243 = vor.u32 %v1239, %v1242
  %v1245 = vshrl.u32 %v1235, 16
  %v1247 = vrot.slane %v1245, 1
  %v1248 = vshll.u32 %v1235, 16
  %v1250 = vrot.slane %v1248, 2
  %v1251 = vor.u32 %v1247, %v1250
  %v1252 = vsel %vm1202, %v1243, %v1251
  %v1253 = vrot.slane %v768, 1
  %v1254 = vrot.slane %v770, 2
  %v1255 = vor.u32 %v1253, %v1254
  %v1256 = vshrl.u32 %v766, 16
  %v1258 = vrot.slane %v1256, 1
  %v1259 = vrot.slane %v775, 2
  %v1260 = vor.u32 %v1258, %v1259
  %v1261 = vsel %vm1202, %v1255, %v1260
  %v1264 = vsel %vm410, %v1219, 0
  %v1265 = vsel %vm410, %v1228, 0
  %v1266 = vsel %vm411, %v1252, 0
  %v1267 = vsel %vm411, %v1261, 0
  %s1268 = scalar_lea.vmem %s4, 384
  %v1269 = vld [vmem:[%s1268] sm:$0xf]
  %v1270 = vld [vmem:[%s1268 + $0x4] sm:$0xf]
  %v1271 = vld [vmem:[%s1268 + $0x8] sm:$0xf]
  %v1272 = vld [vmem:[%s1268 + $0xc] sm:$0xf]
  %v1273 = vld [vmem:[%s1268 + $0x10] sm:$0xf]
  %v1274 = vld [vmem:[%s1268 + $0x14] sm:$0xf]
  %v1275 = vld [vmem:[%s1268 + $0x18] sm:$0xf]
  %v1276 = vld [vmem:[%s1268 + $0x1c] sm:$0xf]
  %v1277 = vld [vmem:[%s1268 + $0x20] sm:$0xf]
  %v1278 = vld [vmem:[%s1268 + $0x24] sm:$0xf]
  %v1279 = vld [vmem:[%s1268 + $0x28] sm:$0xf]
  %v1280 = vld [vmem:[%s1268 + $0x2c] sm:$0xf]
  %v1281 = vld [vmem:[%s1268 + $0x30] sm:$0xf]
  %v1282 = vld [vmem:[%s1268 + $0x34] sm:$0xf]
  %v1283 = vld [vmem:[%s1268 + $0x38] sm:$0xf]
  %v1284 = vld [vmem:[%s1268 + $0x3c] sm:$0xf]
  %v1301 = vunpack.c.l.b16 %v1269
  %v1302 = vunpack.c.l.b16 %v1270
  %v1303 = vunpack.c.l.b16 %v1271
  %v1304 = vunpack.c.l.b16 %v1272
  %v1305 = vunpack.c.l.b16 %v1273
  %v1306 = vunpack.c.l.b16 %v1274
  %v1307 = vunpack.c.l.b16 %v1275
  %v1308 = vunpack.c.l.b16 %v1276
  %v1309 = vunpack.c.l.b16 %v1277
  %v1310 = vunpack.c.l.b16 %v1278
  %v1311 = vunpack.c.l.b16 %v1279
  %v1312 = vunpack.c.l.b16 %v1280
  %v1313 = vunpack.c.l.b16 %v1281
  %v1314 = vunpack.c.l.b16 %v1282
  %v1315 = vunpack.c.l.b16 %v1283
  %v1316 = vunpack.c.l.b16 %v1284
  %v1317 = vpack.c.b16 %v1302, %v1301
  %v1318 = vpack.c.b16 %v1304, %v1303
  %v1319 = vpack.c.b16 %v1306, %v1305
  %v1320 = vpack.c.b16 %v1308, %v1307
  %v1321 = vpack.c.b16 %v1310, %v1309
  %v1322 = vpack.c.b16 %v1312, %v1311
  %v1323 = vpack.c.b16 %v1314, %v1313
  %v1324 = vpack.c.b16 %v1316, %v1315
  %1333 = vmatprep.subr.bf16.mxu0 0
  %1334 = vmatpush1.bf16.msra.mxu0 %v1324
  %1335 = vmatprep.subr.bf16.mxu0 0
  %1336 = vmatpush1.bf16.msra.mxu0 %v1323
  %1337 = vmatprep.subr.bf16.mxu0 0
  %1338 = vmatpush1.bf16.msra.mxu0 %v1322
  %1339 = vmatprep.subr.bf16.mxu0 0
  %1340 = vmatpush1.bf16.msra.mxu0 %v1321
  %1341 = vmatprep.subr.bf16.mxu0 0
  %1342 = vmatpush1.bf16.msra.mxu0 %v1320
  %1343 = vmatprep.subr.bf16.mxu0 0
  %1344 = vmatpush1.bf16.msra.mxu0 %v1319
  %1345 = vmatprep.subr.bf16.mxu0 0
  %1346 = vmatpush1.bf16.msra.mxu0 %v1318
  %1347 = vmatprep.subr.bf16.mxu0 0
  %1348 = vmatpush1.bf16.msra.mxu0 %v1317
  %1349 = vmatprep.subr.bf16.mxu0 0
  %1350 = vmatpush2.bf16.msra.mxu0 0
  %1351 = vmatprep.subr.bf16.mxu0 0
  %1352 = vmatpush2.bf16.msra.mxu0 0
  %1353 = vmatprep.subr.bf16.mxu0 0
  %1354 = vmatpush2.bf16.msra.mxu0 0
  %1355 = vmatprep.subr.bf16.mxu0 0
  %1356 = vmatpush2.bf16.msra.mxu0 0
  %1357 = vmatprep.subr.bf16.mxu0 0
  %1358 = vmatpush2.bf16.msra.mxu0 0
  %1359 = vmatprep.subr.bf16.mxu0 0
  %1360 = vmatpush2.bf16.msra.mxu0 0
  %1361 = vmatprep.subr.bf16.mxu0 0
  %1362 = vmatpush2.bf16.msra.mxu0 0
  %1363 = vmatprep.subr.bf16.mxu0 0
  %1364 = vmatpush2.bf16.msra.mxu0 0
  %1365 = vmatprep.mubr.bf16.mxu0 0
  %1366 = vmatmul.mubr.bf16.gmra.mxu0 %v1265
  %v1367 = vpop.f32.mrf.mxu0
  %v1368 = vadd.f32 0.0, %v1367
  %v1369 = vpop.f32.mrf.mxu0
  %v1370 = vpop.f32.mrf.mxu0
  %v1371 = vadd.f32 0.0, %v1370
  %v1372 = vpop.f32.mrf.mxu0
  %1373 = vmatprep.mubr.bf16.mxu0 0
  %1374 = vmatmul.mubr.bf16.gmra.mxu0 %v1267
  %v1375 = vpop.f32.mrf.mxu0
  %v1376 = vadd.f32 0.0, %v1375
  %v1377 = vpop.f32.mrf.mxu0
  %v1378 = vpop.f32.mrf.mxu0
  %v1379 = vadd.f32 0.0, %v1378
  %v1380 = vpop.f32.mrf.mxu0
  %1381 = vdwg.mxu0
  %v1382 = vadd.f32 %v1193, %v1368
  %v1383 = vadd.f32 %v1194, %v1371
  %v1384 = vadd.f32 %v1195, %v1376
  %v1385 = vadd.f32 %v1196, %v1379
  %v1386 = vld [vmem:[%s3] sm:$0xf]
  %v1387 = vld [vmem:[%s3 + $0x4] sm:$0xf]
  %v1388 = vld [vmem:[%s3 + $0x8] sm:$0xf]
  %v1389 = vld [vmem:[%s3 + $0xc] sm:$0xf]
  %v1390 = vld [vmem:[%s3 + $0x10] sm:$0xf]
  %v1391 = vld [vmem:[%s3 + $0x14] sm:$0xf]
  %v1392 = vld [vmem:[%s3 + $0x18] sm:$0xf]
  %v1393 = vld [vmem:[%s3 + $0x1c] sm:$0xf]
  %v1394 = vld [vmem:[%s3 + $0x20] sm:$0xf]
  %v1395 = vld [vmem:[%s3 + $0x24] sm:$0xf]
  %v1396 = vld [vmem:[%s3 + $0x28] sm:$0xf]
  %v1397 = vld [vmem:[%s3 + $0x2c] sm:$0xf]
  %v1398 = vld [vmem:[%s3 + $0x30] sm:$0xf]
  %v1399 = vld [vmem:[%s3 + $0x34] sm:$0xf]
  %v1400 = vld [vmem:[%s3 + $0x38] sm:$0xf]
  %v1401 = vld [vmem:[%s3 + $0x3c] sm:$0xf]
  %vm1402 = vcmask 1045504
  %v1403 = vrot.slane %v1200, 2
  %v1404 = vrot.slane %v1201, 2
  %v1405 = vsel %vm1402, %v1403, %v1404
  %v1406 = vrot.slane %v625, 2
  %v1407 = vrot.slane %v749, 2
  %v1408 = vsel %vm1402, %v1406, %v1407
  %v1411 = vrot.slane %v1234, 2
  %v1412 = vrot.slane %v1235, 2
  %v1413 = vsel %vm1402, %v1411, %v1412
  %v1414 = vrot.slane %v627, 2
  %v1415 = vrot.slane %v766, 2
  %v1416 = vsel %vm1402, %v1414, %v1415
  %s1419 = scalar_lea.vmem %s4, 448
  %v1420 = vld [vmem:[%s1419] sm:$0xf]
  %v1421 = vld [vmem:[%s1419 + $0x4] sm:$0xf]
  %v1422 = vld [vmem:[%s1419 + $0x8] sm:$0xf]
  %v1423 = vld [vmem:[%s1419 + $0xc] sm:$0xf]
  %v1424 = vld [vmem:[%s1419 + $0x10] sm:$0xf]
  %v1425 = vld [vmem:[%s1419 + $0x14] sm:$0xf]
  %v1426 = vld [vmem:[%s1419 + $0x18] sm:$0xf]
  %v1427 = vld [vmem:[%s1419 + $0x1c] sm:$0xf]
  %v1428 = vld [vmem:[%s1419 + $0x20] sm:$0xf]
  %v1429 = vld [vmem:[%s1419 + $0x24] sm:$0xf]
  %v1430 = vld [vmem:[%s1419 + $0x28] sm:$0xf]
  %v1431 = vld [vmem:[%s1419 + $0x2c] sm:$0xf]
  %v1432 = vld [vmem:[%s1419 + $0x30] sm:$0xf]
  %v1433 = vld [vmem:[%s1419 + $0x34] sm:$0xf]
  %v1434 = vld [vmem:[%s1419 + $0x38] sm:$0xf]
  %v1435 = vld [vmem:[%s1419 + $0x3c] sm:$0xf]
  %v1452 = vunpack.c.l.b16 %v1420
  %v1453 = vunpack.c.l.b16 %v1421
  %v1454 = vunpack.c.l.b16 %v1422
  %v1455 = vunpack.c.l.b16 %v1423
  %v1456 = vunpack.c.l.b16 %v1424
  %v1457 = vunpack.c.l.b16 %v1425
  %v1458 = vunpack.c.l.b16 %v1426
  %v1459 = vunpack.c.l.b16 %v1427
  %v1460 = vunpack.c.l.b16 %v1428
  %v1461 = vunpack.c.l.b16 %v1429
  %v1462 = vunpack.c.l.b16 %v1430
  %v1463 = vunpack.c.l.b16 %v1431
  %v1464 = vunpack.c.l.b16 %v1432
  %v1465 = vunpack.c.l.b16 %v1433
  %v1466 = vunpack.c.l.b16 %v1434
  %v1467 = vunpack.c.l.b16 %v1435
  %v1468 = vpack.c.b16 %v1453, %v1452
  %v1469 = vpack.c.b16 %v1455, %v1454
  %v1470 = vpack.c.b16 %v1457, %v1456
  %v1471 = vpack.c.b16 %v1459, %v1458
  %v1472 = vpack.c.b16 %v1461, %v1460
  %v1473 = vpack.c.b16 %v1463, %v1462
  %v1474 = vpack.c.b16 %v1465, %v1464
  %v1475 = vpack.c.b16 %v1467, %v1466
  %1484 = vmatprep.subr.bf16.mxu0 0
  %1485 = vmatpush1.bf16.msra.mxu0 %v1475
  %1486 = vmatprep.subr.bf16.mxu0 0
  %1487 = vmatpush1.bf16.msra.mxu0 %v1474
  %1488 = vmatprep.subr.bf16.mxu0 0
  %1489 = vmatpush1.bf16.msra.mxu0 %v1473
  %1490 = vmatprep.subr.bf16.mxu0 0
  %1491 = vmatpush1.bf16.msra.mxu0 %v1472
  %1492 = vmatprep.subr.bf16.mxu0 0
  %1493 = vmatpush1.bf16.msra.mxu0 %v1471
  %1494 = vmatprep.subr.bf16.mxu0 0
  %1495 = vmatpush1.bf16.msra.mxu0 %v1470
  %1496 = vmatprep.subr.bf16.mxu0 0
  %1497 = vmatpush1.bf16.msra.mxu0 %v1469
  %1498 = vmatprep.subr.bf16.mxu0 0
  %1499 = vmatpush1.bf16.msra.mxu0 %v1468
  %1500 = vmatprep.subr.bf16.mxu0 0
  %1501 = vmatpush2.bf16.msra.mxu0 0
  %1502 = vmatprep.subr.bf16.mxu0 0
  %1503 = vmatpush2.bf16.msra.mxu0 0
  %1504 = vmatprep.subr.bf16.mxu0 0
  %1505 = vmatpush2.bf16.msra.mxu0 0
  %1506 = vmatprep.subr.bf16.mxu0 0
  %1507 = vmatpush2.bf16.msra.mxu0 0
  %1508 = vmatprep.subr.bf16.mxu0 0
  %1509 = vmatpush2.bf16.msra.mxu0 0
  %1510 = vmatprep.subr.bf16.mxu0 0
  %1511 = vmatpush2.bf16.msra.mxu0 0
  %1512 = vmatprep.subr.bf16.mxu0 0
  %1513 = vmatpush2.bf16.msra.mxu0 0
  %1514 = vmatprep.subr.bf16.mxu0 0
  %1515 = vmatpush2.bf16.msra.mxu0 0
  %1516 = vmatprep.mubr.bf16.mxu0 0
  %1517 = vmatmul.mubr.bf16.gmra.mxu0 %v1408
  %v1518 = vpop.f32.mrf.mxu0
  %v1519 = vadd.f32 0.0, %v1518
  %v1520 = vpop.f32.mrf.mxu0
  %v1521 = vpop.f32.mrf.mxu0
  %v1522 = vadd.f32 0.0, %v1521
  %v1523 = vpop.f32.mrf.mxu0
  %1524 = vmatprep.mubr.bf16.mxu0 0
  %1525 = vmatmul.mubr.bf16.gmra.mxu0 %v1416
  %v1526 = vpop.f32.mrf.mxu0
  %v1527 = vadd.f32 0.0, %v1526
  %v1528 = vpop.f32.mrf.mxu0
  %v1529 = vpop.f32.mrf.mxu0
  %v1530 = vadd.f32 0.0, %v1529
  %v1531 = vpop.f32.mrf.mxu0
  %1532 = vdwg.mxu0
  %v1533 = vadd.f32 %v1382, %v1519
  %v1534 = vadd.f32 %v1383, %v1522
  %v1535 = vadd.f32 %v1384, %v1527
  %v1536 = vadd.f32 %v1385, %v1530
  %s1537 = scalar_lea.vmem %s3, 64
  %v1538 = vld [vmem:[%s1537] sm:$0xf]
  %v1539 = vld [vmem:[%s1537 + $0x4] sm:$0xf]
  %v1540 = vld [vmem:[%s1537 + $0x8] sm:$0xf]
  %v1541 = vld [vmem:[%s1537 + $0xc] sm:$0xf]
  %v1542 = vld [vmem:[%s1537 + $0x10] sm:$0xf]
  %v1543 = vld [vmem:[%s1537 + $0x14] sm:$0xf]
  %v1544 = vld [vmem:[%s1537 + $0x18] sm:$0xf]
  %v1545 = vld [vmem:[%s1537 + $0x1c] sm:$0xf]
  %v1546 = vld [vmem:[%s1537 + $0x20] sm:$0xf]
  %v1547 = vld [vmem:[%s1537 + $0x24] sm:$0xf]
  %v1548 = vld [vmem:[%s1537 + $0x28] sm:$0xf]
  %v1549 = vld [vmem:[%s1537 + $0x2c] sm:$0xf]
  %v1550 = vld [vmem:[%s1537 + $0x30] sm:$0xf]
  %v1551 = vld [vmem:[%s1537 + $0x34] sm:$0xf]
  %v1552 = vld [vmem:[%s1537 + $0x38] sm:$0xf]
  %v1553 = vld [vmem:[%s1537 + $0x3c] sm:$0xf]
  %v1570 = vunpack.c.l.b16 %v1538
  %v1571 = vunpack.c.l.b16 %v1539
  %v1572 = vunpack.c.l.b16 %v1540
  %v1573 = vunpack.c.l.b16 %v1541
  %v1574 = vunpack.c.l.b16 %v1542
  %v1575 = vunpack.c.l.b16 %v1543
  %v1576 = vunpack.c.l.b16 %v1544
  %v1577 = vunpack.c.l.b16 %v1545
  %v1578 = vunpack.c.l.b16 %v1546
  %v1579 = vunpack.c.l.b16 %v1547
  %v1580 = vunpack.c.l.b16 %v1548
  %v1581 = vunpack.c.l.b16 %v1549
  %v1582 = vunpack.c.l.b16 %v1550
  %v1583 = vunpack.c.l.b16 %v1551
  %v1584 = vunpack.c.l.b16 %v1552
  %v1585 = vunpack.c.l.b16 %v1553
  %v1586 = vpack.c.b16 %v1571, %v1570
  %v1587 = vpack.c.b16 %v1573, %v1572
  %v1588 = vpack.c.b16 %v1575, %v1574
  %v1589 = vpack.c.b16 %v1577, %v1576
  %v1590 = vpack.c.b16 %v1579, %v1578
  %v1591 = vpack.c.b16 %v1581, %v1580
  %v1592 = vpack.c.b16 %v1583, %v1582
  %v1593 = vpack.c.b16 %v1585, %v1584
  %1602 = vmatprep.subr.bf16.mxu0 0
  %1603 = vmatpush1.bf16.msra.mxu0 %v1593
  %1604 = vmatprep.subr.bf16.mxu0 0
  %1605 = vmatpush1.bf16.msra.mxu0 %v1592
  %1606 = vmatprep.subr.bf16.mxu0 0
  %1607 = vmatpush1.bf16.msra.mxu0 %v1591
  %1608 = vmatprep.subr.bf16.mxu0 0
  %1609 = vmatpush1.bf16.msra.mxu0 %v1590
  %1610 = vmatprep.subr.bf16.mxu0 0
  %1611 = vmatpush1.bf16.msra.mxu0 %v1589
  %1612 = vmatprep.subr.bf16.mxu0 0
  %1613 = vmatpush1.bf16.msra.mxu0 %v1588
  %1614 = vmatprep.subr.bf16.mxu0 0
  %1615 = vmatpush1.bf16.msra.mxu0 %v1587
  %1616 = vmatprep.subr.bf16.mxu0 0
  %1617 = vmatpush1.bf16.msra.mxu0 %v1586
  %1618 = vmatprep.subr.bf16.mxu0 0
  %1619 = vmatpush2.bf16.msra.mxu0 0
  %1620 = vmatprep.subr.bf16.mxu0 0
  %1621 = vmatpush2.bf16.msra.mxu0 0
  %1622 = vmatprep.subr.bf16.mxu0 0
  %1623 = vmatpush2.bf16.msra.mxu0 0
  %1624 = vmatprep.subr.bf16.mxu0 0
  %1625 = vmatpush2.bf16.msra.mxu0 0
  %1626 = vmatprep.subr.bf16.mxu0 0
  %1627 = vmatpush2.bf16.msra.mxu0 0
  %1628 = vmatprep.subr.bf16.mxu0 0
  %1629 = vmatpush2.bf16.msra.mxu0 0
  %1630 = vmatprep.subr.bf16.mxu0 0
  %1631 = vmatpush2.bf16.msra.mxu0 0
  %1632 = vmatprep.subr.bf16.mxu0 0
  %1633 = vmatpush2.bf16.msra.mxu0 0
  %1634 = vmatprep.mubr.bf16.mxu0 0
  %1635 = vmatmul.mubr.bf16.gmra.mxu0 %v1405
  %v1636 = vpop.f32.mrf.mxu0
  %v1637 = vadd.f32 0.0, %v1636
  %v1638 = vpop.f32.mrf.mxu0
  %v1639 = vpop.f32.mrf.mxu0
  %v1640 = vadd.f32 0.0, %v1639
  %v1641 = vpop.f32.mrf.mxu0
  %1642 = vmatprep.mubr.bf16.mxu0 0
  %1643 = vmatmul.mubr.bf16.gmra.mxu0 %v1413
  %v1644 = vpop.f32.mrf.mxu0
  %v1645 = vadd.f32 0.0, %v1644
  %v1646 = vpop.f32.mrf.mxu0
  %v1647 = vpop.f32.mrf.mxu0
  %v1648 = vadd.f32 0.0, %v1647
  %v1649 = vpop.f32.mrf.mxu0
  %1650 = vdwg.mxu0
  %v1667 = vunpack.c.l.b16 %v1386
  %v1668 = vunpack.c.l.b16 %v1387
  %v1669 = vunpack.c.l.b16 %v1388
  %v1670 = vunpack.c.l.b16 %v1389
  %v1671 = vunpack.c.l.b16 %v1390
  %v1672 = vunpack.c.l.b16 %v1391
  %v1673 = vunpack.c.l.b16 %v1392
  %v1674 = vunpack.c.l.b16 %v1393
  %v1675 = vunpack.c.l.b16 %v1394
  %v1676 = vunpack.c.l.b16 %v1395
  %v1677 = vunpack.c.l.b16 %v1396
  %v1678 = vunpack.c.l.b16 %v1397
  %v1679 = vunpack.c.l.b16 %v1398
  %v1680 = vunpack.c.l.b16 %v1399
  %v1681 = vunpack.c.l.b16 %v1400
  %v1682 = vunpack.c.l.b16 %v1401
  %v1683 = vpack.c.b16 %v1668, %v1667
  %v1684 = vpack.c.b16 %v1670, %v1669
  %v1685 = vpack.c.b16 %v1672, %v1671
  %v1686 = vpack.c.b16 %v1674, %v1673
  %v1687 = vpack.c.b16 %v1676, %v1675
  %v1688 = vpack.c.b16 %v1678, %v1677
  %v1689 = vpack.c.b16 %v1680, %v1679
  %v1690 = vpack.c.b16 %v1682, %v1681
  %1699 = vmatprep.subr.bf16.mxu0 0
  %1700 = vmatpush1.bf16.msra.mxu0 %v1690
  %1701 = vmatprep.subr.bf16.mxu0 0
  %1702 = vmatpush1.bf16.msra.mxu0 %v1689
  %1703 = vmatprep.subr.bf16.mxu0 0
  %1704 = vmatpush1.bf16.msra.mxu0 %v1688
  %1705 = vmatprep.subr.bf16.mxu0 0
  %1706 = vmatpush1.bf16.msra.mxu0 %v1687
  %1707 = vmatprep.subr.bf16.mxu0 0
  %1708 = vmatpush1.bf16.msra.mxu0 %v1686
  %1709 = vmatprep.subr.bf16.mxu0 0
  %1710 = vmatpush1.bf16.msra.mxu0 %v1685
  %1711 = vmatprep.subr.bf16.mxu0 0
  %1712 = vmatpush1.bf16.msra.mxu0 %v1684
  %1713 = vmatprep.subr.bf16.mxu0 0
  %1714 = vmatpush1.bf16.msra.mxu0 %v1683
  %1715 = vmatprep.subr.bf16.mxu0 0
  %1716 = vmatpush2.bf16.msra.mxu0 0
  %1717 = vmatprep.subr.bf16.mxu0 0
  %1718 = vmatpush2.bf16.msra.mxu0 0
  %1719 = vmatprep.subr.bf16.mxu0 0
  %1720 = vmatpush2.bf16.msra.mxu0 0
  %1721 = vmatprep.subr.bf16.mxu0 0
  %1722 = vmatpush2.bf16.msra.mxu0 0
  %1723 = vmatprep.subr.bf16.mxu0 0
  %1724 = vmatpush2.bf16.msra.mxu0 0
  %1725 = vmatprep.subr.bf16.mxu0 0
  %1726 = vmatpush2.bf16.msra.mxu0 0
  %1727 = vmatprep.subr.bf16.mxu0 0
  %1728 = vmatpush2.bf16.msra.mxu0 0
  %1729 = vmatprep.subr.bf16.mxu0 0
  %1730 = vmatpush2.bf16.msra.mxu0 0
  %1731 = vmatprep.mubr.bf16.mxu0 0
  %1732 = vmatmul.mubr.bf16.gmra.mxu0 %v1264
  %v1733 = vpop.f32.mrf.mxu0
  %v1734 = vadd.f32 %v1637, %v1733
  %v1735 = vpop.f32.mrf.mxu0
  %v1736 = vpop.f32.mrf.mxu0
  %v1737 = vadd.f32 %v1640, %v1736
  %v1738 = vpop.f32.mrf.mxu0
  %1739 = vmatprep.mubr.bf16.mxu0 0
  %1740 = vmatmul.mubr.bf16.gmra.mxu0 %v1266
  %v1741 = vpop.f32.mrf.mxu0
  %v1742 = vadd.f32 %v1645, %v1741
  %v1743 = vpop.f32.mrf.mxu0
  %v1744 = vpop.f32.mrf.mxu0
  %v1745 = vadd.f32 %v1648, %v1744
  %v1746 = vpop.f32.mrf.mxu0
  %1747 = vdwg.mxu0
  %vm1748 = vsmask.f32 5376
  %v1749 = vrot.slane %v1204, 2
  %v1750 = vrot.slane %v1207, 3
  %v1751 = vor.u32 %v1749, %v1750
  %v1752 = vrot.slane %v1212, 2
  %v1753 = vrot.slane %v1215, 3
  %v1754 = vor.u32 %v1752, %v1753
  %v1755 = vsel %vm1748, %v1751, %v1754
  %v1756 = vrot.slane %v752, 2
  %v1757 = vrot.slane %v754, 3
  %v1758 = vor.u32 %v1756, %v1757
  %v1759 = vrot.slane %v1223, 2
  %v1760 = vrot.slane %v759, 3
  %v1761 = vor.u32 %v1759, %v1760
  %v1762 = vsel %vm1748, %v1758, %v1761
  %v1765 = vrot.slane %v1237, 2
  %v1766 = vrot.slane %v1240, 3
  %v1767 = vor.u32 %v1765, %v1766
  %v1768 = vrot.slane %v1245, 2
  %v1769 = vrot.slane %v1248, 3
  %v1770 = vor.u32 %v1768, %v1769
  %v1771 = vsel %vm1748, %v1767, %v1770
  %v1772 = vrot.slane %v768, 2
  %v1773 = vrot.slane %v770, 3
  %v1774 = vor.u32 %v1772, %v1773
  %v1775 = vrot.slane %v1256, 2
  %v1776 = vrot.slane %v775, 3
  %v1777 = vor.u32 %v1775, %v1776
  %v1778 = vsel %vm1748, %v1774, %v1777
  %v1781 = vsel %vm802, %v1755, 0
  %v1782 = vsel %vm802, %v1762, 0
  %v1783 = vsel %vm803, %v1771, 0
  %v1784 = vsel %vm803, %v1778, 0
  %s1785 = scalar_lea.vmem %s4, 512
  %v1786 = vld [vmem:[%s1785] sm:$0xf]
  %v1787 = vld [vmem:[%s1785 + $0x4] sm:$0xf]
  %v1788 = vld [vmem:[%s1785 + $0x8] sm:$0xf]
  %v1789 = vld [vmem:[%s1785 + $0xc] sm:$0xf]
  %v1790 = vld [vmem:[%s1785 + $0x10] sm:$0xf]
  %v1791 = vld [vmem:[%s1785 + $0x14] sm:$0xf]
  %v1792 = vld [vmem:[%s1785 + $0x18] sm:$0xf]
  %v1793 = vld [vmem:[%s1785 + $0x1c] sm:$0xf]
  %v1794 = vld [vmem:[%s1785 + $0x20] sm:$0xf]
  %v1795 = vld [vmem:[%s1785 + $0x24] sm:$0xf]
  %v1796 = vld [vmem:[%s1785 + $0x28] sm:$0xf]
  %v1797 = vld [vmem:[%s1785 + $0x2c] sm:$0xf]
  %v1798 = vld [vmem:[%s1785 + $0x30] sm:$0xf]
  %v1799 = vld [vmem:[%s1785 + $0x34] sm:$0xf]
  %v1800 = vld [vmem:[%s1785 + $0x38] sm:$0xf]
  %v1801 = vld [vmem:[%s1785 + $0x3c] sm:$0xf]
  %v1818 = vunpack.c.l.b16 %v1786
  %v1819 = vunpack.c.l.b16 %v1787
  %v1820 = vunpack.c.l.b16 %v1788
  %v1821 = vunpack.c.l.b16 %v1789
  %v1822 = vunpack.c.l.b16 %v1790
  %v1823 = vunpack.c.l.b16 %v1791
  %v1824 = vunpack.c.l.b16 %v1792
  %v1825 = vunpack.c.l.b16 %v1793
  %v1826 = vunpack.c.l.b16 %v1794
  %v1827 = vunpack.c.l.b16 %v1795
  %v1828 = vunpack.c.l.b16 %v1796
  %v1829 = vunpack.c.l.b16 %v1797
  %v1830 = vunpack.c.l.b16 %v1798
  %v1831 = vunpack.c.l.b16 %v1799
  %v1832 = vunpack.c.l.b16 %v1800
  %v1833 = vunpack.c.l.b16 %v1801
  %v1834 = vpack.c.b16 %v1819, %v1818
  %v1835 = vpack.c.b16 %v1821, %v1820
  %v1836 = vpack.c.b16 %v1823, %v1822
  %v1837 = vpack.c.b16 %v1825, %v1824
  %v1838 = vpack.c.b16 %v1827, %v1826
  %v1839 = vpack.c.b16 %v1829, %v1828
  %v1840 = vpack.c.b16 %v1831, %v1830
  %v1841 = vpack.c.b16 %v1833, %v1832
  %1850 = vmatprep.subr.bf16.mxu0 0
  %1851 = vmatpush1.bf16.msra.mxu0 %v1841
  %1852 = vmatprep.subr.bf16.mxu0 0
  %1853 = vmatpush1.bf16.msra.mxu0 %v1840
  %1854 = vmatprep.subr.bf16.mxu0 0
  %1855 = vmatpush1.bf16.msra.mxu0 %v1839
  %1856 = vmatprep.subr.bf16.mxu0 0
  %1857 = vmatpush1.bf16.msra.mxu0 %v1838
  %1858 = vmatprep.subr.bf16.mxu0 0
  %1859 = vmatpush1.bf16.msra.mxu0 %v1837
  %1860 = vmatprep.subr.bf16.mxu0 0
  %1861 = vmatpush1.bf16.msra.mxu0 %v1836
  %1862 = vmatprep.subr.bf16.mxu0 0
  %1863 = vmatpush1.bf16.msra.mxu0 %v1835
  %1864 = vmatprep.subr.bf16.mxu0 0
  %1865 = vmatpush1.bf16.msra.mxu0 %v1834
  %1866 = vmatprep.subr.bf16.mxu0 0
  %1867 = vmatpush2.bf16.msra.mxu0 0
  %1868 = vmatprep.subr.bf16.mxu0 0
  %1869 = vmatpush2.bf16.msra.mxu0 0
  %1870 = vmatprep.subr.bf16.mxu0 0
  %1871 = vmatpush2.bf16.msra.mxu0 0
  %1872 = vmatprep.subr.bf16.mxu0 0
  %1873 = vmatpush2.bf16.msra.mxu0 0
  %1874 = vmatprep.subr.bf16.mxu0 0
  %1875 = vmatpush2.bf16.msra.mxu0 0
  %1876 = vmatprep.subr.bf16.mxu0 0
  %1877 = vmatpush2.bf16.msra.mxu0 0
  %1878 = vmatprep.subr.bf16.mxu0 0
  %1879 = vmatpush2.bf16.msra.mxu0 0
  %1880 = vmatprep.subr.bf16.mxu0 0
  %1881 = vmatpush2.bf16.msra.mxu0 0
  %1882 = vmatprep.mubr.bf16.mxu0 0
  %1883 = vmatmul.mubr.bf16.gmra.mxu0 %v1782
  %v1884 = vpop.f32.mrf.mxu0
  %v1885 = vadd.f32 0.0, %v1884
  %v1886 = vpop.f32.mrf.mxu0
  %v1887 = vpop.f32.mrf.mxu0
  %v1888 = vadd.f32 0.0, %v1887
  %v1889 = vpop.f32.mrf.mxu0
  %1890 = vmatprep.mubr.bf16.mxu0 0
  %1891 = vmatmul.mubr.bf16.gmra.mxu0 %v1784
  %v1892 = vpop.f32.mrf.mxu0
  %v1893 = vadd.f32 0.0, %v1892
  %v1894 = vpop.f32.mrf.mxu0
  %v1895 = vpop.f32.mrf.mxu0
  %v1896 = vadd.f32 0.0, %v1895
  %v1897 = vpop.f32.mrf.mxu0
  %1898 = vdwg.mxu0
  %v1899 = vadd.f32 %v1533, %v1885
  %v1900 = vadd.f32 %v1534, %v1888
  %v1901 = vadd.f32 %v1535, %v1893
  %v1902 = vadd.f32 %v1536, %v1896
  %s1903 = scalar_lea.vmem %s3, 128
  %v1904 = vld [vmem:[%s1903] sm:$0xf]
  %v1905 = vld [vmem:[%s1903 + $0x4] sm:$0xf]
  %v1906 = vld [vmem:[%s1903 + $0x8] sm:$0xf]
  %v1907 = vld [vmem:[%s1903 + $0xc] sm:$0xf]
  %v1908 = vld [vmem:[%s1903 + $0x10] sm:$0xf]
  %v1909 = vld [vmem:[%s1903 + $0x14] sm:$0xf]
  %v1910 = vld [vmem:[%s1903 + $0x18] sm:$0xf]
  %v1911 = vld [vmem:[%s1903 + $0x1c] sm:$0xf]
  %v1912 = vld [vmem:[%s1903 + $0x20] sm:$0xf]
  %v1913 = vld [vmem:[%s1903 + $0x24] sm:$0xf]
  %v1914 = vld [vmem:[%s1903 + $0x28] sm:$0xf]
  %v1915 = vld [vmem:[%s1903 + $0x2c] sm:$0xf]
  %v1916 = vld [vmem:[%s1903 + $0x30] sm:$0xf]
  %v1917 = vld [vmem:[%s1903 + $0x34] sm:$0xf]
  %v1918 = vld [vmem:[%s1903 + $0x38] sm:$0xf]
  %v1919 = vld [vmem:[%s1903 + $0x3c] sm:$0xf]
  %v1936 = vunpack.c.l.b16 %v1904
  %v1937 = vunpack.c.l.b16 %v1905
  %v1938 = vunpack.c.l.b16 %v1906
  %v1939 = vunpack.c.l.b16 %v1907
  %v1940 = vunpack.c.l.b16 %v1908
  %v1941 = vunpack.c.l.b16 %v1909
  %v1942 = vunpack.c.l.b16 %v1910
  %v1943 = vunpack.c.l.b16 %v1911
  %v1944 = vunpack.c.l.b16 %v1912
  %v1945 = vunpack.c.l.b16 %v1913
  %v1946 = vunpack.c.l.b16 %v1914
  %v1947 = vunpack.c.l.b16 %v1915
  %v1948 = vunpack.c.l.b16 %v1916
  %v1949 = vunpack.c.l.b16 %v1917
  %v1950 = vunpack.c.l.b16 %v1918
  %v1951 = vunpack.c.l.b16 %v1919
  %v1952 = vpack.c.b16 %v1937, %v1936
  %v1953 = vpack.c.b16 %v1939, %v1938
  %v1954 = vpack.c.b16 %v1941, %v1940
  %v1955 = vpack.c.b16 %v1943, %v1942
  %v1956 = vpack.c.b16 %v1945, %v1944
  %v1957 = vpack.c.b16 %v1947, %v1946
  %v1958 = vpack.c.b16 %v1949, %v1948
  %v1959 = vpack.c.b16 %v1951, %v1950
  %1968 = vmatprep.subr.bf16.mxu0 0
  %1969 = vmatpush1.bf16.msra.mxu0 %v1959
  %1970 = vmatprep.subr.bf16.mxu0 0
  %1971 = vmatpush1.bf16.msra.mxu0 %v1958
  %1972 = vmatprep.subr.bf16.mxu0 0
  %1973 = vmatpush1.bf16.msra.mxu0 %v1957
  %1974 = vmatprep.subr.bf16.mxu0 0
  %1975 = vmatpush1.bf16.msra.mxu0 %v1956
  %1976 = vmatprep.subr.bf16.mxu0 0
  %1977 = vmatpush1.bf16.msra.mxu0 %v1955
  %1978 = vmatprep.subr.bf16.mxu0 0
  %1979 = vmatpush1.bf16.msra.mxu0 %v1954
  %1980 = vmatprep.subr.bf16.mxu0 0
  %1981 = vmatpush1.bf16.msra.mxu0 %v1953
  %1982 = vmatprep.subr.bf16.mxu0 0
  %1983 = vmatpush1.bf16.msra.mxu0 %v1952
  %1984 = vmatprep.subr.bf16.mxu0 0
  %1985 = vmatpush2.bf16.msra.mxu0 0
  %1986 = vmatprep.subr.bf16.mxu0 0
  %1987 = vmatpush2.bf16.msra.mxu0 0
  %1988 = vmatprep.subr.bf16.mxu0 0
  %1989 = vmatpush2.bf16.msra.mxu0 0
  %1990 = vmatprep.subr.bf16.mxu0 0
  %1991 = vmatpush2.bf16.msra.mxu0 0
  %1992 = vmatprep.subr.bf16.mxu0 0
  %1993 = vmatpush2.bf16.msra.mxu0 0
  %1994 = vmatprep.subr.bf16.mxu0 0
  %1995 = vmatpush2.bf16.msra.mxu0 0
  %1996 = vmatprep.subr.bf16.mxu0 0
  %1997 = vmatpush2.bf16.msra.mxu0 0
  %1998 = vmatprep.subr.bf16.mxu0 0
  %1999 = vmatpush2.bf16.msra.mxu0 0
  %2000 = vmatprep.mubr.bf16.mxu0 0
  %2001 = vmatmul.mubr.bf16.gmra.mxu0 %v1781
  %v2002 = vpop.f32.mrf.mxu0
  %v2003 = vadd.f32 0.0, %v2002
  %v2004 = vpop.f32.mrf.mxu0
  %v2005 = vpop.f32.mrf.mxu0
  %v2006 = vadd.f32 0.0, %v2005
  %v2007 = vpop.f32.mrf.mxu0
  %2008 = vmatprep.mubr.bf16.mxu0 0
  %2009 = vmatmul.mubr.bf16.gmra.mxu0 %v1783
  %v2010 = vpop.f32.mrf.mxu0
  %v2011 = vadd.f32 0.0, %v2010
  %v2012 = vpop.f32.mrf.mxu0
  %v2013 = vpop.f32.mrf.mxu0
  %v2014 = vadd.f32 0.0, %v2013
  %v2015 = vpop.f32.mrf.mxu0
  %2016 = vdwg.mxu0
  %v2017 = vadd.f32 %v1734, %v2003
  %v2018 = vadd.f32 %v1737, %v2006
  %v2019 = vadd.f32 %v1742, %v2011
  %v2020 = vadd.f32 %v1745, %v2014
  %v2021 = vrot.slane %v625, 3
  %v2022 = vrot.slane %v749, 3
  %v2023 = vsel %vm292, %v2021, %v2022
  %v2025 = vrot.slane %v627, 3
  %v2026 = vrot.slane %v766, 3
  %v2027 = vsel %vm292, %v2025, %v2026
  %v2029 = vsel %vm955, %v2023, 0
  %v2030 = vsel %vm956, %v2027, 0
  %s2031 = scalar_lea.vmem %s4, 576
  %v2032 = vld [vmem:[%s2031] sm:$0xf]
  %v2033 = vld [vmem:[%s2031 + $0x4] sm:$0xf]
  %v2034 = vld [vmem:[%s2031 + $0x8] sm:$0xf]
  %v2035 = vld [vmem:[%s2031 + $0xc] sm:$0xf]
  %v2036 = vld [vmem:[%s2031 + $0x10] sm:$0xf]
  %v2037 = vld [vmem:[%s2031 + $0x14] sm:$0xf]
  %v2038 = vld [vmem:[%s2031 + $0x18] sm:$0xf]
  %v2039 = vld [vmem:[%s2031 + $0x1c] sm:$0xf]
  %v2040 = vld [vmem:[%s2031 + $0x20] sm:$0xf]
  %v2041 = vld [vmem:[%s2031 + $0x24] sm:$0xf]
  %v2042 = vld [vmem:[%s2031 + $0x28] sm:$0xf]
  %v2043 = vld [vmem:[%s2031 + $0x2c] sm:$0xf]
  %v2044 = vld [vmem:[%s2031 + $0x30] sm:$0xf]
  %v2045 = vld [vmem:[%s2031 + $0x34] sm:$0xf]
  %v2046 = vld [vmem:[%s2031 + $0x38] sm:$0xf]
  %v2047 = vld [vmem:[%s2031 + $0x3c] sm:$0xf]
  %v2064 = vunpack.c.l.b16 %v2032
  %v2065 = vunpack.c.l.b16 %v2033
  %v2066 = vunpack.c.l.b16 %v2034
  %v2067 = vunpack.c.l.b16 %v2035
  %v2068 = vunpack.c.l.b16 %v2036
  %v2069 = vunpack.c.l.b16 %v2037
  %v2070 = vunpack.c.l.b16 %v2038
  %v2071 = vunpack.c.l.b16 %v2039
  %v2072 = vunpack.c.l.b16 %v2040
  %v2073 = vunpack.c.l.b16 %v2041
  %v2074 = vunpack.c.l.b16 %v2042
  %v2075 = vunpack.c.l.b16 %v2043
  %v2076 = vunpack.c.l.b16 %v2044
  %v2077 = vunpack.c.l.b16 %v2045
  %v2078 = vunpack.c.l.b16 %v2046
  %v2079 = vunpack.c.l.b16 %v2047
  %v2080 = vpack.c.b16 %v2065, %v2064
  %v2081 = vpack.c.b16 %v2067, %v2066
  %v2082 = vpack.c.b16 %v2069, %v2068
  %v2083 = vpack.c.b16 %v2071, %v2070
  %v2084 = vpack.c.b16 %v2073, %v2072
  %v2085 = vpack.c.b16 %v2075, %v2074
  %v2086 = vpack.c.b16 %v2077, %v2076
  %v2087 = vpack.c.b16 %v2079, %v2078
  %2096 = vmatprep.subr.bf16.mxu0 0
  %2097 = vmatpush1.bf16.msra.mxu0 %v2087
  %2098 = vmatprep.subr.bf16.mxu0 0
  %2099 = vmatpush1.bf16.msra.mxu0 %v2086
  %2100 = vmatprep.subr.bf16.mxu0 0
  %2101 = vmatpush1.bf16.msra.mxu0 %v2085
  %2102 = vmatprep.subr.bf16.mxu0 0
  %2103 = vmatpush1.bf16.msra.mxu0 %v2084
  %2104 = vmatprep.subr.bf16.mxu0 0
  %2105 = vmatpush1.bf16.msra.mxu0 %v2083
  %2106 = vmatprep.subr.bf16.mxu0 0
  %2107 = vmatpush1.bf16.msra.mxu0 %v2082
  %2108 = vmatprep.subr.bf16.mxu0 0
  %2109 = vmatpush1.bf16.msra.mxu0 %v2081
  %2110 = vmatprep.subr.bf16.mxu0 0
  %2111 = vmatpush1.bf16.msra.mxu0 %v2080
  %2112 = vmatprep.subr.bf16.mxu0 0
  %2113 = vmatpush2.bf16.msra.mxu0 0
  %2114 = vmatprep.subr.bf16.mxu0 0
  %2115 = vmatpush2.bf16.msra.mxu0 0
  %2116 = vmatprep.subr.bf16.mxu0 0
  %2117 = vmatpush2.bf16.msra.mxu0 0
  %2118 = vmatprep.subr.bf16.mxu0 0
  %2119 = vmatpush2.bf16.msra.mxu0 0
  %2120 = vmatprep.subr.bf16.mxu0 0
  %2121 = vmatpush2.bf16.msra.mxu0 0
  %2122 = vmatprep.subr.bf16.mxu0 0
  %2123 = vmatpush2.bf16.msra.mxu0 0
  %2124 = vmatprep.subr.bf16.mxu0 0
  %2125 = vmatpush2.bf16.msra.mxu0 0
  %2126 = vmatprep.subr.bf16.mxu0 0
  %2127 = vmatpush2.bf16.msra.mxu0 0
  %2128 = vmatprep.mubr.bf16.mxu0 0
  %2129 = vmatmul.mubr.bf16.gmra.mxu0 %v2029
  %v2130 = vpop.f32.mrf.mxu0
  %v2131 = vadd.f32 0.0, %v2130
  %v2132 = vpop.f32.mrf.mxu0
  %v2133 = vpop.f32.mrf.mxu0
  %v2134 = vadd.f32 0.0, %v2133
  %v2135 = vpop.f32.mrf.mxu0
  %2136 = vmatprep.mubr.bf16.mxu0 0
  %2137 = vmatmul.mubr.bf16.gmra.mxu0 %v2030
  %v2138 = vpop.f32.mrf.mxu0
  %v2139 = vadd.f32 0.0, %v2138
  %v2140 = vpop.f32.mrf.mxu0
  %v2141 = vpop.f32.mrf.mxu0
  %v2142 = vadd.f32 0.0, %v2141
  %v2143 = vpop.f32.mrf.mxu0
  %2144 = vdwg.mxu0
  %v2145 = vadd.f32 %v1899, %v2131
  %v2146 = vadd.f32 %v1900, %v2134
  %v2147 = vadd.f32 %v1901, %v2139
  %v2148 = vadd.f32 %v1902, %v2142
  %v2149 = vsel %vm331, %v2023, 0
  %v2150 = vsel %vm332, %v2027, 0
  %s2151 = scalar_lea.vmem %s4, 640
  %v2152 = vld [vmem:[%s2151] sm:$0xf]
  %v2153 = vld [vmem:[%s2151 + $0x4] sm:$0xf]
  %v2154 = vld [vmem:[%s2151 + $0x8] sm:$0xf]
  %v2155 = vld [vmem:[%s2151 + $0xc] sm:$0xf]
  %v2156 = vld [vmem:[%s2151 + $0x10] sm:$0xf]
  %v2157 = vld [vmem:[%s2151 + $0x14] sm:$0xf]
  %v2158 = vld [vmem:[%s2151 + $0x18] sm:$0xf]
  %v2159 = vld [vmem:[%s2151 + $0x1c] sm:$0xf]
  %v2160 = vld [vmem:[%s2151 + $0x20] sm:$0xf]
  %v2161 = vld [vmem:[%s2151 + $0x24] sm:$0xf]
  %v2162 = vld [vmem:[%s2151 + $0x28] sm:$0xf]
  %v2163 = vld [vmem:[%s2151 + $0x2c] sm:$0xf]
  %v2164 = vld [vmem:[%s2151 + $0x30] sm:$0xf]
  %v2165 = vld [vmem:[%s2151 + $0x34] sm:$0xf]
  %v2166 = vld [vmem:[%s2151 + $0x38] sm:$0xf]
  %v2167 = vld [vmem:[%s2151 + $0x3c] sm:$0xf]
  %v2184 = vunpack.c.l.b16 %v2152
  %v2185 = vunpack.c.l.b16 %v2153
  %v2186 = vunpack.c.l.b16 %v2154
  %v2187 = vunpack.c.l.b16 %v2155
  %v2188 = vunpack.c.l.b16 %v2156
  %v2189 = vunpack.c.l.b16 %v2157
  %v2190 = vunpack.c.l.b16 %v2158
  %v2191 = vunpack.c.l.b16 %v2159
  %v2192 = vunpack.c.l.b16 %v2160
  %v2193 = vunpack.c.l.b16 %v2161
  %v2194 = vunpack.c.l.b16 %v2162
  %v2195 = vunpack.c.l.b16 %v2163
  %v2196 = vunpack.c.l.b16 %v2164
  %v2197 = vunpack.c.l.b16 %v2165
  %v2198 = vunpack.c.l.b16 %v2166
  %v2199 = vunpack.c.l.b16 %v2167
  %v2200 = vpack.c.b16 %v2185, %v2184
  %v2201 = vpack.c.b16 %v2187, %v2186
  %v2202 = vpack.c.b16 %v2189, %v2188
  %v2203 = vpack.c.b16 %v2191, %v2190
  %v2204 = vpack.c.b16 %v2193, %v2192
  %v2205 = vpack.c.b16 %v2195, %v2194
  %v2206 = vpack.c.b16 %v2197, %v2196
  %v2207 = vpack.c.b16 %v2199, %v2198
  %2216 = vmatprep.subr.bf16.mxu0 0
  %2217 = vmatpush1.bf16.msra.mxu0 %v2207
  %2218 = vmatprep.subr.bf16.mxu0 0
  %2219 = vmatpush1.bf16.msra.mxu0 %v2206
  %2220 = vmatprep.subr.bf16.mxu0 0
  %2221 = vmatpush1.bf16.msra.mxu0 %v2205
  %2222 = vmatprep.subr.bf16.mxu0 0
  %2223 = vmatpush1.bf16.msra.mxu0 %v2204
  %2224 = vmatprep.subr.bf16.mxu0 0
  %2225 = vmatpush1.bf16.msra.mxu0 %v2203
  %2226 = vmatprep.subr.bf16.mxu0 0
  %2227 = vmatpush1.bf16.msra.mxu0 %v2202
  %2228 = vmatprep.subr.bf16.mxu0 0
  %2229 = vmatpush1.bf16.msra.mxu0 %v2201
  %2230 = vmatprep.subr.bf16.mxu0 0
  %2231 = vmatpush1.bf16.msra.mxu0 %v2200
  %2232 = vmatprep.subr.bf16.mxu0 0
  %2233 = vmatpush2.bf16.msra.mxu0 0
  %2234 = vmatprep.subr.bf16.mxu0 0
  %2235 = vmatpush2.bf16.msra.mxu0 0
  %2236 = vmatprep.subr.bf16.mxu0 0
  %2237 = vmatpush2.bf16.msra.mxu0 0
  %2238 = vmatprep.subr.bf16.mxu0 0
  %2239 = vmatpush2.bf16.msra.mxu0 0
  %2240 = vmatprep.subr.bf16.mxu0 0
  %2241 = vmatpush2.bf16.msra.mxu0 0
  %2242 = vmatprep.subr.bf16.mxu0 0
  %2243 = vmatpush2.bf16.msra.mxu0 0
  %2244 = vmatprep.subr.bf16.mxu0 0
  %2245 = vmatpush2.bf16.msra.mxu0 0
  %2246 = vmatprep.subr.bf16.mxu0 0
  %2247 = vmatpush2.bf16.msra.mxu0 0
  %2248 = vmatprep.mubr.bf16.mxu0 0
  %2249 = vmatmul.mubr.bf16.gmra.mxu0 %v2149
  %v2250 = vpop.f32.mrf.mxu0
  %v2251 = vadd.f32 0.0, %v2250
  %v2252 = vpop.f32.mrf.mxu0
  %v2253 = vpop.f32.mrf.mxu0
  %v2254 = vadd.f32 0.0, %v2253
  %v2255 = vpop.f32.mrf.mxu0
  %2256 = vmatprep.mubr.bf16.mxu0 0
  %2257 = vmatmul.mubr.bf16.gmra.mxu0 %v2150
  %v2258 = vpop.f32.mrf.mxu0
  %v2259 = vadd.f32 0.0, %v2258
  %v2260 = vpop.f32.mrf.mxu0
  %v2261 = vpop.f32.mrf.mxu0
  %v2262 = vadd.f32 0.0, %v2261
  %v2263 = vpop.f32.mrf.mxu0
  %2264 = vdwg.mxu0
  %v2265 = vadd.f32 %v2145, %v2251
  %v2266 = vadd.f32 %v2146, %v2254
  %v2267 = vadd.f32 %v2147, %v2259
  %v2268 = vadd.f32 %v2148, %v2262
  %v2269 = vrot.slane %v1204, 3
  %v2270 = vrot.slane %v1207, 4
  %v2271 = vor.u32 %v2269, %v2270
  %v2272 = vrot.slane %v1212, 3
  %v2273 = vrot.slane %v1215, 4
  %v2274 = vor.u32 %v2272, %v2273
  %v2275 = vsel %vm351, %v2271, %v2274
  %v2276 = vrot.slane %v752, 3
  %v2277 = vrot.slane %v754, 4
  %v2278 = vor.u32 %v2276, %v2277
  %v2279 = vrot.slane %v1223, 3
  %v2280 = vrot.slane %v759, 4
  %v2281 = vor.u32 %v2279, %v2280
  %v2282 = vsel %vm351, %v2278, %v2281
  %v2285 = vrot.slane %v1237, 3
  %v2286 = vrot.slane %v1240, 4
  %v2287 = vor.u32 %v2285, %v2286
  %v2288 = vrot.slane %v1245, 3
  %v2289 = vrot.slane %v1248, 4
  %v2290 = vor.u32 %v2288, %v2289
  %v2291 = vsel %vm351, %v2287, %v2290
  %v2292 = vrot.slane %v768, 3
  %v2293 = vrot.slane %v770, 4
  %v2294 = vor.u32 %v2292, %v2293
  %v2295 = vrot.slane %v1256, 3
  %v2296 = vrot.slane %v775, 4
  %v2297 = vor.u32 %v2295, %v2296
  %v2298 = vsel %vm351, %v2294, %v2297
  %v2301 = vsel %vm410, %v2275, 0
  %v2302 = vsel %vm410, %v2282, 0
  %v2303 = vsel %vm411, %v2291, 0
  %v2304 = vsel %vm411, %v2298, 0
  %s2305 = scalar_lea.vmem %s4, 704
  %v2306 = vld [vmem:[%s2305] sm:$0xf]
  %v2307 = vld [vmem:[%s2305 + $0x4] sm:$0xf]
  %v2308 = vld [vmem:[%s2305 + $0x8] sm:$0xf]
  %v2309 = vld [vmem:[%s2305 + $0xc] sm:$0xf]
  %v2310 = vld [vmem:[%s2305 + $0x10] sm:$0xf]
  %v2311 = vld [vmem:[%s2305 + $0x14] sm:$0xf]
  %v2312 = vld [vmem:[%s2305 + $0x18] sm:$0xf]
  %v2313 = vld [vmem:[%s2305 + $0x1c] sm:$0xf]
  %v2314 = vld [vmem:[%s2305 + $0x20] sm:$0xf]
  %v2315 = vld [vmem:[%s2305 + $0x24] sm:$0xf]
  %v2316 = vld [vmem:[%s2305 + $0x28] sm:$0xf]
  %v2317 = vld [vmem:[%s2305 + $0x2c] sm:$0xf]
  %v2318 = vld [vmem:[%s2305 + $0x30] sm:$0xf]
  %v2319 = vld [vmem:[%s2305 + $0x34] sm:$0xf]
  %v2320 = vld [vmem:[%s2305 + $0x38] sm:$0xf]
  %v2321 = vld [vmem:[%s2305 + $0x3c] sm:$0xf]
  %v2338 = vunpack.c.l.b16 %v2306
  %v2339 = vunpack.c.l.b16 %v2307
  %v2340 = vunpack.c.l.b16 %v2308
  %v2341 = vunpack.c.l.b16 %v2309
  %v2342 = vunpack.c.l.b16 %v2310
  %v2343 = vunpack.c.l.b16 %v2311
  %v2344 = vunpack.c.l.b16 %v2312
  %v2345 = vunpack.c.l.b16 %v2313
  %v2346 = vunpack.c.l.b16 %v2314
  %v2347 = vunpack.c.l.b16 %v2315
  %v2348 = vunpack.c.l.b16 %v2316
  %v2349 = vunpack.c.l.b16 %v2317
  %v2350 = vunpack.c.l.b16 %v2318
  %v2351 = vunpack.c.l.b16 %v2319
  %v2352 = vunpack.c.l.b16 %v2320
  %v2353 = vunpack.c.l.b16 %v2321
  %v2354 = vpack.c.b16 %v2339, %v2338
  %v2355 = vpack.c.b16 %v2341, %v2340
  %v2356 = vpack.c.b16 %v2343, %v2342
  %v2357 = vpack.c.b16 %v2345, %v2344
  %v2358 = vpack.c.b16 %v2347, %v2346
  %v2359 = vpack.c.b16 %v2349, %v2348
  %v2360 = vpack.c.b16 %v2351, %v2350
  %v2361 = vpack.c.b16 %v2353, %v2352
  %2370 = vmatprep.subr.bf16.mxu0 0
  %2371 = vmatpush1.bf16.msra.mxu0 %v2361
  %2372 = vmatprep.subr.bf16.mxu0 0
  %2373 = vmatpush1.bf16.msra.mxu0 %v2360
  %2374 = vmatprep.subr.bf16.mxu0 0
  %2375 = vmatpush1.bf16.msra.mxu0 %v2359
  %2376 = vmatprep.subr.bf16.mxu0 0
  %2377 = vmatpush1.bf16.msra.mxu0 %v2358
  %2378 = vmatprep.subr.bf16.mxu0 0
  %2379 = vmatpush1.bf16.msra.mxu0 %v2357
  %2380 = vmatprep.subr.bf16.mxu0 0
  %2381 = vmatpush1.bf16.msra.mxu0 %v2356
  %2382 = vmatprep.subr.bf16.mxu0 0
  %2383 = vmatpush1.bf16.msra.mxu0 %v2355
  %2384 = vmatprep.subr.bf16.mxu0 0
  %2385 = vmatpush1.bf16.msra.mxu0 %v2354
  %2386 = vmatprep.subr.bf16.mxu0 0
  %2387 = vmatpush2.bf16.msra.mxu0 0
  %2388 = vmatprep.subr.bf16.mxu0 0
  %2389 = vmatpush2.bf16.msra.mxu0 0
  %2390 = vmatprep.subr.bf16.mxu0 0
  %2391 = vmatpush2.bf16.msra.mxu0 0
  %2392 = vmatprep.subr.bf16.mxu0 0
  %2393 = vmatpush2.bf16.msra.mxu0 0
  %2394 = vmatprep.subr.bf16.mxu0 0
  %2395 = vmatpush2.bf16.msra.mxu0 0
  %2396 = vmatprep.subr.bf16.mxu0 0
  %2397 = vmatpush2.bf16.msra.mxu0 0
  %2398 = vmatprep.subr.bf16.mxu0 0
  %2399 = vmatpush2.bf16.msra.mxu0 0
  %2400 = vmatprep.subr.bf16.mxu0 0
  %2401 = vmatpush2.bf16.msra.mxu0 0
  %2402 = vmatprep.mubr.bf16.mxu0 0
  %2403 = vmatmul.mubr.bf16.gmra.mxu0 %v2302
  %v2404 = vpop.f32.mrf.mxu0
  %v2405 = vadd.f32 0.0, %v2404
  %v2406 = vpop.f32.mrf.mxu0
  %v2407 = vpop.f32.mrf.mxu0
  %v2408 = vadd.f32 0.0, %v2407
  %v2409 = vpop.f32.mrf.mxu0
  %2410 = vmatprep.mubr.bf16.mxu0 0
  %2411 = vmatmul.mubr.bf16.gmra.mxu0 %v2304
  %v2412 = vpop.f32.mrf.mxu0
  %v2413 = vadd.f32 0.0, %v2412
  %v2414 = vpop.f32.mrf.mxu0
  %v2415 = vpop.f32.mrf.mxu0
  %v2416 = vadd.f32 0.0, %v2415
  %v2417 = vpop.f32.mrf.mxu0
  %2418 = vdwg.mxu0
  %v2419 = vadd.f32 %v2265, %v2405
  %v2420 = vadd.f32 %v2266, %v2408
  %v2421 = vadd.f32 %v2267, %v2413
  %v2422 = vadd.f32 %v2268, %v2416
  %s2423 = scalar_lea.vmem %s3, 192
  %v2424 = vld [vmem:[%s2423] sm:$0xf]
  %v2425 = vld [vmem:[%s2423 + $0x4] sm:$0xf]
  %v2426 = vld [vmem:[%s2423 + $0x8] sm:$0xf]
  %v2427 = vld [vmem:[%s2423 + $0xc] sm:$0xf]
  %v2428 = vld [vmem:[%s2423 + $0x10] sm:$0xf]
  %v2429 = vld [vmem:[%s2423 + $0x14] sm:$0xf]
  %v2430 = vld [vmem:[%s2423 + $0x18] sm:$0xf]
  %v2431 = vld [vmem:[%s2423 + $0x1c] sm:$0xf]
  %v2432 = vld [vmem:[%s2423 + $0x20] sm:$0xf]
  %v2433 = vld [vmem:[%s2423 + $0x24] sm:$0xf]
  %v2434 = vld [vmem:[%s2423 + $0x28] sm:$0xf]
  %v2435 = vld [vmem:[%s2423 + $0x2c] sm:$0xf]
  %v2436 = vld [vmem:[%s2423 + $0x30] sm:$0xf]
  %v2437 = vld [vmem:[%s2423 + $0x34] sm:$0xf]
  %v2438 = vld [vmem:[%s2423 + $0x38] sm:$0xf]
  %v2439 = vld [vmem:[%s2423 + $0x3c] sm:$0xf]
  %v2456 = vunpack.c.l.b16 %v2424
  %v2457 = vunpack.c.l.b16 %v2425
  %v2458 = vunpack.c.l.b16 %v2426
  %v2459 = vunpack.c.l.b16 %v2427
  %v2460 = vunpack.c.l.b16 %v2428
  %v2461 = vunpack.c.l.b16 %v2429
  %v2462 = vunpack.c.l.b16 %v2430
  %v2463 = vunpack.c.l.b16 %v2431
  %v2464 = vunpack.c.l.b16 %v2432
  %v2465 = vunpack.c.l.b16 %v2433
  %v2466 = vunpack.c.l.b16 %v2434
  %v2467 = vunpack.c.l.b16 %v2435
  %v2468 = vunpack.c.l.b16 %v2436
  %v2469 = vunpack.c.l.b16 %v2437
  %v2470 = vunpack.c.l.b16 %v2438
  %v2471 = vunpack.c.l.b16 %v2439
  %v2472 = vpack.c.b16 %v2457, %v2456
  %v2473 = vpack.c.b16 %v2459, %v2458
  %v2474 = vpack.c.b16 %v2461, %v2460
  %v2475 = vpack.c.b16 %v2463, %v2462
  %v2476 = vpack.c.b16 %v2465, %v2464
  %v2477 = vpack.c.b16 %v2467, %v2466
  %v2478 = vpack.c.b16 %v2469, %v2468
  %v2479 = vpack.c.b16 %v2471, %v2470
  %2488 = vmatprep.subr.bf16.mxu0 0
  %2489 = vmatpush1.bf16.msra.mxu0 %v2479
  %2490 = vmatprep.subr.bf16.mxu0 0
  %2491 = vmatpush1.bf16.msra.mxu0 %v2478
  %2492 = vmatprep.subr.bf16.mxu0 0
  %2493 = vmatpush1.bf16.msra.mxu0 %v2477
  %2494 = vmatprep.subr.bf16.mxu0 0
  %2495 = vmatpush1.bf16.msra.mxu0 %v2476
  %2496 = vmatprep.subr.bf16.mxu0 0
  %2497 = vmatpush1.bf16.msra.mxu0 %v2475
  %2498 = vmatprep.subr.bf16.mxu0 0
  %2499 = vmatpush1.bf16.msra.mxu0 %v2474
  %2500 = vmatprep.subr.bf16.mxu0 0
  %2501 = vmatpush1.bf16.msra.mxu0 %v2473
  %2502 = vmatprep.subr.bf16.mxu0 0
  %2503 = vmatpush1.bf16.msra.mxu0 %v2472
  %2504 = vmatprep.subr.bf16.mxu0 0
  %2505 = vmatpush2.bf16.msra.mxu0 0
  %2506 = vmatprep.subr.bf16.mxu0 0
  %2507 = vmatpush2.bf16.msra.mxu0 0
  %2508 = vmatprep.subr.bf16.mxu0 0
  %2509 = vmatpush2.bf16.msra.mxu0 0
  %2510 = vmatprep.subr.bf16.mxu0 0
  %2511 = vmatpush2.bf16.msra.mxu0 0
  %2512 = vmatprep.subr.bf16.mxu0 0
  %2513 = vmatpush2.bf16.msra.mxu0 0
  %2514 = vmatprep.subr.bf16.mxu0 0
  %2515 = vmatpush2.bf16.msra.mxu0 0
  %2516 = vmatprep.subr.bf16.mxu0 0
  %2517 = vmatpush2.bf16.msra.mxu0 0
  %2518 = vmatprep.subr.bf16.mxu0 0
  %2519 = vmatpush2.bf16.msra.mxu0 0
  %2520 = vmatprep.mubr.bf16.mxu0 0
  %2521 = vmatmul.mubr.bf16.gmra.mxu0 %v2301
  %v2522 = vpop.f32.mrf.mxu0
  %v2523 = vadd.f32 0.0, %v2522
  %v2524 = vpop.f32.mrf.mxu0
  %v2525 = vpop.f32.mrf.mxu0
  %v2526 = vadd.f32 0.0, %v2525
  %v2527 = vpop.f32.mrf.mxu0
  %2528 = vmatprep.mubr.bf16.mxu0 0
  %2529 = vmatmul.mubr.bf16.gmra.mxu0 %v2303
  %v2530 = vpop.f32.mrf.mxu0
  %v2531 = vadd.f32 0.0, %v2530
  %v2532 = vpop.f32.mrf.mxu0
  %v2533 = vpop.f32.mrf.mxu0
  %v2534 = vadd.f32 0.0, %v2533
  %v2535 = vpop.f32.mrf.mxu0
  %2536 = vdwg.mxu0
  %v2537 = vadd.f32 %v2017, %v2523
  %v2538 = vadd.f32 %v2018, %v2526
  %v2539 = vadd.f32 %v2019, %v2531
  %v2540 = vadd.f32 %v2020, %v2534
  %v2541 = vpack.c.b16 %v1199, %v1198
  %v2542 = vpack.c.b16 %v748, %v289
  %v2545 = vpack.c.b16 %v1233, %v1232
  %v2546 = vpack.c.b16 %v765, %v302
  %s2549 = scalar_lea.vmem %s4, 768
  %v2550 = vld [vmem:[%s2549] sm:$0xf]
  %v2551 = vld [vmem:[%s2549 + $0x4] sm:$0xf]
  %v2552 = vld [vmem:[%s2549 + $0x8] sm:$0xf]
  %v2553 = vld [vmem:[%s2549 + $0xc] sm:$0xf]
  %v2554 = vld [vmem:[%s2549 + $0x10] sm:$0xf]
  %v2555 = vld [vmem:[%s2549 + $0x14] sm:$0xf]
  %v2556 = vld [vmem:[%s2549 + $0x18] sm:$0xf]
  %v2557 = vld [vmem:[%s2549 + $0x1c] sm:$0xf]
  %v2558 = vld [vmem:[%s2549 + $0x20] sm:$0xf]
  %v2559 = vld [vmem:[%s2549 + $0x24] sm:$0xf]
  %v2560 = vld [vmem:[%s2549 + $0x28] sm:$0xf]
  %v2561 = vld [vmem:[%s2549 + $0x2c] sm:$0xf]
  %v2562 = vld [vmem:[%s2549 + $0x30] sm:$0xf]
  %v2563 = vld [vmem:[%s2549 + $0x34] sm:$0xf]
  %v2564 = vld [vmem:[%s2549 + $0x38] sm:$0xf]
  %v2565 = vld [vmem:[%s2549 + $0x3c] sm:$0xf]
  %v2582 = vunpack.c.l.b16 %v2550
  %v2583 = vunpack.c.l.b16 %v2551
  %v2584 = vunpack.c.l.b16 %v2552
  %v2585 = vunpack.c.l.b16 %v2553
  %v2586 = vunpack.c.l.b16 %v2554
  %v2587 = vunpack.c.l.b16 %v2555
  %v2588 = vunpack.c.l.b16 %v2556
  %v2589 = vunpack.c.l.b16 %v2557
  %v2590 = vunpack.c.l.b16 %v2558
  %v2591 = vunpack.c.l.b16 %v2559
  %v2592 = vunpack.c.l.b16 %v2560
  %v2593 = vunpack.c.l.b16 %v2561
  %v2594 = vunpack.c.l.b16 %v2562
  %v2595 = vunpack.c.l.b16 %v2563
  %v2596 = vunpack.c.l.b16 %v2564
  %v2597 = vunpack.c.l.b16 %v2565
  %v2598 = vpack.c.b16 %v2583, %v2582
  %v2599 = vpack.c.b16 %v2585, %v2584
  %v2600 = vpack.c.b16 %v2587, %v2586
  %v2601 = vpack.c.b16 %v2589, %v2588
  %v2602 = vpack.c.b16 %v2591, %v2590
  %v2603 = vpack.c.b16 %v2593, %v2592
  %v2604 = vpack.c.b16 %v2595, %v2594
  %v2605 = vpack.c.b16 %v2597, %v2596
  %2614 = vmatprep.subr.bf16.mxu0 0
  %2615 = vmatpush1.bf16.msra.mxu0 %v2605
  %2616 = vmatprep.subr.bf16.mxu0 0
  %2617 = vmatpush1.bf16.msra.mxu0 %v2604
  %2618 = vmatprep.subr.bf16.mxu0 0
  %2619 = vmatpush1.bf16.msra.mxu0 %v2603
  %2620 = vmatprep.subr.bf16.mxu0 0
  %2621 = vmatpush1.bf16.msra.mxu0 %v2602
  %2622 = vmatprep.subr.bf16.mxu0 0
  %2623 = vmatpush1.bf16.msra.mxu0 %v2601
  %2624 = vmatprep.subr.bf16.mxu0 0
  %2625 = vmatpush1.bf16.msra.mxu0 %v2600
  %2626 = vmatprep.subr.bf16.mxu0 0
  %2627 = vmatpush1.bf16.msra.mxu0 %v2599
  %2628 = vmatprep.subr.bf16.mxu0 0
  %2629 = vmatpush1.bf16.msra.mxu0 %v2598
  %2630 = vmatprep.subr.bf16.mxu0 0
  %2631 = vmatpush2.bf16.msra.mxu0 0
  %2632 = vmatprep.subr.bf16.mxu0 0
  %2633 = vmatpush2.bf16.msra.mxu0 0
  %2634 = vmatprep.subr.bf16.mxu0 0
  %2635 = vmatpush2.bf16.msra.mxu0 0
  %2636 = vmatprep.subr.bf16.mxu0 0
  %2637 = vmatpush2.bf16.msra.mxu0 0
  %2638 = vmatprep.subr.bf16.mxu0 0
  %2639 = vmatpush2.bf16.msra.mxu0 0
  %2640 = vmatprep.subr.bf16.mxu0 0
  %2641 = vmatpush2.bf16.msra.mxu0 0
  %2642 = vmatprep.subr.bf16.mxu0 0
  %2643 = vmatpush2.bf16.msra.mxu0 0
  %2644 = vmatprep.subr.bf16.mxu0 0
  %2645 = vmatpush2.bf16.msra.mxu0 0
  %2646 = vmatprep.mubr.bf16.mxu0 0
  %2647 = vmatmul.mubr.bf16.gmra.mxu0 %v2542
  %v2648 = vpop.f32.mrf.mxu0
  %v2649 = vadd.f32 0.0, %v2648
  %v2650 = vpop.f32.mrf.mxu0
  %v2651 = vpop.f32.mrf.mxu0
  %v2652 = vadd.f32 0.0, %v2651
  %v2653 = vpop.f32.mrf.mxu0
  %2654 = vmatprep.mubr.bf16.mxu0 0
  %2655 = vmatmul.mubr.bf16.gmra.mxu0 %v2546
  %v2656 = vpop.f32.mrf.mxu0
  %v2657 = vadd.f32 0.0, %v2656
  %v2658 = vpop.f32.mrf.mxu0
  %v2659 = vpop.f32.mrf.mxu0
  %v2660 = vadd.f32 0.0, %v2659
  %v2661 = vpop.f32.mrf.mxu0
  %2662 = vdwg.mxu0
  %v2663 = vadd.f32 %v2419, %v2649
  %v2664 = vadd.f32 %v2420, %v2652
  %v2665 = vadd.f32 %v2421, %v2657
  %v2666 = vadd.f32 %v2422, %v2660
  %s2667 = scalar_lea.vmem %s3, 256
  %v2668 = vld [vmem:[%s2667] sm:$0xf]
  %v2669 = vld [vmem:[%s2667 + $0x4] sm:$0xf]
  %v2670 = vld [vmem:[%s2667 + $0x8] sm:$0xf]
  %v2671 = vld [vmem:[%s2667 + $0xc] sm:$0xf]
  %v2672 = vld [vmem:[%s2667 + $0x10] sm:$0xf]
  %v2673 = vld [vmem:[%s2667 + $0x14] sm:$0xf]
  %v2674 = vld [vmem:[%s2667 + $0x18] sm:$0xf]
  %v2675 = vld [vmem:[%s2667 + $0x1c] sm:$0xf]
  %v2676 = vld [vmem:[%s2667 + $0x20] sm:$0xf]
  %v2677 = vld [vmem:[%s2667 + $0x24] sm:$0xf]
  %v2678 = vld [vmem:[%s2667 + $0x28] sm:$0xf]
  %v2679 = vld [vmem:[%s2667 + $0x2c] sm:$0xf]
  %v2680 = vld [vmem:[%s2667 + $0x30] sm:$0xf]
  %v2681 = vld [vmem:[%s2667 + $0x34] sm:$0xf]
  %v2682 = vld [vmem:[%s2667 + $0x38] sm:$0xf]
  %v2683 = vld [vmem:[%s2667 + $0x3c] sm:$0xf]
  %v2700 = vunpack.c.l.b16 %v2668
  %v2701 = vunpack.c.l.b16 %v2669
  %v2702 = vunpack.c.l.b16 %v2670
  %v2703 = vunpack.c.l.b16 %v2671
  %v2704 = vunpack.c.l.b16 %v2672
  %v2705 = vunpack.c.l.b16 %v2673
  %v2706 = vunpack.c.l.b16 %v2674
  %v2707 = vunpack.c.l.b16 %v2675
  %v2708 = vunpack.c.l.b16 %v2676
  %v2709 = vunpack.c.l.b16 %v2677
  %v2710 = vunpack.c.l.b16 %v2678
  %v2711 = vunpack.c.l.b16 %v2679
  %v2712 = vunpack.c.l.b16 %v2680
  %v2713 = vunpack.c.l.b16 %v2681
  %v2714 = vunpack.c.l.b16 %v2682
  %v2715 = vunpack.c.l.b16 %v2683
  %v2716 = vpack.c.b16 %v2701, %v2700
  %v2717 = vpack.c.b16 %v2703, %v2702
  %v2718 = vpack.c.b16 %v2705, %v2704
  %v2719 = vpack.c.b16 %v2707, %v2706
  %v2720 = vpack.c.b16 %v2709, %v2708
  %v2721 = vpack.c.b16 %v2711, %v2710
  %v2722 = vpack.c.b16 %v2713, %v2712
  %v2723 = vpack.c.b16 %v2715, %v2714
  %2732 = vmatprep.subr.bf16.mxu0 0
  %2733 = vmatpush1.bf16.msra.mxu0 %v2723
  %2734 = vmatprep.subr.bf16.mxu0 0
  %2735 = vmatpush1.bf16.msra.mxu0 %v2722
  %2736 = vmatprep.subr.bf16.mxu0 0
  %2737 = vmatpush1.bf16.msra.mxu0 %v2721
  %2738 = vmatprep.subr.bf16.mxu0 0
  %2739 = vmatpush1.bf16.msra.mxu0 %v2720
  %2740 = vmatprep.subr.bf16.mxu0 0
  %2741 = vmatpush1.bf16.msra.mxu0 %v2719
  %2742 = vmatprep.subr.bf16.mxu0 0
  %2743 = vmatpush1.bf16.msra.mxu0 %v2718
  %2744 = vmatprep.subr.bf16.mxu0 0
  %2745 = vmatpush1.bf16.msra.mxu0 %v2717
  %2746 = vmatprep.subr.bf16.mxu0 0
  %2747 = vmatpush1.bf16.msra.mxu0 %v2716
  %2748 = vmatprep.subr.bf16.mxu0 0
  %2749 = vmatpush2.bf16.msra.mxu0 0
  %2750 = vmatprep.subr.bf16.mxu0 0
  %2751 = vmatpush2.bf16.msra.mxu0 0
  %2752 = vmatprep.subr.bf16.mxu0 0
  %2753 = vmatpush2.bf16.msra.mxu0 0
  %2754 = vmatprep.subr.bf16.mxu0 0
  %2755 = vmatpush2.bf16.msra.mxu0 0
  %2756 = vmatprep.subr.bf16.mxu0 0
  %2757 = vmatpush2.bf16.msra.mxu0 0
  %2758 = vmatprep.subr.bf16.mxu0 0
  %2759 = vmatpush2.bf16.msra.mxu0 0
  %2760 = vmatprep.subr.bf16.mxu0 0
  %2761 = vmatpush2.bf16.msra.mxu0 0
  %2762 = vmatprep.subr.bf16.mxu0 0
  %2763 = vmatpush2.bf16.msra.mxu0 0
  %2764 = vmatprep.mubr.bf16.mxu0 0
  %2765 = vmatmul.mubr.bf16.gmra.mxu0 %v2541
  %v2766 = vpop.f32.mrf.mxu0
  %v2767 = vadd.f32 0.0, %v2766
  %v2768 = vpop.f32.mrf.mxu0
  %v2769 = vpop.f32.mrf.mxu0
  %v2770 = vadd.f32 0.0, %v2769
  %v2771 = vpop.f32.mrf.mxu0
  %2772 = vmatprep.mubr.bf16.mxu0 0
  %2773 = vmatmul.mubr.bf16.gmra.mxu0 %v2545
  %v2774 = vpop.f32.mrf.mxu0
  %v2775 = vadd.f32 0.0, %v2774
  %v2776 = vpop.f32.mrf.mxu0
  %v2777 = vpop.f32.mrf.mxu0
  %v2778 = vadd.f32 0.0, %v2777
  %v2779 = vpop.f32.mrf.mxu0
  %2780 = vdwg.mxu0
  %v2781 = vadd.f32 %v2537, %v2767
  %v2782 = vadd.f32 %v2538, %v2770
  %v2783 = vadd.f32 %v2539, %v2775
  %v2784 = vadd.f32 %v2540, %v2778
  %v2786 = vunpack.c.l.b16 %v276
  %v2787 = vunpack.c.h.b16 %v276
  %v2788 = vpack.c.b16 %v2786, %v2786
  %v2789 = vpack.c.b16 %v2787, %v2787
  %v2791 = vshrl.u32 %v2541, 16
  %v2793 = vshll.u32 %v2541, 16
  %v2795 = vrot.slane %v2793, 1
  %v2796 = vor.u32 %v2791, %v2795
  %v2798 = vshll.u32 %v2788, 16
  %v2800 = vrot.slane %v2798, 1
  %v2801 = vsel %vm750, %v2796, %v2800
  %v2803 = vshrl.u32 %v2542, 16
  %v2805 = vshll.u32 %v2542, 16
  %v2807 = vrot.slane %v2805, 1
  %v2808 = vor.u32 %v2803, %v2807
  %v2810 = vshll.u32 %v2789, 16
  %v2812 = vrot.slane %v2810, 1
  %v2813 = vsel %vm750, %v2808, %v2812
  %v2817 = vunpack.c.l.b16 %v282
  %v2818 = vunpack.c.h.b16 %v282
  %v2819 = vpack.c.b16 %v2817, %v2817
  %v2820 = vpack.c.b16 %v2818, %v2818
  %v2822 = vshrl.u32 %v2545, 16
  %v2824 = vshll.u32 %v2545, 16
  %v2826 = vrot.slane %v2824, 1
  %v2827 = vor.u32 %v2822, %v2826
  %v2829 = vshll.u32 %v2819, 16
  %v2831 = vrot.slane %v2829, 1
  %v2832 = vsel %vm750, %v2827, %v2831
  %v2834 = vshrl.u32 %v2546, 16
  %v2836 = vshll.u32 %v2546, 16
  %v2838 = vrot.slane %v2836, 1
  %v2839 = vor.u32 %v2834, %v2838
  %v2841 = vshll.u32 %v2820, 16
  %v2843 = vrot.slane %v2841, 1
  %v2844 = vsel %vm750, %v2839, %v2843
  %v2847 = vsel %vm802, %v2801, 0
  %v2848 = vsel %vm802, %v2813, 0
  %v2849 = vsel %vm803, %v2832, 0
  %v2850 = vsel %vm803, %v2844, 0
  %s2851 = scalar_lea.vmem %s4, 832
  %v2852 = vld [vmem:[%s2851] sm:$0xf]
  %v2853 = vld [vmem:[%s2851 + $0x4] sm:$0xf]
  %v2854 = vld [vmem:[%s2851 + $0x8] sm:$0xf]
  %v2855 = vld [vmem:[%s2851 + $0xc] sm:$0xf]
  %v2856 = vld [vmem:[%s2851 + $0x10] sm:$0xf]
  %v2857 = vld [vmem:[%s2851 + $0x14] sm:$0xf]
  %v2858 = vld [vmem:[%s2851 + $0x18] sm:$0xf]
  %v2859 = vld [vmem:[%s2851 + $0x1c] sm:$0xf]
  %v2860 = vld [vmem:[%s2851 + $0x20] sm:$0xf]
  %v2861 = vld [vmem:[%s2851 + $0x24] sm:$0xf]
  %v2862 = vld [vmem:[%s2851 + $0x28] sm:$0xf]
  %v2863 = vld [vmem:[%s2851 + $0x2c] sm:$0xf]
  %v2864 = vld [vmem:[%s2851 + $0x30] sm:$0xf]
  %v2865 = vld [vmem:[%s2851 + $0x34] sm:$0xf]
  %v2866 = vld [vmem:[%s2851 + $0x38] sm:$0xf]
  %v2867 = vld [vmem:[%s2851 + $0x3c] sm:$0xf]
  %v2884 = vunpack.c.l.b16 %v2852
  %v2885 = vunpack.c.l.b16 %v2853
  %v2886 = vunpack.c.l.b16 %v2854
  %v2887 = vunpack.c.l.b16 %v2855
  %v2888 = vunpack.c.l.b16 %v2856
  %v2889 = vunpack.c.l.b16 %v2857
  %v2890 = vunpack.c.l.b16 %v2858
  %v2891 = vunpack.c.l.b16 %v2859
  %v2892 = vunpack.c.l.b16 %v2860
  %v2893 = vunpack.c.l.b16 %v2861
  %v2894 = vunpack.c.l.b16 %v2862
  %v2895 = vunpack.c.l.b16 %v2863
  %v2896 = vunpack.c.l.b16 %v2864
  %v2897 = vunpack.c.l.b16 %v2865
  %v2898 = vunpack.c.l.b16 %v2866
  %v2899 = vunpack.c.l.b16 %v2867
  %v2900 = vpack.c.b16 %v2885, %v2884
  %v2901 = vpack.c.b16 %v2887, %v2886
  %v2902 = vpack.c.b16 %v2889, %v2888
  %v2903 = vpack.c.b16 %v2891, %v2890
  %v2904 = vpack.c.b16 %v2893, %v2892
  %v2905 = vpack.c.b16 %v2895, %v2894
  %v2906 = vpack.c.b16 %v2897, %v2896
  %v2907 = vpack.c.b16 %v2899, %v2898
  %2916 = vmatprep.subr.bf16.mxu0 0
  %2917 = vmatpush1.bf16.msra.mxu0 %v2907
  %2918 = vmatprep.subr.bf16.mxu0 0
  %2919 = vmatpush1.bf16.msra.mxu0 %v2906
  %2920 = vmatprep.subr.bf16.mxu0 0
  %2921 = vmatpush1.bf16.msra.mxu0 %v2905
  %2922 = vmatprep.subr.bf16.mxu0 0
  %2923 = vmatpush1.bf16.msra.mxu0 %v2904
  %2924 = vmatprep.subr.bf16.mxu0 0
  %2925 = vmatpush1.bf16.msra.mxu0 %v2903
  %2926 = vmatprep.subr.bf16.mxu0 0
  %2927 = vmatpush1.bf16.msra.mxu0 %v2902
  %2928 = vmatprep.subr.bf16.mxu0 0
  %2929 = vmatpush1.bf16.msra.mxu0 %v2901
  %2930 = vmatprep.subr.bf16.mxu0 0
  %2931 = vmatpush1.bf16.msra.mxu0 %v2900
  %2932 = vmatprep.subr.bf16.mxu0 0
  %2933 = vmatpush2.bf16.msra.mxu0 0
  %2934 = vmatprep.subr.bf16.mxu0 0
  %2935 = vmatpush2.bf16.msra.mxu0 0
  %2936 = vmatprep.subr.bf16.mxu0 0
  %2937 = vmatpush2.bf16.msra.mxu0 0
  %2938 = vmatprep.subr.bf16.mxu0 0
  %2939 = vmatpush2.bf16.msra.mxu0 0
  %2940 = vmatprep.subr.bf16.mxu0 0
  %2941 = vmatpush2.bf16.msra.mxu0 0
  %2942 = vmatprep.subr.bf16.mxu0 0
  %2943 = vmatpush2.bf16.msra.mxu0 0
  %2944 = vmatprep.subr.bf16.mxu0 0
  %2945 = vmatpush2.bf16.msra.mxu0 0
  %2946 = vmatprep.subr.bf16.mxu0 0
  %2947 = vmatpush2.bf16.msra.mxu0 0
  %2948 = vmatprep.mubr.bf16.mxu0 0
  %2949 = vmatmul.mubr.bf16.gmra.mxu0 %v2848
  %v2950 = vpop.f32.mrf.mxu0
  %v2951 = vadd.f32 0.0, %v2950
  %v2952 = vpop.f32.mrf.mxu0
  %v2953 = vpop.f32.mrf.mxu0
  %v2954 = vadd.f32 0.0, %v2953
  %v2955 = vpop.f32.mrf.mxu0
  %2956 = vmatprep.mubr.bf16.mxu0 0
  %2957 = vmatmul.mubr.bf16.gmra.mxu0 %v2850
  %v2958 = vpop.f32.mrf.mxu0
  %v2959 = vadd.f32 0.0, %v2958
  %v2960 = vpop.f32.mrf.mxu0
  %v2961 = vpop.f32.mrf.mxu0
  %v2962 = vadd.f32 0.0, %v2961
  %v2963 = vpop.f32.mrf.mxu0
  %2964 = vdwg.mxu0
  %v2965 = vadd.f32 %v2663, %v2951
  %v2966 = vadd.f32 %v2664, %v2954
  %v2967 = vadd.f32 %v2665, %v2959
  %v2968 = vadd.f32 %v2666, %v2962
  %s2969 = scalar_lea.vmem %s3, 320
  %v2970 = vld [vmem:[%s2969] sm:$0xf]
  %v2971 = vld [vmem:[%s2969 + $0x4] sm:$0xf]
  %v2972 = vld [vmem:[%s2969 + $0x8] sm:$0xf]
  %v2973 = vld [vmem:[%s2969 + $0xc] sm:$0xf]
  %v2974 = vld [vmem:[%s2969 + $0x10] sm:$0xf]
  %v2975 = vld [vmem:[%s2969 + $0x14] sm:$0xf]
  %v2976 = vld [vmem:[%s2969 + $0x18] sm:$0xf]
  %v2977 = vld [vmem:[%s2969 + $0x1c] sm:$0xf]
  %v2978 = vld [vmem:[%s2969 + $0x20] sm:$0xf]
  %v2979 = vld [vmem:[%s2969 + $0x24] sm:$0xf]
  %v2980 = vld [vmem:[%s2969 + $0x28] sm:$0xf]
  %v2981 = vld [vmem:[%s2969 + $0x2c] sm:$0xf]
  %v2982 = vld [vmem:[%s2969 + $0x30] sm:$0xf]
  %v2983 = vld [vmem:[%s2969 + $0x34] sm:$0xf]
  %v2984 = vld [vmem:[%s2969 + $0x38] sm:$0xf]
  %v2985 = vld [vmem:[%s2969 + $0x3c] sm:$0xf]
  %v3002 = vunpack.c.l.b16 %v2970
  %v3003 = vunpack.c.l.b16 %v2971
  %v3004 = vunpack.c.l.b16 %v2972
  %v3005 = vunpack.c.l.b16 %v2973
  %v3006 = vunpack.c.l.b16 %v2974
  %v3007 = vunpack.c.l.b16 %v2975
  %v3008 = vunpack.c.l.b16 %v2976
  %v3009 = vunpack.c.l.b16 %v2977
  %v3010 = vunpack.c.l.b16 %v2978
  %v3011 = vunpack.c.l.b16 %v2979
  %v3012 = vunpack.c.l.b16 %v2980
  %v3013 = vunpack.c.l.b16 %v2981
  %v3014 = vunpack.c.l.b16 %v2982
  %v3015 = vunpack.c.l.b16 %v2983
  %v3016 = vunpack.c.l.b16 %v2984
  %v3017 = vunpack.c.l.b16 %v2985
  %v3018 = vpack.c.b16 %v3003, %v3002
  %v3019 = vpack.c.b16 %v3005, %v3004
  %v3020 = vpack.c.b16 %v3007, %v3006
  %v3021 = vpack.c.b16 %v3009, %v3008
  %v3022 = vpack.c.b16 %v3011, %v3010
  %v3023 = vpack.c.b16 %v3013, %v3012
  %v3024 = vpack.c.b16 %v3015, %v3014
  %v3025 = vpack.c.b16 %v3017, %v3016
  %3034 = vmatprep.subr.bf16.mxu0 0
  %3035 = vmatpush1.bf16.msra.mxu0 %v3025
  %3036 = vmatprep.subr.bf16.mxu0 0
  %3037 = vmatpush1.bf16.msra.mxu0 %v3024
  %3038 = vmatprep.subr.bf16.mxu0 0
  %3039 = vmatpush1.bf16.msra.mxu0 %v3023
  %3040 = vmatprep.subr.bf16.mxu0 0
  %3041 = vmatpush1.bf16.msra.mxu0 %v3022
  %3042 = vmatprep.subr.bf16.mxu0 0
  %3043 = vmatpush1.bf16.msra.mxu0 %v3021
  %3044 = vmatprep.subr.bf16.mxu0 0
  %3045 = vmatpush1.bf16.msra.mxu0 %v3020
  %3046 = vmatprep.subr.bf16.mxu0 0
  %3047 = vmatpush1.bf16.msra.mxu0 %v3019
  %3048 = vmatprep.subr.bf16.mxu0 0
  %3049 = vmatpush1.bf16.msra.mxu0 %v3018
  %3050 = vmatprep.subr.bf16.mxu0 0
  %3051 = vmatpush2.bf16.msra.mxu0 0
  %3052 = vmatprep.subr.bf16.mxu0 0
  %3053 = vmatpush2.bf16.msra.mxu0 0
  %3054 = vmatprep.subr.bf16.mxu0 0
  %3055 = vmatpush2.bf16.msra.mxu0 0
  %3056 = vmatprep.subr.bf16.mxu0 0
  %3057 = vmatpush2.bf16.msra.mxu0 0
  %3058 = vmatprep.subr.bf16.mxu0 0
  %3059 = vmatpush2.bf16.msra.mxu0 0
  %3060 = vmatprep.subr.bf16.mxu0 0
  %3061 = vmatpush2.bf16.msra.mxu0 0
  %3062 = vmatprep.subr.bf16.mxu0 0
  %3063 = vmatpush2.bf16.msra.mxu0 0
  %3064 = vmatprep.subr.bf16.mxu0 0
  %3065 = vmatpush2.bf16.msra.mxu0 0
  %3066 = vmatprep.mubr.bf16.mxu0 0
  %3067 = vmatmul.mubr.bf16.gmra.mxu0 %v2847
  %v3068 = vpop.f32.mrf.mxu0
  %v3069 = vadd.f32 0.0, %v3068
  %v3070 = vpop.f32.mrf.mxu0
  %v3071 = vpop.f32.mrf.mxu0
  %v3072 = vadd.f32 0.0, %v3071
  %v3073 = vpop.f32.mrf.mxu0
  %3074 = vmatprep.mubr.bf16.mxu0 0
  %3075 = vmatmul.mubr.bf16.gmra.mxu0 %v2849
  %v3076 = vpop.f32.mrf.mxu0
  %v3077 = vadd.f32 0.0, %v3076
  %v3078 = vpop.f32.mrf.mxu0
  %v3079 = vpop.f32.mrf.mxu0
  %v3080 = vadd.f32 0.0, %v3079
  %v3081 = vpop.f32.mrf.mxu0
  %3082 = vdwg.mxu0
  %v3083 = vadd.f32 %v2781, %v3069
  %v3084 = vadd.f32 %v2782, %v3072
  %v3085 = vadd.f32 %v2783, %v3077
  %v3086 = vadd.f32 %v2784, %v3080
  %v3087 = vrot.slane %v2542, 1
  %v3088 = vrot.slane %v2789, 1
  %v3089 = vsel %vm924, %v3087, %v3088
  %v3091 = vrot.slane %v2546, 1
  %v3092 = vrot.slane %v2820, 1
  %v3093 = vsel %vm924, %v3091, %v3092
  %v3095 = vsel %vm955, %v3089, 0
  %v3096 = vsel %vm956, %v3093, 0
  %s3097 = scalar_lea.vmem %s4, 896
  %v3098 = vld [vmem:[%s3097] sm:$0xf]
  %v3099 = vld [vmem:[%s3097 + $0x4] sm:$0xf]
  %v3100 = vld [vmem:[%s3097 + $0x8] sm:$0xf]
  %v3101 = vld [vmem:[%s3097 + $0xc] sm:$0xf]
  %v3102 = vld [vmem:[%s3097 + $0x10] sm:$0xf]
  %v3103 = vld [vmem:[%s3097 + $0x14] sm:$0xf]
  %v3104 = vld [vmem:[%s3097 + $0x18] sm:$0xf]
  %v3105 = vld [vmem:[%s3097 + $0x1c] sm:$0xf]
  %v3106 = vld [vmem:[%s3097 + $0x20] sm:$0xf]
  %v3107 = vld [vmem:[%s3097 + $0x24] sm:$0xf]
  %v3108 = vld [vmem:[%s3097 + $0x28] sm:$0xf]
  %v3109 = vld [vmem:[%s3097 + $0x2c] sm:$0xf]
  %v3110 = vld [vmem:[%s3097 + $0x30] sm:$0xf]
  %v3111 = vld [vmem:[%s3097 + $0x34] sm:$0xf]
  %v3112 = vld [vmem:[%s3097 + $0x38] sm:$0xf]
  %v3113 = vld [vmem:[%s3097 + $0x3c] sm:$0xf]
  %v3130 = vunpack.c.l.b16 %v3098
  %v3131 = vunpack.c.l.b16 %v3099
  %v3132 = vunpack.c.l.b16 %v3100
  %v3133 = vunpack.c.l.b16 %v3101
  %v3134 = vunpack.c.l.b16 %v3102
  %v3135 = vunpack.c.l.b16 %v3103
  %v3136 = vunpack.c.l.b16 %v3104
  %v3137 = vunpack.c.l.b16 %v3105
  %v3138 = vunpack.c.l.b16 %v3106
  %v3139 = vunpack.c.l.b16 %v3107
  %v3140 = vunpack.c.l.b16 %v3108
  %v3141 = vunpack.c.l.b16 %v3109
  %v3142 = vunpack.c.l.b16 %v3110
  %v3143 = vunpack.c.l.b16 %v3111
  %v3144 = vunpack.c.l.b16 %v3112
  %v3145 = vunpack.c.l.b16 %v3113
  %v3146 = vpack.c.b16 %v3131, %v3130
  %v3147 = vpack.c.b16 %v3133, %v3132
  %v3148 = vpack.c.b16 %v3135, %v3134
  %v3149 = vpack.c.b16 %v3137, %v3136
  %v3150 = vpack.c.b16 %v3139, %v3138
  %v3151 = vpack.c.b16 %v3141, %v3140
  %v3152 = vpack.c.b16 %v3143, %v3142
  %v3153 = vpack.c.b16 %v3145, %v3144
  %3162 = vmatprep.subr.bf16.mxu0 0
  %3163 = vmatpush1.bf16.msra.mxu0 %v3153
  %3164 = vmatprep.subr.bf16.mxu0 0
  %3165 = vmatpush1.bf16.msra.mxu0 %v3152
  %3166 = vmatprep.subr.bf16.mxu0 0
  %3167 = vmatpush1.bf16.msra.mxu0 %v3151
  %3168 = vmatprep.subr.bf16.mxu0 0
  %3169 = vmatpush1.bf16.msra.mxu0 %v3150
  %3170 = vmatprep.subr.bf16.mxu0 0
  %3171 = vmatpush1.bf16.msra.mxu0 %v3149
  %3172 = vmatprep.subr.bf16.mxu0 0
  %3173 = vmatpush1.bf16.msra.mxu0 %v3148
  %3174 = vmatprep.subr.bf16.mxu0 0
  %3175 = vmatpush1.bf16.msra.mxu0 %v3147
  %3176 = vmatprep.subr.bf16.mxu0 0
  %3177 = vmatpush1.bf16.msra.mxu0 %v3146
  %3178 = vmatprep.subr.bf16.mxu0 0
  %3179 = vmatpush2.bf16.msra.mxu0 0
  %3180 = vmatprep.subr.bf16.mxu0 0
  %3181 = vmatpush2.bf16.msra.mxu0 0
  %3182 = vmatprep.subr.bf16.mxu0 0
  %3183 = vmatpush2.bf16.msra.mxu0 0
  %3184 = vmatprep.subr.bf16.mxu0 0
  %3185 = vmatpush2.bf16.msra.mxu0 0
  %3186 = vmatprep.subr.bf16.mxu0 0
  %3187 = vmatpush2.bf16.msra.mxu0 0
  %3188 = vmatprep.subr.bf16.mxu0 0
  %3189 = vmatpush2.bf16.msra.mxu0 0
  %3190 = vmatprep.subr.bf16.mxu0 0
  %3191 = vmatpush2.bf16.msra.mxu0 0
  %3192 = vmatprep.subr.bf16.mxu0 0
  %3193 = vmatpush2.bf16.msra.mxu0 0
  %3194 = vmatprep.mubr.bf16.mxu0 0
  %3195 = vmatmul.mubr.bf16.gmra.mxu0 %v3095
  %v3196 = vpop.f32.mrf.mxu0
  %v3197 = vadd.f32 0.0, %v3196
  %v3198 = vpop.f32.mrf.mxu0
  %v3199 = vpop.f32.mrf.mxu0
  %v3200 = vadd.f32 0.0, %v3199
  %v3201 = vpop.f32.mrf.mxu0
  %3202 = vmatprep.mubr.bf16.mxu0 0
  %3203 = vmatmul.mubr.bf16.gmra.mxu0 %v3096
  %v3204 = vpop.f32.mrf.mxu0
  %v3205 = vadd.f32 0.0, %v3204
  %v3206 = vpop.f32.mrf.mxu0
  %v3207 = vpop.f32.mrf.mxu0
  %v3208 = vadd.f32 0.0, %v3207
  %v3209 = vpop.f32.mrf.mxu0
  %3210 = vdwg.mxu0
  %v3211 = vadd.f32 %v2965, %v3197
  %v3212 = vadd.f32 %v2966, %v3200
  %v3213 = vadd.f32 %v2967, %v3205
  %v3214 = vadd.f32 %v2968, %v3208
  %v3215 = vsel %vm331, %v3089, 0
  %v3216 = vsel %vm332, %v3093, 0
  %s3217 = scalar_lea.vmem %s4, 960
  %v3218 = vld [vmem:[%s3217] sm:$0xf]
  %v3219 = vld [vmem:[%s3217 + $0x4] sm:$0xf]
  %v3220 = vld [vmem:[%s3217 + $0x8] sm:$0xf]
  %v3221 = vld [vmem:[%s3217 + $0xc] sm:$0xf]
  %v3222 = vld [vmem:[%s3217 + $0x10] sm:$0xf]
  %v3223 = vld [vmem:[%s3217 + $0x14] sm:$0xf]
  %v3224 = vld [vmem:[%s3217 + $0x18] sm:$0xf]
  %v3225 = vld [vmem:[%s3217 + $0x1c] sm:$0xf]
  %v3226 = vld [vmem:[%s3217 + $0x20] sm:$0xf]
  %v3227 = vld [vmem:[%s3217 + $0x24] sm:$0xf]
  %v3228 = vld [vmem:[%s3217 + $0x28] sm:$0xf]
  %v3229 = vld [vmem:[%s3217 + $0x2c] sm:$0xf]
  %v3230 = vld [vmem:[%s3217 + $0x30] sm:$0xf]
  %v3231 = vld [vmem:[%s3217 + $0x34] sm:$0xf]
  %v3232 = vld [vmem:[%s3217 + $0x38] sm:$0xf]
  %v3233 = vld [vmem:[%s3217 + $0x3c] sm:$0xf]
  %v3250 = vunpack.c.l.b16 %v3218
  %v3251 = vunpack.c.l.b16 %v3219
  %v3252 = vunpack.c.l.b16 %v3220
  %v3253 = vunpack.c.l.b16 %v3221
  %v3254 = vunpack.c.l.b16 %v3222
  %v3255 = vunpack.c.l.b16 %v3223
  %v3256 = vunpack.c.l.b16 %v3224
  %v3257 = vunpack.c.l.b16 %v3225
  %v3258 = vunpack.c.l.b16 %v3226
  %v3259 = vunpack.c.l.b16 %v3227
  %v3260 = vunpack.c.l.b16 %v3228
  %v3261 = vunpack.c.l.b16 %v3229
  %v3262 = vunpack.c.l.b16 %v3230
  %v3263 = vunpack.c.l.b16 %v3231
  %v3264 = vunpack.c.l.b16 %v3232
  %v3265 = vunpack.c.l.b16 %v3233
  %v3266 = vpack.c.b16 %v3251, %v3250
  %v3267 = vpack.c.b16 %v3253, %v3252
  %v3268 = vpack.c.b16 %v3255, %v3254
  %v3269 = vpack.c.b16 %v3257, %v3256
  %v3270 = vpack.c.b16 %v3259, %v3258
  %v3271 = vpack.c.b16 %v3261, %v3260
  %v3272 = vpack.c.b16 %v3263, %v3262
  %v3273 = vpack.c.b16 %v3265, %v3264
  %3282 = vmatprep.subr.bf16.mxu0 0
  %3283 = vmatpush1.bf16.msra.mxu0 %v3273
  %3284 = vmatprep.subr.bf16.mxu0 0
  %3285 = vmatpush1.bf16.msra.mxu0 %v3272
  %3286 = vmatprep.subr.bf16.mxu0 0
  %3287 = vmatpush1.bf16.msra.mxu0 %v3271
  %3288 = vmatprep.subr.bf16.mxu0 0
  %3289 = vmatpush1.bf16.msra.mxu0 %v3270
  %3290 = vmatprep.subr.bf16.mxu0 0
  %3291 = vmatpush1.bf16.msra.mxu0 %v3269
  %3292 = vmatprep.subr.bf16.mxu0 0
  %3293 = vmatpush1.bf16.msra.mxu0 %v3268
  %3294 = vmatprep.subr.bf16.mxu0 0
  %3295 = vmatpush1.bf16.msra.mxu0 %v3267
  %3296 = vmatprep.subr.bf16.mxu0 0
  %3297 = vmatpush1.bf16.msra.mxu0 %v3266
  %3298 = vmatprep.subr.bf16.mxu0 0
  %3299 = vmatpush2.bf16.msra.mxu0 0
  %3300 = vmatprep.subr.bf16.mxu0 0
  %3301 = vmatpush2.bf16.msra.mxu0 0
  %3302 = vmatprep.subr.bf16.mxu0 0
  %3303 = vmatpush2.bf16.msra.mxu0 0
  %3304 = vmatprep.subr.bf16.mxu0 0
  %3305 = vmatpush2.bf16.msra.mxu0 0
  %3306 = vmatprep.subr.bf16.mxu0 0
  %3307 = vmatpush2.bf16.msra.mxu0 0
  %3308 = vmatprep.subr.bf16.mxu0 0
  %3309 = vmatpush2.bf16.msra.mxu0 0
  %3310 = vmatprep.subr.bf16.mxu0 0
  %3311 = vmatpush2.bf16.msra.mxu0 0
  %3312 = vmatprep.subr.bf16.mxu0 0
  %3313 = vmatpush2.bf16.msra.mxu0 0
  %3314 = vmatprep.mubr.bf16.mxu0 0
  %3315 = vmatmul.mubr.bf16.gmra.mxu0 %v3215
  %v3316 = vpop.f32.mrf.mxu0
  %v3317 = vadd.f32 0.0, %v3316
  %v3318 = vpop.f32.mrf.mxu0
  %v3319 = vpop.f32.mrf.mxu0
  %v3320 = vadd.f32 0.0, %v3319
  %v3321 = vpop.f32.mrf.mxu0
  %3322 = vmatprep.mubr.bf16.mxu0 0
  %3323 = vmatmul.mubr.bf16.gmra.mxu0 %v3216
  %v3324 = vpop.f32.mrf.mxu0
  %v3325 = vadd.f32 0.0, %v3324
  %v3326 = vpop.f32.mrf.mxu0
  %v3327 = vpop.f32.mrf.mxu0
  %v3328 = vadd.f32 0.0, %v3327
  %v3329 = vpop.f32.mrf.mxu0
  %3330 = vdwg.mxu0
  %v3331 = vadd.f32 %v3211, %v3317
  %v3332 = vadd.f32 %v3212, %v3320
  %v3333 = vadd.f32 %v3213, %v3325
  %v3334 = vadd.f32 %v3214, %v3328
  %v3335 = vrot.slane %v2791, 1
  %v3336 = vrot.slane %v2793, 2
  %v3337 = vor.u32 %v3335, %v3336
  %v3338 = vshrl.u32 %v2788, 16
  %v3340 = vrot.slane %v3338, 1
  %v3341 = vrot.slane %v2798, 2
  %v3342 = vor.u32 %v3340, %v3341
  %v3343 = vsel %vm1202, %v3337, %v3342
  %v3344 = vrot.slane %v2803, 1
  %v3345 = vrot.slane %v2805, 2
  %v3346 = vor.u32 %v3344, %v3345
  %v3347 = vshrl.u32 %v2789, 16
  %v3349 = vrot.slane %v3347, 1
  %v3350 = vrot.slane %v2810, 2
  %v3351 = vor.u32 %v3349, %v3350
  %v3352 = vsel %vm1202, %v3346, %v3351
  %v3355 = vrot.slane %v2822, 1
  %v3356 = vrot.slane %v2824, 2
  %v3357 = vor.u32 %v3355, %v3356
  %v3358 = vshrl.u32 %v2819, 16
  %v3360 = vrot.slane %v3358, 1
  %v3361 = vrot.slane %v2829, 2
  %v3362 = vor.u32 %v3360, %v3361
  %v3363 = vsel %vm1202, %v3357, %v3362
  %v3364 = vrot.slane %v2834, 1
  %v3365 = vrot.slane %v2836, 2
  %v3366 = vor.u32 %v3364, %v3365
  %v3367 = vshrl.u32 %v2820, 16
  %v3369 = vrot.slane %v3367, 1
  %v3370 = vrot.slane %v2841, 2
  %v3371 = vor.u32 %v3369, %v3370
  %v3372 = vsel %vm1202, %v3366, %v3371
  %v3375 = vsel %vm410, %v3343, 0
  %v3376 = vsel %vm410, %v3352, 0
  %v3377 = vsel %vm411, %v3363, 0
  %v3378 = vsel %vm411, %v3372, 0
  %s3379 = scalar_lea.vmem %s4, 1024
  %v3380 = vld [vmem:[%s3379] sm:$0xf]
  %v3381 = vld [vmem:[%s3379 + $0x4] sm:$0xf]
  %v3382 = vld [vmem:[%s3379 + $0x8] sm:$0xf]
  %v3383 = vld [vmem:[%s3379 + $0xc] sm:$0xf]
  %v3384 = vld [vmem:[%s3379 + $0x10] sm:$0xf]
  %v3385 = vld [vmem:[%s3379 + $0x14] sm:$0xf]
  %v3386 = vld [vmem:[%s3379 + $0x18] sm:$0xf]
  %v3387 = vld [vmem:[%s3379 + $0x1c] sm:$0xf]
  %v3388 = vld [vmem:[%s3379 + $0x20] sm:$0xf]
  %v3389 = vld [vmem:[%s3379 + $0x24] sm:$0xf]
  %v3390 = vld [vmem:[%s3379 + $0x28] sm:$0xf]
  %v3391 = vld [vmem:[%s3379 + $0x2c] sm:$0xf]
  %v3392 = vld [vmem:[%s3379 + $0x30] sm:$0xf]
  %v3393 = vld [vmem:[%s3379 + $0x34] sm:$0xf]
  %v3394 = vld [vmem:[%s3379 + $0x38] sm:$0xf]
  %v3395 = vld [vmem:[%s3379 + $0x3c] sm:$0xf]
  %v3412 = vunpack.c.l.b16 %v3380
  %v3413 = vunpack.c.l.b16 %v3381
  %v3414 = vunpack.c.l.b16 %v3382
  %v3415 = vunpack.c.l.b16 %v3383
  %v3416 = vunpack.c.l.b16 %v3384
  %v3417 = vunpack.c.l.b16 %v3385
  %v3418 = vunpack.c.l.b16 %v3386
  %v3419 = vunpack.c.l.b16 %v3387
  %v3420 = vunpack.c.l.b16 %v3388
  %v3421 = vunpack.c.l.b16 %v3389
  %v3422 = vunpack.c.l.b16 %v3390
  %v3423 = vunpack.c.l.b16 %v3391
  %v3424 = vunpack.c.l.b16 %v3392
  %v3425 = vunpack.c.l.b16 %v3393
  %v3426 = vunpack.c.l.b16 %v3394
  %v3427 = vunpack.c.l.b16 %v3395
  %v3428 = vpack.c.b16 %v3413, %v3412
  %v3429 = vpack.c.b16 %v3415, %v3414
  %v3430 = vpack.c.b16 %v3417, %v3416
  %v3431 = vpack.c.b16 %v3419, %v3418
  %v3432 = vpack.c.b16 %v3421, %v3420
  %v3433 = vpack.c.b16 %v3423, %v3422
  %v3434 = vpack.c.b16 %v3425, %v3424
  %v3435 = vpack.c.b16 %v3427, %v3426
  %3444 = vmatprep.subr.bf16.mxu0 0
  %3445 = vmatpush1.bf16.msra.mxu0 %v3435
  %3446 = vmatprep.subr.bf16.mxu0 0
  %3447 = vmatpush1.bf16.msra.mxu0 %v3434
  %3448 = vmatprep.subr.bf16.mxu0 0
  %3449 = vmatpush1.bf16.msra.mxu0 %v3433
  %3450 = vmatprep.subr.bf16.mxu0 0
  %3451 = vmatpush1.bf16.msra.mxu0 %v3432
  %3452 = vmatprep.subr.bf16.mxu0 0
  %3453 = vmatpush1.bf16.msra.mxu0 %v3431
  %3454 = vmatprep.subr.bf16.mxu0 0
  %3455 = vmatpush1.bf16.msra.mxu0 %v3430
  %3456 = vmatprep.subr.bf16.mxu0 0
  %3457 = vmatpush1.bf16.msra.mxu0 %v3429
  %3458 = vmatprep.subr.bf16.mxu0 0
  %3459 = vmatpush1.bf16.msra.mxu0 %v3428
  %3460 = vmatprep.subr.bf16.mxu0 0
  %3461 = vmatpush2.bf16.msra.mxu0 0
  %3462 = vmatprep.subr.bf16.mxu0 0
  %3463 = vmatpush2.bf16.msra.mxu0 0
  %3464 = vmatprep.subr.bf16.mxu0 0
  %3465 = vmatpush2.bf16.msra.mxu0 0
  %3466 = vmatprep.subr.bf16.mxu0 0
  %3467 = vmatpush2.bf16.msra.mxu0 0
  %3468 = vmatprep.subr.bf16.mxu0 0
  %3469 = vmatpush2.bf16.msra.mxu0 0
  %3470 = vmatprep.subr.bf16.mxu0 0
  %3471 = vmatpush2.bf16.msra.mxu0 0
  %3472 = vmatprep.subr.bf16.mxu0 0
  %3473 = vmatpush2.bf16.msra.mxu0 0
  %3474 = vmatprep.subr.bf16.mxu0 0
  %3475 = vmatpush2.bf16.msra.mxu0 0
  %3476 = vmatprep.mubr.bf16.mxu0 0
  %3477 = vmatmul.mubr.bf16.gmra.mxu0 %v3376
  %v3478 = vpop.f32.mrf.mxu0
  %v3479 = vadd.f32 0.0, %v3478
  %v3480 = vpop.f32.mrf.mxu0
  %v3481 = vpop.f32.mrf.mxu0
  %v3482 = vadd.f32 0.0, %v3481
  %v3483 = vpop.f32.mrf.mxu0
  %3484 = vmatprep.mubr.bf16.mxu0 0
  %3485 = vmatmul.mubr.bf16.gmra.mxu0 %v3378
  %v3486 = vpop.f32.mrf.mxu0
  %v3487 = vadd.f32 0.0, %v3486
  %v3488 = vpop.f32.mrf.mxu0
  %v3489 = vpop.f32.mrf.mxu0
  %v3490 = vadd.f32 0.0, %v3489
  %v3491 = vpop.f32.mrf.mxu0
  %3492 = vdwg.mxu0
  %v3493 = vadd.f32 %v3331, %v3479
  %v3494 = vadd.f32 %v3332, %v3482
  %v3495 = vadd.f32 %v3333, %v3487
  %v3496 = vadd.f32 %v3334, %v3490
  %s3497 = scalar_lea.vmem %s3, 384
  %v3498 = vld [vmem:[%s3497] sm:$0xf]
  %v3499 = vld [vmem:[%s3497 + $0x4] sm:$0xf]
  %v3500 = vld [vmem:[%s3497 + $0x8] sm:$0xf]
  %v3501 = vld [vmem:[%s3497 + $0xc] sm:$0xf]
  %v3502 = vld [vmem:[%s3497 + $0x10] sm:$0xf]
  %v3503 = vld [vmem:[%s3497 + $0x14] sm:$0xf]
  %v3504 = vld [vmem:[%s3497 + $0x18] sm:$0xf]
  %v3505 = vld [vmem:[%s3497 + $0x1c] sm:$0xf]
  %v3506 = vld [vmem:[%s3497 + $0x20] sm:$0xf]
  %v3507 = vld [vmem:[%s3497 + $0x24] sm:$0xf]
  %v3508 = vld [vmem:[%s3497 + $0x28] sm:$0xf]
  %v3509 = vld [vmem:[%s3497 + $0x2c] sm:$0xf]
  %v3510 = vld [vmem:[%s3497 + $0x30] sm:$0xf]
  %v3511 = vld [vmem:[%s3497 + $0x34] sm:$0xf]
  %v3512 = vld [vmem:[%s3497 + $0x38] sm:$0xf]
  %v3513 = vld [vmem:[%s3497 + $0x3c] sm:$0xf]
  %v3530 = vunpack.c.l.b16 %v3498
  %v3531 = vunpack.c.l.b16 %v3499
  %v3532 = vunpack.c.l.b16 %v3500
  %v3533 = vunpack.c.l.b16 %v3501
  %v3534 = vunpack.c.l.b16 %v3502
  %v3535 = vunpack.c.l.b16 %v3503
  %v3536 = vunpack.c.l.b16 %v3504
  %v3537 = vunpack.c.l.b16 %v3505
  %v3538 = vunpack.c.l.b16 %v3506
  %v3539 = vunpack.c.l.b16 %v3507
  %v3540 = vunpack.c.l.b16 %v3508
  %v3541 = vunpack.c.l.b16 %v3509
  %v3542 = vunpack.c.l.b16 %v3510
  %v3543 = vunpack.c.l.b16 %v3511
  %v3544 = vunpack.c.l.b16 %v3512
  %v3545 = vunpack.c.l.b16 %v3513
  %v3546 = vpack.c.b16 %v3531, %v3530
  %v3547 = vpack.c.b16 %v3533, %v3532
  %v3548 = vpack.c.b16 %v3535, %v3534
  %v3549 = vpack.c.b16 %v3537, %v3536
  %v3550 = vpack.c.b16 %v3539, %v3538
  %v3551 = vpack.c.b16 %v3541, %v3540
  %v3552 = vpack.c.b16 %v3543, %v3542
  %v3553 = vpack.c.b16 %v3545, %v3544
  %3562 = vmatprep.subr.bf16.mxu0 0
  %3563 = vmatpush1.bf16.msra.mxu0 %v3553
  %3564 = vmatprep.subr.bf16.mxu0 0
  %3565 = vmatpush1.bf16.msra.mxu0 %v3552
  %3566 = vmatprep.subr.bf16.mxu0 0
  %3567 = vmatpush1.bf16.msra.mxu0 %v3551
  %3568 = vmatprep.subr.bf16.mxu0 0
  %3569 = vmatpush1.bf16.msra.mxu0 %v3550
  %3570 = vmatprep.subr.bf16.mxu0 0
  %3571 = vmatpush1.bf16.msra.mxu0 %v3549
  %3572 = vmatprep.subr.bf16.mxu0 0
  %3573 = vmatpush1.bf16.msra.mxu0 %v3548
  %3574 = vmatprep.subr.bf16.mxu0 0
  %3575 = vmatpush1.bf16.msra.mxu0 %v3547
  %3576 = vmatprep.subr.bf16.mxu0 0
  %3577 = vmatpush1.bf16.msra.mxu0 %v3546
  %3578 = vmatprep.subr.bf16.mxu0 0
  %3579 = vmatpush2.bf16.msra.mxu0 0
  %3580 = vmatprep.subr.bf16.mxu0 0
  %3581 = vmatpush2.bf16.msra.mxu0 0
  %3582 = vmatprep.subr.bf16.mxu0 0
  %3583 = vmatpush2.bf16.msra.mxu0 0
  %3584 = vmatprep.subr.bf16.mxu0 0
  %3585 = vmatpush2.bf16.msra.mxu0 0
  %3586 = vmatprep.subr.bf16.mxu0 0
  %3587 = vmatpush2.bf16.msra.mxu0 0
  %3588 = vmatprep.subr.bf16.mxu0 0
  %3589 = vmatpush2.bf16.msra.mxu0 0
  %3590 = vmatprep.subr.bf16.mxu0 0
  %3591 = vmatpush2.bf16.msra.mxu0 0
  %3592 = vmatprep.subr.bf16.mxu0 0
  %3593 = vmatpush2.bf16.msra.mxu0 0
  %3594 = vmatprep.mubr.bf16.mxu0 0
  %3595 = vmatmul.mubr.bf16.gmra.mxu0 %v3375
  %v3596 = vpop.f32.mrf.mxu0
  %v3597 = vadd.f32 0.0, %v3596
  %v3598 = vpop.f32.mrf.mxu0
  %v3599 = vpop.f32.mrf.mxu0
  %v3600 = vadd.f32 0.0, %v3599
  %v3601 = vpop.f32.mrf.mxu0
  %3602 = vmatprep.mubr.bf16.mxu0 0
  %3603 = vmatmul.mubr.bf16.gmra.mxu0 %v3377
  %v3604 = vpop.f32.mrf.mxu0
  %v3605 = vadd.f32 0.0, %v3604
  %v3606 = vpop.f32.mrf.mxu0
  %v3607 = vpop.f32.mrf.mxu0
  %v3608 = vadd.f32 0.0, %v3607
  %v3609 = vpop.f32.mrf.mxu0
  %3610 = vdwg.mxu0
  %v3611 = vadd.f32 %v3083, %v3597
  %v3612 = vadd.f32 %v3084, %v3600
  %v3613 = vadd.f32 %v3085, %v3605
  %v3614 = vadd.f32 %v3086, %v3608
  %v3615 = vrot.slane %v2541, 2
  %v3616 = vrot.slane %v2788, 2
  %v3617 = vsel %vm1402, %v3615, %v3616
  %v3618 = vrot.slane %v2542, 2
  %v3619 = vrot.slane %v2789, 2
  %v3620 = vsel %vm1402, %v3618, %v3619
  %v3623 = vrot.slane %v2545, 2
  %v3624 = vrot.slane %v2819, 2
  %v3625 = vsel %vm1402, %v3623, %v3624
  %v3626 = vrot.slane %v2546, 2
  %v3627 = vrot.slane %v2820, 2
  %v3628 = vsel %vm1402, %v3626, %v3627
  %s3631 = scalar_lea.vmem %s4, 1088
  %v3632 = vld [vmem:[%s3631] sm:$0xf]
  %v3633 = vld [vmem:[%s3631 + $0x4] sm:$0xf]
  %v3634 = vld [vmem:[%s3631 + $0x8] sm:$0xf]
  %v3635 = vld [vmem:[%s3631 + $0xc] sm:$0xf]
  %v3636 = vld [vmem:[%s3631 + $0x10] sm:$0xf]
  %v3637 = vld [vmem:[%s3631 + $0x14] sm:$0xf]
  %v3638 = vld [vmem:[%s3631 + $0x18] sm:$0xf]
  %v3639 = vld [vmem:[%s3631 + $0x1c] sm:$0xf]
  %v3640 = vld [vmem:[%s3631 + $0x20] sm:$0xf]
  %v3641 = vld [vmem:[%s3631 + $0x24] sm:$0xf]
  %v3642 = vld [vmem:[%s3631 + $0x28] sm:$0xf]
  %v3643 = vld [vmem:[%s3631 + $0x2c] sm:$0xf]
  %v3644 = vld [vmem:[%s3631 + $0x30] sm:$0xf]
  %v3645 = vld [vmem:[%s3631 + $0x34] sm:$0xf]
  %v3646 = vld [vmem:[%s3631 + $0x38] sm:$0xf]
  %v3647 = vld [vmem:[%s3631 + $0x3c] sm:$0xf]
  %v3664 = vunpack.c.l.b16 %v3632
  %v3665 = vunpack.c.l.b16 %v3633
  %v3666 = vunpack.c.l.b16 %v3634
  %v3667 = vunpack.c.l.b16 %v3635
  %v3668 = vunpack.c.l.b16 %v3636
  %v3669 = vunpack.c.l.b16 %v3637
  %v3670 = vunpack.c.l.b16 %v3638
  %v3671 = vunpack.c.l.b16 %v3639
  %v3672 = vunpack.c.l.b16 %v3640
  %v3673 = vunpack.c.l.b16 %v3641
  %v3674 = vunpack.c.l.b16 %v3642
  %v3675 = vunpack.c.l.b16 %v3643
  %v3676 = vunpack.c.l.b16 %v3644
  %v3677 = vunpack.c.l.b16 %v3645
  %v3678 = vunpack.c.l.b16 %v3646
  %v3679 = vunpack.c.l.b16 %v3647
  %v3680 = vpack.c.b16 %v3665, %v3664
  %v3681 = vpack.c.b16 %v3667, %v3666
  %v3682 = vpack.c.b16 %v3669, %v3668
  %v3683 = vpack.c.b16 %v3671, %v3670
  %v3684 = vpack.c.b16 %v3673, %v3672
  %v3685 = vpack.c.b16 %v3675, %v3674
  %v3686 = vpack.c.b16 %v3677, %v3676
  %v3687 = vpack.c.b16 %v3679, %v3678
  %3696 = vmatprep.subr.bf16.mxu0 0
  %3697 = vmatpush1.bf16.msra.mxu0 %v3687
  %3698 = vmatprep.subr.bf16.mxu0 0
  %3699 = vmatpush1.bf16.msra.mxu0 %v3686
  %3700 = vmatprep.subr.bf16.mxu0 0
  %3701 = vmatpush1.bf16.msra.mxu0 %v3685
  %3702 = vmatprep.subr.bf16.mxu0 0
  %3703 = vmatpush1.bf16.msra.mxu0 %v3684
  %3704 = vmatprep.subr.bf16.mxu0 0
  %3705 = vmatpush1.bf16.msra.mxu0 %v3683
  %3706 = vmatprep.subr.bf16.mxu0 0
  %3707 = vmatpush1.bf16.msra.mxu0 %v3682
  %3708 = vmatprep.subr.bf16.mxu0 0
  %3709 = vmatpush1.bf16.msra.mxu0 %v3681
  %3710 = vmatprep.subr.bf16.mxu0 0
  %3711 = vmatpush1.bf16.msra.mxu0 %v3680
  %3712 = vmatprep.subr.bf16.mxu0 0
  %3713 = vmatpush2.bf16.msra.mxu0 0
  %3714 = vmatprep.subr.bf16.mxu0 0
  %3715 = vmatpush2.bf16.msra.mxu0 0
  %3716 = vmatprep.subr.bf16.mxu0 0
  %3717 = vmatpush2.bf16.msra.mxu0 0
  %3718 = vmatprep.subr.bf16.mxu0 0
  %3719 = vmatpush2.bf16.msra.mxu0 0
  %3720 = vmatprep.subr.bf16.mxu0 0
  %3721 = vmatpush2.bf16.msra.mxu0 0
  %3722 = vmatprep.subr.bf16.mxu0 0
  %3723 = vmatpush2.bf16.msra.mxu0 0
  %3724 = vmatprep.subr.bf16.mxu0 0
  %3725 = vmatpush2.bf16.msra.mxu0 0
  %3726 = vmatprep.subr.bf16.mxu0 0
  %3727 = vmatpush2.bf16.msra.mxu0 0
  %3728 = vmatprep.mubr.bf16.mxu0 0
  %3729 = vmatmul.mubr.bf16.gmra.mxu0 %v3620
  %v3730 = vpop.f32.mrf.mxu0
  %v3731 = vadd.f32 0.0, %v3730
  %v3732 = vpop.f32.mrf.mxu0
  %v3733 = vpop.f32.mrf.mxu0
  %v3734 = vadd.f32 0.0, %v3733
  %v3735 = vpop.f32.mrf.mxu0
  %3736 = vmatprep.mubr.bf16.mxu0 0
  %3737 = vmatmul.mubr.bf16.gmra.mxu0 %v3628
  %v3738 = vpop.f32.mrf.mxu0
  %v3739 = vadd.f32 0.0, %v3738
  %v3740 = vpop.f32.mrf.mxu0
  %v3741 = vpop.f32.mrf.mxu0
  %v3742 = vadd.f32 0.0, %v3741
  %v3743 = vpop.f32.mrf.mxu0
  %3744 = vdwg.mxu0
  %v3745 = vadd.f32 %v3493, %v3731
  %v3746 = vadd.f32 %v3494, %v3734
  %v3747 = vadd.f32 %v3495, %v3739
  %v3748 = vadd.f32 %v3496, %v3742
  %s3749 = scalar_lea.vmem %s3, 448
  %v3750 = vld [vmem:[%s3749] sm:$0xf]
  %v3751 = vld [vmem:[%s3749 + $0x4] sm:$0xf]
  %v3752 = vld [vmem:[%s3749 + $0x8] sm:$0xf]
  %v3753 = vld [vmem:[%s3749 + $0xc] sm:$0xf]
  %v3754 = vld [vmem:[%s3749 + $0x10] sm:$0xf]
  %v3755 = vld [vmem:[%s3749 + $0x14] sm:$0xf]
  %v3756 = vld [vmem:[%s3749 + $0x18] sm:$0xf]
  %v3757 = vld [vmem:[%s3749 + $0x1c] sm:$0xf]
  %v3758 = vld [vmem:[%s3749 + $0x20] sm:$0xf]
  %v3759 = vld [vmem:[%s3749 + $0x24] sm:$0xf]
  %v3760 = vld [vmem:[%s3749 + $0x28] sm:$0xf]
  %v3761 = vld [vmem:[%s3749 + $0x2c] sm:$0xf]
  %v3762 = vld [vmem:[%s3749 + $0x30] sm:$0xf]
  %v3763 = vld [vmem:[%s3749 + $0x34] sm:$0xf]
  %v3764 = vld [vmem:[%s3749 + $0x38] sm:$0xf]
  %v3765 = vld [vmem:[%s3749 + $0x3c] sm:$0xf]
  %v3782 = vunpack.c.l.b16 %v3750
  %v3783 = vunpack.c.l.b16 %v3751
  %v3784 = vunpack.c.l.b16 %v3752
  %v3785 = vunpack.c.l.b16 %v3753
  %v3786 = vunpack.c.l.b16 %v3754
  %v3787 = vunpack.c.l.b16 %v3755
  %v3788 = vunpack.c.l.b16 %v3756
  %v3789 = vunpack.c.l.b16 %v3757
  %v3790 = vunpack.c.l.b16 %v3758
  %v3791 = vunpack.c.l.b16 %v3759
  %v3792 = vunpack.c.l.b16 %v3760
  %v3793 = vunpack.c.l.b16 %v3761
  %v3794 = vunpack.c.l.b16 %v3762
  %v3795 = vunpack.c.l.b16 %v3763
  %v3796 = vunpack.c.l.b16 %v3764
  %v3797 = vunpack.c.l.b16 %v3765
  %v3798 = vpack.c.b16 %v3783, %v3782
  %v3799 = vpack.c.b16 %v3785, %v3784
  %v3800 = vpack.c.b16 %v3787, %v3786
  %v3801 = vpack.c.b16 %v3789, %v3788
  %v3802 = vpack.c.b16 %v3791, %v3790
  %v3803 = vpack.c.b16 %v3793, %v3792
  %v3804 = vpack.c.b16 %v3795, %v3794
  %v3805 = vpack.c.b16 %v3797, %v3796
  %3814 = vmatprep.subr.bf16.mxu0 0
  %3815 = vmatpush1.bf16.msra.mxu0 %v3805
  %3816 = vmatprep.subr.bf16.mxu0 0
  %3817 = vmatpush1.bf16.msra.mxu0 %v3804
  %3818 = vmatprep.subr.bf16.mxu0 0
  %3819 = vmatpush1.bf16.msra.mxu0 %v3803
  %3820 = vmatprep.subr.bf16.mxu0 0
  %3821 = vmatpush1.bf16.msra.mxu0 %v3802
  %3822 = vmatprep.subr.bf16.mxu0 0
  %3823 = vmatpush1.bf16.msra.mxu0 %v3801
  %3824 = vmatprep.subr.bf16.mxu0 0
  %3825 = vmatpush1.bf16.msra.mxu0 %v3800
  %3826 = vmatprep.subr.bf16.mxu0 0
  %3827 = vmatpush1.bf16.msra.mxu0 %v3799
  %3828 = vmatprep.subr.bf16.mxu0 0
  %3829 = vmatpush1.bf16.msra.mxu0 %v3798
  %3830 = vmatprep.subr.bf16.mxu0 0
  %3831 = vmatpush2.bf16.msra.mxu0 0
  %3832 = vmatprep.subr.bf16.mxu0 0
  %3833 = vmatpush2.bf16.msra.mxu0 0
  %3834 = vmatprep.subr.bf16.mxu0 0
  %3835 = vmatpush2.bf16.msra.mxu0 0
  %3836 = vmatprep.subr.bf16.mxu0 0
  %3837 = vmatpush2.bf16.msra.mxu0 0
  %3838 = vmatprep.subr.bf16.mxu0 0
  %3839 = vmatpush2.bf16.msra.mxu0 0
  %3840 = vmatprep.subr.bf16.mxu0 0
  %3841 = vmatpush2.bf16.msra.mxu0 0
  %3842 = vmatprep.subr.bf16.mxu0 0
  %3843 = vmatpush2.bf16.msra.mxu0 0
  %3844 = vmatprep.subr.bf16.mxu0 0
  %3845 = vmatpush2.bf16.msra.mxu0 0
  %3846 = vmatprep.mubr.bf16.mxu0 0
  %3847 = vmatmul.mubr.bf16.gmra.mxu0 %v3617
  %v3848 = vpop.f32.mrf.mxu0
  %v3849 = vadd.f32 0.0, %v3848
  %v3850 = vpop.f32.mrf.mxu0
  %v3851 = vpop.f32.mrf.mxu0
  %v3852 = vadd.f32 0.0, %v3851
  %v3853 = vpop.f32.mrf.mxu0
  %3854 = vmatprep.mubr.bf16.mxu0 0
  %3855 = vmatmul.mubr.bf16.gmra.mxu0 %v3625
  %v3856 = vpop.f32.mrf.mxu0
  %v3857 = vadd.f32 0.0, %v3856
  %v3858 = vpop.f32.mrf.mxu0
  %v3859 = vpop.f32.mrf.mxu0
  %v3860 = vadd.f32 0.0, %v3859
  %v3861 = vpop.f32.mrf.mxu0
  %3862 = vdwg.mxu0
  %v3863 = vadd.f32 %v3611, %v3849
  %v3864 = vadd.f32 %v3612, %v3852
  %v3865 = vadd.f32 %v3613, %v3857
  %v3866 = vadd.f32 %v3614, %v3860
  %v3867 = vrot.slane %v2791, 2
  %v3868 = vrot.slane %v2793, 3
  %v3869 = vor.u32 %v3867, %v3868
  %v3870 = vrot.slane %v3338, 2
  %v3871 = vrot.slane %v2798, 3
  %v3872 = vor.u32 %v3870, %v3871
  %v3873 = vsel %vm1748, %v3869, %v3872
  %v3874 = vrot.slane %v2803, 2
  %v3875 = vrot.slane %v2805, 3
  %v3876 = vor.u32 %v3874, %v3875
  %v3877 = vrot.slane %v3347, 2
  %v3878 = vrot.slane %v2810, 3
  %v3879 = vor.u32 %v3877, %v3878
  %v3880 = vsel %vm1748, %v3876, %v3879
  %v3883 = vrot.slane %v2822, 2
  %v3884 = vrot.slane %v2824, 3
  %v3885 = vor.u32 %v3883, %v3884
  %v3886 = vrot.slane %v3358, 2
  %v3887 = vrot.slane %v2829, 3
  %v3888 = vor.u32 %v3886, %v3887
  %v3889 = vsel %vm1748, %v3885, %v3888
  %v3890 = vrot.slane %v2834, 2
  %v3891 = vrot.slane %v2836, 3
  %v3892 = vor.u32 %v3890, %v3891
  %v3893 = vrot.slane %v3367, 2
  %v3894 = vrot.slane %v2841, 3
  %v3895 = vor.u32 %v3893, %v3894
  %v3896 = vsel %vm1748, %v3892, %v3895
  %v3899 = vsel %vm802, %v3873, 0
  %v3900 = vsel %vm802, %v3880, 0
  %v3901 = vsel %vm803, %v3889, 0
  %v3902 = vsel %vm803, %v3896, 0
  %s3903 = scalar_lea.vmem %s4, 1152
  %v3904 = vld [vmem:[%s3903] sm:$0xf]
  %v3905 = vld [vmem:[%s3903 + $0x4] sm:$0xf]
  %v3906 = vld [vmem:[%s3903 + $0x8] sm:$0xf]
  %v3907 = vld [vmem:[%s3903 + $0xc] sm:$0xf]
  %v3908 = vld [vmem:[%s3903 + $0x10] sm:$0xf]
  %v3909 = vld [vmem:[%s3903 + $0x14] sm:$0xf]
  %v3910 = vld [vmem:[%s3903 + $0x18] sm:$0xf]
  %v3911 = vld [vmem:[%s3903 + $0x1c] sm:$0xf]
  %v3912 = vld [vmem:[%s3903 + $0x20] sm:$0xf]
  %v3913 = vld [vmem:[%s3903 + $0x24] sm:$0xf]
  %v3914 = vld [vmem:[%s3903 + $0x28] sm:$0xf]
  %v3915 = vld [vmem:[%s3903 + $0x2c] sm:$0xf]
  %v3916 = vld [vmem:[%s3903 + $0x30] sm:$0xf]
  %v3917 = vld [vmem:[%s3903 + $0x34] sm:$0xf]
  %v3918 = vld [vmem:[%s3903 + $0x38] sm:$0xf]
  %v3919 = vld [vmem:[%s3903 + $0x3c] sm:$0xf]
  %v3936 = vunpack.c.l.b16 %v3904
  %v3937 = vunpack.c.l.b16 %v3905
  %v3938 = vunpack.c.l.b16 %v3906
  %v3939 = vunpack.c.l.b16 %v3907
  %v3940 = vunpack.c.l.b16 %v3908
  %v3941 = vunpack.c.l.b16 %v3909
  %v3942 = vunpack.c.l.b16 %v3910
  %v3943 = vunpack.c.l.b16 %v3911
  %v3944 = vunpack.c.l.b16 %v3912
  %v3945 = vunpack.c.l.b16 %v3913
  %v3946 = vunpack.c.l.b16 %v3914
  %v3947 = vunpack.c.l.b16 %v3915
  %v3948 = vunpack.c.l.b16 %v3916
  %v3949 = vunpack.c.l.b16 %v3917
  %v3950 = vunpack.c.l.b16 %v3918
  %v3951 = vunpack.c.l.b16 %v3919
  %v3952 = vpack.c.b16 %v3937, %v3936
  %v3953 = vpack.c.b16 %v3939, %v3938
  %v3954 = vpack.c.b16 %v3941, %v3940
  %v3955 = vpack.c.b16 %v3943, %v3942
  %v3956 = vpack.c.b16 %v3945, %v3944
  %v3957 = vpack.c.b16 %v3947, %v3946
  %v3958 = vpack.c.b16 %v3949, %v3948
  %v3959 = vpack.c.b16 %v3951, %v3950
  %3968 = vmatprep.subr.bf16.mxu0 0
  %3969 = vmatpush1.bf16.msra.mxu0 %v3959
  %3970 = vmatprep.subr.bf16.mxu0 0
  %3971 = vmatpush1.bf16.msra.mxu0 %v3958
  %3972 = vmatprep.subr.bf16.mxu0 0
  %3973 = vmatpush1.bf16.msra.mxu0 %v3957
  %3974 = vmatprep.subr.bf16.mxu0 0
  %3975 = vmatpush1.bf16.msra.mxu0 %v3956
  %3976 = vmatprep.subr.bf16.mxu0 0
  %3977 = vmatpush1.bf16.msra.mxu0 %v3955
  %3978 = vmatprep.subr.bf16.mxu0 0
  %3979 = vmatpush1.bf16.msra.mxu0 %v3954
  %3980 = vmatprep.subr.bf16.mxu0 0
  %3981 = vmatpush1.bf16.msra.mxu0 %v3953
  %3982 = vmatprep.subr.bf16.mxu0 0
  %3983 = vmatpush1.bf16.msra.mxu0 %v3952
  %3984 = vmatprep.subr.bf16.mxu0 0
  %3985 = vmatpush2.bf16.msra.mxu0 0
  %3986 = vmatprep.subr.bf16.mxu0 0
  %3987 = vmatpush2.bf16.msra.mxu0 0
  %3988 = vmatprep.subr.bf16.mxu0 0
  %3989 = vmatpush2.bf16.msra.mxu0 0
  %3990 = vmatprep.subr.bf16.mxu0 0
  %3991 = vmatpush2.bf16.msra.mxu0 0
  %3992 = vmatprep.subr.bf16.mxu0 0
  %3993 = vmatpush2.bf16.msra.mxu0 0
  %3994 = vmatprep.subr.bf16.mxu0 0
  %3995 = vmatpush2.bf16.msra.mxu0 0
  %3996 = vmatprep.subr.bf16.mxu0 0
  %3997 = vmatpush2.bf16.msra.mxu0 0
  %3998 = vmatprep.subr.bf16.mxu0 0
  %3999 = vmatpush2.bf16.msra.mxu0 0
  %4000 = vmatprep.mubr.bf16.mxu0 0
  %4001 = vmatmul.mubr.bf16.gmra.mxu0 %v3900
  %v4002 = vpop.f32.mrf.mxu0
  %v4003 = vadd.f32 0.0, %v4002
  %v4004 = vpop.f32.mrf.mxu0
  %v4005 = vpop.f32.mrf.mxu0
  %v4006 = vadd.f32 0.0, %v4005
  %v4007 = vpop.f32.mrf.mxu0
  %4008 = vmatprep.mubr.bf16.mxu0 0
  %4009 = vmatmul.mubr.bf16.gmra.mxu0 %v3902
  %v4010 = vpop.f32.mrf.mxu0
  %v4011 = vadd.f32 0.0, %v4010
  %v4012 = vpop.f32.mrf.mxu0
  %v4013 = vpop.f32.mrf.mxu0
  %v4014 = vadd.f32 0.0, %v4013
  %v4015 = vpop.f32.mrf.mxu0
  %4016 = vdwg.mxu0
  %v4017 = vadd.f32 %v3745, %v4003
  %v4018 = vadd.f32 %v3746, %v4006
  %v4019 = vadd.f32 %v3747, %v4011
  %v4020 = vadd.f32 %v3748, %v4014
  %s4021 = scalar_lea.vmem %s3, 512
  %v4022 = vld [vmem:[%s4021] sm:$0xf]
  %v4023 = vld [vmem:[%s4021 + $0x4] sm:$0xf]
  %v4024 = vld [vmem:[%s4021 + $0x8] sm:$0xf]
  %v4025 = vld [vmem:[%s4021 + $0xc] sm:$0xf]
  %v4026 = vld [vmem:[%s4021 + $0x10] sm:$0xf]
  %v4027 = vld [vmem:[%s4021 + $0x14] sm:$0xf]
  %v4028 = vld [vmem:[%s4021 + $0x18] sm:$0xf]
  %v4029 = vld [vmem:[%s4021 + $0x1c] sm:$0xf]
  %v4030 = vld [vmem:[%s4021 + $0x20] sm:$0xf]
  %v4031 = vld [vmem:[%s4021 + $0x24] sm:$0xf]
  %v4032 = vld [vmem:[%s4021 + $0x28] sm:$0xf]
  %v4033 = vld [vmem:[%s4021 + $0x2c] sm:$0xf]
  %v4034 = vld [vmem:[%s4021 + $0x30] sm:$0xf]
  %v4035 = vld [vmem:[%s4021 + $0x34] sm:$0xf]
  %v4036 = vld [vmem:[%s4021 + $0x38] sm:$0xf]
  %v4037 = vld [vmem:[%s4021 + $0x3c] sm:$0xf]
  %v4054 = vunpack.c.l.b16 %v4022
  %v4055 = vunpack.c.l.b16 %v4023
  %v4056 = vunpack.c.l.b16 %v4024
  %v4057 = vunpack.c.l.b16 %v4025
  %v4058 = vunpack.c.l.b16 %v4026
  %v4059 = vunpack.c.l.b16 %v4027
  %v4060 = vunpack.c.l.b16 %v4028
  %v4061 = vunpack.c.l.b16 %v4029
  %v4062 = vunpack.c.l.b16 %v4030
  %v4063 = vunpack.c.l.b16 %v4031
  %v4064 = vunpack.c.l.b16 %v4032
  %v4065 = vunpack.c.l.b16 %v4033
  %v4066 = vunpack.c.l.b16 %v4034
  %v4067 = vunpack.c.l.b16 %v4035
  %v4068 = vunpack.c.l.b16 %v4036
  %v4069 = vunpack.c.l.b16 %v4037
  %v4070 = vpack.c.b16 %v4055, %v4054
  %v4071 = vpack.c.b16 %v4057, %v4056
  %v4072 = vpack.c.b16 %v4059, %v4058
  %v4073 = vpack.c.b16 %v4061, %v4060
  %v4074 = vpack.c.b16 %v4063, %v4062
  %v4075 = vpack.c.b16 %v4065, %v4064
  %v4076 = vpack.c.b16 %v4067, %v4066
  %v4077 = vpack.c.b16 %v4069, %v4068
  %4086 = vmatprep.subr.bf16.mxu0 0
  %4087 = vmatpush1.bf16.msra.mxu0 %v4077
  %4088 = vmatprep.subr.bf16.mxu0 0
  %4089 = vmatpush1.bf16.msra.mxu0 %v4076
  %4090 = vmatprep.subr.bf16.mxu0 0
  %4091 = vmatpush1.bf16.msra.mxu0 %v4075
  %4092 = vmatprep.subr.bf16.mxu0 0
  %4093 = vmatpush1.bf16.msra.mxu0 %v4074
  %4094 = vmatprep.subr.bf16.mxu0 0
  %4095 = vmatpush1.bf16.msra.mxu0 %v4073
  %4096 = vmatprep.subr.bf16.mxu0 0
  %4097 = vmatpush1.bf16.msra.mxu0 %v4072
  %4098 = vmatprep.subr.bf16.mxu0 0
  %4099 = vmatpush1.bf16.msra.mxu0 %v4071
  %4100 = vmatprep.subr.bf16.mxu0 0
  %4101 = vmatpush1.bf16.msra.mxu0 %v4070
  %4102 = vmatprep.subr.bf16.mxu0 0
  %4103 = vmatpush2.bf16.msra.mxu0 0
  %4104 = vmatprep.subr.bf16.mxu0 0
  %4105 = vmatpush2.bf16.msra.mxu0 0
  %4106 = vmatprep.subr.bf16.mxu0 0
  %4107 = vmatpush2.bf16.msra.mxu0 0
  %4108 = vmatprep.subr.bf16.mxu0 0
  %4109 = vmatpush2.bf16.msra.mxu0 0
  %4110 = vmatprep.subr.bf16.mxu0 0
  %4111 = vmatpush2.bf16.msra.mxu0 0
  %4112 = vmatprep.subr.bf16.mxu0 0
  %4113 = vmatpush2.bf16.msra.mxu0 0
  %4114 = vmatprep.subr.bf16.mxu0 0
  %4115 = vmatpush2.bf16.msra.mxu0 0
  %4116 = vmatprep.subr.bf16.mxu0 0
  %4117 = vmatpush2.bf16.msra.mxu0 0
  %4118 = vmatprep.mubr.bf16.mxu0 0
  %4119 = vmatmul.mubr.bf16.gmra.mxu0 %v3899
  %v4120 = vpop.f32.mrf.mxu0
  %v4121 = vadd.f32 0.0, %v4120
  %v4122 = vpop.f32.mrf.mxu0
  %v4123 = vpop.f32.mrf.mxu0
  %v4124 = vadd.f32 0.0, %v4123
  %v4125 = vpop.f32.mrf.mxu0
  %4126 = vmatprep.mubr.bf16.mxu0 0
  %4127 = vmatmul.mubr.bf16.gmra.mxu0 %v3901
  %v4128 = vpop.f32.mrf.mxu0
  %v4129 = vadd.f32 0.0, %v4128
  %v4130 = vpop.f32.mrf.mxu0
  %v4131 = vpop.f32.mrf.mxu0
  %v4132 = vadd.f32 0.0, %v4131
  %v4133 = vpop.f32.mrf.mxu0
  %4134 = vdwg.mxu0
  %v4135 = vadd.f32 %v3863, %v4121
  %v4136 = vadd.f32 %v3864, %v4124
  %v4137 = vadd.f32 %v3865, %v4129
  %v4138 = vadd.f32 %v3866, %v4132
  %v4139 = vrot.slane %v2542, 3
  %v4140 = vrot.slane %v2789, 3
  %v4141 = vsel %vm292, %v4139, %v4140
  %v4143 = vrot.slane %v2546, 3
  %v4144 = vrot.slane %v2820, 3
  %v4145 = vsel %vm292, %v4143, %v4144
  %v4147 = vsel %vm955, %v4141, 0
  %v4148 = vsel %vm956, %v4145, 0
  %s4149 = scalar_lea.vmem %s4, 1216
  %v4150 = vld [vmem:[%s4149] sm:$0xf]
  %v4151 = vld [vmem:[%s4149 + $0x4] sm:$0xf]
  %v4152 = vld [vmem:[%s4149 + $0x8] sm:$0xf]
  %v4153 = vld [vmem:[%s4149 + $0xc] sm:$0xf]
  %v4154 = vld [vmem:[%s4149 + $0x10] sm:$0xf]
  %v4155 = vld [vmem:[%s4149 + $0x14] sm:$0xf]
  %v4156 = vld [vmem:[%s4149 + $0x18] sm:$0xf]
  %v4157 = vld [vmem:[%s4149 + $0x1c] sm:$0xf]
  %v4158 = vld [vmem:[%s4149 + $0x20] sm:$0xf]
  %v4159 = vld [vmem:[%s4149 + $0x24] sm:$0xf]
  %v4160 = vld [vmem:[%s4149 + $0x28] sm:$0xf]
  %v4161 = vld [vmem:[%s4149 + $0x2c] sm:$0xf]
  %v4162 = vld [vmem:[%s4149 + $0x30] sm:$0xf]
  %v4163 = vld [vmem:[%s4149 + $0x34] sm:$0xf]
  %v4164 = vld [vmem:[%s4149 + $0x38] sm:$0xf]
  %v4165 = vld [vmem:[%s4149 + $0x3c] sm:$0xf]
  %v4182 = vunpack.c.l.b16 %v4150
  %v4183 = vunpack.c.l.b16 %v4151
  %v4184 = vunpack.c.l.b16 %v4152
  %v4185 = vunpack.c.l.b16 %v4153
  %v4186 = vunpack.c.l.b16 %v4154
  %v4187 = vunpack.c.l.b16 %v4155
  %v4188 = vunpack.c.l.b16 %v4156
  %v4189 = vunpack.c.l.b16 %v4157
  %v4190 = vunpack.c.l.b16 %v4158
  %v4191 = vunpack.c.l.b16 %v4159
  %v4192 = vunpack.c.l.b16 %v4160
  %v4193 = vunpack.c.l.b16 %v4161
  %v4194 = vunpack.c.l.b16 %v4162
  %v4195 = vunpack.c.l.b16 %v4163
  %v4196 = vunpack.c.l.b16 %v4164
  %v4197 = vunpack.c.l.b16 %v4165
  %v4198 = vpack.c.b16 %v4183, %v4182
  %v4199 = vpack.c.b16 %v4185, %v4184
  %v4200 = vpack.c.b16 %v4187, %v4186
  %v4201 = vpack.c.b16 %v4189, %v4188
  %v4202 = vpack.c.b16 %v4191, %v4190
  %v4203 = vpack.c.b16 %v4193, %v4192
  %v4204 = vpack.c.b16 %v4195, %v4194
  %v4205 = vpack.c.b16 %v4197, %v4196
  %4214 = vmatprep.subr.bf16.mxu0 0
  %4215 = vmatpush1.bf16.msra.mxu0 %v4205
  %4216 = vmatprep.subr.bf16.mxu0 0
  %4217 = vmatpush1.bf16.msra.mxu0 %v4204
  %4218 = vmatprep.subr.bf16.mxu0 0
  %4219 = vmatpush1.bf16.msra.mxu0 %v4203
  %4220 = vmatprep.subr.bf16.mxu0 0
  %4221 = vmatpush1.bf16.msra.mxu0 %v4202
  %4222 = vmatprep.subr.bf16.mxu0 0
  %4223 = vmatpush1.bf16.msra.mxu0 %v4201
  %4224 = vmatprep.subr.bf16.mxu0 0
  %4225 = vmatpush1.bf16.msra.mxu0 %v4200
  %4226 = vmatprep.subr.bf16.mxu0 0
  %4227 = vmatpush1.bf16.msra.mxu0 %v4199
  %4228 = vmatprep.subr.bf16.mxu0 0
  %4229 = vmatpush1.bf16.msra.mxu0 %v4198
  %4230 = vmatprep.subr.bf16.mxu0 0
  %4231 = vmatpush2.bf16.msra.mxu0 0
  %4232 = vmatprep.subr.bf16.mxu0 0
  %4233 = vmatpush2.bf16.msra.mxu0 0
  %4234 = vmatprep.subr.bf16.mxu0 0
  %4235 = vmatpush2.bf16.msra.mxu0 0
  %4236 = vmatprep.subr.bf16.mxu0 0
  %4237 = vmatpush2.bf16.msra.mxu0 0
  %4238 = vmatprep.subr.bf16.mxu0 0
  %4239 = vmatpush2.bf16.msra.mxu0 0
  %4240 = vmatprep.subr.bf16.mxu0 0
  %4241 = vmatpush2.bf16.msra.mxu0 0
  %4242 = vmatprep.subr.bf16.mxu0 0
  %4243 = vmatpush2.bf16.msra.mxu0 0
  %4244 = vmatprep.subr.bf16.mxu0 0
  %4245 = vmatpush2.bf16.msra.mxu0 0
  %4246 = vmatprep.mubr.bf16.mxu0 0
  %4247 = vmatmul.mubr.bf16.gmra.mxu0 %v4147
  %v4248 = vpop.f32.mrf.mxu0
  %v4249 = vadd.f32 0.0, %v4248
  %v4250 = vpop.f32.mrf.mxu0
  %v4251 = vpop.f32.mrf.mxu0
  %v4252 = vadd.f32 0.0, %v4251
  %v4253 = vpop.f32.mrf.mxu0
  %4254 = vmatprep.mubr.bf16.mxu0 0
  %4255 = vmatmul.mubr.bf16.gmra.mxu0 %v4148
  %v4256 = vpop.f32.mrf.mxu0
  %v4257 = vadd.f32 0.0, %v4256
  %v4258 = vpop.f32.mrf.mxu0
  %v4259 = vpop.f32.mrf.mxu0
  %v4260 = vadd.f32 0.0, %v4259
  %v4261 = vpop.f32.mrf.mxu0
  %4262 = vdwg.mxu0
  %v4263 = vadd.f32 %v4017, %v4249
  %v4264 = vadd.f32 %v4018, %v4252
  %v4265 = vadd.f32 %v4019, %v4257
  %v4266 = vadd.f32 %v4020, %v4260
  %v4267 = vsel %vm331, %v4141, 0
  %v4268 = vsel %vm332, %v4145, 0
  %s4269 = scalar_lea.vmem %s4, 1280
  %v4270 = vld [vmem:[%s4269] sm:$0xf]
  %v4271 = vld [vmem:[%s4269 + $0x4] sm:$0xf]
  %v4272 = vld [vmem:[%s4269 + $0x8] sm:$0xf]
  %v4273 = vld [vmem:[%s4269 + $0xc] sm:$0xf]
  %v4274 = vld [vmem:[%s4269 + $0x10] sm:$0xf]
  %v4275 = vld [vmem:[%s4269 + $0x14] sm:$0xf]
  %v4276 = vld [vmem:[%s4269 + $0x18] sm:$0xf]
  %v4277 = vld [vmem:[%s4269 + $0x1c] sm:$0xf]
  %v4278 = vld [vmem:[%s4269 + $0x20] sm:$0xf]
  %v4279 = vld [vmem:[%s4269 + $0x24] sm:$0xf]
  %v4280 = vld [vmem:[%s4269 + $0x28] sm:$0xf]
  %v4281 = vld [vmem:[%s4269 + $0x2c] sm:$0xf]
  %v4282 = vld [vmem:[%s4269 + $0x30] sm:$0xf]
  %v4283 = vld [vmem:[%s4269 + $0x34] sm:$0xf]
  %v4284 = vld [vmem:[%s4269 + $0x38] sm:$0xf]
  %v4285 = vld [vmem:[%s4269 + $0x3c] sm:$0xf]
  %v4302 = vunpack.c.l.b16 %v4270
  %v4303 = vunpack.c.l.b16 %v4271
  %v4304 = vunpack.c.l.b16 %v4272
  %v4305 = vunpack.c.l.b16 %v4273
  %v4306 = vunpack.c.l.b16 %v4274
  %v4307 = vunpack.c.l.b16 %v4275
  %v4308 = vunpack.c.l.b16 %v4276
  %v4309 = vunpack.c.l.b16 %v4277
  %v4310 = vunpack.c.l.b16 %v4278
  %v4311 = vunpack.c.l.b16 %v4279
  %v4312 = vunpack.c.l.b16 %v4280
  %v4313 = vunpack.c.l.b16 %v4281
  %v4314 = vunpack.c.l.b16 %v4282
  %v4315 = vunpack.c.l.b16 %v4283
  %v4316 = vunpack.c.l.b16 %v4284
  %v4317 = vunpack.c.l.b16 %v4285
  %v4318 = vpack.c.b16 %v4303, %v4302
  %v4319 = vpack.c.b16 %v4305, %v4304
  %v4320 = vpack.c.b16 %v4307, %v4306
  %v4321 = vpack.c.b16 %v4309, %v4308
  %v4322 = vpack.c.b16 %v4311, %v4310
  %v4323 = vpack.c.b16 %v4313, %v4312
  %v4324 = vpack.c.b16 %v4315, %v4314
  %v4325 = vpack.c.b16 %v4317, %v4316
  %4334 = vmatprep.subr.bf16.mxu0 0
  %4335 = vmatpush1.bf16.msra.mxu0 %v4325
  %4336 = vmatprep.subr.bf16.mxu0 0
  %4337 = vmatpush1.bf16.msra.mxu0 %v4324
  %4338 = vmatprep.subr.bf16.mxu0 0
  %4339 = vmatpush1.bf16.msra.mxu0 %v4323
  %4340 = vmatprep.subr.bf16.mxu0 0
  %4341 = vmatpush1.bf16.msra.mxu0 %v4322
  %4342 = vmatprep.subr.bf16.mxu0 0
  %4343 = vmatpush1.bf16.msra.mxu0 %v4321
  %4344 = vmatprep.subr.bf16.mxu0 0
  %4345 = vmatpush1.bf16.msra.mxu0 %v4320
  %4346 = vmatprep.subr.bf16.mxu0 0
  %4347 = vmatpush1.bf16.msra.mxu0 %v4319
  %4348 = vmatprep.subr.bf16.mxu0 0
  %4349 = vmatpush1.bf16.msra.mxu0 %v4318
  %4350 = vmatprep.subr.bf16.mxu0 0
  %4351 = vmatpush2.bf16.msra.mxu0 0
  %4352 = vmatprep.subr.bf16.mxu0 0
  %4353 = vmatpush2.bf16.msra.mxu0 0
  %4354 = vmatprep.subr.bf16.mxu0 0
  %4355 = vmatpush2.bf16.msra.mxu0 0
  %4356 = vmatprep.subr.bf16.mxu0 0
  %4357 = vmatpush2.bf16.msra.mxu0 0
  %4358 = vmatprep.subr.bf16.mxu0 0
  %4359 = vmatpush2.bf16.msra.mxu0 0
  %4360 = vmatprep.subr.bf16.mxu0 0
  %4361 = vmatpush2.bf16.msra.mxu0 0
  %4362 = vmatprep.subr.bf16.mxu0 0
  %4363 = vmatpush2.bf16.msra.mxu0 0
  %4364 = vmatprep.subr.bf16.mxu0 0
  %4365 = vmatpush2.bf16.msra.mxu0 0
  %4366 = vmatprep.mubr.bf16.mxu0 0
  %4367 = vmatmul.mubr.bf16.gmra.mxu0 %v4267
  %v4368 = vpop.f32.mrf.mxu0
  %v4369 = vadd.f32 0.0, %v4368
  %v4370 = vpop.f32.mrf.mxu0
  %v4371 = vpop.f32.mrf.mxu0
  %v4372 = vadd.f32 0.0, %v4371
  %v4373 = vpop.f32.mrf.mxu0
  %4374 = vmatprep.mubr.bf16.mxu0 0
  %4375 = vmatmul.mubr.bf16.gmra.mxu0 %v4268
  %v4376 = vpop.f32.mrf.mxu0
  %v4377 = vadd.f32 0.0, %v4376
  %v4378 = vpop.f32.mrf.mxu0
  %v4379 = vpop.f32.mrf.mxu0
  %v4380 = vadd.f32 0.0, %v4379
  %v4381 = vpop.f32.mrf.mxu0
  %4382 = vdwg.mxu0
  %v4383 = vadd.f32 %v4263, %v4369
  %v4384 = vadd.f32 %v4264, %v4372
  %v4385 = vadd.f32 %v4265, %v4377
  %v4386 = vadd.f32 %v4266, %v4380
  %v4387 = vrot.slane %v2803, 3
  %v4388 = vrot.slane %v2805, 4
  %v4389 = vor.u32 %v4387, %v4388
  %v4390 = vrot.slane %v3347, 3
  %v4391 = vrot.slane %v2810, 4
  %v4392 = vor.u32 %v4390, %v4391
  %v4393 = vsel %vm351, %v4389, %v4392
  %v4395 = vrot.slane %v2834, 3
  %v4396 = vrot.slane %v2836, 4
  %v4397 = vor.u32 %v4395, %v4396
  %v4398 = vrot.slane %v3367, 3
  %v4399 = vrot.slane %v2841, 4
  %v4400 = vor.u32 %v4398, %v4399
  %v4401 = vsel %vm351, %v4397, %v4400
  %v4403 = vsel %vm410, %v4393, 0
  %v4404 = vsel %vm411, %v4401, 0
  %s4405 = scalar_lea.vmem %s4, 1344
  %v4406 = vld [vmem:[%s4405] sm:$0xf]
  %v4407 = vld [vmem:[%s4405 + $0x4] sm:$0xf]
  %v4408 = vld [vmem:[%s4405 + $0x8] sm:$0xf]
  %v4409 = vld [vmem:[%s4405 + $0xc] sm:$0xf]
  %v4410 = vld [vmem:[%s4405 + $0x10] sm:$0xf]
  %v4411 = vld [vmem:[%s4405 + $0x14] sm:$0xf]
  %v4412 = vld [vmem:[%s4405 + $0x18] sm:$0xf]
  %v4413 = vld [vmem:[%s4405 + $0x1c] sm:$0xf]
  %v4414 = vld [vmem:[%s4405 + $0x20] sm:$0xf]
  %v4415 = vld [vmem:[%s4405 + $0x24] sm:$0xf]
  %v4416 = vld [vmem:[%s4405 + $0x28] sm:$0xf]
  %v4417 = vld [vmem:[%s4405 + $0x2c] sm:$0xf]
  %v4418 = vld [vmem:[%s4405 + $0x30] sm:$0xf]
  %v4419 = vld [vmem:[%s4405 + $0x34] sm:$0xf]
  %v4420 = vld [vmem:[%s4405 + $0x38] sm:$0xf]
  %v4421 = vld [vmem:[%s4405 + $0x3c] sm:$0xf]
  %v4438 = vunpack.c.l.b16 %v4406
  %v4439 = vunpack.c.l.b16 %v4407
  %v4440 = vunpack.c.l.b16 %v4408
  %v4441 = vunpack.c.l.b16 %v4409
  %v4442 = vunpack.c.l.b16 %v4410
  %v4443 = vunpack.c.l.b16 %v4411
  %v4444 = vunpack.c.l.b16 %v4412
  %v4445 = vunpack.c.l.b16 %v4413
  %v4446 = vunpack.c.l.b16 %v4414
  %v4447 = vunpack.c.l.b16 %v4415
  %v4448 = vunpack.c.l.b16 %v4416
  %v4449 = vunpack.c.l.b16 %v4417
  %v4450 = vunpack.c.l.b16 %v4418
  %v4451 = vunpack.c.l.b16 %v4419
  %v4452 = vunpack.c.l.b16 %v4420
  %v4453 = vunpack.c.l.b16 %v4421
  %v4454 = vpack.c.b16 %v4439, %v4438
  %v4455 = vpack.c.b16 %v4441, %v4440
  %v4456 = vpack.c.b16 %v4443, %v4442
  %v4457 = vpack.c.b16 %v4445, %v4444
  %v4458 = vpack.c.b16 %v4447, %v4446
  %v4459 = vpack.c.b16 %v4449, %v4448
  %v4460 = vpack.c.b16 %v4451, %v4450
  %v4461 = vpack.c.b16 %v4453, %v4452
  %4470 = vmatprep.subr.bf16.mxu0 0
  %4471 = vmatpush1.bf16.msra.mxu0 %v4461
  %4472 = vmatprep.subr.bf16.mxu0 0
  %4473 = vmatpush1.bf16.msra.mxu0 %v4460
  %4474 = vmatprep.subr.bf16.mxu0 0
  %4475 = vmatpush1.bf16.msra.mxu0 %v4459
  %4476 = vmatprep.subr.bf16.mxu0 0
  %4477 = vmatpush1.bf16.msra.mxu0 %v4458
  %4478 = vmatprep.subr.bf16.mxu0 0
  %4479 = vmatpush1.bf16.msra.mxu0 %v4457
  %4480 = vmatprep.subr.bf16.mxu0 0
  %4481 = vmatpush1.bf16.msra.mxu0 %v4456
  %4482 = vmatprep.subr.bf16.mxu0 0
  %4483 = vmatpush1.bf16.msra.mxu0 %v4455
  %4484 = vmatprep.subr.bf16.mxu0 0
  %4485 = vmatpush1.bf16.msra.mxu0 %v4454
  %4486 = vmatprep.subr.bf16.mxu0 0
  %4487 = vmatpush2.bf16.msra.mxu0 0
  %4488 = vmatprep.subr.bf16.mxu0 0
  %4489 = vmatpush2.bf16.msra.mxu0 0
  %4490 = vmatprep.subr.bf16.mxu0 0
  %4491 = vmatpush2.bf16.msra.mxu0 0
  %4492 = vmatprep.subr.bf16.mxu0 0
  %4493 = vmatpush2.bf16.msra.mxu0 0
  %4494 = vmatprep.subr.bf16.mxu0 0
  %4495 = vmatpush2.bf16.msra.mxu0 0
  %4496 = vmatprep.subr.bf16.mxu0 0
  %4497 = vmatpush2.bf16.msra.mxu0 0
  %4498 = vmatprep.subr.bf16.mxu0 0
  %4499 = vmatpush2.bf16.msra.mxu0 0
  %4500 = vmatprep.subr.bf16.mxu0 0
  %4501 = vmatpush2.bf16.msra.mxu0 0
  %4502 = vmatprep.mubr.bf16.mxu0 0
  %4503 = vmatmul.mubr.bf16.gmra.mxu0 %v4403
  %v4504 = vpop.f32.mrf.mxu0
  %v4505 = vadd.f32 0.0, %v4504
  %v4506 = vpop.f32.mrf.mxu0
  %v4507 = vpop.f32.mrf.mxu0
  %v4508 = vadd.f32 0.0, %v4507
  %v4509 = vpop.f32.mrf.mxu0
  %4510 = vmatprep.mubr.bf16.mxu0 0
  %4511 = vmatmul.mubr.bf16.gmra.mxu0 %v4404
  %v4512 = vpop.f32.mrf.mxu0
  %v4513 = vadd.f32 0.0, %v4512
  %v4514 = vpop.f32.mrf.mxu0
  %v4515 = vpop.f32.mrf.mxu0
  %v4516 = vadd.f32 0.0, %v4515
  %v4517 = vpop.f32.mrf.mxu0
  %4518 = vdwg.mxu0
  %v4519 = vadd.f32 %v4383, %v4505
  %v4520 = vadd.f32 %v4384, %v4508
  %v4521 = vadd.f32 %v4385, %v4513
  %v4522 = vadd.f32 %v4386, %v4516
  %v4523 = vpack.c.b16 %v2787, %v748
  %v4525 = vpack.c.b16 %v2818, %v765
  %s4527 = scalar_lea.vmem %s4, 1408
  %v4528 = vld [vmem:[%s4527] sm:$0xf]
  %v4529 = vld [vmem:[%s4527 + $0x4] sm:$0xf]
  %v4530 = vld [vmem:[%s4527 + $0x8] sm:$0xf]
  %v4531 = vld [vmem:[%s4527 + $0xc] sm:$0xf]
  %v4532 = vld [vmem:[%s4527 + $0x10] sm:$0xf]
  %v4533 = vld [vmem:[%s4527 + $0x14] sm:$0xf]
  %v4534 = vld [vmem:[%s4527 + $0x18] sm:$0xf]
  %v4535 = vld [vmem:[%s4527 + $0x1c] sm:$0xf]
  %v4536 = vld [vmem:[%s4527 + $0x20] sm:$0xf]
  %v4537 = vld [vmem:[%s4527 + $0x24] sm:$0xf]
  %v4538 = vld [vmem:[%s4527 + $0x28] sm:$0xf]
  %v4539 = vld [vmem:[%s4527 + $0x2c] sm:$0xf]
  %v4540 = vld [vmem:[%s4527 + $0x30] sm:$0xf]
  %v4541 = vld [vmem:[%s4527 + $0x34] sm:$0xf]
  %v4542 = vld [vmem:[%s4527 + $0x38] sm:$0xf]
  %v4543 = vld [vmem:[%s4527 + $0x3c] sm:$0xf]
  %v4560 = vunpack.c.l.b16 %v4528
  %v4561 = vunpack.c.l.b16 %v4529
  %v4562 = vunpack.c.l.b16 %v4530
  %v4563 = vunpack.c.l.b16 %v4531
  %v4564 = vunpack.c.l.b16 %v4532
  %v4565 = vunpack.c.l.b16 %v4533
  %v4566 = vunpack.c.l.b16 %v4534
  %v4567 = vunpack.c.l.b16 %v4535
  %v4568 = vunpack.c.l.b16 %v4536
  %v4569 = vunpack.c.l.b16 %v4537
  %v4570 = vunpack.c.l.b16 %v4538
  %v4571 = vunpack.c.l.b16 %v4539
  %v4572 = vunpack.c.l.b16 %v4540
  %v4573 = vunpack.c.l.b16 %v4541
  %v4574 = vunpack.c.l.b16 %v4542
  %v4575 = vunpack.c.l.b16 %v4543
  %v4576 = vpack.c.b16 %v4561, %v4560
  %v4577 = vpack.c.b16 %v4563, %v4562
  %v4578 = vpack.c.b16 %v4565, %v4564
  %v4579 = vpack.c.b16 %v4567, %v4566
  %v4580 = vpack.c.b16 %v4569, %v4568
  %v4581 = vpack.c.b16 %v4571, %v4570
  %v4582 = vpack.c.b16 %v4573, %v4572
  %v4583 = vpack.c.b16 %v4575, %v4574
  %4592 = vmatprep.subr.bf16.mxu0 0
  %4593 = vmatpush1.bf16.msra.mxu0 %v4583
  %4594 = vmatprep.subr.bf16.mxu0 0
  %4595 = vmatpush1.bf16.msra.mxu0 %v4582
  %4596 = vmatprep.subr.bf16.mxu0 0
  %4597 = vmatpush1.bf16.msra.mxu0 %v4581
  %4598 = vmatprep.subr.bf16.mxu0 0
  %4599 = vmatpush1.bf16.msra.mxu0 %v4580
  %4600 = vmatprep.subr.bf16.mxu0 0
  %4601 = vmatpush1.bf16.msra.mxu0 %v4579
  %4602 = vmatprep.subr.bf16.mxu0 0
  %4603 = vmatpush1.bf16.msra.mxu0 %v4578
  %4604 = vmatprep.subr.bf16.mxu0 0
  %4605 = vmatpush1.bf16.msra.mxu0 %v4577
  %4606 = vmatprep.subr.bf16.mxu0 0
  %4607 = vmatpush1.bf16.msra.mxu0 %v4576
  %4608 = vmatprep.subr.bf16.mxu0 0
  %4609 = vmatpush2.bf16.msra.mxu0 0
  %4610 = vmatprep.subr.bf16.mxu0 0
  %4611 = vmatpush2.bf16.msra.mxu0 0
  %4612 = vmatprep.subr.bf16.mxu0 0
  %4613 = vmatpush2.bf16.msra.mxu0 0
  %4614 = vmatprep.subr.bf16.mxu0 0
  %4615 = vmatpush2.bf16.msra.mxu0 0
  %4616 = vmatprep.subr.bf16.mxu0 0
  %4617 = vmatpush2.bf16.msra.mxu0 0
  %4618 = vmatprep.subr.bf16.mxu0 0
  %4619 = vmatpush2.bf16.msra.mxu0 0
  %4620 = vmatprep.subr.bf16.mxu0 0
  %4621 = vmatpush2.bf16.msra.mxu0 0
  %4622 = vmatprep.subr.bf16.mxu0 0
  %4623 = vmatpush2.bf16.msra.mxu0 0
  %4624 = vmatprep.mubr.bf16.mxu0 0
  %4625 = vmatmul.mubr.bf16.gmra.mxu0 %v4523
  %v4626 = vpop.f32.mrf.mxu0
  %v4627 = vadd.f32 0.0, %v4626
  %v4628 = vpop.f32.mrf.mxu0
  %v4629 = vpop.f32.mrf.mxu0
  %v4630 = vadd.f32 0.0, %v4629
  %v4631 = vpop.f32.mrf.mxu0
  %4632 = vmatprep.mubr.bf16.mxu0 0
  %4633 = vmatmul.mubr.bf16.gmra.mxu0 %v4525
  %v4634 = vpop.f32.mrf.mxu0
  %v4635 = vadd.f32 0.0, %v4634
  %v4636 = vpop.f32.mrf.mxu0
  %v4637 = vpop.f32.mrf.mxu0
  %v4638 = vadd.f32 0.0, %v4637
  %v4639 = vpop.f32.mrf.mxu0
  %4640 = vdwg.mxu0
  %v4641 = vadd.f32 %v4519, %v4627
  %v4642 = vadd.f32 %v4520, %v4630
  %v4643 = vadd.f32 %v4521, %v4635
  %v4644 = vadd.f32 %v4522, %v4638
  %v4646 = vunpack.c.h.b16 %v277
  %v4647 = vpack.c.b16 %v4646, %v4646
  %v4649 = vshrl.u32 %v4523, 16
  %v4651 = vshll.u32 %v4523, 16
  %v4653 = vrot.slane %v4651, 1
  %v4654 = vor.u32 %v4649, %v4653
  %v4656 = vshll.u32 %v4647, 16
  %v4658 = vrot.slane %v4656, 1
  %v4659 = vsel %vm750, %v4654, %v4658
  %v4662 = vunpack.c.h.b16 %v283
  %v4663 = vpack.c.b16 %v4662, %v4662
  %v4665 = vshrl.u32 %v4525, 16
  %v4667 = vshll.u32 %v4525, 16
  %v4669 = vrot.slane %v4667, 1
  %v4670 = vor.u32 %v4665, %v4669
  %v4672 = vshll.u32 %v4663, 16
  %v4674 = vrot.slane %v4672, 1
  %v4675 = vsel %vm750, %v4670, %v4674
  %v4677 = vsel %vm802, %v4659, 0
  %v4678 = vsel %vm803, %v4675, 0
  %s4679 = scalar_lea.vmem %s4, 1472
  %v4680 = vld [vmem:[%s4679] sm:$0xf]
  %v4681 = vld [vmem:[%s4679 + $0x4] sm:$0xf]
  %v4682 = vld [vmem:[%s4679 + $0x8] sm:$0xf]
  %v4683 = vld [vmem:[%s4679 + $0xc] sm:$0xf]
  %v4684 = vld [vmem:[%s4679 + $0x10] sm:$0xf]
  %v4685 = vld [vmem:[%s4679 + $0x14] sm:$0xf]
  %v4686 = vld [vmem:[%s4679 + $0x18] sm:$0xf]
  %v4687 = vld [vmem:[%s4679 + $0x1c] sm:$0xf]
  %v4688 = vld [vmem:[%s4679 + $0x20] sm:$0xf]
  %v4689 = vld [vmem:[%s4679 + $0x24] sm:$0xf]
  %v4690 = vld [vmem:[%s4679 + $0x28] sm:$0xf]
  %v4691 = vld [vmem:[%s4679 + $0x2c] sm:$0xf]
  %v4692 = vld [vmem:[%s4679 + $0x30] sm:$0xf]
  %v4693 = vld [vmem:[%s4679 + $0x34] sm:$0xf]
  %v4694 = vld [vmem:[%s4679 + $0x38] sm:$0xf]
  %v4695 = vld [vmem:[%s4679 + $0x3c] sm:$0xf]
  %v4712 = vunpack.c.l.b16 %v4680
  %v4713 = vunpack.c.l.b16 %v4681
  %v4714 = vunpack.c.l.b16 %v4682
  %v4715 = vunpack.c.l.b16 %v4683
  %v4716 = vunpack.c.l.b16 %v4684
  %v4717 = vunpack.c.l.b16 %v4685
  %v4718 = vunpack.c.l.b16 %v4686
  %v4719 = vunpack.c.l.b16 %v4687
  %v4720 = vunpack.c.l.b16 %v4688
  %v4721 = vunpack.c.l.b16 %v4689
  %v4722 = vunpack.c.l.b16 %v4690
  %v4723 = vunpack.c.l.b16 %v4691
  %v4724 = vunpack.c.l.b16 %v4692
  %v4725 = vunpack.c.l.b16 %v4693
  %v4726 = vunpack.c.l.b16 %v4694
  %v4727 = vunpack.c.l.b16 %v4695
  %v4728 = vpack.c.b16 %v4713, %v4712
  %v4729 = vpack.c.b16 %v4715, %v4714
  %v4730 = vpack.c.b16 %v4717, %v4716
  %v4731 = vpack.c.b16 %v4719, %v4718
  %v4732 = vpack.c.b16 %v4721, %v4720
  %v4733 = vpack.c.b16 %v4723, %v4722
  %v4734 = vpack.c.b16 %v4725, %v4724
  %v4735 = vpack.c.b16 %v4727, %v4726
  %4744 = vmatprep.subr.bf16.mxu0 0
  %4745 = vmatpush1.bf16.msra.mxu0 %v4735
  %4746 = vmatprep.subr.bf16.mxu0 0
  %4747 = vmatpush1.bf16.msra.mxu0 %v4734
  %4748 = vmatprep.subr.bf16.mxu0 0
  %4749 = vmatpush1.bf16.msra.mxu0 %v4733
  %4750 = vmatprep.subr.bf16.mxu0 0
  %4751 = vmatpush1.bf16.msra.mxu0 %v4732
  %4752 = vmatprep.subr.bf16.mxu0 0
  %4753 = vmatpush1.bf16.msra.mxu0 %v4731
  %4754 = vmatprep.subr.bf16.mxu0 0
  %4755 = vmatpush1.bf16.msra.mxu0 %v4730
  %4756 = vmatprep.subr.bf16.mxu0 0
  %4757 = vmatpush1.bf16.msra.mxu0 %v4729
  %4758 = vmatprep.subr.bf16.mxu0 0
  %4759 = vmatpush1.bf16.msra.mxu0 %v4728
  %4760 = vmatprep.subr.bf16.mxu0 0
  %4761 = vmatpush2.bf16.msra.mxu0 0
  %4762 = vmatprep.subr.bf16.mxu0 0
  %4763 = vmatpush2.bf16.msra.mxu0 0
  %4764 = vmatprep.subr.bf16.mxu0 0
  %4765 = vmatpush2.bf16.msra.mxu0 0
  %4766 = vmatprep.subr.bf16.mxu0 0
  %4767 = vmatpush2.bf16.msra.mxu0 0
  %4768 = vmatprep.subr.bf16.mxu0 0
  %4769 = vmatpush2.bf16.msra.mxu0 0
  %4770 = vmatprep.subr.bf16.mxu0 0
  %4771 = vmatpush2.bf16.msra.mxu0 0
  %4772 = vmatprep.subr.bf16.mxu0 0
  %4773 = vmatpush2.bf16.msra.mxu0 0
  %4774 = vmatprep.subr.bf16.mxu0 0
  %4775 = vmatpush2.bf16.msra.mxu0 0
  %4776 = vmatprep.mubr.bf16.mxu0 0
  %4777 = vmatmul.mubr.bf16.gmra.mxu0 %v4677
  %v4778 = vpop.f32.mrf.mxu0
  %v4779 = vadd.f32 0.0, %v4778
  %v4780 = vpop.f32.mrf.mxu0
  %v4781 = vpop.f32.mrf.mxu0
  %v4782 = vadd.f32 0.0, %v4781
  %v4783 = vpop.f32.mrf.mxu0
  %4784 = vmatprep.mubr.bf16.mxu0 0
  %4785 = vmatmul.mubr.bf16.gmra.mxu0 %v4678
  %v4786 = vpop.f32.mrf.mxu0
  %v4787 = vadd.f32 0.0, %v4786
  %v4788 = vpop.f32.mrf.mxu0
  %v4789 = vpop.f32.mrf.mxu0
  %v4790 = vadd.f32 0.0, %v4789
  %v4791 = vpop.f32.mrf.mxu0
  %4792 = vdwg.mxu0
  %v4793 = vadd.f32 %v4641, %v4779
  %v4794 = vadd.f32 %v4642, %v4782
  %v4795 = vadd.f32 %v4643, %v4787
  %v4796 = vadd.f32 %v4644, %v4790
  %v4797 = vrot.slane %v4523, 1
  %v4798 = vrot.slane %v4647, 1
  %v4799 = vsel %vm924, %v4797, %v4798
  %v4801 = vrot.slane %v4525, 1
  %v4802 = vrot.slane %v4663, 1
  %v4803 = vsel %vm924, %v4801, %v4802
  %v4805 = vsel %vm955, %v4799, 0
  %v4806 = vsel %vm956, %v4803, 0
  %s4807 = scalar_lea.vmem %s4, 1536
  %v4808 = vld [vmem:[%s4807] sm:$0xf]
  %v4809 = vld [vmem:[%s4807 + $0x4] sm:$0xf]
  %v4810 = vld [vmem:[%s4807 + $0x8] sm:$0xf]
  %v4811 = vld [vmem:[%s4807 + $0xc] sm:$0xf]
  %v4812 = vld [vmem:[%s4807 + $0x10] sm:$0xf]
  %v4813 = vld [vmem:[%s4807 + $0x14] sm:$0xf]
  %v4814 = vld [vmem:[%s4807 + $0x18] sm:$0xf]
  %v4815 = vld [vmem:[%s4807 + $0x1c] sm:$0xf]
  %v4816 = vld [vmem:[%s4807 + $0x20] sm:$0xf]
  %v4817 = vld [vmem:[%s4807 + $0x24] sm:$0xf]
  %v4818 = vld [vmem:[%s4807 + $0x28] sm:$0xf]
  %v4819 = vld [vmem:[%s4807 + $0x2c] sm:$0xf]
  %v4820 = vld [vmem:[%s4807 + $0x30] sm:$0xf]
  %v4821 = vld [vmem:[%s4807 + $0x34] sm:$0xf]
  %v4822 = vld [vmem:[%s4807 + $0x38] sm:$0xf]
  %v4823 = vld [vmem:[%s4807 + $0x3c] sm:$0xf]
  %v4840 = vunpack.c.l.b16 %v4808
  %v4841 = vunpack.c.l.b16 %v4809
  %v4842 = vunpack.c.l.b16 %v4810
  %v4843 = vunpack.c.l.b16 %v4811
  %v4844 = vunpack.c.l.b16 %v4812
  %v4845 = vunpack.c.l.b16 %v4813
  %v4846 = vunpack.c.l.b16 %v4814
  %v4847 = vunpack.c.l.b16 %v4815
  %v4848 = vunpack.c.l.b16 %v4816
  %v4849 = vunpack.c.l.b16 %v4817
  %v4850 = vunpack.c.l.b16 %v4818
  %v4851 = vunpack.c.l.b16 %v4819
  %v4852 = vunpack.c.l.b16 %v4820
  %v4853 = vunpack.c.l.b16 %v4821
  %v4854 = vunpack.c.l.b16 %v4822
  %v4855 = vunpack.c.l.b16 %v4823
  %v4856 = vpack.c.b16 %v4841, %v4840
  %v4857 = vpack.c.b16 %v4843, %v4842
  %v4858 = vpack.c.b16 %v4845, %v4844
  %v4859 = vpack.c.b16 %v4847, %v4846
  %v4860 = vpack.c.b16 %v4849, %v4848
  %v4861 = vpack.c.b16 %v4851, %v4850
  %v4862 = vpack.c.b16 %v4853, %v4852
  %v4863 = vpack.c.b16 %v4855, %v4854
  %4872 = vmatprep.subr.bf16.mxu0 0
  %4873 = vmatpush1.bf16.msra.mxu0 %v4863
  %4874 = vmatprep.subr.bf16.mxu0 0
  %4875 = vmatpush1.bf16.msra.mxu0 %v4862
  %4876 = vmatprep.subr.bf16.mxu0 0
  %4877 = vmatpush1.bf16.msra.mxu0 %v4861
  %4878 = vmatprep.subr.bf16.mxu0 0
  %4879 = vmatpush1.bf16.msra.mxu0 %v4860
  %4880 = vmatprep.subr.bf16.mxu0 0
  %4881 = vmatpush1.bf16.msra.mxu0 %v4859
  %4882 = vmatprep.subr.bf16.mxu0 0
  %4883 = vmatpush1.bf16.msra.mxu0 %v4858
  %4884 = vmatprep.subr.bf16.mxu0 0
  %4885 = vmatpush1.bf16.msra.mxu0 %v4857
  %4886 = vmatprep.subr.bf16.mxu0 0
  %4887 = vmatpush1.bf16.msra.mxu0 %v4856
  %4888 = vmatprep.subr.bf16.mxu0 0
  %4889 = vmatpush2.bf16.msra.mxu0 0
  %4890 = vmatprep.subr.bf16.mxu0 0
  %4891 = vmatpush2.bf16.msra.mxu0 0
  %4892 = vmatprep.subr.bf16.mxu0 0
  %4893 = vmatpush2.bf16.msra.mxu0 0
  %4894 = vmatprep.subr.bf16.mxu0 0
  %4895 = vmatpush2.bf16.msra.mxu0 0
  %4896 = vmatprep.subr.bf16.mxu0 0
  %4897 = vmatpush2.bf16.msra.mxu0 0
  %4898 = vmatprep.subr.bf16.mxu0 0
  %4899 = vmatpush2.bf16.msra.mxu0 0
  %4900 = vmatprep.subr.bf16.mxu0 0
  %4901 = vmatpush2.bf16.msra.mxu0 0
  %4902 = vmatprep.subr.bf16.mxu0 0
  %4903 = vmatpush2.bf16.msra.mxu0 0
  %4904 = vmatprep.mubr.bf16.mxu0 0
  %4905 = vmatmul.mubr.bf16.gmra.mxu0 %v4805
  %v4906 = vpop.f32.mrf.mxu0
  %v4907 = vadd.f32 0.0, %v4906
  %v4908 = vpop.f32.mrf.mxu0
  %v4909 = vpop.f32.mrf.mxu0
  %v4910 = vadd.f32 0.0, %v4909
  %v4911 = vpop.f32.mrf.mxu0
  %4912 = vmatprep.mubr.bf16.mxu0 0
  %4913 = vmatmul.mubr.bf16.gmra.mxu0 %v4806
  %v4914 = vpop.f32.mrf.mxu0
  %v4915 = vadd.f32 0.0, %v4914
  %v4916 = vpop.f32.mrf.mxu0
  %v4917 = vpop.f32.mrf.mxu0
  %v4918 = vadd.f32 0.0, %v4917
  %v4919 = vpop.f32.mrf.mxu0
  %4920 = vdwg.mxu0
  %v4921 = vadd.f32 %v4793, %v4907
  %v4922 = vadd.f32 %v4794, %v4910
  %v4923 = vadd.f32 %v4795, %v4915
  %v4924 = vadd.f32 %v4796, %v4918
  %v4925 = vpack.c.bf16 %v4136, %v4135
  %v4927 = vunpack.c.l.b16 %v4925
  %v4928 = vunpack.c.h.b16 %v4925
  %v4929 = vpack.c.b16 %v4927, %v4927
  %v4930 = vpack.c.b16 %v4928, %v4928
  %4933 = vst [vmem:[%s5] sm:$0xf] %v4929
  %4934 = vst [vmem:[%s5 + $0x8] sm:$0xf] %v4930
  %v4935 = vpack.c.bf16 %v4922, %v4921
  %v4937 = vunpack.c.l.b16 %v4935
  %v4938 = vunpack.c.h.b16 %v4935
  %v4939 = vpack.c.b16 %v4937, %v4937
  %v4940 = vpack.c.b16 %v4938, %v4938
  %4943 = vst [vmem:[%s5 + $0x4] sm:$0xf] %v4939
  %4944 = vst [vmem:[%s5 + $0xc] sm:$0xf] %v4940
  %v4945 = vpack.c.bf16 %v4138, %v4137
  %v4947 = vunpack.c.l.b16 %v4945
  %v4948 = vunpack.c.h.b16 %v4945
  %v4949 = vpack.c.b16 %v4947, %v4947
  %v4950 = vpack.c.b16 %v4948, %v4948
  %s4953 = scalar_lea.vmem %s5, 16
  %4954 = vst [vmem:[%s4953] sm:$0xf] %v4949
  %4955 = vst [vmem:[%s4953 + $0x8] sm:$0xf] %v4950
  %v4956 = vpack.c.bf16 %v4924, %v4923
  %v4958 = vunpack.c.l.b16 %v4956
  %v4959 = vunpack.c.h.b16 %v4956
  %v4960 = vpack.c.b16 %v4958, %v4958
  %v4961 = vpack.c.b16 %v4959, %v4959
  %4964 = vst [vmem:[%s4953 + $0x4] sm:$0xf] %v4960
  %4965 = vst [vmem:[%s4953 + $0xc] sm:$0xf] %v4961
  %v4966 = vadd.f32 %v4135, %v4136
  %v4967 = vadd.f32 %v4966, %v4137
  %v4968 = vadd.f32 %v4967, %v4138
  %v4969 = vrot.slane %v4968, 4
  %v4970 = vadd.f32 %v4968, %v4969
  %v4971 = vrot.slane %v4970, 2
  %v4972 = vadd.f32 %v4970, %v4971
  %v4973 = vrot.slane %v4972, 1
  %v4974 = vadd.f32 %v4972, %v4973
  %v4975 = vadd.f32 %v4921, %v4922
  %v4976 = vadd.f32 %v4975, %v4923
  %v4977 = vadd.f32 %v4976, %v4924
  %v4978 = vrot.slane %v4977, 4
  %v4979 = vadd.f32 %v4977, %v4978
  %v4980 = vrot.slane %v4979, 2
  %v4981 = vadd.f32 %v4979, %v4980
  %v4982 = vrot.slane %v4981, 1
  %v4983 = vadd.f32 %v4981, %v4982
  %v4984 = vmul.f32 %v4135, %v4135
  %v4985 = vmul.f32 %v4136, %v4136
  %v4986 = vmul.f32 %v4137, %v4137
  %v4987 = vmul.f32 %v4138, %v4138
  %v4988 = vadd.f32 %v4984, %v4985
  %v4989 = vadd.f32 %v4988, %v4986
  %v4990 = vadd.f32 %v4989, %v4987
  %v4991 = vrot.slane %v4990, 4
  %v4992 = vadd.f32 %v4990, %v4991
  %v4993 = vrot.slane %v4992, 2
  %v4994 = vadd.f32 %v4992, %v4993
  %v4995 = vrot.slane %v4994, 1
  %v4996 = vadd.f32 %v4994, %v4995
  %v4997 = vmul.f32 %v4921, %v4921
  %v4998 = vmul.f32 %v4922, %v4922
  %v4999 = vmul.f32 %v4923, %v4923
  %v5000 = vmul.f32 %v4924, %v4924
  %v5001 = vadd.f32 %v4997, %v4998
  %v5002 = vadd.f32 %v5001, %v4999
  %v5003 = vadd.f32 %v5002, %v5000
  %v5004 = vrot.slane %v5003, 4
  %v5005 = vadd.f32 %v5003, %v5004
  %v5006 = vrot.slane %v5005, 2
  %v5007 = vadd.f32 %v5005, %v5006
  %v5008 = vrot.slane %v5007, 1
  %v5009 = vadd.f32 %v5007, %v5008
  %v5012 = vrot.slane %v4996, 7
  %v5013 = vrot.slane %v5009, 7
  %vm5016 = vcmask 1040384
  %v5017 = vsel %vm5016, %v4974, %v5012
  %v5018 = vsel %vm5016, %v4983, %v5013
  %v5021 = vcombine.low %v5017, %v5018
  %v5023 = vunpack.c.l.s4 1983009808
  %v5024 = vunpack.c.0.s8 %v5023
  %v5025 = vlaneseq
  %v5026 = vshrl.u32 %v5025, 7
  %v5027 = vsub.s32 %v5024, %v5026
  %v5028 = vrot.slane %v5021, %v5027
  %5030 = vst [vmem:[%s6] sm:$0xf] %v5028
  // Predicated region
  $region26: #{gam_attention_pallas.4} parent=0 // pred_check
    _
  $region27: #{gam_attention_pallas.4} parent=0 // pred_check_branch
    %5032 = sbr.rel (0) target = $region29
  $region28: #{gam_attention_pallas.4} parent=0 // pred_region
    _
  $region29: #{gam_attention_pallas.4} parent=0 // pred_fallthru
    _
  // Predicated region
  $region30: #{gam_attention_pallas.4} parent=0 // pred_check
    _
  $region31: #{gam_attention_pallas.4} parent=0 // pred_check_branch
    %5034 = sbr.rel (0) target = $region33
  $region32: #{gam_attention_pallas.4} parent=0 // pred_region
    _
  $region33: #{gam_attention_pallas.4} parent=0 // pred_fallthru
    _
  // Predicated region
  $region34: #{gam_attention_pallas.4} parent=0 // pred_check
    _
  $region35: #{gam_attention_pallas.4} parent=0 // pred_check_branch
    %5036 = sbr.rel (0) target = $region37
  $region36: #{gam_attention_pallas.4} parent=0 // pred_region
    _
  $region37: #{gam_attention_pallas.4} parent=0 // pred_fallthru
    _
  // Predicated region
  $region38: #{gam_attention_pallas.4} parent=0 // pred_check
    _
  $region39: #{gam_attention_pallas.4} parent=0 // pred_check_branch
    %5038 = sbr.rel (0) target = $region41
  $region40: #{gam_attention_pallas.4} parent=0 // pred_region
    _
  $region41: #{gam_attention_pallas.4} parent=0 // pred_fallthru
    _

</llo_original>
